<compile_context>
chip_gen: v6e
topology: v6e:2x2x1
jax: 0.10.0
libtpu: 0.0.40
codegen_flags: <defaults>
</compile_context>

<pallas_src>
import functools

import numpy as np
import jax
import jax.numpy as jnp
from jax import lax
from jax.experimental import pallas as pl
from jax.experimental.pallas import tpu as pltpu


def _residual_block_kernel(x_ref, w1_ref, s1_ref, b1_ref, w2_ref, s2_ref, b2_ref,
                           out_ref, xpad_s, y1pad_s, acc1_ref, acc2_ref,
                           *, W, Cp, d, TH):
    """Grid step (n, t): batch element n, output rows [t*TH, (t+1)*TH).

    x_ref    : (1, H, W, Cp) f32   full image (resident across row tiles)
    w1/w2    : (9, Cp, Cp)   bf16  conv taps, (kh,kw) row-major
    s*/b*    : (1, Cp)       f32   folded BN scale / bias
    out_ref  : (1, TH, W, Cp) f32
    xpad_s   : (TH+4d, W+2d, Cp) bf16  zero-halo'd x strip (conv1 input)
    y1pad_s  : (TH+2d, W+2d, Cp) bf16  zero-halo'd conv1 output strip (conv2 input)
    acc1/2   : f32 VMEM accumulators for the tap matmuls
    """
    t = pl.program_id(1)
    T = pl.num_programs(1)
    r0 = pl.multiple_of(t * TH, TH)          # first output row of this tile
    Wp = W + 2 * d
    HS1 = TH + 2 * d                         # rows of the conv1 (y1) strip
    bf16 = jnp.bfloat16

    # ---- stage x rows [r0-2d, r0+TH+2d) as a zero-padded bf16 strip --------
    # Only the halo strips are zeroed (cheap); rows/cols outside the image stay
    # zero, which is exactly the conv's zero padding.
    xpad_s[0:2 * d, :, :] = jnp.zeros((2 * d, Wp, Cp), bf16)
    xpad_s[2 * d + TH:, :, :] = jnp.zeros((2 * d, Wp, Cp), bf16)
    xpad_s[:, 0:d, :] = jnp.zeros((TH + 4 * d, d, Cp), bf16)
    xpad_s[:, d + W:, :] = jnp.zeros((TH + 4 * d, d, Cp), bf16)
    xpad_s[2 * d:2 * d + TH, d:d + W, :] = x_ref[0, pl.ds(r0, TH)].astype(bf16)

    @pl.when(t > 0)
    def _():   # real image rows above this tile
        xpad_s[0:2 * d, d:d + W, :] = x_ref[0, pl.ds(r0 - 2 * d, 2 * d)].astype(bf16)

    @pl.when(t < T - 1)
    def _():   # real image rows below this tile
        xpad_s[2 * d + TH:, d:d + W, :] = x_ref[0, pl.ds(r0 + TH, 2 * d)].astype(bf16)

    # ---- conv1: 9 shifted tap matmuls (bf16 in, f32 acc on the MXU) --------
    # NOTE: the (HS1, W, Cp)->(HS1*W, Cp) reshape is layout-cheap when W % 8 == 0.
    for idx in range(9):
        kh, kw = idx // 3, idx % 3
        patch = xpad_s[kh * d:kh * d + HS1, kw * d:kw * d + W, :]
        contrib = jnp.dot(patch.reshape(HS1 * W, Cp), w1_ref[idx],
                          preferred_element_type=jnp.float32)
        if idx == 0:
            acc1_ref[...] = contrib
        else:
            acc1_ref[...] += contrib

    # BN1 (folded) + ReLU, staged as a zero-padded bf16 strip for conv2.
    y1 = jnp.maximum(acc1_ref[...] * s1_ref[...] + b1_ref[...], 0.0).astype(bf16)
    y1pad_s[:, 0:d, :] = jnp.zeros((HS1, d, Cp), bf16)
    y1pad_s[:, d + W:, :] = jnp.zeros((HS1, d, Cp), bf16)
    y1pad_s[:, d:d + W, :] = y1.reshape(HS1, W, Cp)

    # conv2 zero-pads y1 at the image boundary: the first/last d strip rows
    # fall outside the image only for the first/last row tile -> zero them.
    @pl.when(t == 0)
    def _():
        y1pad_s[0:d, :, :] = jnp.zeros((d, Wp, Cp), bf16)

    @pl.when(t == T - 1)
    def _():
        y1pad_s[TH + d:, :, :] = jnp.zeros((d, Wp, Cp), bf16)

    # ---- conv2: 9 shifted tap matmuls over the TH output rows --------------
    for idx in range(9):
        kh, kw = idx // 3, idx % 3
        patch = y1pad_s[kh * d:kh * d + TH, kw * d:kw * d + W, :]
        contrib = jnp.dot(patch.reshape(TH * W, Cp), w2_ref[idx],
                          preferred_element_type=jnp.float32)
        if idx == 0:
            acc2_ref[...] = contrib
        else:
            acc2_ref[...] += contrib

    # BN2 (folded) + identity residual (re-read from the resident x block in
    # f32 -- no second HBM DMA of x) + final ReLU.
    res = x_ref[0, pl.ds(r0, TH)].reshape(TH * W, Cp)
    out = jnp.maximum(acc2_ref[...] * s2_ref[...] + b2_ref[...] + res, 0.0)
    out_ref[0] = out.reshape(TH, W, Cp).astype(out_ref.dtype)


def _pick_row_tile(H, d):
    """Largest row tile <= 32 that divides H and holds the 2d halo; else H."""
    for th in range(min(H, 32), max(2 * d, 1) - 1, -1):
        if H % th == 0 and th >= 2 * d:
            return th
    return H


def residual_block_pallas(x_nchw, params, dilation=1, row_tile=None):
    """Forward of ResidualBlock(in_ch, out_ch, stride=1, shortcut=None, dilation)."""
    # TODO(synk): the `shortcut` (self.right) projection branch / stride != 1 is not
    # implemented; identity residual requires in_ch == out_ch and stride == 1.
    eps = 1e-5
    d = int(dilation)

    x = jnp.transpose(x_nchw, (0, 2, 3, 1))               # NCHW -> NHWC
    N, H, W, Cin = x.shape
    Cout = params["w1"].shape[0]
    assert Cin == Cout, "identity shortcut requires in_ch == out_ch"
    C = Cin

    # Pad channels (lane axis) up to a multiple of 128 so vregs / MXU are full.
    Cp = ((C + 127) // 128) * 128
    cpad = Cp - C

    TH = _pick_row_tile(H, d) if row_tile is None else int(row_tile)
    assert H % TH == 0, "row tile must divide H"
    T = H // TH
    assert T == 1 or TH >= 2 * d, "row tile must cover the 2*dilation halo"

    # Fold BatchNorm (eval mode, running stats) into per-channel scale/bias.
    s1 = params["bn1_gamma"] / jnp.sqrt(params["bn1_var"] + eps)
    b1 = params["bn1_beta"] - params["bn1_mean"] * s1
    s2 = params["bn2_gamma"] / jnp.sqrt(params["bn2_var"] + eps)
    b2 = params["bn2_beta"] - params["bn2_mean"] * s2

    # Conv weights: torch OIHW -> (kh*3+kw, Cin, Cout) tap-major matmul weights.
    w1_taps = jnp.transpose(params["w1"], (2, 3, 1, 0)).reshape(9, C, C)
    w2_taps = jnp.transpose(params["w2"], (2, 3, 1, 0)).reshape(9, C, C)
    if cpad:
        x = jnp.pad(x, ((0, 0), (0, 0), (0, 0), (0, cpad)))
        w1_taps = jnp.pad(w1_taps, ((0, 0), (0, cpad), (0, cpad)))
        w2_taps = jnp.pad(w2_taps, ((0, 0), (0, cpad), (0, cpad)))
        s1 = jnp.pad(s1, (0, cpad))
        b1 = jnp.pad(b1, (0, cpad))
        s2 = jnp.pad(s2, (0, cpad))
        b2 = jnp.pad(b2, (0, cpad))
    w1_taps = w1_taps.astype(jnp.bfloat16)                 # single-pass MXU matmuls
    w2_taps = w2_taps.astype(jnp.bfloat16)

    kernel = functools.partial(_residual_block_kernel, W=W, Cp=Cp, d=d, TH=TH)

    out_p = pl.pallas_call(
        kernel,
        out_shape=jax.ShapeDtypeStruct((N, H, W, Cp), x.dtype),
        grid_spec=pltpu.PrefetchScalarGridSpec(
            num_scalar_prefetch=0,
            grid=(N, T),
            in_specs=[
                # Full image per batch element; block index is constant across the
                # row-tile axis so it stays resident (no re-DMA per tile).
                pl.BlockSpec((1, H, W, Cp), lambda n, t: (n, 0, 0, 0)),
                pl.BlockSpec((9, Cp, Cp), lambda n, t: (0, 0, 0)),
                pl.BlockSpec((1, Cp), lambda n, t: (0, 0)),
                pl.BlockSpec((1, Cp), lambda n, t: (0, 0)),
                pl.BlockSpec((9, Cp, Cp), lambda n, t: (0, 0, 0)),
                pl.BlockSpec((1, Cp), lambda n, t: (0, 0)),
                pl.BlockSpec((1, Cp), lambda n, t: (0, 0)),
            ],
            out_specs=pl.BlockSpec((1, TH, W, Cp), lambda n, t: (n, t, 0, 0)),
            scratch_shapes=[
                pltpu.VMEM((TH + 4 * d, W + 2 * d, Cp), jnp.bfloat16),  # x strip
                pltpu.VMEM((TH + 2 * d, W + 2 * d, Cp), jnp.bfloat16),  # y1 strip
                pltpu.VMEM(((TH + 2 * d) * W, Cp), jnp.float32),        # conv1 acc
                pltpu.VMEM((TH * W, Cp), jnp.float32),                  # conv2 acc
            ],
        ),
        compiler_params=pltpu.CompilerParams(
            # batch and row tiles are independent -> shard across v7x's 2 TCs.
            dimension_semantics=("parallel", "parallel"),
            vmem_limit_bytes=48 * 1024 * 1024,
        ),
    )(x, w1_taps, s1.reshape(1, Cp), b1.reshape(1, Cp),
      w2_taps, s2.reshape(1, Cp), b2.reshape(1, Cp))

    out = out_p[..., :C] if cpad else out_p
    return jnp.transpose(out, (0, 3, 1, 2))                # NHWC -> NCHW


def residual_block_ref(x, params, dilation=1, matmul_dtype=None):
    """Pure-JAX reference (NCHW, matches the PyTorch module in eval mode).

    matmul_dtype=jnp.bfloat16 rounds conv inputs/weights the same way the
    Pallas kernel does (bf16 operands, f32 accumulation) for a tight check.
    """
    eps = 1e-5
    d = int(dilation)

    def rnd(a):
        return a.astype(matmul_dtype).astype(a.dtype) if matmul_dtype is not None else a

    def conv(x_, w):
        return lax.conv_general_dilated(
            rnd(x_), rnd(w), window_strides=(1, 1),
            padding=[(d, d), (d, d)], rhs_dilation=(d, d),
            dimension_numbers=("NCHW", "OIHW", "NCHW"),
            precision=lax.Precision.HIGHEST)

    def bn(x_, g, b, m, v):
        s = g / jnp.sqrt(v + eps)
        return x_ * s[None, :, None, None] + (b - m * s)[None, :, None, None]

    y = conv(x, params["w1"])
    y = jax.nn.relu(bn(y, params["bn1_gamma"], params["bn1_beta"],
                       params["bn1_mean"], params["bn1_var"]))
    y = conv(y, params["w2"])
    y = bn(y, params["bn2_gamma"], params["bn2_beta"],
           params["bn2_mean"], params["bn2_var"])
    return jax.nn.relu(y + x)


if __name__ == "__main__":
    key = jax.random.PRNGKey(0)
    N, C, Hs, Ws = 2, 4, 16, 16        # in_ch == out_ch == 4, stride=1, dilation=1
    dilation = 1

    ks = jax.random.split(key, 11)
    params = {
        "w1": jax.random.normal(ks[0], (C, C, 3, 3), jnp.float32) * 0.2,
        "w2": jax.random.normal(ks[1], (C, C, 3, 3), jnp.float32) * 0.2,
        "bn1_gamma": jax.random.uniform(ks[2], (C,), jnp.float32, 0.5, 1.5),
        "bn1_beta":  jax.random.normal(ks[3], (C,), jnp.float32) * 0.1,
        "bn1_mean":  jax.random.normal(ks[4], (C,), jnp.float32) * 0.1,
        "bn1_var":   jax.random.uniform(ks[5], (C,), jnp.float32, 0.5, 1.5),
        "bn2_gamma": jax.random.uniform(ks[6], (C,), jnp.float32, 0.5, 1.5),
        "bn2_beta":  jax.random.normal(ks[7], (C,), jnp.float32) * 0.1,
        "bn2_mean":  jax.random.normal(ks[8], (C,), jnp.float32) * 0.1,
        "bn2_var":   jax.random.uniform(ks[9], (C,), jnp.float32, 0.5, 1.5),
    }
    x = jax.random.normal(ks[10], (N, C, Hs, Ws), jnp.float32)

    # row_tile=8 -> 2 row tiles per image: exercises the halo copy + boundary
    # zeroing paths of the tiled kernel at this small test size.
    out = jax.block_until_ready(residual_block_pallas(x, params, dilation, row_tile=8))

    # Tight check: reference with the same bf16 operand rounding (f32 accumulation).
    ref_bf16 = jax.block_until_ready(
        residual_block_ref(x, params, dilation, matmul_dtype=jnp.bfloat16))
    np.testing.assert_allclose(np.asarray(out), np.asarray(ref_bf16),
                               atol=1e-3, rtol=1e-3)

    # Loose check vs the exact f32 (HIGHEST) reference: the kernel intentionally
    # uses bf16 tap matmuls, so only bf16-level agreement is expected here.
    ref = jax.block_until_ready(residual_block_ref(x, params, dilation))
    np.testing.assert_allclose(np.asarray(out), np.asarray(ref),
                               atol=1e-1, rtol=5e-2)

    assert out.shape == (N, C, Hs, Ws) and out.dtype == jnp.float32
    print("KERNEL_OK")
</pallas_src>

<mosaic_0001>
module attributes {stable_mosaic.version = 11 : i64} {
  func.func @_residual_block_kernel(%arg0: i32, %arg1: i32, %arg2: memref<1x16x16x128xf32, #tpu.memory_space<vmem>>, %arg3: memref<9x128x128xbf16, #tpu.memory_space<vmem>>, %arg4: memref<1x128xf32, #tpu.memory_space<vmem>>, %arg5: memref<1x128xf32, #tpu.memory_space<vmem>>, %arg6: memref<9x128x128xbf16, #tpu.memory_space<vmem>>, %arg7: memref<1x128xf32, #tpu.memory_space<vmem>>, %arg8: memref<1x128xf32, #tpu.memory_space<vmem>>, %arg9: memref<1x8x16x128xf32, #tpu.memory_space<vmem>>, %arg10: memref<12x18x128xbf16, #tpu.memory_space<vmem>>, %arg11: memref<10x18x128xbf16, #tpu.memory_space<vmem>>, %arg12: memref<160x128xf32, #tpu.memory_space<vmem>>, %arg13: memref<128x128xf32, #tpu.memory_space<vmem>>) attributes {dimension_semantics = [#tpu.dimension_semantics<parallel>, #tpu.dimension_semantics<parallel>], iteration_bounds = array<i64: 2, 2>, scalar_prefetch = 0 : i64, scratch_operands = 4 : i64, tpu.core_type = #tpu.core_type<tc>, window_params = [{transform_indices = @transform_0, window_bounds = array<i64: 1, 16, 16, 128>}, {pipeline_mode = #tpu.pipeline_mode<synchronous>, transform_indices = @transform_1, window_bounds = array<i64: 9, 128, 128>}, {pipeline_mode = #tpu.pipeline_mode<synchronous>, transform_indices = @transform_2, window_bounds = array<i64: 1, 128>}, {pipeline_mode = #tpu.pipeline_mode<synchronous>, transform_indices = @transform_3, window_bounds = array<i64: 1, 128>}, {pipeline_mode = #tpu.pipeline_mode<synchronous>, transform_indices = @transform_4, window_bounds = array<i64: 9, 128, 128>}, {pipeline_mode = #tpu.pipeline_mode<synchronous>, transform_indices = @transform_5, window_bounds = array<i64: 1, 128>}, {pipeline_mode = #tpu.pipeline_mode<synchronous>, transform_indices = @transform_6, window_bounds = array<i64: 1, 128>}, {transform_indices = @transform_7, window_bounds = array<i64: 1, 8, 16, 128>}]} {
    %c8_i32 = arith.constant 8 : i32
    %0 = arith.muli %arg1, %c8_i32 : i32
    %1 = tpu.assume_multiple %0, 8 : i32
    %cst = arith.constant 0.000000e+00 : bf16
    %2 = vector.broadcast %cst : bf16 to vector<2x18x128xbf16>
    %c0 = arith.constant 0 : index
    %c0_0 = arith.constant 0 : index
    %c0_1 = arith.constant 0 : index
    %3 = vector.load %arg10[%c0, %c0_0, %c0_1] : memref<12x18x128xbf16, #tpu.memory_space<vmem>>, vector<2x18x128xbf16>
    tpu.vector_store %arg10[%c0, %c0_0, %c0_1], %2 {strides = array<i32>} : memref<12x18x128xbf16, #tpu.memory_space<vmem>>, vector<2x18x128xbf16>,
    %cst_2 = arith.constant 0.000000e+00 : bf16
    %4 = vector.broadcast %cst_2 : bf16 to vector<2x18x128xbf16>
    %c10 = arith.constant 10 : index
    %c0_3 = arith.constant 0 : index
    %c0_4 = arith.constant 0 : index
    %5 = vector.load %arg10[%c10, %c0_3, %c0_4] : memref<12x18x128xbf16, #tpu.memory_space<vmem>>, vector<2x18x128xbf16>
    tpu.vector_store %arg10[%c10, %c0_3, %c0_4], %4 {strides = array<i32>} : memref<12x18x128xbf16, #tpu.memory_space<vmem>>, vector<2x18x128xbf16>,
    %cst_5 = arith.constant 0.000000e+00 : bf16
    %6 = vector.broadcast %cst_5 : bf16 to vector<12x1x128xbf16>
    %c0_6 = arith.constant 0 : index
    %c0_7 = arith.constant 0 : index
    %c0_8 = arith.constant 0 : index
    %7 = vector.load %arg10[%c0_6, %c0_7, %c0_8] : memref<12x18x128xbf16, #tpu.memory_space<vmem>>, vector<12x1x128xbf16>
    tpu.vector_store %arg10[%c0_6, %c0_7, %c0_8], %6 {strides = array<i32>} : memref<12x18x128xbf16, #tpu.memory_space<vmem>>, vector<12x1x128xbf16>,
    %cst_9 = arith.constant 0.000000e+00 : bf16
    %8 = vector.broadcast %cst_9 : bf16 to vector<12x1x128xbf16>
    %c0_10 = arith.constant 0 : index
    %c17 = arith.constant 17 : index
    %c0_11 = arith.constant 0 : index
    %9 = vector.load %arg10[%c0_10, %c17, %c0_11] : memref<12x18x128xbf16, #tpu.memory_space<vmem>>, vector<12x1x128xbf16>
    tpu.vector_store %arg10[%c0_10, %c17, %c0_11], %8 {strides = array<i32>} : memref<12x18x128xbf16, #tpu.memory_space<vmem>>, vector<12x1x128xbf16>,
    %c0_12 = arith.constant 0 : index
    %10 = arith.index_cast %1 : i32 to index
    %c0_13 = arith.constant 0 : index
    %c0_14 = arith.constant 0 : index
    %11 = vector.load %arg2[%c0_12, %10, %c0_13, %c0_14] : memref<1x16x16x128xf32, #tpu.memory_space<vmem>>, vector<1x8x16x128xf32>
    %12 = vector.shape_cast %11 : vector<1x8x16x128xf32> to vector<8x16x128xf32>
    %13 = arith.truncf %12 : vector<8x16x128xf32> to vector<8x16x128xbf16>
    %c2 = arith.constant 2 : index
    %c1 = arith.constant 1 : index
    %c0_15 = arith.constant 0 : index
    %14 = vector.load %arg10[%c2, %c1, %c0_15] : memref<12x18x128xbf16, #tpu.memory_space<vmem>>, vector<8x16x128xbf16>
    tpu.vector_store %arg10[%c2, %c1, %c0_15], %13 {strides = array<i32>} : memref<12x18x128xbf16, #tpu.memory_space<vmem>>, vector<8x16x128xbf16>,
    %c0_i32 = arith.constant 0 : i32
    %15 = arith.cmpi sgt, %arg1, %c0_i32 : i32
    %16 = arith.extui %15 : i1 to i32
    %c0_i32_16 = arith.constant 0 : i32
    %17 = arith.cmpi ne, %16, %c0_i32_16 : i32
    scf.if %17 {
      %c2_i32 = arith.constant 2 : i32
      %201 = arith.subi %1, %c2_i32 : i32
      %c0_242 = arith.constant 0 : index
      %202 = arith.index_cast %201 : i32 to index
      %c0_243 = arith.constant 0 : index
      %c0_244 = arith.constant 0 : index
      %203 = vector.load %arg2[%c0_242, %202, %c0_243, %c0_244] : memref<1x16x16x128xf32, #tpu.memory_space<vmem>>, vector<1x2x16x128xf32>
      %204 = vector.shape_cast %203 : vector<1x2x16x128xf32> to vector<2x16x128xf32>
      %205 = arith.truncf %204 : vector<2x16x128xf32> to vector<2x16x128xbf16>
      %c0_245 = arith.constant 0 : index
      %c1_246 = arith.constant 1 : index
      %c0_247 = arith.constant 0 : index
      %206 = vector.load %arg10[%c0_245, %c1_246, %c0_247] : memref<12x18x128xbf16, #tpu.memory_space<vmem>>, vector<2x16x128xbf16>
      tpu.vector_store %arg10[%c0_245, %c1_246, %c0_247], %205 {strides = array<i32>} : memref<12x18x128xbf16, #tpu.memory_space<vmem>>, vector<2x16x128xbf16>,
    } else {
    }
    %c1_i32 = arith.constant 1 : i32
    %18 = arith.cmpi slt, %arg1, %c1_i32 : i32
    %19 = arith.extui %18 : i1 to i32
    %c0_i32_17 = arith.constant 0 : i32
    %20 = arith.cmpi ne, %19, %c0_i32_17 : i32
    scf.if %20 {
      %c8_i32_242 = arith.constant 8 : i32
      %201 = arith.addi %1, %c8_i32_242 : i32
      %c0_243 = arith.constant 0 : index
      %202 = arith.index_cast %201 : i32 to index
      %c0_244 = arith.constant 0 : index
      %c0_245 = arith.constant 0 : index
      %203 = vector.load %arg2[%c0_243, %202, %c0_244, %c0_245] : memref<1x16x16x128xf32, #tpu.memory_space<vmem>>, vector<1x2x16x128xf32>
      %204 = vector.shape_cast %203 : vector<1x2x16x128xf32> to vector<2x16x128xf32>
      %205 = arith.truncf %204 : vector<2x16x128xf32> to vector<2x16x128xbf16>
      %c10_246 = arith.constant 10 : index
      %c1_247 = arith.constant 1 : index
      %c0_248 = arith.constant 0 : index
      %206 = vector.load %arg10[%c10_246, %c1_247, %c0_248] : memref<12x18x128xbf16, #tpu.memory_space<vmem>>, vector<2x16x128xbf16>
      tpu.vector_store %arg10[%c10_246, %c1_247, %c0_248], %205 {strides = array<i32>} : memref<12x18x128xbf16, #tpu.memory_space<vmem>>, vector<2x16x128xbf16>,
    } else {
    }
    %c0_18 = arith.constant 0 : index
    %c0_19 = arith.constant 0 : index
    %c0_20 = arith.constant 0 : index
    %21 = vector.load %arg10[%c0_18, %c0_19, %c0_20] : memref<12x18x128xbf16, #tpu.memory_space<vmem>>, vector<10x16x128xbf16>
    %22 = vector.shape_cast %21 : vector<10x16x128xbf16> to vector<160x128xbf16>
    %c0_21 = arith.constant 0 : index
    %c0_22 = arith.constant 0 : index
    %c0_23 = arith.constant 0 : index
    %23 = vector.load %arg3[%c0_21, %c0_22, %c0_23] : memref<9x128x128xbf16, #tpu.memory_space<vmem>>, vector<1x128x128xbf16>
    %24 = vector.shape_cast %23 : vector<1x128x128xbf16> to vector<128x128xbf16>
    %cst_24 = arith.constant dense<0.000000e+00> : vector<160x128xf32>
    %25 = tpu.matmul %22, %24, %cst_24 {dimension_numbers = #tpu.dot_dimension_numbers<[1], [0], [0], [1], [0, 0, 1, 1], [], []>} : vector<160x128xbf16>, vector<128x128xbf16>, vector<160x128xf32> -> vector<160x128xf32>
    %c0_25 = arith.constant 0 : index
    %c0_26 = arith.constant 0 : index
    %26 = vector.load %arg12[%c0_25, %c0_26] : memref<160x128xf32, #tpu.memory_space<vmem>>, vector<160x128xf32>
    tpu.vector_store %arg12[%c0_25, %c0_26], %25 {strides = array<i32>} : memref<160x128xf32, #tpu.memory_space<vmem>>, vector<160x128xf32>,
    %c0_27 = arith.constant 0 : index
    %c1_28 = arith.constant 1 : index
    %c0_29 = arith.constant 0 : index
    %27 = vector.load %arg10[%c0_27, %c1_28, %c0_29] : memref<12x18x128xbf16, #tpu.memory_space<vmem>>, vector<10x16x128xbf16>
    %28 = vector.shape_cast %27 : vector<10x16x128xbf16> to vector<160x128xbf16>
    %c1_30 = arith.constant 1 : index
    %c0_31 = arith.constant 0 : index
    %c0_32 = arith.constant 0 : index
    %29 = vector.load %arg3[%c1_30, %c0_31, %c0_32] : memref<9x128x128xbf16, #tpu.memory_space<vmem>>, vector<1x128x128xbf16>
    %30 = vector.shape_cast %29 : vector<1x128x128xbf16> to vector<128x128xbf16>
    %cst_33 = arith.constant dense<0.000000e+00> : vector<160x128xf32>
    %31 = tpu.matmul %28, %30, %cst_33 {dimension_numbers = #tpu.dot_dimension_numbers<[1], [0], [0], [1], [0, 0, 1, 1], [], []>} : vector<160x128xbf16>, vector<128x128xbf16>, vector<160x128xf32> -> vector<160x128xf32>
    %c0_34 = arith.constant 0 : index
    %c0_35 = arith.constant 0 : index
    %32 = vector.load %arg12[%c0_34, %c0_35] : memref<160x128xf32, #tpu.memory_space<vmem>>, vector<160x128xf32>
    %33 = arith.addf %32, %31 : vector<160x128xf32>
    %c0_36 = arith.constant 0 : index
    %c0_37 = arith.constant 0 : index
    %34 = vector.load %arg12[%c0_36, %c0_37] : memref<160x128xf32, #tpu.memory_space<vmem>>, vector<160x128xf32>
    tpu.vector_store %arg12[%c0_36, %c0_37], %33 {strides = array<i32>} : memref<160x128xf32, #tpu.memory_space<vmem>>, vector<160x128xf32>,
    %c0_38 = arith.constant 0 : index
    %c2_39 = arith.constant 2 : index
    %c0_40 = arith.constant 0 : index
    %35 = vector.load %arg10[%c0_38, %c2_39, %c0_40] : memref<12x18x128xbf16, #tpu.memory_space<vmem>>, vector<10x16x128xbf16>
    %36 = vector.shape_cast %35 : vector<10x16x128xbf16> to vector<160x128xbf16>
    %c2_41 = arith.constant 2 : index
    %c0_42 = arith.constant 0 : index
    %c0_43 = arith.constant 0 : index
    %37 = vector.load %arg3[%c2_41, %c0_42, %c0_43] : memref<9x128x128xbf16, #tpu.memory_space<vmem>>, vector<1x128x128xbf16>
    %38 = vector.shape_cast %37 : vector<1x128x128xbf16> to vector<128x128xbf16>
    %cst_44 = arith.constant dense<0.000000e+00> : vector<160x128xf32>
    %39 = tpu.matmul %36, %38, %cst_44 {dimension_numbers = #tpu.dot_dimension_numbers<[1], [0], [0], [1], [0, 0, 1, 1], [], []>} : vector<160x128xbf16>, vector<128x128xbf16>, vector<160x128xf32> -> vector<160x128xf32>
    %c0_45 = arith.constant 0 : index
    %c0_46 = arith.constant 0 : index
    %40 = vector.load %arg12[%c0_45, %c0_46] : memref<160x128xf32, #tpu.memory_space<vmem>>, vector<160x128xf32>
    %41 = arith.addf %40, %39 : vector<160x128xf32>
    %c0_47 = arith.constant 0 : index
    %c0_48 = arith.constant 0 : index
    %42 = vector.load %arg12[%c0_47, %c0_48] : memref<160x128xf32, #tpu.memory_space<vmem>>, vector<160x128xf32>
    tpu.vector_store %arg12[%c0_47, %c0_48], %41 {strides = array<i32>} : memref<160x128xf32, #tpu.memory_space<vmem>>, vector<160x128xf32>,
    %c1_49 = arith.constant 1 : index
    %c0_50 = arith.constant 0 : index
    %c0_51 = arith.constant 0 : index
    %43 = vector.load %arg10[%c1_49, %c0_50, %c0_51] : memref<12x18x128xbf16, #tpu.memory_space<vmem>>, vector<10x16x128xbf16>
    %44 = vector.shape_cast %43 : vector<10x16x128xbf16> to vector<160x128xbf16>
    %c3 = arith.constant 3 : index
    %c0_52 = arith.constant 0 : index
    %c0_53 = arith.constant 0 : index
    %45 = vector.load %arg3[%c3, %c0_52, %c0_53] : memref<9x128x128xbf16, #tpu.memory_space<vmem>>, vector<1x128x128xbf16>
    %46 = vector.shape_cast %45 : vector<1x128x128xbf16> to vector<128x128xbf16>
    %cst_54 = arith.constant dense<0.000000e+00> : vector<160x128xf32>
    %47 = tpu.matmul %44, %46, %cst_54 {dimension_numbers = #tpu.dot_dimension_numbers<[1], [0], [0], [1], [0, 0, 1, 1], [], []>} : vector<160x128xbf16>, vector<128x128xbf16>, vector<160x128xf32> -> vector<160x128xf32>
    %c0_55 = arith.constant 0 : index
    %c0_56 = arith.constant 0 : index
    %48 = vector.load %arg12[%c0_55, %c0_56] : memref<160x128xf32, #tpu.memory_space<vmem>>, vector<160x128xf32>
    %49 = arith.addf %48, %47 : vector<160x128xf32>
    %c0_57 = arith.constant 0 : index
    %c0_58 = arith.constant 0 : index
    %50 = vector.load %arg12[%c0_57, %c0_58] : memref<160x128xf32, #tpu.memory_space<vmem>>, vector<160x128xf32>
    tpu.vector_store %arg12[%c0_57, %c0_58], %49 {strides = array<i32>} : memref<160x128xf32, #tpu.memory_space<vmem>>, vector<160x128xf32>,
    %c1_59 = arith.constant 1 : index
    %c1_60 = arith.constant 1 : index
    %c0_61 = arith.constant 0 : index
    %51 = vector.load %arg10[%c1_59, %c1_60, %c0_61] : memref<12x18x128xbf16, #tpu.memory_space<vmem>>, vector<10x16x128xbf16>
    %52 = vector.shape_cast %51 : vector<10x16x128xbf16> to vector<160x128xbf16>
    %c4 = arith.constant 4 : index
    %c0_62 = arith.constant 0 : index
    %c0_63 = arith.constant 0 : index
    %53 = vector.load %arg3[%c4, %c0_62, %c0_63] : memref<9x128x128xbf16, #tpu.memory_space<vmem>>, vector<1x128x128xbf16>
    %54 = vector.shape_cast %53 : vector<1x128x128xbf16> to vector<128x128xbf16>
    %cst_64 = arith.constant dense<0.000000e+00> : vector<160x128xf32>
    %55 = tpu.matmul %52, %54, %cst_64 {dimension_numbers = #tpu.dot_dimension_numbers<[1], [0], [0], [1], [0, 0, 1, 1], [], []>} : vector<160x128xbf16>, vector<128x128xbf16>, vector<160x128xf32> -> vector<160x128xf32>
    %c0_65 = arith.constant 0 : index
    %c0_66 = arith.constant 0 : index
    %56 = vector.load %arg12[%c0_65, %c0_66] : memref<160x128xf32, #tpu.memory_space<vmem>>, vector<160x128xf32>
    %57 = arith.addf %56, %55 : vector<160x128xf32>
    %c0_67 = arith.constant 0 : index
    %c0_68 = arith.constant 0 : index
    %58 = vector.load %arg12[%c0_67, %c0_68] : memref<160x128xf32, #tpu.memory_space<vmem>>, vector<160x128xf32>
    tpu.vector_store %arg12[%c0_67, %c0_68], %57 {strides = array<i32>} : memref<160x128xf32, #tpu.memory_space<vmem>>, vector<160x128xf32>,
    %c1_69 = arith.constant 1 : index
    %c2_70 = arith.constant 2 : index
    %c0_71 = arith.constant 0 : index
    %59 = vector.load %arg10[%c1_69, %c2_70, %c0_71] : memref<12x18x128xbf16, #tpu.memory_space<vmem>>, vector<10x16x128xbf16>
    %60 = vector.shape_cast %59 : vector<10x16x128xbf16> to vector<160x128xbf16>
    %c5 = arith.constant 5 : index
    %c0_72 = arith.constant 0 : index
    %c0_73 = arith.constant 0 : index
    %61 = vector.load %arg3[%c5, %c0_72, %c0_73] : memref<9x128x128xbf16, #tpu.memory_space<vmem>>, vector<1x128x128xbf16>
    %62 = vector.shape_cast %61 : vector<1x128x128xbf16> to vector<128x128xbf16>
    %cst_74 = arith.constant dense<0.000000e+00> : vector<160x128xf32>
    %63 = tpu.matmul %60, %62, %cst_74 {dimension_numbers = #tpu.dot_dimension_numbers<[1], [0], [0], [1], [0, 0, 1, 1], [], []>} : vector<160x128xbf16>, vector<128x128xbf16>, vector<160x128xf32> -> vector<160x128xf32>
    %c0_75 = arith.constant 0 : index
    %c0_76 = arith.constant 0 : index
    %64 = vector.load %arg12[%c0_75, %c0_76] : memref<160x128xf32, #tpu.memory_space<vmem>>, vector<160x128xf32>
    %65 = arith.addf %64, %63 : vector<160x128xf32>
    %c0_77 = arith.constant 0 : index
    %c0_78 = arith.constant 0 : index
    %66 = vector.load %arg12[%c0_77, %c0_78] : memref<160x128xf32, #tpu.memory_space<vmem>>, vector<160x128xf32>
    tpu.vector_store %arg12[%c0_77, %c0_78], %65 {strides = array<i32>} : memref<160x128xf32, #tpu.memory_space<vmem>>, vector<160x128xf32>,
    %c2_79 = arith.constant 2 : index
    %c0_80 = arith.constant 0 : index
    %c0_81 = arith.constant 0 : index
    %67 = vector.load %arg10[%c2_79, %c0_80, %c0_81] : memref<12x18x128xbf16, #tpu.memory_space<vmem>>, vector<10x16x128xbf16>
    %68 = vector.shape_cast %67 : vector<10x16x128xbf16> to vector<160x128xbf16>
    %c6 = arith.constant 6 : index
    %c0_82 = arith.constant 0 : index
    %c0_83 = arith.constant 0 : index
    %69 = vector.load %arg3[%c6, %c0_82, %c0_83] : memref<9x128x128xbf16, #tpu.memory_space<vmem>>, vector<1x128x128xbf16>
    %70 = vector.shape_cast %69 : vector<1x128x128xbf16> to vector<128x128xbf16>
    %cst_84 = arith.constant dense<0.000000e+00> : vector<160x128xf32>
    %71 = tpu.matmul %68, %70, %cst_84 {dimension_numbers = #tpu.dot_dimension_numbers<[1], [0], [0], [1], [0, 0, 1, 1], [], []>} : vector<160x128xbf16>, vector<128x128xbf16>, vector<160x128xf32> -> vector<160x128xf32>
    %c0_85 = arith.constant 0 : index
    %c0_86 = arith.constant 0 : index
    %72 = vector.load %arg12[%c0_85, %c0_86] : memref<160x128xf32, #tpu.memory_space<vmem>>, vector<160x128xf32>
    %73 = arith.addf %72, %71 : vector<160x128xf32>
    %c0_87 = arith.constant 0 : index
    %c0_88 = arith.constant 0 : index
    %74 = vector.load %arg12[%c0_87, %c0_88] : memref<160x128xf32, #tpu.memory_space<vmem>>, vector<160x128xf32>
    tpu.vector_store %arg12[%c0_87, %c0_88], %73 {strides = array<i32>} : memref<160x128xf32, #tpu.memory_space<vmem>>, vector<160x128xf32>,
    %c2_89 = arith.constant 2 : index
    %c1_90 = arith.constant 1 : index
    %c0_91 = arith.constant 0 : index
    %75 = vector.load %arg10[%c2_89, %c1_90, %c0_91] : memref<12x18x128xbf16, #tpu.memory_space<vmem>>, vector<10x16x128xbf16>
    %76 = vector.shape_cast %75 : vector<10x16x128xbf16> to vector<160x128xbf16>
    %c7 = arith.constant 7 : index
    %c0_92 = arith.constant 0 : index
    %c0_93 = arith.constant 0 : index
    %77 = vector.load %arg3[%c7, %c0_92, %c0_93] : memref<9x128x128xbf16, #tpu.memory_space<vmem>>, vector<1x128x128xbf16>
    %78 = vector.shape_cast %77 : vector<1x128x128xbf16> to vector<128x128xbf16>
    %cst_94 = arith.constant dense<0.000000e+00> : vector<160x128xf32>
    %79 = tpu.matmul %76, %78, %cst_94 {dimension_numbers = #tpu.dot_dimension_numbers<[1], [0], [0], [1], [0, 0, 1, 1], [], []>} : vector<160x128xbf16>, vector<128x128xbf16>, vector<160x128xf32> -> vector<160x128xf32>
    %c0_95 = arith.constant 0 : index
    %c0_96 = arith.constant 0 : index
    %80 = vector.load %arg12[%c0_95, %c0_96] : memref<160x128xf32, #tpu.memory_space<vmem>>, vector<160x128xf32>
    %81 = arith.addf %80, %79 : vector<160x128xf32>
    %c0_97 = arith.constant 0 : index
    %c0_98 = arith.constant 0 : index
    %82 = vector.load %arg12[%c0_97, %c0_98] : memref<160x128xf32, #tpu.memory_space<vmem>>, vector<160x128xf32>
    tpu.vector_store %arg12[%c0_97, %c0_98], %81 {strides = array<i32>} : memref<160x128xf32, #tpu.memory_space<vmem>>, vector<160x128xf32>,
    %c2_99 = arith.constant 2 : index
    %c2_100 = arith.constant 2 : index
    %c0_101 = arith.constant 0 : index
    %83 = vector.load %arg10[%c2_99, %c2_100, %c0_101] : memref<12x18x128xbf16, #tpu.memory_space<vmem>>, vector<10x16x128xbf16>
    %84 = vector.shape_cast %83 : vector<10x16x128xbf16> to vector<160x128xbf16>
    %c8 = arith.constant 8 : index
    %c0_102 = arith.constant 0 : index
    %c0_103 = arith.constant 0 : index
    %85 = vector.load %arg3[%c8, %c0_102, %c0_103] : memref<9x128x128xbf16, #tpu.memory_space<vmem>>, vector<1x128x128xbf16>
    %86 = vector.shape_cast %85 : vector<1x128x128xbf16> to vector<128x128xbf16>
    %cst_104 = arith.constant dense<0.000000e+00> : vector<160x128xf32>
    %87 = tpu.matmul %84, %86, %cst_104 {dimension_numbers = #tpu.dot_dimension_numbers<[1], [0], [0], [1], [0, 0, 1, 1], [], []>} : vector<160x128xbf16>, vector<128x128xbf16>, vector<160x128xf32> -> vector<160x128xf32>
    %c0_105 = arith.constant 0 : index
    %c0_106 = arith.constant 0 : index
    %88 = vector.load %arg12[%c0_105, %c0_106] : memref<160x128xf32, #tpu.memory_space<vmem>>, vector<160x128xf32>
    %89 = arith.addf %88, %87 : vector<160x128xf32>
    %c0_107 = arith.constant 0 : index
    %c0_108 = arith.constant 0 : index
    %90 = vector.load %arg12[%c0_107, %c0_108] : memref<160x128xf32, #tpu.memory_space<vmem>>, vector<160x128xf32>
    tpu.vector_store %arg12[%c0_107, %c0_108], %89 {strides = array<i32>} : memref<160x128xf32, #tpu.memory_space<vmem>>, vector<160x128xf32>,
    %c0_109 = arith.constant 0 : index
    %c0_110 = arith.constant 0 : index
    %91 = vector.load %arg12[%c0_109, %c0_110] : memref<160x128xf32, #tpu.memory_space<vmem>>, vector<160x128xf32>
    %c0_111 = arith.constant 0 : index
    %c0_112 = arith.constant 0 : index
    %92 = vector.load %arg4[%c0_111, %c0_112] : memref<1x128xf32, #tpu.memory_space<vmem>>, vector<1x128xf32>
    %93 = vector.broadcast %92 : vector<1x128xf32> to vector<160x128xf32>
    %94 = arith.mulf %91, %93 : vector<160x128xf32>
    %c0_113 = arith.constant 0 : index
    %c0_114 = arith.constant 0 : index
    %95 = vector.load %arg5[%c0_113, %c0_114] : memref<1x128xf32, #tpu.memory_space<vmem>>, vector<1x128xf32>
    %96 = vector.broadcast %95 : vector<1x128xf32> to vector<160x128xf32>
    %97 = arith.addf %94, %96 : vector<160x128xf32>
    %cst_115 = arith.constant 0.000000e+00 : f32
    %98 = vector.broadcast %cst_115 : f32 to vector<160x128xf32>
    %99 = arith.maximumf %97, %98 : vector<160x128xf32>
    %100 = arith.truncf %99 : vector<160x128xf32> to vector<160x128xbf16>
    %cst_116 = arith.constant 0.000000e+00 : bf16
    %101 = vector.broadcast %cst_116 : bf16 to vector<10x1x128xbf16>
    %c0_117 = arith.constant 0 : index
    %c0_118 = arith.constant 0 : index
    %c0_119 = arith.constant 0 : index
    %102 = vector.load %arg11[%c0_117, %c0_118, %c0_119] : memref<10x18x128xbf16, #tpu.memory_space<vmem>>, vector<10x1x128xbf16>
    tpu.vector_store %arg11[%c0_117, %c0_118, %c0_119], %101 {strides = array<i32>} : memref<10x18x128xbf16, #tpu.memory_space<vmem>>, vector<10x1x128xbf16>,
    %cst_120 = arith.constant 0.000000e+00 : bf16
    %103 = vector.broadcast %cst_120 : bf16 to vector<10x1x128xbf16>
    %c0_121 = arith.constant 0 : index
    %c17_122 = arith.constant 17 : index
    %c0_123 = arith.constant 0 : index
    %104 = vector.load %arg11[%c0_121, %c17_122, %c0_123] : memref<10x18x128xbf16, #tpu.memory_space<vmem>>, vector<10x1x128xbf16>
    tpu.vector_store %arg11[%c0_121, %c17_122, %c0_123], %103 {strides = array<i32>} : memref<10x18x128xbf16, #tpu.memory_space<vmem>>, vector<10x1x128xbf16>,
    %105 = vector.shape_cast %100 : vector<160x128xbf16> to vector<10x16x128xbf16>
    %c0_124 = arith.constant 0 : index
    %c1_125 = arith.constant 1 : index
    %c0_126 = arith.constant 0 : index
    %106 = vector.load %arg11[%c0_124, %c1_125, %c0_126] : memref<10x18x128xbf16, #tpu.memory_space<vmem>>, vector<10x16x128xbf16>
    tpu.vector_store %arg11[%c0_124, %c1_125, %c0_126], %105 {strides = array<i32>} : memref<10x18x128xbf16, #tpu.memory_space<vmem>>, vector<10x16x128xbf16>,
    %c0_i32_127 = arith.constant 0 : i32
    %107 = arith.cmpi eq, %arg1, %c0_i32_127 : i32
    %108 = arith.extui %107 : i1 to i32
    %c0_i32_128 = arith.constant 0 : i32
    %109 = arith.cmpi ne, %108, %c0_i32_128 : i32
    scf.if %109 {
      %cst_242 = arith.constant 0.000000e+00 : bf16
      %201 = vector.broadcast %cst_242 : bf16 to vector<1x18x128xbf16>
      %c0_243 = arith.constant 0 : index
      %c0_244 = arith.constant 0 : index
      %c0_245 = arith.constant 0 : index
      %202 = vector.load %arg11[%c0_243, %c0_244, %c0_245] : memref<10x18x128xbf16, #tpu.memory_space<vmem>>, vector<1x18x128xbf16>
      tpu.vector_store %arg11[%c0_243, %c0_244, %c0_245], %201 {strides = array<i32>} : memref<10x18x128xbf16, #tpu.memory_space<vmem>>, vector<1x18x128xbf16>,
    } else {
    }
    %c1_i32_129 = arith.constant 1 : i32
    %110 = arith.cmpi eq, %arg1, %c1_i32_129 : i32
    %111 = arith.extui %110 : i1 to i32
    %c0_i32_130 = arith.constant 0 : i32
    %112 = arith.cmpi ne, %111, %c0_i32_130 : i32
    scf.if %112 {
      %cst_242 = arith.constant 0.000000e+00 : bf16
      %201 = vector.broadcast %cst_242 : bf16 to vector<1x18x128xbf16>
      %c9 = arith.constant 9 : index
      %c0_243 = arith.constant 0 : index
      %c0_244 = arith.constant 0 : index
      %202 = vector.load %arg11[%c9, %c0_243, %c0_244] : memref<10x18x128xbf16, #tpu.memory_space<vmem>>, vector<1x18x128xbf16>
      tpu.vector_store %arg11[%c9, %c0_243, %c0_244], %201 {strides = array<i32>} : memref<10x18x128xbf16, #tpu.memory_space<vmem>>, vector<1x18x128xbf16>,
    } else {
    }
    %c0_131 = arith.constant 0 : index
    %c0_132 = arith.constant 0 : index
    %c0_133 = arith.constant 0 : index
    %113 = vector.load %arg11[%c0_131, %c0_132, %c0_133] : memref<10x18x128xbf16, #tpu.memory_space<vmem>>, vector<8x16x128xbf16>
    %114 = vector.shape_cast %113 : vector<8x16x128xbf16> to vector<128x128xbf16>
    %c0_134 = arith.constant 0 : index
    %c0_135 = arith.constant 0 : index
    %c0_136 = arith.constant 0 : index
    %115 = vector.load %arg6[%c0_134, %c0_135, %c0_136] : memref<9x128x128xbf16, #tpu.memory_space<vmem>>, vector<1x128x128xbf16>
    %116 = vector.shape_cast %115 : vector<1x128x128xbf16> to vector<128x128xbf16>
    %cst_137 = arith.constant dense<0.000000e+00> : vector<128x128xf32>
    %117 = tpu.matmul %114, %116, %cst_137 {dimension_numbers = #tpu.dot_dimension_numbers<[1], [0], [0], [1], [0, 0, 1, 1], [], []>} : vector<128x128xbf16>, vector<128x128xbf16>, vector<128x128xf32> -> vector<128x128xf32>
    %c0_138 = arith.constant 0 : index
    %c0_139 = arith.constant 0 : index
    %118 = vector.load %arg13[%c0_138, %c0_139] : memref<128x128xf32, #tpu.memory_space<vmem>>, vector<128x128xf32>
    tpu.vector_store %arg13[%c0_138, %c0_139], %117 {strides = array<i32>} : memref<128x128xf32, #tpu.memory_space<vmem>>, vector<128x128xf32>,
    %c0_140 = arith.constant 0 : index
    %c1_141 = arith.constant 1 : index
    %c0_142 = arith.constant 0 : index
    %119 = vector.load %arg11[%c0_140, %c1_141, %c0_142] : memref<10x18x128xbf16, #tpu.memory_space<vmem>>, vector<8x16x128xbf16>
    %120 = vector.shape_cast %119 : vector<8x16x128xbf16> to vector<128x128xbf16>
    %c1_143 = arith.constant 1 : index
    %c0_144 = arith.constant 0 : index
    %c0_145 = arith.constant 0 : index
    %121 = vector.load %arg6[%c1_143, %c0_144, %c0_145] : memref<9x128x128xbf16, #tpu.memory_space<vmem>>, vector<1x128x128xbf16>
    %122 = vector.shape_cast %121 : vector<1x128x128xbf16> to vector<128x128xbf16>
    %cst_146 = arith.constant dense<0.000000e+00> : vector<128x128xf32>
    %123 = tpu.matmul %120, %122, %cst_146 {dimension_numbers = #tpu.dot_dimension_numbers<[1], [0], [0], [1], [0, 0, 1, 1], [], []>} : vector<128x128xbf16>, vector<128x128xbf16>, vector<128x128xf32> -> vector<128x128xf32>
    %c0_147 = arith.constant 0 : index
    %c0_148 = arith.constant 0 : index
    %124 = vector.load %arg13[%c0_147, %c0_148] : memref<128x128xf32, #tpu.memory_space<vmem>>, vector<128x128xf32>
    %125 = arith.addf %124, %123 : vector<128x128xf32>
    %c0_149 = arith.constant 0 : index
    %c0_150 = arith.constant 0 : index
    %126 = vector.load %arg13[%c0_149, %c0_150] : memref<128x128xf32, #tpu.memory_space<vmem>>, vector<128x128xf32>
    tpu.vector_store %arg13[%c0_149, %c0_150], %125 {strides = array<i32>} : memref<128x128xf32, #tpu.memory_space<vmem>>, vector<128x128xf32>,
    %c0_151 = arith.constant 0 : index
    %c2_152 = arith.constant 2 : index
    %c0_153 = arith.constant 0 : index
    %127 = vector.load %arg11[%c0_151, %c2_152, %c0_153] : memref<10x18x128xbf16, #tpu.memory_space<vmem>>, vector<8x16x128xbf16>
    %128 = vector.shape_cast %127 : vector<8x16x128xbf16> to vector<128x128xbf16>
    %c2_154 = arith.constant 2 : index
    %c0_155 = arith.constant 0 : index
    %c0_156 = arith.constant 0 : index
    %129 = vector.load %arg6[%c2_154, %c0_155, %c0_156] : memref<9x128x128xbf16, #tpu.memory_space<vmem>>, vector<1x128x128xbf16>
    %130 = vector.shape_cast %129 : vector<1x128x128xbf16> to vector<128x128xbf16>
    %cst_157 = arith.constant dense<0.000000e+00> : vector<128x128xf32>
    %131 = tpu.matmul %128, %130, %cst_157 {dimension_numbers = #tpu.dot_dimension_numbers<[1], [0], [0], [1], [0, 0, 1, 1], [], []>} : vector<128x128xbf16>, vector<128x128xbf16>, vector<128x128xf32> -> vector<128x128xf32>
    %c0_158 = arith.constant 0 : index
    %c0_159 = arith.constant 0 : index
    %132 = vector.load %arg13[%c0_158, %c0_159] : memref<128x128xf32, #tpu.memory_space<vmem>>, vector<128x128xf32>
    %133 = arith.addf %132, %131 : vector<128x128xf32>
    %c0_160 = arith.constant 0 : index
    %c0_161 = arith.constant 0 : index
    %134 = vector.load %arg13[%c0_160, %c0_161] : memref<128x128xf32, #tpu.memory_space<vmem>>, vector<128x128xf32>
    tpu.vector_store %arg13[%c0_160, %c0_161], %133 {strides = array<i32>} : memref<128x128xf32, #tpu.memory_space<vmem>>, vector<128x128xf32>,
    %c1_162 = arith.constant 1 : index
    %c0_163 = arith.constant 0 : index
    %c0_164 = arith.constant 0 : index
    %135 = vector.load %arg11[%c1_162, %c0_163, %c0_164] : memref<10x18x128xbf16, #tpu.memory_space<vmem>>, vector<8x16x128xbf16>
    %136 = vector.shape_cast %135 : vector<8x16x128xbf16> to vector<128x128xbf16>
    %c3_165 = arith.constant 3 : index
    %c0_166 = arith.constant 0 : index
    %c0_167 = arith.constant 0 : index
    %137 = vector.load %arg6[%c3_165, %c0_166, %c0_167] : memref<9x128x128xbf16, #tpu.memory_space<vmem>>, vector<1x128x128xbf16>
    %138 = vector.shape_cast %137 : vector<1x128x128xbf16> to vector<128x128xbf16>
    %cst_168 = arith.constant dense<0.000000e+00> : vector<128x128xf32>
    %139 = tpu.matmul %136, %138, %cst_168 {dimension_numbers = #tpu.dot_dimension_numbers<[1], [0], [0], [1], [0, 0, 1, 1], [], []>} : vector<128x128xbf16>, vector<128x128xbf16>, vector<128x128xf32> -> vector<128x128xf32>
    %c0_169 = arith.constant 0 : index
    %c0_170 = arith.constant 0 : index
    %140 = vector.load %arg13[%c0_169, %c0_170] : memref<128x128xf32, #tpu.memory_space<vmem>>, vector<128x128xf32>
    %141 = arith.addf %140, %139 : vector<128x128xf32>
    %c0_171 = arith.constant 0 : index
    %c0_172 = arith.constant 0 : index
    %142 = vector.load %arg13[%c0_171, %c0_172] : memref<128x128xf32, #tpu.memory_space<vmem>>, vector<128x128xf32>
    tpu.vector_store %arg13[%c0_171, %c0_172], %141 {strides = array<i32>} : memref<128x128xf32, #tpu.memory_space<vmem>>, vector<128x128xf32>,
    %c1_173 = arith.constant 1 : index
    %c1_174 = arith.constant 1 : index
    %c0_175 = arith.constant 0 : index
    %143 = vector.load %arg11[%c1_173, %c1_174, %c0_175] : memref<10x18x128xbf16, #tpu.memory_space<vmem>>, vector<8x16x128xbf16>
    %144 = vector.shape_cast %143 : vector<8x16x128xbf16> to vector<128x128xbf16>
    %c4_176 = arith.constant 4 : index
    %c0_177 = arith.constant 0 : index
    %c0_178 = arith.constant 0 : index
    %145 = vector.load %arg6[%c4_176, %c0_177, %c0_178] : memref<9x128x128xbf16, #tpu.memory_space<vmem>>, vector<1x128x128xbf16>
    %146 = vector.shape_cast %145 : vector<1x128x128xbf16> to vector<128x128xbf16>
    %cst_179 = arith.constant dense<0.000000e+00> : vector<128x128xf32>
    %147 = tpu.matmul %144, %146, %cst_179 {dimension_numbers = #tpu.dot_dimension_numbers<[1], [0], [0], [1], [0, 0, 1, 1], [], []>} : vector<128x128xbf16>, vector<128x128xbf16>, vector<128x128xf32> -> vector<128x128xf32>
    %c0_180 = arith.constant 0 : index
    %c0_181 = arith.constant 0 : index
    %148 = vector.load %arg13[%c0_180, %c0_181] : memref<128x128xf32, #tpu.memory_space<vmem>>, vector<128x128xf32>
    %149 = arith.addf %148, %147 : vector<128x128xf32>
    %c0_182 = arith.constant 0 : index
    %c0_183 = arith.constant 0 : index
    %150 = vector.load %arg13[%c0_182, %c0_183] : memref<128x128xf32, #tpu.memory_space<vmem>>, vector<128x128xf32>
    tpu.vector_store %arg13[%c0_182, %c0_183], %149 {strides = array<i32>} : memref<128x128xf32, #tpu.memory_space<vmem>>, vector<128x128xf32>,
    %c1_184 = arith.constant 1 : index
    %c2_185 = arith.constant 2 : index
    %c0_186 = arith.constant 0 : index
    %151 = vector.load %arg11[%c1_184, %c2_185, %c0_186] : memref<10x18x128xbf16, #tpu.memory_space<vmem>>, vector<8x16x128xbf16>
    %152 = vector.shape_cast %151 : vector<8x16x128xbf16> to vector<128x128xbf16>
    %c5_187 = arith.constant 5 : index
    %c0_188 = arith.constant 0 : index
    %c0_189 = arith.constant 0 : index
    %153 = vector.load %arg6[%c5_187, %c0_188, %c0_189] : memref<9x128x128xbf16, #tpu.memory_space<vmem>>, vector<1x128x128xbf16>
    %154 = vector.shape_cast %153 : vector<1x128x128xbf16> to vector<128x128xbf16>
    %cst_190 = arith.constant dense<0.000000e+00> : vector<128x128xf32>
    %155 = tpu.matmul %152, %154, %cst_190 {dimension_numbers = #tpu.dot_dimension_numbers<[1], [0], [0], [1], [0, 0, 1, 1], [], []>} : vector<128x128xbf16>, vector<128x128xbf16>, vector<128x128xf32> -> vector<128x128xf32>
    %c0_191 = arith.constant 0 : index
    %c0_192 = arith.constant 0 : index
    %156 = vector.load %arg13[%c0_191, %c0_192] : memref<128x128xf32, #tpu.memory_space<vmem>>, vector<128x128xf32>
    %157 = arith.addf %156, %155 : vector<128x128xf32>
    %c0_193 = arith.constant 0 : index
    %c0_194 = arith.constant 0 : index
    %158 = vector.load %arg13[%c0_193, %c0_194] : memref<128x128xf32, #tpu.memory_space<vmem>>, vector<128x128xf32>
    tpu.vector_store %arg13[%c0_193, %c0_194], %157 {strides = array<i32>} : memref<128x128xf32, #tpu.memory_space<vmem>>, vector<128x128xf32>,
    %c2_195 = arith.constant 2 : index
    %c0_196 = arith.constant 0 : index
    %c0_197 = arith.constant 0 : index
    %159 = vector.load %arg11[%c2_195, %c0_196, %c0_197] : memref<10x18x128xbf16, #tpu.memory_space<vmem>>, vector<8x16x128xbf16>
    %160 = vector.shape_cast %159 : vector<8x16x128xbf16> to vector<128x128xbf16>
    %c6_198 = arith.constant 6 : index
    %c0_199 = arith.constant 0 : index
    %c0_200 = arith.constant 0 : index
    %161 = vector.load %arg6[%c6_198, %c0_199, %c0_200] : memref<9x128x128xbf16, #tpu.memory_space<vmem>>, vector<1x128x128xbf16>
    %162 = vector.shape_cast %161 : vector<1x128x128xbf16> to vector<128x128xbf16>
    %cst_201 = arith.constant dense<0.000000e+00> : vector<128x128xf32>
    %163 = tpu.matmul %160, %162, %cst_201 {dimension_numbers = #tpu.dot_dimension_numbers<[1], [0], [0], [1], [0, 0, 1, 1], [], []>} : vector<128x128xbf16>, vector<128x128xbf16>, vector<128x128xf32> -> vector<128x128xf32>
    %c0_202 = arith.constant 0 : index
    %c0_203 = arith.constant 0 : index
    %164 = vector.load %arg13[%c0_202, %c0_203] : memref<128x128xf32, #tpu.memory_space<vmem>>, vector<128x128xf32>
    %165 = arith.addf %164, %163 : vector<128x128xf32>
    %c0_204 = arith.constant 0 : index
    %c0_205 = arith.constant 0 : index
    %166 = vector.load %arg13[%c0_204, %c0_205] : memref<128x128xf32, #tpu.memory_space<vmem>>, vector<128x128xf32>
    tpu.vector_store %arg13[%c0_204, %c0_205], %165 {strides = array<i32>} : memref<128x128xf32, #tpu.memory_space<vmem>>, vector<128x128xf32>,
    %c2_206 = arith.constant 2 : index
    %c1_207 = arith.constant 1 : index
    %c0_208 = arith.constant 0 : index
    %167 = vector.load %arg11[%c2_206, %c1_207, %c0_208] : memref<10x18x128xbf16, #tpu.memory_space<vmem>>, vector<8x16x128xbf16>
    %168 = vector.shape_cast %167 : vector<8x16x128xbf16> to vector<128x128xbf16>
    %c7_209 = arith.constant 7 : index
    %c0_210 = arith.constant 0 : index
    %c0_211 = arith.constant 0 : index
    %169 = vector.load %arg6[%c7_209, %c0_210, %c0_211] : memref<9x128x128xbf16, #tpu.memory_space<vmem>>, vector<1x128x128xbf16>
    %170 = vector.shape_cast %169 : vector<1x128x128xbf16> to vector<128x128xbf16>
    %cst_212 = arith.constant dense<0.000000e+00> : vector<128x128xf32>
    %171 = tpu.matmul %168, %170, %cst_212 {dimension_numbers = #tpu.dot_dimension_numbers<[1], [0], [0], [1], [0, 0, 1, 1], [], []>} : vector<128x128xbf16>, vector<128x128xbf16>, vector<128x128xf32> -> vector<128x128xf32>
    %c0_213 = arith.constant 0 : index
    %c0_214 = arith.constant 0 : index
    %172 = vector.load %arg13[%c0_213, %c0_214] : memref<128x128xf32, #tpu.memory_space<vmem>>, vector<128x128xf32>
    %173 = arith.addf %172, %171 : vector<128x128xf32>
    %c0_215 = arith.constant 0 : index
    %c0_216 = arith.constant 0 : index
    %174 = vector.load %arg13[%c0_215, %c0_216] : memref<128x128xf32, #tpu.memory_space<vmem>>, vector<128x128xf32>
    tpu.vector_store %arg13[%c0_215, %c0_216], %173 {strides = array<i32>} : memref<128x128xf32, #tpu.memory_space<vmem>>, vector<128x128xf32>,
    %c2_217 = arith.constant 2 : index
    %c2_218 = arith.constant 2 : index
    %c0_219 = arith.constant 0 : index
    %175 = vector.load %arg11[%c2_217, %c2_218, %c0_219] : memref<10x18x128xbf16, #tpu.memory_space<vmem>>, vector<8x16x128xbf16>
    %176 = vector.shape_cast %175 : vector<8x16x128xbf16> to vector<128x128xbf16>
    %c8_220 = arith.constant 8 : index
    %c0_221 = arith.constant 0 : index
    %c0_222 = arith.constant 0 : index
    %177 = vector.load %arg6[%c8_220, %c0_221, %c0_222] : memref<9x128x128xbf16, #tpu.memory_space<vmem>>, vector<1x128x128xbf16>
    %178 = vector.shape_cast %177 : vector<1x128x128xbf16> to vector<128x128xbf16>
    %cst_223 = arith.constant dense<0.000000e+00> : vector<128x128xf32>
    %179 = tpu.matmul %176, %178, %cst_223 {dimension_numbers = #tpu.dot_dimension_numbers<[1], [0], [0], [1], [0, 0, 1, 1], [], []>} : vector<128x128xbf16>, vector<128x128xbf16>, vector<128x128xf32> -> vector<128x128xf32>
    %c0_224 = arith.constant 0 : index
    %c0_225 = arith.constant 0 : index
    %180 = vector.load %arg13[%c0_224, %c0_225] : memref<128x128xf32, #tpu.memory_space<vmem>>, vector<128x128xf32>
    %181 = arith.addf %180, %179 : vector<128x128xf32>
    %c0_226 = arith.constant 0 : index
    %c0_227 = arith.constant 0 : index
    %182 = vector.load %arg13[%c0_226, %c0_227] : memref<128x128xf32, #tpu.memory_space<vmem>>, vector<128x128xf32>
    tpu.vector_store %arg13[%c0_226, %c0_227], %181 {strides = array<i32>} : memref<128x128xf32, #tpu.memory_space<vmem>>, vector<128x128xf32>,
    %c0_228 = arith.constant 0 : index
    %183 = arith.index_cast %1 : i32 to index
    %c0_229 = arith.constant 0 : index
    %c0_230 = arith.constant 0 : index
    %184 = vector.load %arg2[%c0_228, %183, %c0_229, %c0_230] : memref<1x16x16x128xf32, #tpu.memory_space<vmem>>, vector<1x8x16x128xf32>
    %185 = vector.shape_cast %184 : vector<1x8x16x128xf32> to vector<8x16x128xf32>
    %186 = vector.shape_cast %185 : vector<8x16x128xf32> to vector<128x128xf32>
    %c0_231 = arith.constant 0 : index
    %c0_232 = arith.constant 0 : index
    %187 = vector.load %arg13[%c0_231, %c0_232] : memref<128x128xf32, #tpu.memory_space<vmem>>, vector<128x128xf32>
    %c0_233 = arith.constant 0 : index
    %c0_234 = arith.constant 0 : index
    %188 = vector.load %arg7[%c0_233, %c0_234] : memref<1x128xf32, #tpu.memory_space<vmem>>, vector<1x128xf32>
    %189 = vector.broadcast %188 : vector<1x128xf32> to vector<128x128xf32>
    %190 = arith.mulf %187, %189 : vector<128x128xf32>
    %c0_235 = arith.constant 0 : index
    %c0_236 = arith.constant 0 : index
    %191 = vector.load %arg8[%c0_235, %c0_236] : memref<1x128xf32, #tpu.memory_space<vmem>>, vector<1x128xf32>
    %192 = vector.broadcast %191 : vector<1x128xf32> to vector<128x128xf32>
    %193 = arith.addf %190, %192 : vector<128x128xf32>
    %194 = arith.addf %193, %186 : vector<128x128xf32>
    %cst_237 = arith.constant 0.000000e+00 : f32
    %195 = vector.broadcast %cst_237 : f32 to vector<128x128xf32>
    %196 = arith.maximumf %194, %195 : vector<128x128xf32>
    %197 = vector.shape_cast %196 : vector<128x128xf32> to vector<8x16x128xf32>
    %c0_238 = arith.constant 0 : index
    %c0_239 = arith.constant 0 : index
    %c0_240 = arith.constant 0 : index
    %c0_241 = arith.constant 0 : index
    %198 = vector.load %arg9[%c0_238, %c0_239, %c0_240, %c0_241] : memref<1x8x16x128xf32, #tpu.memory_space<vmem>>, vector<1x8x16x128xf32>
    %199 = vector.shape_cast %198 : vector<1x8x16x128xf32> to vector<8x16x128xf32>
    %200 = vector.shape_cast %197 : vector<8x16x128xf32> to vector<1x8x16x128xf32>
    tpu.vector_store %arg9[%c0_238, %c0_239, %c0_240, %c0_241], %200 {strides = array<i32>} : memref<1x8x16x128xf32, #tpu.memory_space<vmem>>, vector<1x8x16x128xf32>,
    return
  }
  func.func @transform_0(%arg0: i32, %arg1: i32) -> (i32, i32, i32, i32) {
    %c0_i32 = arith.constant 0 : i32
    %c0_i32_0 = arith.constant 0 : i32
    %c0_i32_1 = arith.constant 0 : i32
    %c0_i32_2 = arith.constant 0 : i32
    return %arg0, %c0_i32, %c0_i32_0, %c0_i32_1 : i32, i32, i32, i32
  }
  func.func @transform_1(%arg0: i32, %arg1: i32) -> (i32, i32, i32) {
    %c0_i32 = arith.constant 0 : i32
    %c0_i32_0 = arith.constant 0 : i32
    %c0_i32_1 = arith.constant 0 : i32
    %c0_i32_2 = arith.constant 0 : i32
    return %c0_i32, %c0_i32_0, %c0_i32_1 : i32, i32, i32
  }
  func.func @transform_2(%arg0: i32, %arg1: i32) -> (i32, i32) {
    %c0_i32 = arith.constant 0 : i32
    %c0_i32_0 = arith.constant 0 : i32
    %c0_i32_1 = arith.constant 0 : i32
    return %c0_i32, %c0_i32_0 : i32, i32
  }
  func.func @transform_3(%arg0: i32, %arg1: i32) -> (i32, i32) {
    %c0_i32 = arith.constant 0 : i32
    %c0_i32_0 = arith.constant 0 : i32
    %c0_i32_1 = arith.constant 0 : i32
    return %c0_i32, %c0_i32_0 : i32, i32
  }
  func.func @transform_4(%arg0: i32, %arg1: i32) -> (i32, i32, i32) {
    %c0_i32 = arith.constant 0 : i32
    %c0_i32_0 = arith.constant 0 : i32
    %c0_i32_1 = arith.constant 0 : i32
    %c0_i32_2 = arith.constant 0 : i32
    return %c0_i32, %c0_i32_0, %c0_i32_1 : i32, i32, i32
  }
  func.func @transform_5(%arg0: i32, %arg1: i32) -> (i32, i32) {
    %c0_i32 = arith.constant 0 : i32
    %c0_i32_0 = arith.constant 0 : i32
    %c0_i32_1 = arith.constant 0 : i32
    return %c0_i32, %c0_i32_0 : i32, i32
  }
  func.func @transform_6(%arg0: i32, %arg1: i32) -> (i32, i32) {
    %c0_i32 = arith.constant 0 : i32
    %c0_i32_0 = arith.constant 0 : i32
    %c0_i32_1 = arith.constant 0 : i32
    return %c0_i32, %c0_i32_0 : i32, i32
  }
  func.func @transform_7(%arg0: i32, %arg1: i32) -> (i32, i32, i32, i32) {
    %c0_i32 = arith.constant 0 : i32
    %c0_i32_0 = arith.constant 0 : i32
    %c0_i32_1 = arith.constant 0 : i32
    return %arg0, %arg1, %c0_i32, %c0_i32_0 : i32, i32, i32, i32
  }
}

</mosaic_0001>

<llo_original>
// kernel: tpu_custom_call.1
$region0: #{tpu_custom_call.1}
  #allocation0 [shape = 'u32[]', space=smem, size = 0x4, offset = 0x4, fixed_abs, tag = 'smem constant byte address 0x4 - core index']
  #allocation1 [shape = 'u32[144,128]{1,0:T(1,128)}', space=vmem, size = 0x12000, scoped, tag = 'internal scratch']
  #allocation2 [shape = 'bf16[12,18,128]{2,1,0:T(8,128)(2,1)}', space=vmem, size = 0x12000, scoped, tag = 'scratch operand']
  #allocation3 [shape = 'bf16[10,18,128]{2,1,0:T(8,128)(2,1)}', space=vmem, size = 0xf000, scoped, tag = 'scratch operand']
  #allocation4 [shape = 'f32[160,128]{1,0:T(8,128)}', space=vmem, size = 0x14000, scoped, tag = 'scratch operand']
  #allocation5 [shape = 'f32[128,128]{1,0:T(8,128)}', space=vmem, size = 0x10000, scoped, tag = 'scratch operand']
  %s0 = inlined_call_operand.hbm [shape: f32[2,16,16,128], index: 0, kind: input, shape index: {}]
  %s1 = inlined_call_operand.hbm [shape: bf16[9,128,128], index: 1, kind: input, shape index: {}]
  %s2 = inlined_call_operand.vmem [shape: f32[1,128], index: 2, kind: input, shape index: {}]
  %s3 = inlined_call_operand.vmem [shape: f32[1,128], index: 3, kind: input, shape index: {}]
  %s4 = inlined_call_operand.hbm [shape: bf16[9,128,128], index: 4, kind: input, shape index: {}]
  %s5 = inlined_call_operand.vmem [shape: f32[1,128], index: 5, kind: input, shape index: {}]
  %s6 = inlined_call_operand.vmem [shape: f32[1,128], index: 6, kind: input, shape index: {}]
  %s7 = inlined_call_operand.hbm [shape: f32[2,16,16,128], index: 7, kind: output, shape index: {}]
  %s8 = sld [smem:[#allocation0]]
  $region89: #{tpu_custom_call.1} parent=0
    _
  %s10 = ssub.s32 1, %s8
  %s11 = scalar_select 0, %s10, %s8
  $region1: #{tpu_custom_call.1} parent=0
    #allocation6 [shape = 'u8[262144]{0}', space=vmem, size = 0x40000, scoped, tag = 'input window, operand 0']
    #allocation7 [shape = 's32[2]{0}', space=sflag, size = 0x8, scoped, tag = 'scoped memory for tpu_custom_call.1']
    #allocation8 [shape = 's32[2]{0}', space=sflag, size = 0x8, scoped, tag = 'scoped memory for tpu_custom_call.1']
    #allocation9 [shape = 'u8[294912]{0}', space=vmem, size = 0x48000, scoped, tag = 'input window, operand 1, single buffered']
    #allocation10 [shape = 's32[1]{0}', space=sflag, size = 0x4, scoped, tag = 'scoped memory for tpu_custom_call.1']
    #allocation11 [shape = 'u8[294912]{0}', space=vmem, size = 0x48000, scoped, tag = 'input window, operand 4, single buffered']
    #allocation12 [shape = 'u8[131072]{0}', space=vmem, size = 0x20000, scoped, tag = 'output window, operand 0']
    %12 = vsyncpa [#allocation7], 0
    %s13 = scalar_lea.sflag [#allocation7], 1
    %14 = vsyncpa %s13, 0
    %15 = vsyncpa [#allocation10], 0
    %16 = vsyncpa [#allocation8], 0
    %s17 = scalar_lea.sflag [#allocation8], 1
    %18 = vsyncpa %s17, 0
    loop: start=0, step=1, limit=6
    $region2: #{tpu_custom_call.1} parent=1 // loop_pre_header
      _
    $region3: #{tpu_custom_call.1} parent=1 // loop_header
      %s20 = sphi 0, %s24
      %p21 = scmp.ge.s32.totalorder %s20, 6
      %s27 = sphi 0, %s39
      %s28 = sphi 0, %s35
      %s29 = sphi 0, %s27
      %s30 = sphi 0, %s28
      %s31 = sphi 0, %s29
      %s32 = sphi 0, %s30
      %s42 = sphi 0, %s44
      %s45 = sphi 0, %s42
      %s46 = sphi 0, %s45
      %s62 = sphi 0, %s46
      %s66 = sphi 0, %s66
      %s68 = sphi 0, %s66
      %s69 = sphi 0, %s68
      %s83 = sphi 0, %s69
      %s87 = sphi 0, %s87
      %s89 = sphi 0, %s87
      %s90 = sphi 0, %s89
      %s104 = sphi 0, %s90
      %s108 = sphi 0, %s108
      %s110 = sphi 0, %s108
      %s111 = sphi 0, %s110
      %s125 = sphi 0, %s111
      %s129 = sphi 0, %s129
      %s131 = sphi 0, %s129
      %s132 = sphi 0, %s131
      %s146 = sphi 0, %s132
      %s150 = sphi 0, %s150
      %s152 = sphi 0, %s150
      %s153 = sphi 0, %s152
      %s167 = sphi 0, %s153
      %s171 = sphi 0, %s171
      %s173 = sphi 0, %s171
      %s174 = sphi 0, %s173
      %s188 = sphi 0, %s174
      %s196 = sphi 0, %s198
      %s199 = sphi 0, %s196
      %s200 = sphi 0, %s199
      %s216 = sphi 0, %s200
    $region4: #{tpu_custom_call.1} parent=1 // loop_header_branch
      %23 = sbr.rel (%p21) target = $region8
    $region5: #{tpu_custom_call.1} parent=1 // loop_body
      %s25 = ssub.s32 %s20, 1
      %s26 = ssub.s32 %s20, 2
      %s33 = sadd.s32 1, %s28
      %p34 = scmp.ge.s32.totalorder %s33, 2
      %s35 = scalar_select %p34, 0, %s33
      %s36 = sadd.s32 1, %s27
      %s37 = scalar_select %p34, %s36, %s27
      %p38 = scmp.ge.s32.totalorder %s37, 2
      %s39 = scalar_select %p38, 0, %s37
      %s40 = ssub.s32 %s27, %s39
      %p41 = scmp.eq.s32.totalorder %s40, 0
      %s43 = sadd.s32 %s42, 1
      %s44 = scalar_select %p41, %s42, %s43
      %p47 = pneg %p41
      %p48 = scmp.eq.s32.totalorder %s20, 3
      %p49 = por %p47, %p48
      %p50 = scmp.ne.s32.totalorder %s42, %s45
      %p51 = scmp.eq.s32.totalorder %s20, 0
      %p52 = por %p50, %p51
      %p53 = scmp.ne.s32.totalorder %s42, %s45
      %p54 = scmp.eq.s32.totalorder %s25, 3
      %p55 = por %p53, %p54
      %p56 = scmp.ne.s32.totalorder %s45, %s46
      %p57 = scmp.eq.s32.totalorder %s25, 0
      %p58 = por %p56, %p57
      %p59 = scmp.ne.s32.totalorder %s45, %s46
      %p60 = scmp.eq.s32.totalorder %s26, 3
      %p61 = por %p59, %p60
      %p63 = scmp.ne.s32.totalorder %s46, %s62
      %p64 = scmp.eq.s32.totalorder %s26, 0
      %p65 = por %p63, %p64
      %s67 = sadd.s32 %s66, 1
      %p70 = scmp.eq.s32.totalorder %s20, 3
      %p71 = scmp.ne.s32.totalorder %s66, %s68
      %p72 = scmp.eq.s32.totalorder %s20, 0
      %p73 = por %p71, %p72
      %p74 = scmp.ne.s32.totalorder %s66, %s68
      %p75 = scmp.eq.s32.totalorder %s25, 3
      %p76 = por %p74, %p75
      %p77 = scmp.ne.s32.totalorder %s68, %s69
      %p78 = scmp.eq.s32.totalorder %s25, 0
      %p79 = por %p77, %p78
      %p80 = scmp.ne.s32.totalorder %s68, %s69
      %p81 = scmp.eq.s32.totalorder %s26, 3
      %p82 = por %p80, %p81
      %p84 = scmp.ne.s32.totalorder %s69, %s83
      %p85 = scmp.eq.s32.totalorder %s26, 0
      %p86 = por %p84, %p85
      %s88 = sadd.s32 %s87, 1
      %p91 = scmp.eq.s32.totalorder %s20, 3
      %p92 = scmp.ne.s32.totalorder %s87, %s89
      %p93 = scmp.eq.s32.totalorder %s20, 0
      %p94 = por %p92, %p93
      %p95 = scmp.ne.s32.totalorder %s87, %s89
      %p96 = scmp.eq.s32.totalorder %s25, 3
      %p97 = por %p95, %p96
      %p98 = scmp.ne.s32.totalorder %s89, %s90
      %p99 = scmp.eq.s32.totalorder %s25, 0
      %p100 = por %p98, %p99
      %p101 = scmp.ne.s32.totalorder %s89, %s90
      %p102 = scmp.eq.s32.totalorder %s26, 3
      %p103 = por %p101, %p102
      %p105 = scmp.ne.s32.totalorder %s90, %s104
      %p106 = scmp.eq.s32.totalorder %s26, 0
      %p107 = por %p105, %p106
      %s109 = sadd.s32 %s108, 1
      %p112 = scmp.eq.s32.totalorder %s20, 3
      %p113 = scmp.ne.s32.totalorder %s108, %s110
      %p114 = scmp.eq.s32.totalorder %s20, 0
      %p115 = por %p113, %p114
      %p116 = scmp.ne.s32.totalorder %s108, %s110
      %p117 = scmp.eq.s32.totalorder %s25, 3
      %p118 = por %p116, %p117
      %p119 = scmp.ne.s32.totalorder %s110, %s111
      %p120 = scmp.eq.s32.totalorder %s25, 0
      %p121 = por %p119, %p120
      %p122 = scmp.ne.s32.totalorder %s110, %s111
      %p123 = scmp.eq.s32.totalorder %s26, 3
      %p124 = por %p122, %p123
      %p126 = scmp.ne.s32.totalorder %s111, %s125
      %p127 = scmp.eq.s32.totalorder %s26, 0
      %p128 = por %p126, %p127
      %s130 = sadd.s32 %s129, 1
      %p133 = scmp.eq.s32.totalorder %s20, 3
      %p134 = scmp.ne.s32.totalorder %s129, %s131
      %p135 = scmp.eq.s32.totalorder %s20, 0
      %p136 = por %p134, %p135
      %p137 = scmp.ne.s32.totalorder %s129, %s131
      %p138 = scmp.eq.s32.totalorder %s25, 3
      %p139 = por %p137, %p138
      %p140 = scmp.ne.s32.totalorder %s131, %s132
      %p141 = scmp.eq.s32.totalorder %s25, 0
      %p142 = por %p140, %p141
      %p143 = scmp.ne.s32.totalorder %s131, %s132
      %p144 = scmp.eq.s32.totalorder %s26, 3
      %p145 = por %p143, %p144
      %p147 = scmp.ne.s32.totalorder %s132, %s146
      %p148 = scmp.eq.s32.totalorder %s26, 0
      %p149 = por %p147, %p148
      %s151 = sadd.s32 %s150, 1
      %p154 = scmp.eq.s32.totalorder %s20, 3
      %p155 = scmp.ne.s32.totalorder %s150, %s152
      %p156 = scmp.eq.s32.totalorder %s20, 0
      %p157 = por %p155, %p156
      %p158 = scmp.ne.s32.totalorder %s150, %s152
      %p159 = scmp.eq.s32.totalorder %s25, 3
      %p160 = por %p158, %p159
      %p161 = scmp.ne.s32.totalorder %s152, %s153
      %p162 = scmp.eq.s32.totalorder %s25, 0
      %p163 = por %p161, %p162
      %p164 = scmp.ne.s32.totalorder %s152, %s153
      %p165 = scmp.eq.s32.totalorder %s26, 3
      %p166 = por %p164, %p165
      %p168 = scmp.ne.s32.totalorder %s153, %s167
      %p169 = scmp.eq.s32.totalorder %s26, 0
      %p170 = por %p168, %p169
      %s172 = sadd.s32 %s171, 1
      %p175 = scmp.eq.s32.totalorder %s20, 3
      %p176 = scmp.ne.s32.totalorder %s171, %s173
      %p177 = scmp.eq.s32.totalorder %s20, 0
      %p178 = por %p176, %p177
      %p179 = scmp.ne.s32.totalorder %s171, %s173
      %p180 = scmp.eq.s32.totalorder %s25, 3
      %p181 = por %p179, %p180
      %p182 = scmp.ne.s32.totalorder %s173, %s174
      %p183 = scmp.eq.s32.totalorder %s25, 0
      %p184 = por %p182, %p183
      %p185 = scmp.ne.s32.totalorder %s173, %s174
      %p186 = scmp.eq.s32.totalorder %s26, 3
      %p187 = por %p185, %p186
      %p189 = scmp.ne.s32.totalorder %s174, %s188
      %p190 = scmp.eq.s32.totalorder %s26, 0
      %p191 = por %p189, %p190
      %s192 = ssub.s32 %s27, %s39
      %s193 = ssub.s32 %s28, %s35
      %s194 = sor.u32 %s192, %s193
      %p195 = scmp.eq.s32.totalorder %s194, 0
      %s197 = sadd.s32 %s196, 1
      %s198 = scalar_select %p195, %s196, %s197
      %p201 = pneg %p195
      %p202 = scmp.eq.s32.totalorder %s20, 3
      %p203 = por %p201, %p202
      %p204 = scmp.ne.s32.totalorder %s196, %s199
      %p205 = scmp.eq.s32.totalorder %s20, 0
      %p206 = por %p204, %p205
      %p207 = scmp.ne.s32.totalorder %s196, %s199
      %p208 = scmp.eq.s32.totalorder %s25, 3
      %p209 = por %p207, %p208
      %p210 = scmp.ne.s32.totalorder %s199, %s200
      %p211 = scmp.eq.s32.totalorder %s25, 0
      %p212 = por %p210, %p211
      %p213 = scmp.ne.s32.totalorder %s199, %s200
      %p214 = scmp.eq.s32.totalorder %s26, 3
      %p215 = por %p213, %p214
      %p217 = scmp.ne.s32.totalorder %s200, %s216
      %p218 = scmp.eq.s32.totalorder %s26, 0
      %p219 = por %p217, %p218
      %p220 = scmp.le.s32.totalorder 1, %s20
      %p221 = scmp.lt.s32.totalorder %s20, 5
      %p222 = pnand %p220, %p221
      %p223 = pneg %p222
      // Predicated region
      $region9: #{tpu_custom_call.1} parent=5 // pred_check
        _
      $region10: #{tpu_custom_call.1} parent=5 // pred_check_branch
        %225 = sbr.rel (%p222) target = $region12
      $region11: #{tpu_custom_call.1} parent=5 // pred_region
        %s226 = ssub.s32 %s20, 1
        // Predicated region
        $region13: #{tpu_custom_call.1} parent=11 // pred_check
          %p227 = pneg %p79
        $region14: #{tpu_custom_call.1} parent=11 // pred_check_branch
          %229 = sbr.rel (%p227) target = $region16
        $region15: #{tpu_custom_call.1} parent=11 // pred_region
          %s231 = ssub.s32 9216, 9216
          %232 = vsyncadd [#allocation10], %s231
          %s233 = sshll.u32 [#allocation9], 4
          %s234 = int_to_ptr.vmem [resolvable:$true] %s233
          %239 = dma.hbm_to_vmem [thread:$0]  %s1, 9216, %s234, [#allocation10], 64, 64, 4
        $region16: #{tpu_custom_call.1} parent=11 // pred_fallthru
          _
        // Predicated region
        $region17: #{tpu_custom_call.1} parent=11 // pred_check
          %p240 = pneg %p100
        $region18: #{tpu_custom_call.1} parent=11 // pred_check_branch
          %242 = sbr.rel (%p240) target = $region20
        $region19: #{tpu_custom_call.1} parent=11 // pred_region
          _
        $region20: #{tpu_custom_call.1} parent=11 // pred_fallthru
          _
        // Predicated region
        $region21: #{tpu_custom_call.1} parent=11 // pred_check
          %p243 = pneg %p121
        $region22: #{tpu_custom_call.1} parent=11 // pred_check_branch
          %245 = sbr.rel (%p243) target = $region24
        $region23: #{tpu_custom_call.1} parent=11 // pred_region
          _
        $region24: #{tpu_custom_call.1} parent=11 // pred_fallthru
          _
        // Predicated region
        $region25: #{tpu_custom_call.1} parent=11 // pred_check
          %p246 = pneg %p142
        $region26: #{tpu_custom_call.1} parent=11 // pred_check_branch
          %248 = sbr.rel (%p246) target = $region28
        $region27: #{tpu_custom_call.1} parent=11 // pred_region
          %s250 = ssub.s32 9216, 9216
          %251 = vsyncadd [#allocation10], %s250
          %s252 = sshll.u32 [#allocation11], 4
          %s253 = int_to_ptr.vmem [resolvable:$true] %s252
          %258 = dma.hbm_to_vmem [thread:$0]  %s4, 9216, %s253, [#allocation10], 64, 64, 4
        $region28: #{tpu_custom_call.1} parent=11 // pred_fallthru
          _
        // Predicated region
        $region29: #{tpu_custom_call.1} parent=11 // pred_check
          %p259 = pneg %p163
        $region30: #{tpu_custom_call.1} parent=11 // pred_check_branch
          %261 = sbr.rel (%p259) target = $region32
        $region31: #{tpu_custom_call.1} parent=11 // pred_region
          _
        $region32: #{tpu_custom_call.1} parent=11 // pred_fallthru
          _
        // Predicated region
        $region33: #{tpu_custom_call.1} parent=11 // pred_check
          %p262 = pneg %p184
        $region34: #{tpu_custom_call.1} parent=11 // pred_check_branch
          %264 = sbr.rel (%p262) target = $region36
        $region35: #{tpu_custom_call.1} parent=11 // pred_region
          _
        $region36: #{tpu_custom_call.1} parent=11 // pred_fallthru
          _
      $region12: #{tpu_custom_call.1} parent=5 // pred_fallthru
        _
      %p265 = scmp.lt.s32.totalorder %s20, 4
      // Predicated region
      $region37: #{tpu_custom_call.1} parent=5 // pred_check
        %p266 = pneg %p265
      $region38: #{tpu_custom_call.1} parent=5 // pred_check_branch
        %268 = sbr.rel (%p266) target = $region40
      $region39: #{tpu_custom_call.1} parent=5 // pred_region
        // Predicated region
        $region41: #{tpu_custom_call.1} parent=39 // pred_check
          %p269 = pneg %p52
        $region42: #{tpu_custom_call.1} parent=39 // pred_check_branch
          %271 = sbr.rel (%p269) target = $region44
        $region43: #{tpu_custom_call.1} parent=39 // pred_region
          %s272 = sand.u32 %s42, 1
          %s273 = scalar_lea.sflag [#allocation7], %s272
          %s274 = sand.u32 %s42, 1
          %s275 = smul.addr %s274, 256
          %s276 = scalar_lea.vmem [#allocation6], %s275
          %s278 = ssub.s32 4096, 4096
          %279 = vsyncadd %s273, %s278
          %s280 = smul.addr %s27, 32
          %s281 = smul.addr %s280, 128
          %s282 = scalar_lea.hbm %s0, %s281
          %s283 = sshll.u32 %s276, 4
          %s284 = int_to_ptr.vmem [resolvable:$true] %s283
          %289 = dma.hbm_to_vmem [thread:$0]  %s282, 4096, %s284, %s273, 128, 128, 8
        $region44: #{tpu_custom_call.1} parent=39 // pred_fallthru
          _
      $region40: #{tpu_custom_call.1} parent=5 // pred_fallthru
        _
      %p290 = scmp.le.s32.totalorder 1, %s20
      %p291 = scmp.lt.s32.totalorder %s20, 5
      %p292 = pnand %p290, %p291
      %p293 = pneg %p292
      // Predicated region
      $region45: #{tpu_custom_call.1} parent=5 // pred_check
        _
      $region46: #{tpu_custom_call.1} parent=5 // pred_check_branch
        %295 = sbr.rel (%p292) target = $region48
      $region47: #{tpu_custom_call.1} parent=5 // pred_region
        %s296 = ssub.s32 %s20, 1
        %s297 = sand.u32 %s45, 1
        %s298 = scalar_lea.sflag [#allocation7], %s297
        %s299 = sand.u32 %s45, 1
        %s300 = smul.addr %s299, 256
        %s301 = scalar_lea.vmem [#allocation6], %s300
        // Predicated region
        $region49: #{tpu_custom_call.1} parent=47 // pred_check
          %p302 = pneg %p58
        $region50: #{tpu_custom_call.1} parent=47 // pred_check_branch
          %304 = sbr.rel (%p302) target = $region52
        $region51: #{tpu_custom_call.1} parent=47 // pred_region
          %305 = dma.done %s298, 4096
        $region52: #{tpu_custom_call.1} parent=47 // pred_fallthru
          _
        // Predicated region
        $region53: #{tpu_custom_call.1} parent=47 // pred_check
          %p306 = pneg %p79
        $region54: #{tpu_custom_call.1} parent=47 // pred_check_branch
          %308 = sbr.rel (%p306) target = $region56
        $region55: #{tpu_custom_call.1} parent=47 // pred_region
          %309 = dma.done [#allocation10], 9216
        $region56: #{tpu_custom_call.1} parent=47 // pred_fallthru
          _
        // Predicated region
        $region57: #{tpu_custom_call.1} parent=47 // pred_check
          %p310 = pneg %p142
        $region58: #{tpu_custom_call.1} parent=47 // pred_check_branch
          %312 = sbr.rel (%p310) target = $region60
        $region59: #{tpu_custom_call.1} parent=47 // pred_region
          %313 = dma.done [#allocation10], 9216
        $region60: #{tpu_custom_call.1} parent=47 // pred_fallthru
          _
        %s314 = sand.u32 %s45, 1
        %s315 = scalar_lea.sflag [#allocation7], %s314
        %s316 = sand.u32 %s45, 1
        %s317 = smul.addr %s316, 256
        %s318 = scalar_lea.vmem [#allocation6], %s317
        %p319 = pneg %p58
        %p320 = pneg %p55
        %p321 = pneg %p79
        %p322 = pneg %p76
        %p323 = pneg %p100
        %p324 = pneg %p97
        %p325 = pneg %p121
        %p326 = pneg %p118
        %p327 = pneg %p142
        %p328 = pneg %p139
        %p329 = pneg %p163
        %p330 = pneg %p160
        %p331 = pneg %p184
        %p332 = pneg %p181
        %p333 = pneg %p212
        %p334 = pneg %p209
        %s335 = sand.u32 %s199, 1
        %s336 = scalar_lea.sflag [#allocation8], %s335
        %s337 = sand.u32 %s199, 1
        %s338 = smul.addr %s337, 128
        %s339 = scalar_lea.vmem [#allocation12], %s338
        %s340 = smul.u32 8, %s30
        %s342 = smul.u32 %s30, 8
        %343 = vst [vmem:[#allocation2] sm:$0xf] 0
        %344 = vst [vmem:[#allocation2 + $0x4] sm:$0xf] 0
        %345 = vst [vmem:[#allocation2 + $0x8] sm:$0x1] 0
        %346 = vst [vmem:[#allocation2 + $0xc] sm:$0xf] 0
        %347 = vst [vmem:[#allocation2 + $0x10] sm:$0xf] 0
        %348 = vst [vmem:[#allocation2 + $0x14] sm:$0x1] 0
        %s349 = scalar_lea.vmem [#allocation2], 120
        %350 = vst [vmem:[%s349] sm:$0xf] 0
        %351 = vst [vmem:[%s349 + $0x4] sm:$0xf] 0
        %352 = vst [vmem:[%s349 + $0x8] sm:$0x1] 0
        %353 = vst [vmem:[%s349 + $0xc] sm:$0xf] 0
        %354 = vst [vmem:[%s349 + $0x10] sm:$0xf] 0
        %355 = vst [vmem:[%s349 + $0x14] sm:$0x1] 0
        %vm356 = vcmask 1040384
        %vm357 = vsmask.f32 256
        %vm358 = vmand %vm356, %vm357
        %v359 = vld [vmem:[#allocation2] sm:$0x1]
        %v360 = vsel %vm358, 0, %v359
        %361 = vst [vmem:[#allocation2] sm:$0x1] %v360
        %v362 = vld [vmem:[#allocation2 + $0xc] sm:$0x1]
        %v363 = vsel %vm358, 0, %v362
        %364 = vst [vmem:[#allocation2 + $0xc] sm:$0x1] %v363
        %v365 = vld [vmem:[#allocation2 + $0x18] sm:$0x1]
        %v366 = vsel %vm358, 0, %v365
        %367 = vst [vmem:[#allocation2 + $0x18] sm:$0x1] %v366
        %v368 = vld [vmem:[#allocation2 + $0x24] sm:$0x1]
        %v369 = vsel %vm358, 0, %v368
        %370 = vst [vmem:[#allocation2 + $0x24] sm:$0x1] %v369
        %v371 = vld [vmem:[#allocation2 + $0x30] sm:$0x1]
        %v372 = vsel %vm358, 0, %v371
        %373 = vst [vmem:[#allocation2 + $0x30] sm:$0x1] %v372
        %v374 = vld [vmem:[#allocation2 + $0x3c] sm:$0x1]
        %v375 = vsel %vm358, 0, %v374
        %376 = vst [vmem:[#allocation2 + $0x3c] sm:$0x1] %v375
        %v377 = vld [vmem:[#allocation2 + $0x48] sm:$0x1]
        %v378 = vsel %vm358, 0, %v377
        %379 = vst [vmem:[#allocation2 + $0x48] sm:$0x1] %v378
        %v380 = vld [vmem:[#allocation2 + $0x54] sm:$0x1]
        %v381 = vsel %vm358, 0, %v380
        %382 = vst [vmem:[#allocation2 + $0x54] sm:$0x1] %v381
        %v383 = vld [vmem:[#allocation2 + $0x60] sm:$0x1]
        %v384 = vsel %vm358, 0, %v383
        %385 = vst [vmem:[#allocation2 + $0x60] sm:$0x1] %v384
        %v386 = vld [vmem:[#allocation2 + $0x6c] sm:$0x1]
        %v387 = vsel %vm358, 0, %v386
        %388 = vst [vmem:[#allocation2 + $0x6c] sm:$0x1] %v387
        %v389 = vld [vmem:[#allocation2 + $0x78] sm:$0x1]
        %v390 = vsel %vm358, 0, %v389
        %391 = vst [vmem:[#allocation2 + $0x78] sm:$0x1] %v390
        %v392 = vld [vmem:[#allocation2 + $0x84] sm:$0x1]
        %v393 = vsel %vm358, 0, %v392
        %394 = vst [vmem:[#allocation2 + $0x84] sm:$0x1] %v393
        %vm395 = vsmask.f32 7938
        %vm396 = vmand %vm356, %vm395
        %v397 = vld [vmem:[#allocation2 + $0x8] sm:$0x1]
        %v398 = vsel %vm396, 0, %v397
        %399 = vst [vmem:[#allocation2 + $0x8] sm:$0x1] %v398
        %v400 = vld [vmem:[#allocation2 + $0x14] sm:$0x1]
        %v401 = vsel %vm396, 0, %v400
        %402 = vst [vmem:[#allocation2 + $0x14] sm:$0x1] %v401
        %v403 = vld [vmem:[#allocation2 + $0x20] sm:$0x1]
        %v404 = vsel %vm396, 0, %v403
        %405 = vst [vmem:[#allocation2 + $0x20] sm:$0x1] %v404
        %v406 = vld [vmem:[#allocation2 + $0x2c] sm:$0x1]
        %v407 = vsel %vm396, 0, %v406
        %408 = vst [vmem:[#allocation2 + $0x2c] sm:$0x1] %v407
        %v409 = vld [vmem:[#allocation2 + $0x38] sm:$0x1]
        %v410 = vsel %vm396, 0, %v409
        %411 = vst [vmem:[#allocation2 + $0x38] sm:$0x1] %v410
        %v412 = vld [vmem:[#allocation2 + $0x44] sm:$0x1]
        %v413 = vsel %vm396, 0, %v412
        %414 = vst [vmem:[#allocation2 + $0x44] sm:$0x1] %v413
        %v415 = vld [vmem:[#allocation2 + $0x50] sm:$0x1]
        %v416 = vsel %vm396, 0, %v415
        %417 = vst [vmem:[#allocation2 + $0x50] sm:$0x1] %v416
        %v418 = vld [vmem:[#allocation2 + $0x5c] sm:$0x1]
        %v419 = vsel %vm396, 0, %v418
        %420 = vst [vmem:[#allocation2 + $0x5c] sm:$0x1] %v419
        %v421 = vld [vmem:[#allocation2 + $0x68] sm:$0x1]
        %v422 = vsel %vm396, 0, %v421
        %423 = vst [vmem:[#allocation2 + $0x68] sm:$0x1] %v422
        %v424 = vld [vmem:[#allocation2 + $0x74] sm:$0x1]
        %v425 = vsel %vm396, 0, %v424
        %426 = vst [vmem:[#allocation2 + $0x74] sm:$0x1] %v425
        %v427 = vld [vmem:[#allocation2 + $0x80] sm:$0x1]
        %v428 = vsel %vm396, 0, %v427
        %429 = vst [vmem:[#allocation2 + $0x80] sm:$0x1] %v428
        %v430 = vld [vmem:[#allocation2 + $0x8c] sm:$0x1]
        %v431 = vsel %vm396, 0, %v430
        %432 = vst [vmem:[#allocation2 + $0x8c] sm:$0x1] %v431
        %s433 = smul.u32 %s342, 16
        %s434 = scalar_lea.vmem %s301, %s433 [#allocation6]
        %v435 = vld [vmem:[%s434] sm:$0xff]
        %v436 = vld [vmem:[%s434 + $0x8] sm:$0xff]
        %v437 = vld [vmem:[%s434 + $0x10] sm:$0xff]
        %v438 = vld [vmem:[%s434 + $0x18] sm:$0xff]
        %v439 = vld [vmem:[%s434 + $0x20] sm:$0xff]
        %v440 = vld [vmem:[%s434 + $0x28] sm:$0xff]
        %v441 = vld [vmem:[%s434 + $0x30] sm:$0xff]
        %v442 = vld [vmem:[%s434 + $0x38] sm:$0xff]
        %v443 = vld [vmem:[%s434 + $0x40] sm:$0xff]
        %v444 = vld [vmem:[%s434 + $0x48] sm:$0xff]
        %v445 = vld [vmem:[%s434 + $0x50] sm:$0xff]
        %v446 = vld [vmem:[%s434 + $0x58] sm:$0xff]
        %v447 = vld [vmem:[%s434 + $0x60] sm:$0xff]
        %v448 = vld [vmem:[%s434 + $0x68] sm:$0xff]
        %v449 = vld [vmem:[%s434 + $0x70] sm:$0xff]
        %v450 = vld [vmem:[%s434 + $0x78] sm:$0xff]
        %v451 = vpack.c.bf16 %v436, %v435
        %v452 = vpack.c.bf16 %v438, %v437
        %v453 = vpack.c.bf16 %v440, %v439
        %v454 = vpack.c.bf16 %v442, %v441
        %v455 = vpack.c.bf16 %v444, %v443
        %v456 = vpack.c.bf16 %v446, %v445
        %v457 = vpack.c.bf16 %v448, %v447
        %v458 = vpack.c.bf16 %v450, %v449
        %v467 = vunpack.c.l.b16 %v451
        %v468 = vunpack.c.h.b16 %v451
        %v469 = vunpack.c.l.b16 %v452
        %v470 = vunpack.c.h.b16 %v452
        %v471 = vunpack.c.l.b16 %v453
        %v472 = vunpack.c.h.b16 %v453
        %v473 = vunpack.c.l.b16 %v454
        %v474 = vunpack.c.h.b16 %v454
        %v475 = vunpack.c.l.b16 %v455
        %v476 = vunpack.c.h.b16 %v455
        %v477 = vunpack.c.l.b16 %v456
        %v478 = vunpack.c.h.b16 %v456
        %v479 = vunpack.c.l.b16 %v457
        %v480 = vunpack.c.h.b16 %v457
        %v481 = vunpack.c.l.b16 %v458
        %v482 = vunpack.c.h.b16 %v458
        %v483 = vpack.c.b16 %v467, %v467
        %v484 = vpack.c.b16 %v468, %v468
        %v485 = vpack.c.b16 %v469, %v469
        %v486 = vpack.c.b16 %v470, %v470
        %v487 = vpack.c.b16 %v471, %v471
        %v488 = vpack.c.b16 %v472, %v472
        %v489 = vpack.c.b16 %v473, %v473
        %v490 = vpack.c.b16 %v474, %v474
        %v491 = vpack.c.b16 %v475, %v475
        %v492 = vpack.c.b16 %v476, %v476
        %v493 = vpack.c.b16 %v477, %v477
        %v494 = vpack.c.b16 %v478, %v478
        %v495 = vpack.c.b16 %v479, %v479
        %v496 = vpack.c.b16 %v480, %v480
        %v497 = vpack.c.b16 %v481, %v481
        %v498 = vpack.c.b16 %v482, %v482
        %vm499 = vsmask.f32 4368
        %vm500 = vmor %vm357, %vm499
        %v502 = vshrl.u32 %v483, 16
        %v504 = vrot.slane %v502, 7
        %v505 = vshll.u32 %v483, 16
        %v507 = vor.u32 %v504, %v505
        %v508 = vrot.slane %v504, 4
        %v510 = vshrl.u32 %v484, 16
        %v512 = vrot.slane %v510, 7
        %v513 = vshll.u32 %v484, 16
        %v515 = vor.u32 %v512, %v513
        %v516 = vsel %vm500, %v508, %v515
        %v517 = vrot.slane %v512, 4
        %v519 = vshrl.u32 %v485, 16
        %v521 = vrot.slane %v519, 7
        %v522 = vshll.u32 %v485, 16
        %v524 = vor.u32 %v521, %v522
        %v525 = vrot.slane %v521, 4
        %v527 = vshrl.u32 %v486, 16
        %v529 = vrot.slane %v527, 7
        %v530 = vshll.u32 %v486, 16
        %v532 = vor.u32 %v529, %v530
        %v533 = vsel %vm500, %v525, %v532
        %v534 = vrot.slane %v529, 4
        %v536 = vshrl.u32 %v487, 16
        %v538 = vrot.slane %v536, 7
        %v539 = vshll.u32 %v487, 16
        %v541 = vor.u32 %v538, %v539
        %v542 = vrot.slane %v538, 4
        %v544 = vshrl.u32 %v488, 16
        %v546 = vrot.slane %v544, 7
        %v547 = vshll.u32 %v488, 16
        %v549 = vor.u32 %v546, %v547
        %v550 = vsel %vm500, %v542, %v549
        %v551 = vrot.slane %v546, 4
        %v553 = vshrl.u32 %v489, 16
        %v555 = vrot.slane %v553, 7
        %v556 = vshll.u32 %v489, 16
        %v558 = vor.u32 %v555, %v556
        %v559 = vrot.slane %v555, 4
        %v561 = vshrl.u32 %v490, 16
        %v563 = vrot.slane %v561, 7
        %v564 = vshll.u32 %v490, 16
        %v566 = vor.u32 %v563, %v564
        %v567 = vsel %vm500, %v559, %v566
        %v568 = vrot.slane %v563, 4
        %v570 = vshrl.u32 %v491, 16
        %v572 = vrot.slane %v570, 7
        %v573 = vshll.u32 %v491, 16
        %v575 = vor.u32 %v572, %v573
        %v576 = vrot.slane %v572, 4
        %v578 = vshrl.u32 %v492, 16
        %v580 = vrot.slane %v578, 7
        %v581 = vshll.u32 %v492, 16
        %v583 = vor.u32 %v580, %v581
        %v584 = vsel %vm500, %v576, %v583
        %v585 = vrot.slane %v580, 4
        %v587 = vshrl.u32 %v493, 16
        %v589 = vrot.slane %v587, 7
        %v590 = vshll.u32 %v493, 16
        %v592 = vor.u32 %v589, %v590
        %v593 = vrot.slane %v589, 4
        %v595 = vshrl.u32 %v494, 16
        %v597 = vrot.slane %v595, 7
        %v598 = vshll.u32 %v494, 16
        %v600 = vor.u32 %v597, %v598
        %v601 = vsel %vm500, %v593, %v600
        %v602 = vrot.slane %v597, 4
        %v604 = vshrl.u32 %v495, 16
        %v606 = vrot.slane %v604, 7
        %v607 = vshll.u32 %v495, 16
        %v609 = vor.u32 %v606, %v607
        %v610 = vrot.slane %v606, 4
        %v612 = vshrl.u32 %v496, 16
        %v614 = vrot.slane %v612, 7
        %v615 = vshll.u32 %v496, 16
        %v617 = vor.u32 %v614, %v615
        %v618 = vsel %vm500, %v610, %v617
        %v619 = vrot.slane %v614, 4
        %v621 = vshrl.u32 %v497, 16
        %v623 = vrot.slane %v621, 7
        %v624 = vshll.u32 %v497, 16
        %v626 = vor.u32 %v623, %v624
        %v627 = vrot.slane %v623, 4
        %v629 = vshrl.u32 %v498, 16
        %v631 = vrot.slane %v629, 7
        %v632 = vshll.u32 %v498, 16
        %v634 = vor.u32 %v631, %v632
        %v635 = vsel %vm500, %v627, %v634
        %v636 = vrot.slane %v631, 4
        %s661 = scalar_lea.vmem [#allocation2], 24
        %vm662 = vcmask 1043456
        %vm663 = vmand %vm662, %vm395
        %v664 = vld [vmem:[%s661] sm:$0xf]
        %v665 = vsel %vm663, %v507, %v664
        %666 = vst [vmem:[%s661] sm:$0xf] %v665
        %667 = vst [vmem:[%s661 + $0x4] sm:$0xf] %v516
        %v668 = vld [vmem:[%s661 + $0x8] sm:$0x1]
        %v669 = vsel %vm358, %v517, %v668
        %670 = vst [vmem:[%s661 + $0x8] sm:$0x1] %v669
        %v671 = vld [vmem:[%s661 + $0xc] sm:$0xf]
        %v672 = vsel %vm663, %v524, %v671
        %673 = vst [vmem:[%s661 + $0xc] sm:$0xf] %v672
        %674 = vst [vmem:[%s661 + $0x10] sm:$0xf] %v533
        %v675 = vld [vmem:[%s661 + $0x14] sm:$0x1]
        %v676 = vsel %vm358, %v534, %v675
        %677 = vst [vmem:[%s661 + $0x14] sm:$0x1] %v676
        %v678 = vld [vmem:[%s661 + $0x18] sm:$0xf]
        %v679 = vsel %vm663, %v541, %v678
        %680 = vst [vmem:[%s661 + $0x18] sm:$0xf] %v679
        %681 = vst [vmem:[%s661 + $0x1c] sm:$0xf] %v550
        %v682 = vld [vmem:[%s661 + $0x20] sm:$0x1]
        %v683 = vsel %vm358, %v551, %v682
        %684 = vst [vmem:[%s661 + $0x20] sm:$0x1] %v683
        %v685 = vld [vmem:[%s661 + $0x24] sm:$0xf]
        %v686 = vsel %vm663, %v558, %v685
        %687 = vst [vmem:[%s661 + $0x24] sm:$0xf] %v686
        %688 = vst [vmem:[%s661 + $0x28] sm:$0xf] %v567
        %v689 = vld [vmem:[%s661 + $0x2c] sm:$0x1]
        %v690 = vsel %vm358, %v568, %v689
        %691 = vst [vmem:[%s661 + $0x2c] sm:$0x1] %v690
        %v692 = vld [vmem:[%s661 + $0x30] sm:$0xf]
        %v693 = vsel %vm663, %v575, %v692
        %694 = vst [vmem:[%s661 + $0x30] sm:$0xf] %v693
        %695 = vst [vmem:[%s661 + $0x34] sm:$0xf] %v584
        %v696 = vld [vmem:[%s661 + $0x38] sm:$0x1]
        %v697 = vsel %vm358, %v585, %v696
        %698 = vst [vmem:[%s661 + $0x38] sm:$0x1] %v697
        %v699 = vld [vmem:[%s661 + $0x3c] sm:$0xf]
        %v700 = vsel %vm663, %v592, %v699
        %701 = vst [vmem:[%s661 + $0x3c] sm:$0xf] %v700
        %702 = vst [vmem:[%s661 + $0x40] sm:$0xf] %v601
        %v703 = vld [vmem:[%s661 + $0x44] sm:$0x1]
        %v704 = vsel %vm358, %v602, %v703
        %705 = vst [vmem:[%s661 + $0x44] sm:$0x1] %v704
        %v706 = vld [vmem:[%s661 + $0x48] sm:$0xf]
        %v707 = vsel %vm663, %v609, %v706
        %708 = vst [vmem:[%s661 + $0x48] sm:$0xf] %v707
        %709 = vst [vmem:[%s661 + $0x4c] sm:$0xf] %v618
        %v710 = vld [vmem:[%s661 + $0x50] sm:$0x1]
        %v711 = vsel %vm358, %v619, %v710
        %712 = vst [vmem:[%s661 + $0x50] sm:$0x1] %v711
        %v713 = vld [vmem:[%s661 + $0x54] sm:$0xf]
        %v714 = vsel %vm663, %v626, %v713
        %715 = vst [vmem:[%s661 + $0x54] sm:$0xf] %v714
        %716 = vst [vmem:[%s661 + $0x58] sm:$0xf] %v635
        %v717 = vld [vmem:[%s661 + $0x5c] sm:$0x1]
        %v718 = vsel %vm358, %v636, %v717
        %719 = vst [vmem:[%s661 + $0x5c] sm:$0x1] %v718
        %p720 = scmp.gt.s32.totalorder %s30, 0
        // Predicated region
        $region61: #{tpu_custom_call.1} parent=47 // pred_check
          %p721 = pneg %p720
        $region62: #{tpu_custom_call.1} parent=47 // pred_check_branch
          %723 = sbr.rel (%p721) target = $region64
        $region63: #{tpu_custom_call.1} parent=47 // pred_region
          %s724 = ssub.s32 %s342, 2
          %s725 = smul.u32 %s724, 16
          %s726 = scalar_lea.vmem %s301, %s725 [#allocation6]
          %v727 = vld [vmem:[%s726] sm:$0xff]
          %v728 = vld [vmem:[%s726 + $0x8] sm:$0xff]
          %v729 = vld [vmem:[%s726 + $0x10] sm:$0xff]
          %v730 = vld [vmem:[%s726 + $0x18] sm:$0xff]
          %v731 = vpack.c.bf16 %v728, %v727
          %v732 = vpack.c.bf16 %v730, %v729
          %v735 = vunpack.c.l.b16 %v731
          %v736 = vunpack.c.h.b16 %v731
          %v737 = vunpack.c.l.b16 %v732
          %v738 = vunpack.c.h.b16 %v732
          %v739 = vpack.c.b16 %v735, %v735
          %v740 = vpack.c.b16 %v736, %v736
          %v741 = vpack.c.b16 %v737, %v737
          %v742 = vpack.c.b16 %v738, %v738
          %v744 = vshrl.u32 %v739, 16
          %v746 = vrot.slane %v744, 7
          %v747 = vshll.u32 %v739, 16
          %v749 = vor.u32 %v746, %v747
          %v750 = vrot.slane %v746, 4
          %v752 = vshrl.u32 %v740, 16
          %v754 = vrot.slane %v752, 7
          %v755 = vshll.u32 %v740, 16
          %v757 = vor.u32 %v754, %v755
          %v758 = vsel %vm500, %v750, %v757
          %v759 = vrot.slane %v754, 4
          %v761 = vshrl.u32 %v741, 16
          %v763 = vrot.slane %v761, 7
          %v764 = vshll.u32 %v741, 16
          %v766 = vor.u32 %v763, %v764
          %v767 = vrot.slane %v763, 4
          %v769 = vshrl.u32 %v742, 16
          %v771 = vrot.slane %v769, 7
          %v772 = vshll.u32 %v742, 16
          %v774 = vor.u32 %v771, %v772
          %v775 = vsel %vm500, %v767, %v774
          %v776 = vrot.slane %v771, 4
          %v783 = vld [vmem:[#allocation2] sm:$0xf]
          %v784 = vsel %vm663, %v749, %v783
          %785 = vst [vmem:[#allocation2] sm:$0xf] %v784
          %786 = vst [vmem:[#allocation2 + $0x4] sm:$0xf] %v758
          %v787 = vld [vmem:[#allocation2 + $0x8] sm:$0x1]
          %v788 = vsel %vm358, %v759, %v787
          %789 = vst [vmem:[#allocation2 + $0x8] sm:$0x1] %v788
          %v790 = vld [vmem:[#allocation2 + $0xc] sm:$0xf]
          %v791 = vsel %vm663, %v766, %v790
          %792 = vst [vmem:[#allocation2 + $0xc] sm:$0xf] %v791
          %793 = vst [vmem:[#allocation2 + $0x10] sm:$0xf] %v775
          %v794 = vld [vmem:[#allocation2 + $0x14] sm:$0x1]
          %v795 = vsel %vm358, %v776, %v794
          %796 = vst [vmem:[#allocation2 + $0x14] sm:$0x1] %v795
        $region64: #{tpu_custom_call.1} parent=47 // pred_fallthru
          _
        %p797 = scmp.lt.s32.totalorder %s30, 1
        // Predicated region
        $region65: #{tpu_custom_call.1} parent=47 // pred_check
          %p798 = pneg %p797
        $region66: #{tpu_custom_call.1} parent=47 // pred_check_branch
          %800 = sbr.rel (%p798) target = $region68
        $region67: #{tpu_custom_call.1} parent=47 // pred_region
          %s801 = sadd.s32 %s342, 8
          %s802 = smul.u32 %s801, 16
          %s803 = scalar_lea.vmem %s301, %s802 [#allocation6]
          %v804 = vld [vmem:[%s803] sm:$0xff]
          %v805 = vld [vmem:[%s803 + $0x8] sm:$0xff]
          %v806 = vld [vmem:[%s803 + $0x10] sm:$0xff]
          %v807 = vld [vmem:[%s803 + $0x18] sm:$0xff]
          %v808 = vpack.c.bf16 %v805, %v804
          %v809 = vpack.c.bf16 %v807, %v806
          %v812 = vunpack.c.l.b16 %v808
          %v813 = vunpack.c.h.b16 %v808
          %v814 = vunpack.c.l.b16 %v809
          %v815 = vunpack.c.h.b16 %v809
          %v816 = vpack.c.b16 %v812, %v812
          %v817 = vpack.c.b16 %v813, %v813
          %v818 = vpack.c.b16 %v814, %v814
          %v819 = vpack.c.b16 %v815, %v815
          %v821 = vshrl.u32 %v816, 16
          %v823 = vrot.slane %v821, 7
          %v824 = vshll.u32 %v816, 16
          %v826 = vor.u32 %v823, %v824
          %v827 = vrot.slane %v823, 4
          %v829 = vshrl.u32 %v817, 16
          %v831 = vrot.slane %v829, 7
          %v832 = vshll.u32 %v817, 16
          %v834 = vor.u32 %v831, %v832
          %v835 = vsel %vm500, %v827, %v834
          %v836 = vrot.slane %v831, 4
          %v838 = vshrl.u32 %v818, 16
          %v840 = vrot.slane %v838, 7
          %v841 = vshll.u32 %v818, 16
          %v843 = vor.u32 %v840, %v841
          %v844 = vrot.slane %v840, 4
          %v846 = vshrl.u32 %v819, 16
          %v848 = vrot.slane %v846, 7
          %v849 = vshll.u32 %v819, 16
          %v851 = vor.u32 %v848, %v849
          %v852 = vsel %vm500, %v844, %v851
          %v853 = vrot.slane %v848, 4
          %v860 = vld [vmem:[%s349] sm:$0xf]
          %v861 = vsel %vm663, %v826, %v860
          %862 = vst [vmem:[%s349] sm:$0xf] %v861
          %863 = vst [vmem:[%s349 + $0x4] sm:$0xf] %v835
          %v864 = vld [vmem:[%s349 + $0x8] sm:$0x1]
          %v865 = vsel %vm358, %v836, %v864
          %866 = vst [vmem:[%s349 + $0x8] sm:$0x1] %v865
          %v867 = vld [vmem:[%s349 + $0xc] sm:$0xf]
          %v868 = vsel %vm663, %v843, %v867
          %869 = vst [vmem:[%s349 + $0xc] sm:$0xf] %v868
          %870 = vst [vmem:[%s349 + $0x10] sm:$0xf] %v852
          %v871 = vld [vmem:[%s349 + $0x14] sm:$0x1]
          %v872 = vsel %vm358, %v853, %v871
          %873 = vst [vmem:[%s349 + $0x14] sm:$0x1] %v872
        $region68: #{tpu_custom_call.1} parent=47 // pred_fallthru
          _
        %v874 = vld [vmem:[#allocation2] sm:$0xf]
        %v875 = vld [vmem:[#allocation2 + $0x4] sm:$0xf]
        %v876 = vld [vmem:[#allocation2 + $0xc] sm:$0xf]
        %v877 = vld [vmem:[#allocation2 + $0x10] sm:$0xf]
        %v878 = vld [vmem:[#allocation2 + $0x18] sm:$0xf]
        %v879 = vld [vmem:[#allocation2 + $0x1c] sm:$0xf]
        %v880 = vld [vmem:[#allocation2 + $0x24] sm:$0xf]
        %v881 = vld [vmem:[#allocation2 + $0x28] sm:$0xf]
        %v882 = vld [vmem:[#allocation2 + $0x30] sm:$0xf]
        %v883 = vld [vmem:[#allocation2 + $0x34] sm:$0xf]
        %v884 = vld [vmem:[#allocation2 + $0x3c] sm:$0xf]
        %v885 = vld [vmem:[#allocation2 + $0x40] sm:$0xf]
        %v886 = vld [vmem:[#allocation2 + $0x48] sm:$0xf]
        %v887 = vld [vmem:[#allocation2 + $0x4c] sm:$0xf]
        %v888 = vld [vmem:[#allocation2 + $0x54] sm:$0xf]
        %v889 = vld [vmem:[#allocation2 + $0x58] sm:$0xf]
        %v890 = vld [vmem:[#allocation2 + $0x60] sm:$0xf]
        %v891 = vld [vmem:[#allocation2 + $0x64] sm:$0xf]
        %v892 = vld [vmem:[#allocation2 + $0x6c] sm:$0xf]
        %v893 = vld [vmem:[#allocation2 + $0x70] sm:$0xf]
        %v894 = vld [vmem:[#allocation9] sm:$0xf]
        %v895 = vld [vmem:[#allocation9 + $0x4] sm:$0xf]
        %v896 = vld [vmem:[#allocation9 + $0x8] sm:$0xf]
        %v897 = vld [vmem:[#allocation9 + $0xc] sm:$0xf]
        %v898 = vld [vmem:[#allocation9 + $0x10] sm:$0xf]
        %v899 = vld [vmem:[#allocation9 + $0x14] sm:$0xf]
        %v900 = vld [vmem:[#allocation9 + $0x18] sm:$0xf]
        %v901 = vld [vmem:[#allocation9 + $0x1c] sm:$0xf]
        %v902 = vld [vmem:[#allocation9 + $0x20] sm:$0xf]
        %v903 = vld [vmem:[#allocation9 + $0x24] sm:$0xf]
        %v904 = vld [vmem:[#allocation9 + $0x28] sm:$0xf]
        %v905 = vld [vmem:[#allocation9 + $0x2c] sm:$0xf]
        %v906 = vld [vmem:[#allocation9 + $0x30] sm:$0xf]
        %v907 = vld [vmem:[#allocation9 + $0x34] sm:$0xf]
        %v908 = vld [vmem:[#allocation9 + $0x38] sm:$0xf]
        %v909 = vld [vmem:[#allocation9 + $0x3c] sm:$0xf]
        %v930 = vunpack.c.l.b16 %v874
        %v931 = vunpack.c.l.b16 %v875
        %v932 = vunpack.c.l.b16 %v876
        %v933 = vunpack.c.l.b16 %v877
        %v934 = vunpack.c.l.b16 %v878
        %v935 = vunpack.c.l.b16 %v879
        %v936 = vunpack.c.l.b16 %v880
        %v937 = vunpack.c.l.b16 %v881
        %v938 = vunpack.c.l.b16 %v882
        %v939 = vunpack.c.l.b16 %v883
        %v940 = vunpack.c.l.b16 %v884
        %v941 = vunpack.c.l.b16 %v885
        %v942 = vunpack.c.l.b16 %v886
        %v943 = vunpack.c.l.b16 %v887
        %v944 = vunpack.c.l.b16 %v888
        %v945 = vunpack.c.l.b16 %v889
        %v946 = vunpack.c.l.b16 %v890
        %v947 = vunpack.c.l.b16 %v891
        %v948 = vunpack.c.l.b16 %v892
        %v949 = vunpack.c.l.b16 %v893
        %v950 = vpack.c.b16 %v931, %v930
        %v951 = vpack.c.b16 %v933, %v932
        %v952 = vpack.c.b16 %v935, %v934
        %v953 = vpack.c.b16 %v937, %v936
        %v954 = vpack.c.b16 %v939, %v938
        %v955 = vpack.c.b16 %v941, %v940
        %v956 = vpack.c.b16 %v943, %v942
        %v957 = vpack.c.b16 %v945, %v944
        %v958 = vpack.c.b16 %v947, %v946
        %v959 = vpack.c.b16 %v949, %v948
        %v986 = vunpack.c.l.b16 %v894
        %v987 = vunpack.c.l.b16 %v895
        %v988 = vunpack.c.l.b16 %v896
        %v989 = vunpack.c.l.b16 %v897
        %v990 = vunpack.c.l.b16 %v898
        %v991 = vunpack.c.l.b16 %v899
        %v992 = vunpack.c.l.b16 %v900
        %v993 = vunpack.c.l.b16 %v901
        %v994 = vunpack.c.l.b16 %v902
        %v995 = vunpack.c.l.b16 %v903
        %v996 = vunpack.c.l.b16 %v904
        %v997 = vunpack.c.l.b16 %v905
        %v998 = vunpack.c.l.b16 %v906
        %v999 = vunpack.c.l.b16 %v907
        %v1000 = vunpack.c.l.b16 %v908
        %v1001 = vunpack.c.l.b16 %v909
        %v1002 = vpack.c.b16 %v987, %v986
        %v1003 = vpack.c.b16 %v989, %v988
        %v1004 = vpack.c.b16 %v991, %v990
        %v1005 = vpack.c.b16 %v993, %v992
        %v1006 = vpack.c.b16 %v995, %v994
        %v1007 = vpack.c.b16 %v997, %v996
        %v1008 = vpack.c.b16 %v999, %v998
        %v1009 = vpack.c.b16 %v1001, %v1000
        %1018 = vmatprep.subr.bf16.mxu0 0
        %1019 = vmatpush1.bf16.msra.mxu0 %v1009
        %1020 = vmatprep.subr.bf16.mxu0 0
        %1021 = vmatpush1.bf16.msra.mxu0 %v1008
        %1022 = vmatprep.subr.bf16.mxu0 0
        %1023 = vmatpush1.bf16.msra.mxu0 %v1007
        %1024 = vmatprep.subr.bf16.mxu0 0
        %1025 = vmatpush1.bf16.msra.mxu0 %v1006
        %1026 = vmatprep.subr.bf16.mxu0 0
        %1027 = vmatpush1.bf16.msra.mxu0 %v1005
        %1028 = vmatprep.subr.bf16.mxu0 0
        %1029 = vmatpush1.bf16.msra.mxu0 %v1004
        %1030 = vmatprep.subr.bf16.mxu0 0
        %1031 = vmatpush1.bf16.msra.mxu0 %v1003
        %1032 = vmatprep.subr.bf16.mxu0 0
        %1033 = vmatpush1.bf16.msra.mxu0 %v1002
        %1034 = vmatprep.subr.bf16.mxu0 0
        %1035 = vmatpush2.bf16.msra.mxu0 0
        %1036 = vmatprep.subr.bf16.mxu0 0
        %1037 = vmatpush2.bf16.msra.mxu0 0
        %1038 = vmatprep.subr.bf16.mxu0 0
        %1039 = vmatpush2.bf16.msra.mxu0 0
        %1040 = vmatprep.subr.bf16.mxu0 0
        %1041 = vmatpush2.bf16.msra.mxu0 0
        %1042 = vmatprep.subr.bf16.mxu0 0
        %1043 = vmatpush2.bf16.msra.mxu0 0
        %1044 = vmatprep.subr.bf16.mxu0 0
        %1045 = vmatpush2.bf16.msra.mxu0 0
        %1046 = vmatprep.subr.bf16.mxu0 0
        %1047 = vmatpush2.bf16.msra.mxu0 0
        %1048 = vmatprep.subr.bf16.mxu0 0
        %1049 = vmatpush2.bf16.msra.mxu0 0
        %1050 = vmatprep.mubr.bf16.mxu0 0
        %1051 = vmatmul.mubr.bf16.gmra.mxu0 %v950
        %v1052 = vpop.f32.mrf.mxu0
        %v1053 = vadd.f32 0.0, %v1052
        %v1054 = vpop.f32.mrf.mxu0
        %v1055 = vpop.f32.mrf.mxu0
        %v1056 = vadd.f32 0.0, %v1055
        %v1057 = vpop.f32.mrf.mxu0
        %1058 = vmatprep.mubr.bf16.mxu0 0
        %1059 = vmatmul.mubr.bf16.gmra.mxu0 %v951
        %v1060 = vpop.f32.mrf.mxu0
        %v1061 = vadd.f32 0.0, %v1060
        %v1062 = vpop.f32.mrf.mxu0
        %v1063 = vpop.f32.mrf.mxu0
        %v1064 = vadd.f32 0.0, %v1063
        %v1065 = vpop.f32.mrf.mxu0
        %1066 = vmatprep.mubr.bf16.mxu0 0
        %1067 = vmatmul.mubr.bf16.gmra.mxu0 %v952
        %v1068 = vpop.f32.mrf.mxu0
        %v1069 = vadd.f32 0.0, %v1068
        %v1070 = vpop.f32.mrf.mxu0
        %v1071 = vpop.f32.mrf.mxu0
        %v1072 = vadd.f32 0.0, %v1071
        %v1073 = vpop.f32.mrf.mxu0
        %1074 = vmatprep.mubr.bf16.mxu0 0
        %1075 = vmatmul.mubr.bf16.gmra.mxu0 %v953
        %v1076 = vpop.f32.mrf.mxu0
        %v1077 = vadd.f32 0.0, %v1076
        %v1078 = vpop.f32.mrf.mxu0
        %v1079 = vpop.f32.mrf.mxu0
        %v1080 = vadd.f32 0.0, %v1079
        %v1081 = vpop.f32.mrf.mxu0
        %1082 = vmatprep.mubr.bf16.mxu0 0
        %1083 = vmatmul.mubr.bf16.gmra.mxu0 %v954
        %v1084 = vpop.f32.mrf.mxu0
        %v1085 = vadd.f32 0.0, %v1084
        %v1086 = vpop.f32.mrf.mxu0
        %v1087 = vpop.f32.mrf.mxu0
        %v1088 = vadd.f32 0.0, %v1087
        %v1089 = vpop.f32.mrf.mxu0
        %1090 = vmatprep.mubr.bf16.mxu0 0
        %1091 = vmatmul.mubr.bf16.gmra.mxu0 %v955
        %v1092 = vpop.f32.mrf.mxu0
        %v1093 = vadd.f32 0.0, %v1092
        %v1094 = vpop.f32.mrf.mxu0
        %v1095 = vpop.f32.mrf.mxu0
        %v1096 = vadd.f32 0.0, %v1095
        %v1097 = vpop.f32.mrf.mxu0
        %1098 = vmatprep.mubr.bf16.mxu0 0
        %1099 = vmatmul.mubr.bf16.gmra.mxu0 %v956
        %v1100 = vpop.f32.mrf.mxu0
        %v1101 = vadd.f32 0.0, %v1100
        %v1102 = vpop.f32.mrf.mxu0
        %v1103 = vpop.f32.mrf.mxu0
        %v1104 = vadd.f32 0.0, %v1103
        %v1105 = vpop.f32.mrf.mxu0
        %1106 = vmatprep.mubr.bf16.mxu0 0
        %1107 = vmatmul.mubr.bf16.gmra.mxu0 %v957
        %v1108 = vpop.f32.mrf.mxu0
        %v1109 = vadd.f32 0.0, %v1108
        %v1110 = vpop.f32.mrf.mxu0
        %v1111 = vpop.f32.mrf.mxu0
        %v1112 = vadd.f32 0.0, %v1111
        %v1113 = vpop.f32.mrf.mxu0
        %1114 = vmatprep.mubr.bf16.mxu0 0
        %1115 = vmatmul.mubr.bf16.gmra.mxu0 %v958
        %v1116 = vpop.f32.mrf.mxu0
        %v1117 = vadd.f32 0.0, %v1116
        %v1118 = vpop.f32.mrf.mxu0
        %v1119 = vpop.f32.mrf.mxu0
        %v1120 = vadd.f32 0.0, %v1119
        %v1121 = vpop.f32.mrf.mxu0
        %1122 = vmatprep.mubr.bf16.mxu0 0
        %1123 = vmatmul.mubr.bf16.gmra.mxu0 %v959
        %v1124 = vpop.f32.mrf.mxu0
        %v1125 = vadd.f32 0.0, %v1124
        %v1126 = vpop.f32.mrf.mxu0
        %v1127 = vpop.f32.mrf.mxu0
        %v1128 = vadd.f32 0.0, %v1127
        %v1129 = vpop.f32.mrf.mxu0
        %1130 = vdwg.mxu0
        %1131 = vst [vmem:[#allocation4] sm:$0xff] %v1053
        %1132 = vst [vmem:[#allocation4 + $0x8] sm:$0xff] %v1056
        %1133 = vst [vmem:[#allocation4 + $0x10] sm:$0xff] %v1061
        %1134 = vst [vmem:[#allocation4 + $0x18] sm:$0xff] %v1064
        %1135 = vst [vmem:[#allocation4 + $0x20] sm:$0xff] %v1069
        %1136 = vst [vmem:[#allocation4 + $0x28] sm:$0xff] %v1072
        %1137 = vst [vmem:[#allocation4 + $0x30] sm:$0xff] %v1077
        %1138 = vst [vmem:[#allocation4 + $0x38] sm:$0xff] %v1080
        %1139 = vst [vmem:[#allocation4 + $0x40] sm:$0xff] %v1085
        %1140 = vst [vmem:[#allocation4 + $0x48] sm:$0xff] %v1088
        %1141 = vst [vmem:[#allocation4 + $0x50] sm:$0xff] %v1093
        %1142 = vst [vmem:[#allocation4 + $0x58] sm:$0xff] %v1096
        %1143 = vst [vmem:[#allocation4 + $0x60] sm:$0xff] %v1101
        %1144 = vst [vmem:[#allocation4 + $0x68] sm:$0xff] %v1104
        %1145 = vst [vmem:[#allocation4 + $0x70] sm:$0xff] %v1109
        %1146 = vst [vmem:[#allocation4 + $0x78] sm:$0xff] %v1112
        %1147 = vst [vmem:[#allocation4 + $0x80] sm:$0xff] %v1117
        %1148 = vst [vmem:[#allocation4 + $0x88] sm:$0xff] %v1120
        %1149 = vst [vmem:[#allocation4 + $0x90] sm:$0xff] %v1125
        %1150 = vst [vmem:[#allocation4 + $0x98] sm:$0xff] %v1128
        %v1151 = vld [vmem:[#allocation2] sm:$0xf]
        %v1152 = vld [vmem:[#allocation2 + $0x4] sm:$0xf]
        %v1153 = vld [vmem:[#allocation2 + $0x8] sm:$0x1]
        %v1154 = vld [vmem:[#allocation2 + $0xc] sm:$0xf]
        %v1155 = vld [vmem:[#allocation2 + $0x10] sm:$0xf]
        %v1156 = vld [vmem:[#allocation2 + $0x14] sm:$0x1]
        %v1157 = vld [vmem:[#allocation2 + $0x18] sm:$0xf]
        %v1158 = vld [vmem:[#allocation2 + $0x1c] sm:$0xf]
        %v1159 = vld [vmem:[#allocation2 + $0x20] sm:$0x1]
        %v1160 = vld [vmem:[#allocation2 + $0x24] sm:$0xf]
        %v1161 = vld [vmem:[#allocation2 + $0x28] sm:$0xf]
        %v1162 = vld [vmem:[#allocation2 + $0x2c] sm:$0x1]
        %v1163 = vld [vmem:[#allocation2 + $0x30] sm:$0xf]
        %v1164 = vld [vmem:[#allocation2 + $0x34] sm:$0xf]
        %v1165 = vld [vmem:[#allocation2 + $0x38] sm:$0x1]
        %v1166 = vld [vmem:[#allocation2 + $0x3c] sm:$0xf]
        %v1167 = vld [vmem:[#allocation2 + $0x40] sm:$0xf]
        %v1168 = vld [vmem:[#allocation2 + $0x44] sm:$0x1]
        %v1169 = vld [vmem:[#allocation2 + $0x48] sm:$0xf]
        %v1170 = vld [vmem:[#allocation2 + $0x4c] sm:$0xf]
        %v1171 = vld [vmem:[#allocation2 + $0x50] sm:$0x1]
        %v1172 = vld [vmem:[#allocation2 + $0x54] sm:$0xf]
        %v1173 = vld [vmem:[#allocation2 + $0x58] sm:$0xf]
        %v1174 = vld [vmem:[#allocation2 + $0x5c] sm:$0x1]
        %v1175 = vld [vmem:[#allocation2 + $0x60] sm:$0xf]
        %v1176 = vld [vmem:[#allocation2 + $0x64] sm:$0xf]
        %v1177 = vld [vmem:[#allocation2 + $0x68] sm:$0x1]
        %v1178 = vld [vmem:[#allocation2 + $0x6c] sm:$0xf]
        %v1179 = vld [vmem:[#allocation2 + $0x70] sm:$0xf]
        %v1180 = vld [vmem:[#allocation2 + $0x74] sm:$0x1]
        %vm1181 = vsmask.f32 3328
        %vm1182 = vsmask.f32 7440
        %vm1183 = vmor %vm1181, %vm1182
        %v1185 = vshrl.u32 %v1151, 16
        %v1187 = vrot.slane %v1185, 4
        %v1188 = vshll.u32 %v1151, 16
        %v1190 = vrot.slane %v1188, 5
        %v1191 = vor.u32 %v1187, %v1190
        %v1192 = vrot.slane %v1191, 4
        %v1194 = vshll.u32 %v1152, 16
        %v1196 = vrot.slane %v1194, 5
        %v1197 = vsel %vm1183, %v1192, %v1196
        %v1198 = vshrl.u32 %v1152, 16
        %v1200 = vrot.slane %v1198, 4
        %v1201 = vor.u32 %v1200, %v1196
        %v1202 = vrot.slane %v1201, 4
        %v1204 = vshll.u32 %v1153, 16
        %v1206 = vrot.slane %v1204, 5
        %v1207 = vsel %vm1183, %v1202, %v1206
        %v1209 = vshrl.u32 %v1154, 16
        %v1211 = vrot.slane %v1209, 4
        %v1212 = vshll.u32 %v1154, 16
        %v1214 = vrot.slane %v1212, 5
        %v1215 = vor.u32 %v1211, %v1214
        %v1216 = vrot.slane %v1215, 4
        %v1218 = vshll.u32 %v1155, 16
        %v1220 = vrot.slane %v1218, 5
        %v1221 = vsel %vm1183, %v1216, %v1220
        %v1222 = vshrl.u32 %v1155, 16
        %v1224 = vrot.slane %v1222, 4
        %v1225 = vor.u32 %v1224, %v1220
        %v1226 = vrot.slane %v1225, 4
        %v1228 = vshll.u32 %v1156, 16
        %v1230 = vrot.slane %v1228, 5
        %v1231 = vsel %vm1183, %v1226, %v1230
        %v1233 = vshrl.u32 %v1157, 16
        %v1235 = vrot.slane %v1233, 4
        %v1236 = vshll.u32 %v1157, 16
        %v1238 = vrot.slane %v1236, 5
        %v1239 = vor.u32 %v1235, %v1238
        %v1240 = vrot.slane %v1239, 4
        %v1242 = vshll.u32 %v1158, 16
        %v1244 = vrot.slane %v1242, 5
        %v1245 = vsel %vm1183, %v1240, %v1244
        %v1246 = vshrl.u32 %v1158, 16
        %v1248 = vrot.slane %v1246, 4
        %v1249 = vor.u32 %v1248, %v1244
        %v1250 = vrot.slane %v1249, 4
        %v1252 = vshll.u32 %v1159, 16
        %v1254 = vrot.slane %v1252, 5
        %v1255 = vsel %vm1183, %v1250, %v1254
        %v1257 = vshrl.u32 %v1160, 16
        %v1259 = vrot.slane %v1257, 4
        %v1260 = vshll.u32 %v1160, 16
        %v1262 = vrot.slane %v1260, 5
        %v1263 = vor.u32 %v1259, %v1262
        %v1264 = vrot.slane %v1263, 4
        %v1266 = vshll.u32 %v1161, 16
        %v1268 = vrot.slane %v1266, 5
        %v1269 = vsel %vm1183, %v1264, %v1268
        %v1270 = vshrl.u32 %v1161, 16
        %v1272 = vrot.slane %v1270, 4
        %v1273 = vor.u32 %v1272, %v1268
        %v1274 = vrot.slane %v1273, 4
        %v1276 = vshll.u32 %v1162, 16
        %v1278 = vrot.slane %v1276, 5
        %v1279 = vsel %vm1183, %v1274, %v1278
        %v1281 = vshrl.u32 %v1163, 16
        %v1283 = vrot.slane %v1281, 4
        %v1284 = vshll.u32 %v1163, 16
        %v1286 = vrot.slane %v1284, 5
        %v1287 = vor.u32 %v1283, %v1286
        %v1288 = vrot.slane %v1287, 4
        %v1290 = vshll.u32 %v1164, 16
        %v1292 = vrot.slane %v1290, 5
        %v1293 = vsel %vm1183, %v1288, %v1292
        %v1294 = vshrl.u32 %v1164, 16
        %v1296 = vrot.slane %v1294, 4
        %v1297 = vor.u32 %v1296, %v1292
        %v1298 = vrot.slane %v1297, 4
        %v1300 = vshll.u32 %v1165, 16
        %v1302 = vrot.slane %v1300, 5
        %v1303 = vsel %vm1183, %v1298, %v1302
        %v1305 = vshrl.u32 %v1166, 16
        %v1307 = vrot.slane %v1305, 4
        %v1308 = vshll.u32 %v1166, 16
        %v1310 = vrot.slane %v1308, 5
        %v1311 = vor.u32 %v1307, %v1310
        %v1312 = vrot.slane %v1311, 4
        %v1314 = vshll.u32 %v1167, 16
        %v1316 = vrot.slane %v1314, 5
        %v1317 = vsel %vm1183, %v1312, %v1316
        %v1318 = vshrl.u32 %v1167, 16
        %v1320 = vrot.slane %v1318, 4
        %v1321 = vor.u32 %v1320, %v1316
        %v1322 = vrot.slane %v1321, 4
        %v1324 = vshll.u32 %v1168, 16
        %v1326 = vrot.slane %v1324, 5
        %v1327 = vsel %vm1183, %v1322, %v1326
        %v1329 = vshrl.u32 %v1169, 16
        %v1331 = vrot.slane %v1329, 4
        %v1332 = vshll.u32 %v1169, 16
        %v1334 = vrot.slane %v1332, 5
        %v1335 = vor.u32 %v1331, %v1334
        %v1336 = vrot.slane %v1335, 4
        %v1338 = vshll.u32 %v1170, 16
        %v1340 = vrot.slane %v1338, 5
        %v1341 = vsel %vm1183, %v1336, %v1340
        %v1342 = vshrl.u32 %v1170, 16
        %v1344 = vrot.slane %v1342, 4
        %v1345 = vor.u32 %v1344, %v1340
        %v1346 = vrot.slane %v1345, 4
        %v1348 = vshll.u32 %v1171, 16
        %v1350 = vrot.slane %v1348, 5
        %v1351 = vsel %vm1183, %v1346, %v1350
        %v1353 = vshrl.u32 %v1172, 16
        %v1355 = vrot.slane %v1353, 4
        %v1356 = vshll.u32 %v1172, 16
        %v1358 = vrot.slane %v1356, 5
        %v1359 = vor.u32 %v1355, %v1358
        %v1360 = vrot.slane %v1359, 4
        %v1362 = vshll.u32 %v1173, 16
        %v1364 = vrot.slane %v1362, 5
        %v1365 = vsel %vm1183, %v1360, %v1364
        %v1366 = vshrl.u32 %v1173, 16
        %v1368 = vrot.slane %v1366, 4
        %v1369 = vor.u32 %v1368, %v1364
        %v1370 = vrot.slane %v1369, 4
        %v1372 = vshll.u32 %v1174, 16
        %v1374 = vrot.slane %v1372, 5
        %v1375 = vsel %vm1183, %v1370, %v1374
        %v1377 = vshrl.u32 %v1175, 16
        %v1379 = vrot.slane %v1377, 4
        %v1380 = vshll.u32 %v1175, 16
        %v1382 = vrot.slane %v1380, 5
        %v1383 = vor.u32 %v1379, %v1382
        %v1384 = vrot.slane %v1383, 4
        %v1386 = vshll.u32 %v1176, 16
        %v1388 = vrot.slane %v1386, 5
        %v1389 = vsel %vm1183, %v1384, %v1388
        %v1390 = vshrl.u32 %v1176, 16
        %v1392 = vrot.slane %v1390, 4
        %v1393 = vor.u32 %v1392, %v1388
        %v1394 = vrot.slane %v1393, 4
        %v1396 = vshll.u32 %v1177, 16
        %v1398 = vrot.slane %v1396, 5
        %v1399 = vsel %vm1183, %v1394, %v1398
        %v1401 = vshrl.u32 %v1178, 16
        %v1403 = vrot.slane %v1401, 4
        %v1404 = vshll.u32 %v1178, 16
        %v1406 = vrot.slane %v1404, 5
        %v1407 = vor.u32 %v1403, %v1406
        %v1408 = vrot.slane %v1407, 4
        %v1410 = vshll.u32 %v1179, 16
        %v1412 = vrot.slane %v1410, 5
        %v1413 = vsel %vm1183, %v1408, %v1412
        %v1414 = vshrl.u32 %v1179, 16
        %v1416 = vrot.slane %v1414, 4
        %v1417 = vor.u32 %v1416, %v1412
        %v1418 = vrot.slane %v1417, 4
        %v1420 = vshll.u32 %v1180, 16
        %v1422 = vrot.slane %v1420, 5
        %v1423 = vsel %vm1183, %v1418, %v1422
        %s1424 = scalar_lea.vmem [#allocation9], 64
        %v1425 = vld [vmem:[%s1424] sm:$0xf]
        %v1426 = vld [vmem:[%s1424 + $0x4] sm:$0xf]
        %v1427 = vld [vmem:[%s1424 + $0x8] sm:$0xf]
        %v1428 = vld [vmem:[%s1424 + $0xc] sm:$0xf]
        %v1429 = vld [vmem:[%s1424 + $0x10] sm:$0xf]
        %v1430 = vld [vmem:[%s1424 + $0x14] sm:$0xf]
        %v1431 = vld [vmem:[%s1424 + $0x18] sm:$0xf]
        %v1432 = vld [vmem:[%s1424 + $0x1c] sm:$0xf]
        %v1433 = vld [vmem:[%s1424 + $0x20] sm:$0xf]
        %v1434 = vld [vmem:[%s1424 + $0x24] sm:$0xf]
        %v1435 = vld [vmem:[%s1424 + $0x28] sm:$0xf]
        %v1436 = vld [vmem:[%s1424 + $0x2c] sm:$0xf]
        %v1437 = vld [vmem:[%s1424 + $0x30] sm:$0xf]
        %v1438 = vld [vmem:[%s1424 + $0x34] sm:$0xf]
        %v1439 = vld [vmem:[%s1424 + $0x38] sm:$0xf]
        %v1440 = vld [vmem:[%s1424 + $0x3c] sm:$0xf]
        %v1441 = vunpack.c.l.b16 %v1197
        %v1442 = vunpack.c.l.b16 %v1207
        %v1443 = vunpack.c.l.b16 %v1221
        %v1444 = vunpack.c.l.b16 %v1231
        %v1445 = vunpack.c.l.b16 %v1245
        %v1446 = vunpack.c.l.b16 %v1255
        %v1447 = vunpack.c.l.b16 %v1269
        %v1448 = vunpack.c.l.b16 %v1279
        %v1449 = vunpack.c.l.b16 %v1293
        %v1450 = vunpack.c.l.b16 %v1303
        %v1451 = vunpack.c.l.b16 %v1317
        %v1452 = vunpack.c.l.b16 %v1327
        %v1453 = vunpack.c.l.b16 %v1341
        %v1454 = vunpack.c.l.b16 %v1351
        %v1455 = vunpack.c.l.b16 %v1365
        %v1456 = vunpack.c.l.b16 %v1375
        %v1457 = vunpack.c.l.b16 %v1389
        %v1458 = vunpack.c.l.b16 %v1399
        %v1459 = vunpack.c.l.b16 %v1413
        %v1460 = vunpack.c.l.b16 %v1423
        %v1461 = vpack.c.b16 %v1442, %v1441
        %v1462 = vpack.c.b16 %v1444, %v1443
        %v1463 = vpack.c.b16 %v1446, %v1445
        %v1464 = vpack.c.b16 %v1448, %v1447
        %v1465 = vpack.c.b16 %v1450, %v1449
        %v1466 = vpack.c.b16 %v1452, %v1451
        %v1467 = vpack.c.b16 %v1454, %v1453
        %v1468 = vpack.c.b16 %v1456, %v1455
        %v1469 = vpack.c.b16 %v1458, %v1457
        %v1470 = vpack.c.b16 %v1460, %v1459
        %v1497 = vunpack.c.l.b16 %v1425
        %v1498 = vunpack.c.l.b16 %v1426
        %v1499 = vunpack.c.l.b16 %v1427
        %v1500 = vunpack.c.l.b16 %v1428
        %v1501 = vunpack.c.l.b16 %v1429
        %v1502 = vunpack.c.l.b16 %v1430
        %v1503 = vunpack.c.l.b16 %v1431
        %v1504 = vunpack.c.l.b16 %v1432
        %v1505 = vunpack.c.l.b16 %v1433
        %v1506 = vunpack.c.l.b16 %v1434
        %v1507 = vunpack.c.l.b16 %v1435
        %v1508 = vunpack.c.l.b16 %v1436
        %v1509 = vunpack.c.l.b16 %v1437
        %v1510 = vunpack.c.l.b16 %v1438
        %v1511 = vunpack.c.l.b16 %v1439
        %v1512 = vunpack.c.l.b16 %v1440
        %v1513 = vpack.c.b16 %v1498, %v1497
        %v1514 = vpack.c.b16 %v1500, %v1499
        %v1515 = vpack.c.b16 %v1502, %v1501
        %v1516 = vpack.c.b16 %v1504, %v1503
        %v1517 = vpack.c.b16 %v1506, %v1505
        %v1518 = vpack.c.b16 %v1508, %v1507
        %v1519 = vpack.c.b16 %v1510, %v1509
        %v1520 = vpack.c.b16 %v1512, %v1511
        %1529 = vmatprep.subr.bf16.mxu0 0
        %1530 = vmatpush1.bf16.msra.mxu0 %v1520
        %1531 = vmatprep.subr.bf16.mxu0 0
        %1532 = vmatpush1.bf16.msra.mxu0 %v1519
        %1533 = vmatprep.subr.bf16.mxu0 0
        %1534 = vmatpush1.bf16.msra.mxu0 %v1518
        %1535 = vmatprep.subr.bf16.mxu0 0
        %1536 = vmatpush1.bf16.msra.mxu0 %v1517
        %1537 = vmatprep.subr.bf16.mxu0 0
        %1538 = vmatpush1.bf16.msra.mxu0 %v1516
        %1539 = vmatprep.subr.bf16.mxu0 0
        %1540 = vmatpush1.bf16.msra.mxu0 %v1515
        %1541 = vmatprep.subr.bf16.mxu0 0
        %1542 = vmatpush1.bf16.msra.mxu0 %v1514
        %1543 = vmatprep.subr.bf16.mxu0 0
        %1544 = vmatpush1.bf16.msra.mxu0 %v1513
        %1545 = vmatprep.subr.bf16.mxu0 0
        %1546 = vmatpush2.bf16.msra.mxu0 0
        %1547 = vmatprep.subr.bf16.mxu0 0
        %1548 = vmatpush2.bf16.msra.mxu0 0
        %1549 = vmatprep.subr.bf16.mxu0 0
        %1550 = vmatpush2.bf16.msra.mxu0 0
        %1551 = vmatprep.subr.bf16.mxu0 0
        %1552 = vmatpush2.bf16.msra.mxu0 0
        %1553 = vmatprep.subr.bf16.mxu0 0
        %1554 = vmatpush2.bf16.msra.mxu0 0
        %1555 = vmatprep.subr.bf16.mxu0 0
        %1556 = vmatpush2.bf16.msra.mxu0 0
        %1557 = vmatprep.subr.bf16.mxu0 0
        %1558 = vmatpush2.bf16.msra.mxu0 0
        %1559 = vmatprep.subr.bf16.mxu0 0
        %1560 = vmatpush2.bf16.msra.mxu0 0
        %1561 = vmatprep.mubr.bf16.mxu0 0
        %1562 = vmatmul.mubr.bf16.gmra.mxu0 %v1461
        %v1563 = vpop.f32.mrf.mxu0
        %v1564 = vadd.f32 0.0, %v1563
        %v1565 = vpop.f32.mrf.mxu0
        %v1566 = vpop.f32.mrf.mxu0
        %v1567 = vadd.f32 0.0, %v1566
        %v1568 = vpop.f32.mrf.mxu0
        %1569 = vmatprep.mubr.bf16.mxu0 0
        %1570 = vmatmul.mubr.bf16.gmra.mxu0 %v1462
        %v1571 = vpop.f32.mrf.mxu0
        %v1572 = vadd.f32 0.0, %v1571
        %v1573 = vpop.f32.mrf.mxu0
        %v1574 = vpop.f32.mrf.mxu0
        %v1575 = vadd.f32 0.0, %v1574
        %v1576 = vpop.f32.mrf.mxu0
        %1577 = vmatprep.mubr.bf16.mxu0 0
        %1578 = vmatmul.mubr.bf16.gmra.mxu0 %v1463
        %v1579 = vpop.f32.mrf.mxu0
        %v1580 = vadd.f32 0.0, %v1579
        %v1581 = vpop.f32.mrf.mxu0
        %v1582 = vpop.f32.mrf.mxu0
        %v1583 = vadd.f32 0.0, %v1582
        %v1584 = vpop.f32.mrf.mxu0
        %1585 = vmatprep.mubr.bf16.mxu0 0
        %1586 = vmatmul.mubr.bf16.gmra.mxu0 %v1464
        %v1587 = vpop.f32.mrf.mxu0
        %v1588 = vadd.f32 0.0, %v1587
        %v1589 = vpop.f32.mrf.mxu0
        %v1590 = vpop.f32.mrf.mxu0
        %v1591 = vadd.f32 0.0, %v1590
        %v1592 = vpop.f32.mrf.mxu0
        %1593 = vmatprep.mubr.bf16.mxu0 0
        %1594 = vmatmul.mubr.bf16.gmra.mxu0 %v1465
        %v1595 = vpop.f32.mrf.mxu0
        %v1596 = vadd.f32 0.0, %v1595
        %v1597 = vpop.f32.mrf.mxu0
        %v1598 = vpop.f32.mrf.mxu0
        %v1599 = vadd.f32 0.0, %v1598
        %v1600 = vpop.f32.mrf.mxu0
        %1601 = vmatprep.mubr.bf16.mxu0 0
        %1602 = vmatmul.mubr.bf16.gmra.mxu0 %v1466
        %v1603 = vpop.f32.mrf.mxu0
        %v1604 = vadd.f32 0.0, %v1603
        %v1605 = vpop.f32.mrf.mxu0
        %v1606 = vpop.f32.mrf.mxu0
        %v1607 = vadd.f32 0.0, %v1606
        %v1608 = vpop.f32.mrf.mxu0
        %1609 = vmatprep.mubr.bf16.mxu0 0
        %1610 = vmatmul.mubr.bf16.gmra.mxu0 %v1467
        %v1611 = vpop.f32.mrf.mxu0
        %v1612 = vadd.f32 0.0, %v1611
        %v1613 = vpop.f32.mrf.mxu0
        %v1614 = vpop.f32.mrf.mxu0
        %v1615 = vadd.f32 0.0, %v1614
        %v1616 = vpop.f32.mrf.mxu0
        %1617 = vmatprep.mubr.bf16.mxu0 0
        %1618 = vmatmul.mubr.bf16.gmra.mxu0 %v1468
        %v1619 = vpop.f32.mrf.mxu0
        %v1620 = vadd.f32 0.0, %v1619
        %v1621 = vpop.f32.mrf.mxu0
        %v1622 = vpop.f32.mrf.mxu0
        %v1623 = vadd.f32 0.0, %v1622
        %v1624 = vpop.f32.mrf.mxu0
        %1625 = vmatprep.mubr.bf16.mxu0 0
        %1626 = vmatmul.mubr.bf16.gmra.mxu0 %v1469
        %v1627 = vpop.f32.mrf.mxu0
        %v1628 = vadd.f32 0.0, %v1627
        %v1629 = vpop.f32.mrf.mxu0
        %v1630 = vpop.f32.mrf.mxu0
        %v1631 = vadd.f32 0.0, %v1630
        %v1632 = vpop.f32.mrf.mxu0
        %1633 = vmatprep.mubr.bf16.mxu0 0
        %1634 = vmatmul.mubr.bf16.gmra.mxu0 %v1470
        %v1635 = vpop.f32.mrf.mxu0
        %v1636 = vadd.f32 0.0, %v1635
        %v1637 = vpop.f32.mrf.mxu0
        %v1638 = vpop.f32.mrf.mxu0
        %v1639 = vadd.f32 0.0, %v1638
        %v1640 = vpop.f32.mrf.mxu0
        %1641 = vdwg.mxu0
        %v1642 = vld [vmem:[#allocation4] sm:$0xff]
        %v1643 = vld [vmem:[#allocation4 + $0x8] sm:$0xff]
        %v1644 = vld [vmem:[#allocation4 + $0x10] sm:$0xff]
        %v1645 = vld [vmem:[#allocation4 + $0x18] sm:$0xff]
        %v1646 = vld [vmem:[#allocation4 + $0x20] sm:$0xff]
        %v1647 = vld [vmem:[#allocation4 + $0x28] sm:$0xff]
        %v1648 = vld [vmem:[#allocation4 + $0x30] sm:$0xff]
        %v1649 = vld [vmem:[#allocation4 + $0x38] sm:$0xff]
        %v1650 = vld [vmem:[#allocation4 + $0x40] sm:$0xff]
        %v1651 = vld [vmem:[#allocation4 + $0x48] sm:$0xff]
        %v1652 = vld [vmem:[#allocation4 + $0x50] sm:$0xff]
        %v1653 = vld [vmem:[#allocation4 + $0x58] sm:$0xff]
        %v1654 = vld [vmem:[#allocation4 + $0x60] sm:$0xff]
        %v1655 = vld [vmem:[#allocation4 + $0x68] sm:$0xff]
        %v1656 = vld [vmem:[#allocation4 + $0x70] sm:$0xff]
        %v1657 = vld [vmem:[#allocation4 + $0x78] sm:$0xff]
        %v1658 = vld [vmem:[#allocation4 + $0x80] sm:$0xff]
        %v1659 = vld [vmem:[#allocation4 + $0x88] sm:$0xff]
        %v1660 = vld [vmem:[#allocation4 + $0x90] sm:$0xff]
        %v1661 = vld [vmem:[#allocation4 + $0x98] sm:$0xff]
        %v1662 = vadd.f32 %v1642, %v1564
        %v1663 = vadd.f32 %v1643, %v1567
        %v1664 = vadd.f32 %v1644, %v1572
        %v1665 = vadd.f32 %v1645, %v1575
        %v1666 = vadd.f32 %v1646, %v1580
        %v1667 = vadd.f32 %v1647, %v1583
        %v1668 = vadd.f32 %v1648, %v1588
        %v1669 = vadd.f32 %v1649, %v1591
        %v1670 = vadd.f32 %v1650, %v1596
        %v1671 = vadd.f32 %v1651, %v1599
        %v1672 = vadd.f32 %v1652, %v1604
        %v1673 = vadd.f32 %v1653, %v1607
        %v1674 = vadd.f32 %v1654, %v1612
        %v1675 = vadd.f32 %v1655, %v1615
        %v1676 = vadd.f32 %v1656, %v1620
        %v1677 = vadd.f32 %v1657, %v1623
        %v1678 = vadd.f32 %v1658, %v1628
        %v1679 = vadd.f32 %v1659, %v1631
        %v1680 = vadd.f32 %v1660, %v1636
        %v1681 = vadd.f32 %v1661, %v1639
        %1682 = vst [vmem:[#allocation4] sm:$0xff] %v1662
        %1683 = vst [vmem:[#allocation4 + $0x8] sm:$0xff] %v1663
        %1684 = vst [vmem:[#allocation4 + $0x10] sm:$0xff] %v1664
        %1685 = vst [vmem:[#allocation4 + $0x18] sm:$0xff] %v1665
        %1686 = vst [vmem:[#allocation4 + $0x20] sm:$0xff] %v1666
        %1687 = vst [vmem:[#allocation4 + $0x28] sm:$0xff] %v1667
        %1688 = vst [vmem:[#allocation4 + $0x30] sm:$0xff] %v1668
        %1689 = vst [vmem:[#allocation4 + $0x38] sm:$0xff] %v1669
        %1690 = vst [vmem:[#allocation4 + $0x40] sm:$0xff] %v1670
        %1691 = vst [vmem:[#allocation4 + $0x48] sm:$0xff] %v1671
        %1692 = vst [vmem:[#allocation4 + $0x50] sm:$0xff] %v1672
        %1693 = vst [vmem:[#allocation4 + $0x58] sm:$0xff] %v1673
        %1694 = vst [vmem:[#allocation4 + $0x60] sm:$0xff] %v1674
        %1695 = vst [vmem:[#allocation4 + $0x68] sm:$0xff] %v1675
        %1696 = vst [vmem:[#allocation4 + $0x70] sm:$0xff] %v1676
        %1697 = vst [vmem:[#allocation4 + $0x78] sm:$0xff] %v1677
        %1698 = vst [vmem:[#allocation4 + $0x80] sm:$0xff] %v1678
        %1699 = vst [vmem:[#allocation4 + $0x88] sm:$0xff] %v1679
        %1700 = vst [vmem:[#allocation4 + $0x90] sm:$0xff] %v1680
        %1701 = vst [vmem:[#allocation4 + $0x98] sm:$0xff] %v1681
        %v1702 = vld [vmem:[#allocation2] sm:$0xe]
        %v1703 = vld [vmem:[#allocation2 + $0x4] sm:$0xf]
        %v1704 = vld [vmem:[#allocation2 + $0x8] sm:$0x1]
        %v1705 = vld [vmem:[#allocation2 + $0xc] sm:$0xe]
        %v1706 = vld [vmem:[#allocation2 + $0x10] sm:$0xf]
        %v1707 = vld [vmem:[#allocation2 + $0x14] sm:$0x1]
        %v1708 = vld [vmem:[#allocation2 + $0x18] sm:$0xe]
        %v1709 = vld [vmem:[#allocation2 + $0x1c] sm:$0xf]
        %v1710 = vld [vmem:[#allocation2 + $0x20] sm:$0x1]
        %v1711 = vld [vmem:[#allocation2 + $0x24] sm:$0xe]
        %v1712 = vld [vmem:[#allocation2 + $0x28] sm:$0xf]
        %v1713 = vld [vmem:[#allocation2 + $0x2c] sm:$0x1]
        %v1714 = vld [vmem:[#allocation2 + $0x30] sm:$0xe]
        %v1715 = vld [vmem:[#allocation2 + $0x34] sm:$0xf]
        %v1716 = vld [vmem:[#allocation2 + $0x38] sm:$0x1]
        %v1717 = vld [vmem:[#allocation2 + $0x3c] sm:$0xe]
        %v1718 = vld [vmem:[#allocation2 + $0x40] sm:$0xf]
        %v1719 = vld [vmem:[#allocation2 + $0x44] sm:$0x1]
        %v1720 = vld [vmem:[#allocation2 + $0x48] sm:$0xe]
        %v1721 = vld [vmem:[#allocation2 + $0x4c] sm:$0xf]
        %v1722 = vld [vmem:[#allocation2 + $0x50] sm:$0x1]
        %v1723 = vld [vmem:[#allocation2 + $0x54] sm:$0xe]
        %v1724 = vld [vmem:[#allocation2 + $0x58] sm:$0xf]
        %v1725 = vld [vmem:[#allocation2 + $0x5c] sm:$0x1]
        %v1726 = vld [vmem:[#allocation2 + $0x60] sm:$0xe]
        %v1727 = vld [vmem:[#allocation2 + $0x64] sm:$0xf]
        %v1728 = vld [vmem:[#allocation2 + $0x68] sm:$0x1]
        %v1729 = vld [vmem:[#allocation2 + $0x6c] sm:$0xe]
        %v1730 = vld [vmem:[#allocation2 + $0x70] sm:$0xf]
        %v1731 = vld [vmem:[#allocation2 + $0x74] sm:$0x1]
        %vm1762 = vcmask 1042432
        %vm1763 = vcmask 1046532
        %vm1764 = vmor %vm1762, %vm1763
        %v1765 = vrot.slane %v1702, 5
        %v1766 = vrot.slane %v1765, 4
        %v1767 = vrot.slane %v1703, 5
        %v1768 = vsel %vm1764, %v1766, %v1767
        %v1769 = vrot.slane %v1767, 4
        %v1770 = vrot.slane %v1704, 5
        %v1771 = vsel %vm1764, %v1769, %v1770
        %v1772 = vrot.slane %v1705, 5
        %v1773 = vrot.slane %v1772, 4
        %v1774 = vrot.slane %v1706, 5
        %v1775 = vsel %vm1764, %v1773, %v1774
        %v1776 = vrot.slane %v1774, 4
        %v1777 = vrot.slane %v1707, 5
        %v1778 = vsel %vm1764, %v1776, %v1777
        %v1779 = vrot.slane %v1708, 5
        %v1780 = vrot.slane %v1779, 4
        %v1781 = vrot.slane %v1709, 5
        %v1782 = vsel %vm1764, %v1780, %v1781
        %v1783 = vrot.slane %v1781, 4
        %v1784 = vrot.slane %v1710, 5
        %v1785 = vsel %vm1764, %v1783, %v1784
        %v1786 = vrot.slane %v1711, 5
        %v1787 = vrot.slane %v1786, 4
        %v1788 = vrot.slane %v1712, 5
        %v1789 = vsel %vm1764, %v1787, %v1788
        %v1790 = vrot.slane %v1788, 4
        %v1791 = vrot.slane %v1713, 5
        %v1792 = vsel %vm1764, %v1790, %v1791
        %v1793 = vrot.slane %v1714, 5
        %v1794 = vrot.slane %v1793, 4
        %v1795 = vrot.slane %v1715, 5
        %v1796 = vsel %vm1764, %v1794, %v1795
        %v1797 = vrot.slane %v1795, 4
        %v1798 = vrot.slane %v1716, 5
        %v1799 = vsel %vm1764, %v1797, %v1798
        %v1800 = vrot.slane %v1717, 5
        %v1801 = vrot.slane %v1800, 4
        %v1802 = vrot.slane %v1718, 5
        %v1803 = vsel %vm1764, %v1801, %v1802
        %v1804 = vrot.slane %v1802, 4
        %v1805 = vrot.slane %v1719, 5
        %v1806 = vsel %vm1764, %v1804, %v1805
        %v1807 = vrot.slane %v1720, 5
        %v1808 = vrot.slane %v1807, 4
        %v1809 = vrot.slane %v1721, 5
        %v1810 = vsel %vm1764, %v1808, %v1809
        %v1811 = vrot.slane %v1809, 4
        %v1812 = vrot.slane %v1722, 5
        %v1813 = vsel %vm1764, %v1811, %v1812
        %v1814 = vrot.slane %v1723, 5
        %v1815 = vrot.slane %v1814, 4
        %v1816 = vrot.slane %v1724, 5
        %v1817 = vsel %vm1764, %v1815, %v1816
        %v1818 = vrot.slane %v1816, 4
        %v1819 = vrot.slane %v1725, 5
        %v1820 = vsel %vm1764, %v1818, %v1819
        %v1821 = vrot.slane %v1726, 5
        %v1822 = vrot.slane %v1821, 4
        %v1823 = vrot.slane %v1727, 5
        %v1824 = vsel %vm1764, %v1822, %v1823
        %v1825 = vrot.slane %v1823, 4
        %v1826 = vrot.slane %v1728, 5
        %v1827 = vsel %vm1764, %v1825, %v1826
        %v1828 = vrot.slane %v1729, 5
        %v1829 = vrot.slane %v1828, 4
        %v1830 = vrot.slane %v1730, 5
        %v1831 = vsel %vm1764, %v1829, %v1830
        %v1832 = vrot.slane %v1830, 4
        %v1833 = vrot.slane %v1731, 5
        %v1834 = vsel %vm1764, %v1832, %v1833
        %s1835 = scalar_lea.vmem [#allocation9], 128
        %v1836 = vld [vmem:[%s1835] sm:$0xf]
        %v1837 = vld [vmem:[%s1835 + $0x4] sm:$0xf]
        %v1838 = vld [vmem:[%s1835 + $0x8] sm:$0xf]
        %v1839 = vld [vmem:[%s1835 + $0xc] sm:$0xf]
        %v1840 = vld [vmem:[%s1835 + $0x10] sm:$0xf]
        %v1841 = vld [vmem:[%s1835 + $0x14] sm:$0xf]
        %v1842 = vld [vmem:[%s1835 + $0x18] sm:$0xf]
        %v1843 = vld [vmem:[%s1835 + $0x1c] sm:$0xf]
        %v1844 = vld [vmem:[%s1835 + $0x20] sm:$0xf]
        %v1845 = vld [vmem:[%s1835 + $0x24] sm:$0xf]
        %v1846 = vld [vmem:[%s1835 + $0x28] sm:$0xf]
        %v1847 = vld [vmem:[%s1835 + $0x2c] sm:$0xf]
        %v1848 = vld [vmem:[%s1835 + $0x30] sm:$0xf]
        %v1849 = vld [vmem:[%s1835 + $0x34] sm:$0xf]
        %v1850 = vld [vmem:[%s1835 + $0x38] sm:$0xf]
        %v1851 = vld [vmem:[%s1835 + $0x3c] sm:$0xf]
        %v1852 = vunpack.c.l.b16 %v1768
        %v1853 = vunpack.c.l.b16 %v1771
        %v1854 = vunpack.c.l.b16 %v1775
        %v1855 = vunpack.c.l.b16 %v1778
        %v1856 = vunpack.c.l.b16 %v1782
        %v1857 = vunpack.c.l.b16 %v1785
        %v1858 = vunpack.c.l.b16 %v1789
        %v1859 = vunpack.c.l.b16 %v1792
        %v1860 = vunpack.c.l.b16 %v1796
        %v1861 = vunpack.c.l.b16 %v1799
        %v1862 = vunpack.c.l.b16 %v1803
        %v1863 = vunpack.c.l.b16 %v1806
        %v1864 = vunpack.c.l.b16 %v1810
        %v1865 = vunpack.c.l.b16 %v1813
        %v1866 = vunpack.c.l.b16 %v1817
        %v1867 = vunpack.c.l.b16 %v1820
        %v1868 = vunpack.c.l.b16 %v1824
        %v1869 = vunpack.c.l.b16 %v1827
        %v1870 = vunpack.c.l.b16 %v1831
        %v1871 = vunpack.c.l.b16 %v1834
        %v1872 = vpack.c.b16 %v1853, %v1852
        %v1873 = vpack.c.b16 %v1855, %v1854
        %v1874 = vpack.c.b16 %v1857, %v1856
        %v1875 = vpack.c.b16 %v1859, %v1858
        %v1876 = vpack.c.b16 %v1861, %v1860
        %v1877 = vpack.c.b16 %v1863, %v1862
        %v1878 = vpack.c.b16 %v1865, %v1864
        %v1879 = vpack.c.b16 %v1867, %v1866
        %v1880 = vpack.c.b16 %v1869, %v1868
        %v1881 = vpack.c.b16 %v1871, %v1870
        %v1908 = vunpack.c.l.b16 %v1836
        %v1909 = vunpack.c.l.b16 %v1837
        %v1910 = vunpack.c.l.b16 %v1838
        %v1911 = vunpack.c.l.b16 %v1839
        %v1912 = vunpack.c.l.b16 %v1840
        %v1913 = vunpack.c.l.b16 %v1841
        %v1914 = vunpack.c.l.b16 %v1842
        %v1915 = vunpack.c.l.b16 %v1843
        %v1916 = vunpack.c.l.b16 %v1844
        %v1917 = vunpack.c.l.b16 %v1845
        %v1918 = vunpack.c.l.b16 %v1846
        %v1919 = vunpack.c.l.b16 %v1847
        %v1920 = vunpack.c.l.b16 %v1848
        %v1921 = vunpack.c.l.b16 %v1849
        %v1922 = vunpack.c.l.b16 %v1850
        %v1923 = vunpack.c.l.b16 %v1851
        %v1924 = vpack.c.b16 %v1909, %v1908
        %v1925 = vpack.c.b16 %v1911, %v1910
        %v1926 = vpack.c.b16 %v1913, %v1912
        %v1927 = vpack.c.b16 %v1915, %v1914
        %v1928 = vpack.c.b16 %v1917, %v1916
        %v1929 = vpack.c.b16 %v1919, %v1918
        %v1930 = vpack.c.b16 %v1921, %v1920
        %v1931 = vpack.c.b16 %v1923, %v1922
        %1940 = vmatprep.subr.bf16.mxu0 0
        %1941 = vmatpush1.bf16.msra.mxu0 %v1931
        %1942 = vmatprep.subr.bf16.mxu0 0
        %1943 = vmatpush1.bf16.msra.mxu0 %v1930
        %1944 = vmatprep.subr.bf16.mxu0 0
        %1945 = vmatpush1.bf16.msra.mxu0 %v1929
        %1946 = vmatprep.subr.bf16.mxu0 0
        %1947 = vmatpush1.bf16.msra.mxu0 %v1928
        %1948 = vmatprep.subr.bf16.mxu0 0
        %1949 = vmatpush1.bf16.msra.mxu0 %v1927
        %1950 = vmatprep.subr.bf16.mxu0 0
        %1951 = vmatpush1.bf16.msra.mxu0 %v1926
        %1952 = vmatprep.subr.bf16.mxu0 0
        %1953 = vmatpush1.bf16.msra.mxu0 %v1925
        %1954 = vmatprep.subr.bf16.mxu0 0
        %1955 = vmatpush1.bf16.msra.mxu0 %v1924
        %1956 = vmatprep.subr.bf16.mxu0 0
        %1957 = vmatpush2.bf16.msra.mxu0 0
        %1958 = vmatprep.subr.bf16.mxu0 0
        %1959 = vmatpush2.bf16.msra.mxu0 0
        %1960 = vmatprep.subr.bf16.mxu0 0
        %1961 = vmatpush2.bf16.msra.mxu0 0
        %1962 = vmatprep.subr.bf16.mxu0 0
        %1963 = vmatpush2.bf16.msra.mxu0 0
        %1964 = vmatprep.subr.bf16.mxu0 0
        %1965 = vmatpush2.bf16.msra.mxu0 0
        %1966 = vmatprep.subr.bf16.mxu0 0
        %1967 = vmatpush2.bf16.msra.mxu0 0
        %1968 = vmatprep.subr.bf16.mxu0 0
        %1969 = vmatpush2.bf16.msra.mxu0 0
        %1970 = vmatprep.subr.bf16.mxu0 0
        %1971 = vmatpush2.bf16.msra.mxu0 0
        %1972 = vmatprep.mubr.bf16.mxu0 0
        %1973 = vmatmul.mubr.bf16.gmra.mxu0 %v1872
        %v1974 = vpop.f32.mrf.mxu0
        %v1975 = vadd.f32 0.0, %v1974
        %v1976 = vpop.f32.mrf.mxu0
        %v1977 = vpop.f32.mrf.mxu0
        %v1978 = vadd.f32 0.0, %v1977
        %v1979 = vpop.f32.mrf.mxu0
        %1980 = vmatprep.mubr.bf16.mxu0 0
        %1981 = vmatmul.mubr.bf16.gmra.mxu0 %v1873
        %v1982 = vpop.f32.mrf.mxu0
        %v1983 = vadd.f32 0.0, %v1982
        %v1984 = vpop.f32.mrf.mxu0
        %v1985 = vpop.f32.mrf.mxu0
        %v1986 = vadd.f32 0.0, %v1985
        %v1987 = vpop.f32.mrf.mxu0
        %1988 = vmatprep.mubr.bf16.mxu0 0
        %1989 = vmatmul.mubr.bf16.gmra.mxu0 %v1874
        %v1990 = vpop.f32.mrf.mxu0
        %v1991 = vadd.f32 0.0, %v1990
        %v1992 = vpop.f32.mrf.mxu0
        %v1993 = vpop.f32.mrf.mxu0
        %v1994 = vadd.f32 0.0, %v1993
        %v1995 = vpop.f32.mrf.mxu0
        %1996 = vmatprep.mubr.bf16.mxu0 0
        %1997 = vmatmul.mubr.bf16.gmra.mxu0 %v1875
        %v1998 = vpop.f32.mrf.mxu0
        %v1999 = vadd.f32 0.0, %v1998
        %v2000 = vpop.f32.mrf.mxu0
        %v2001 = vpop.f32.mrf.mxu0
        %v2002 = vadd.f32 0.0, %v2001
        %v2003 = vpop.f32.mrf.mxu0
        %2004 = vmatprep.mubr.bf16.mxu0 0
        %2005 = vmatmul.mubr.bf16.gmra.mxu0 %v1876
        %v2006 = vpop.f32.mrf.mxu0
        %v2007 = vadd.f32 0.0, %v2006
        %v2008 = vpop.f32.mrf.mxu0
        %v2009 = vpop.f32.mrf.mxu0
        %v2010 = vadd.f32 0.0, %v2009
        %v2011 = vpop.f32.mrf.mxu0
        %2012 = vmatprep.mubr.bf16.mxu0 0
        %2013 = vmatmul.mubr.bf16.gmra.mxu0 %v1877
        %v2014 = vpop.f32.mrf.mxu0
        %v2015 = vadd.f32 0.0, %v2014
        %v2016 = vpop.f32.mrf.mxu0
        %v2017 = vpop.f32.mrf.mxu0
        %v2018 = vadd.f32 0.0, %v2017
        %v2019 = vpop.f32.mrf.mxu0
        %2020 = vmatprep.mubr.bf16.mxu0 0
        %2021 = vmatmul.mubr.bf16.gmra.mxu0 %v1878
        %v2022 = vpop.f32.mrf.mxu0
        %v2023 = vadd.f32 0.0, %v2022
        %v2024 = vpop.f32.mrf.mxu0
        %v2025 = vpop.f32.mrf.mxu0
        %v2026 = vadd.f32 0.0, %v2025
        %v2027 = vpop.f32.mrf.mxu0
        %2028 = vmatprep.mubr.bf16.mxu0 0
        %2029 = vmatmul.mubr.bf16.gmra.mxu0 %v1879
        %v2030 = vpop.f32.mrf.mxu0
        %v2031 = vadd.f32 0.0, %v2030
        %v2032 = vpop.f32.mrf.mxu0
        %v2033 = vpop.f32.mrf.mxu0
        %v2034 = vadd.f32 0.0, %v2033
        %v2035 = vpop.f32.mrf.mxu0
        %2036 = vmatprep.mubr.bf16.mxu0 0
        %2037 = vmatmul.mubr.bf16.gmra.mxu0 %v1880
        %v2038 = vpop.f32.mrf.mxu0
        %v2039 = vadd.f32 0.0, %v2038
        %v2040 = vpop.f32.mrf.mxu0
        %v2041 = vpop.f32.mrf.mxu0
        %v2042 = vadd.f32 0.0, %v2041
        %v2043 = vpop.f32.mrf.mxu0
        %2044 = vmatprep.mubr.bf16.mxu0 0
        %2045 = vmatmul.mubr.bf16.gmra.mxu0 %v1881
        %v2046 = vpop.f32.mrf.mxu0
        %v2047 = vadd.f32 0.0, %v2046
        %v2048 = vpop.f32.mrf.mxu0
        %v2049 = vpop.f32.mrf.mxu0
        %v2050 = vadd.f32 0.0, %v2049
        %v2051 = vpop.f32.mrf.mxu0
        %2052 = vdwg.mxu0
        %v2053 = vld [vmem:[#allocation4] sm:$0xff]
        %v2054 = vld [vmem:[#allocation4 + $0x8] sm:$0xff]
        %v2055 = vld [vmem:[#allocation4 + $0x10] sm:$0xff]
        %v2056 = vld [vmem:[#allocation4 + $0x18] sm:$0xff]
        %v2057 = vld [vmem:[#allocation4 + $0x20] sm:$0xff]
        %v2058 = vld [vmem:[#allocation4 + $0x28] sm:$0xff]
        %v2059 = vld [vmem:[#allocation4 + $0x30] sm:$0xff]
        %v2060 = vld [vmem:[#allocation4 + $0x38] sm:$0xff]
        %v2061 = vld [vmem:[#allocation4 + $0x40] sm:$0xff]
        %v2062 = vld [vmem:[#allocation4 + $0x48] sm:$0xff]
        %v2063 = vld [vmem:[#allocation4 + $0x50] sm:$0xff]
        %v2064 = vld [vmem:[#allocation4 + $0x58] sm:$0xff]
        %v2065 = vld [vmem:[#allocation4 + $0x60] sm:$0xff]
        %v2066 = vld [vmem:[#allocation4 + $0x68] sm:$0xff]
        %v2067 = vld [vmem:[#allocation4 + $0x70] sm:$0xff]
        %v2068 = vld [vmem:[#allocation4 + $0x78] sm:$0xff]
        %v2069 = vld [vmem:[#allocation4 + $0x80] sm:$0xff]
        %v2070 = vld [vmem:[#allocation4 + $0x88] sm:$0xff]
        %v2071 = vld [vmem:[#allocation4 + $0x90] sm:$0xff]
        %v2072 = vld [vmem:[#allocation4 + $0x98] sm:$0xff]
        %v2073 = vadd.f32 %v2053, %v1975
        %v2074 = vadd.f32 %v2054, %v1978
        %v2075 = vadd.f32 %v2055, %v1983
        %v2076 = vadd.f32 %v2056, %v1986
        %v2077 = vadd.f32 %v2057, %v1991
        %v2078 = vadd.f32 %v2058, %v1994
        %v2079 = vadd.f32 %v2059, %v1999
        %v2080 = vadd.f32 %v2060, %v2002
        %v2081 = vadd.f32 %v2061, %v2007
        %v2082 = vadd.f32 %v2062, %v2010
        %v2083 = vadd.f32 %v2063, %v2015
        %v2084 = vadd.f32 %v2064, %v2018
        %v2085 = vadd.f32 %v2065, %v2023
        %v2086 = vadd.f32 %v2066, %v2026
        %v2087 = vadd.f32 %v2067, %v2031
        %v2088 = vadd.f32 %v2068, %v2034
        %v2089 = vadd.f32 %v2069, %v2039
        %v2090 = vadd.f32 %v2070, %v2042
        %v2091 = vadd.f32 %v2071, %v2047
        %v2092 = vadd.f32 %v2072, %v2050
        %2093 = vst [vmem:[#allocation4] sm:$0xff] %v2073
        %2094 = vst [vmem:[#allocation4 + $0x8] sm:$0xff] %v2074
        %2095 = vst [vmem:[#allocation4 + $0x10] sm:$0xff] %v2075
        %2096 = vst [vmem:[#allocation4 + $0x18] sm:$0xff] %v2076
        %2097 = vst [vmem:[#allocation4 + $0x20] sm:$0xff] %v2077
        %2098 = vst [vmem:[#allocation4 + $0x28] sm:$0xff] %v2078
        %2099 = vst [vmem:[#allocation4 + $0x30] sm:$0xff] %v2079
        %2100 = vst [vmem:[#allocation4 + $0x38] sm:$0xff] %v2080
        %2101 = vst [vmem:[#allocation4 + $0x40] sm:$0xff] %v2081
        %2102 = vst [vmem:[#allocation4 + $0x48] sm:$0xff] %v2082
        %2103 = vst [vmem:[#allocation4 + $0x50] sm:$0xff] %v2083
        %2104 = vst [vmem:[#allocation4 + $0x58] sm:$0xff] %v2084
        %2105 = vst [vmem:[#allocation4 + $0x60] sm:$0xff] %v2085
        %2106 = vst [vmem:[#allocation4 + $0x68] sm:$0xff] %v2086
        %2107 = vst [vmem:[#allocation4 + $0x70] sm:$0xff] %v2087
        %2108 = vst [vmem:[#allocation4 + $0x78] sm:$0xff] %v2088
        %2109 = vst [vmem:[#allocation4 + $0x80] sm:$0xff] %v2089
        %2110 = vst [vmem:[#allocation4 + $0x88] sm:$0xff] %v2090
        %2111 = vst [vmem:[#allocation4 + $0x90] sm:$0xff] %v2091
        %2112 = vst [vmem:[#allocation4 + $0x98] sm:$0xff] %v2092
        %s2113 = scalar_lea.vmem [#allocation2], 12
        %v2114 = vld [vmem:[%s2113] sm:$0xf]
        %v2115 = vld [vmem:[%s2113 + $0x4] sm:$0xf]
        %v2116 = vld [vmem:[%s2113 + $0xc] sm:$0xf]
        %v2117 = vld [vmem:[%s2113 + $0x10] sm:$0xf]
        %v2118 = vld [vmem:[%s2113 + $0x18] sm:$0xf]
        %v2119 = vld [vmem:[%s2113 + $0x1c] sm:$0xf]
        %v2120 = vld [vmem:[%s2113 + $0x24] sm:$0xf]
        %v2121 = vld [vmem:[%s2113 + $0x28] sm:$0xf]
        %v2122 = vld [vmem:[%s2113 + $0x30] sm:$0xf]
        %v2123 = vld [vmem:[%s2113 + $0x34] sm:$0xf]
        %v2124 = vld [vmem:[%s2113 + $0x3c] sm:$0xf]
        %v2125 = vld [vmem:[%s2113 + $0x40] sm:$0xf]
        %v2126 = vld [vmem:[%s2113 + $0x48] sm:$0xf]
        %v2127 = vld [vmem:[%s2113 + $0x4c] sm:$0xf]
        %v2128 = vld [vmem:[%s2113 + $0x54] sm:$0xf]
        %v2129 = vld [vmem:[%s2113 + $0x58] sm:$0xf]
        %v2130 = vld [vmem:[%s2113 + $0x60] sm:$0xf]
        %v2131 = vld [vmem:[%s2113 + $0x64] sm:$0xf]
        %v2132 = vld [vmem:[%s2113 + $0x6c] sm:$0xf]
        %v2133 = vld [vmem:[%s2113 + $0x70] sm:$0xf]
        %s2134 = scalar_lea.vmem [#allocation9], 192
        %v2135 = vld [vmem:[%s2134] sm:$0xf]
        %v2136 = vld [vmem:[%s2134 + $0x4] sm:$0xf]
        %v2137 = vld [vmem:[%s2134 + $0x8] sm:$0xf]
        %v2138 = vld [vmem:[%s2134 + $0xc] sm:$0xf]
        %v2139 = vld [vmem:[%s2134 + $0x10] sm:$0xf]
        %v2140 = vld [vmem:[%s2134 + $0x14] sm:$0xf]
        %v2141 = vld [vmem:[%s2134 + $0x18] sm:$0xf]
        %v2142 = vld [vmem:[%s2134 + $0x1c] sm:$0xf]
        %v2143 = vld [vmem:[%s2134 + $0x20] sm:$0xf]
        %v2144 = vld [vmem:[%s2134 + $0x24] sm:$0xf]
        %v2145 = vld [vmem:[%s2134 + $0x28] sm:$0xf]
        %v2146 = vld [vmem:[%s2134 + $0x2c] sm:$0xf]
        %v2147 = vld [vmem:[%s2134 + $0x30] sm:$0xf]
        %v2148 = vld [vmem:[%s2134 + $0x34] sm:$0xf]
        %v2149 = vld [vmem:[%s2134 + $0x38] sm:$0xf]
        %v2150 = vld [vmem:[%s2134 + $0x3c] sm:$0xf]
        %v2171 = vunpack.c.l.b16 %v2114
        %v2172 = vunpack.c.l.b16 %v2115
        %v2173 = vunpack.c.l.b16 %v2116
        %v2174 = vunpack.c.l.b16 %v2117
        %v2175 = vunpack.c.l.b16 %v2118
        %v2176 = vunpack.c.l.b16 %v2119
        %v2177 = vunpack.c.l.b16 %v2120
        %v2178 = vunpack.c.l.b16 %v2121
        %v2179 = vunpack.c.l.b16 %v2122
        %v2180 = vunpack.c.l.b16 %v2123
        %v2181 = vunpack.c.l.b16 %v2124
        %v2182 = vunpack.c.l.b16 %v2125
        %v2183 = vunpack.c.l.b16 %v2126
        %v2184 = vunpack.c.l.b16 %v2127
        %v2185 = vunpack.c.l.b16 %v2128
        %v2186 = vunpack.c.l.b16 %v2129
        %v2187 = vunpack.c.l.b16 %v2130
        %v2188 = vunpack.c.l.b16 %v2131
        %v2189 = vunpack.c.l.b16 %v2132
        %v2190 = vunpack.c.l.b16 %v2133
        %v2191 = vpack.c.b16 %v2172, %v2171
        %v2192 = vpack.c.b16 %v2174, %v2173
        %v2193 = vpack.c.b16 %v2176, %v2175
        %v2194 = vpack.c.b16 %v2178, %v2177
        %v2195 = vpack.c.b16 %v2180, %v2179
        %v2196 = vpack.c.b16 %v2182, %v2181
        %v2197 = vpack.c.b16 %v2184, %v2183
        %v2198 = vpack.c.b16 %v2186, %v2185
        %v2199 = vpack.c.b16 %v2188, %v2187
        %v2200 = vpack.c.b16 %v2190, %v2189
        %v2227 = vunpack.c.l.b16 %v2135
        %v2228 = vunpack.c.l.b16 %v2136
        %v2229 = vunpack.c.l.b16 %v2137
        %v2230 = vunpack.c.l.b16 %v2138
        %v2231 = vunpack.c.l.b16 %v2139
        %v2232 = vunpack.c.l.b16 %v2140
        %v2233 = vunpack.c.l.b16 %v2141
        %v2234 = vunpack.c.l.b16 %v2142
        %v2235 = vunpack.c.l.b16 %v2143
        %v2236 = vunpack.c.l.b16 %v2144
        %v2237 = vunpack.c.l.b16 %v2145
        %v2238 = vunpack.c.l.b16 %v2146
        %v2239 = vunpack.c.l.b16 %v2147
        %v2240 = vunpack.c.l.b16 %v2148
        %v2241 = vunpack.c.l.b16 %v2149
        %v2242 = vunpack.c.l.b16 %v2150
        %v2243 = vpack.c.b16 %v2228, %v2227
        %v2244 = vpack.c.b16 %v2230, %v2229
        %v2245 = vpack.c.b16 %v2232, %v2231
        %v2246 = vpack.c.b16 %v2234, %v2233
        %v2247 = vpack.c.b16 %v2236, %v2235
        %v2248 = vpack.c.b16 %v2238, %v2237
        %v2249 = vpack.c.b16 %v2240, %v2239
        %v2250 = vpack.c.b16 %v2242, %v2241
        %2259 = vmatprep.subr.bf16.mxu0 0
        %2260 = vmatpush1.bf16.msra.mxu0 %v2250
        %2261 = vmatprep.subr.bf16.mxu0 0
        %2262 = vmatpush1.bf16.msra.mxu0 %v2249
        %2263 = vmatprep.subr.bf16.mxu0 0
        %2264 = vmatpush1.bf16.msra.mxu0 %v2248
        %2265 = vmatprep.subr.bf16.mxu0 0
        %2266 = vmatpush1.bf16.msra.mxu0 %v2247
        %2267 = vmatprep.subr.bf16.mxu0 0
        %2268 = vmatpush1.bf16.msra.mxu0 %v2246
        %2269 = vmatprep.subr.bf16.mxu0 0
        %2270 = vmatpush1.bf16.msra.mxu0 %v2245
        %2271 = vmatprep.subr.bf16.mxu0 0
        %2272 = vmatpush1.bf16.msra.mxu0 %v2244
        %2273 = vmatprep.subr.bf16.mxu0 0
        %2274 = vmatpush1.bf16.msra.mxu0 %v2243
        %2275 = vmatprep.subr.bf16.mxu0 0
        %2276 = vmatpush2.bf16.msra.mxu0 0
        %2277 = vmatprep.subr.bf16.mxu0 0
        %2278 = vmatpush2.bf16.msra.mxu0 0
        %2279 = vmatprep.subr.bf16.mxu0 0
        %2280 = vmatpush2.bf16.msra.mxu0 0
        %2281 = vmatprep.subr.bf16.mxu0 0
        %2282 = vmatpush2.bf16.msra.mxu0 0
        %2283 = vmatprep.subr.bf16.mxu0 0
        %2284 = vmatpush2.bf16.msra.mxu0 0
        %2285 = vmatprep.subr.bf16.mxu0 0
        %2286 = vmatpush2.bf16.msra.mxu0 0
        %2287 = vmatprep.subr.bf16.mxu0 0
        %2288 = vmatpush2.bf16.msra.mxu0 0
        %2289 = vmatprep.subr.bf16.mxu0 0
        %2290 = vmatpush2.bf16.msra.mxu0 0
        %2291 = vmatprep.mubr.bf16.mxu0 0
        %2292 = vmatmul.mubr.bf16.gmra.mxu0 %v2191
        %v2293 = vpop.f32.mrf.mxu0
        %v2294 = vadd.f32 0.0, %v2293
        %v2295 = vpop.f32.mrf.mxu0
        %v2296 = vpop.f32.mrf.mxu0
        %v2297 = vadd.f32 0.0, %v2296
        %v2298 = vpop.f32.mrf.mxu0
        %2299 = vmatprep.mubr.bf16.mxu0 0
        %2300 = vmatmul.mubr.bf16.gmra.mxu0 %v2192
        %v2301 = vpop.f32.mrf.mxu0
        %v2302 = vadd.f32 0.0, %v2301
        %v2303 = vpop.f32.mrf.mxu0
        %v2304 = vpop.f32.mrf.mxu0
        %v2305 = vadd.f32 0.0, %v2304
        %v2306 = vpop.f32.mrf.mxu0
        %2307 = vmatprep.mubr.bf16.mxu0 0
        %2308 = vmatmul.mubr.bf16.gmra.mxu0 %v2193
        %v2309 = vpop.f32.mrf.mxu0
        %v2310 = vadd.f32 0.0, %v2309
        %v2311 = vpop.f32.mrf.mxu0
        %v2312 = vpop.f32.mrf.mxu0
        %v2313 = vadd.f32 0.0, %v2312
        %v2314 = vpop.f32.mrf.mxu0
        %2315 = vmatprep.mubr.bf16.mxu0 0
        %2316 = vmatmul.mubr.bf16.gmra.mxu0 %v2194
        %v2317 = vpop.f32.mrf.mxu0
        %v2318 = vadd.f32 0.0, %v2317
        %v2319 = vpop.f32.mrf.mxu0
        %v2320 = vpop.f32.mrf.mxu0
        %v2321 = vadd.f32 0.0, %v2320
        %v2322 = vpop.f32.mrf.mxu0
        %2323 = vmatprep.mubr.bf16.mxu0 0
        %2324 = vmatmul.mubr.bf16.gmra.mxu0 %v2195
        %v2325 = vpop.f32.mrf.mxu0
        %v2326 = vadd.f32 0.0, %v2325
        %v2327 = vpop.f32.mrf.mxu0
        %v2328 = vpop.f32.mrf.mxu0
        %v2329 = vadd.f32 0.0, %v2328
        %v2330 = vpop.f32.mrf.mxu0
        %2331 = vmatprep.mubr.bf16.mxu0 0
        %2332 = vmatmul.mubr.bf16.gmra.mxu0 %v2196
        %v2333 = vpop.f32.mrf.mxu0
        %v2334 = vadd.f32 0.0, %v2333
        %v2335 = vpop.f32.mrf.mxu0
        %v2336 = vpop.f32.mrf.mxu0
        %v2337 = vadd.f32 0.0, %v2336
        %v2338 = vpop.f32.mrf.mxu0
        %2339 = vmatprep.mubr.bf16.mxu0 0
        %2340 = vmatmul.mubr.bf16.gmra.mxu0 %v2197
        %v2341 = vpop.f32.mrf.mxu0
        %v2342 = vadd.f32 0.0, %v2341
        %v2343 = vpop.f32.mrf.mxu0
        %v2344 = vpop.f32.mrf.mxu0
        %v2345 = vadd.f32 0.0, %v2344
        %v2346 = vpop.f32.mrf.mxu0
        %2347 = vmatprep.mubr.bf16.mxu0 0
        %2348 = vmatmul.mubr.bf16.gmra.mxu0 %v2198
        %v2349 = vpop.f32.mrf.mxu0
        %v2350 = vadd.f32 0.0, %v2349
        %v2351 = vpop.f32.mrf.mxu0
        %v2352 = vpop.f32.mrf.mxu0
        %v2353 = vadd.f32 0.0, %v2352
        %v2354 = vpop.f32.mrf.mxu0
        %2355 = vmatprep.mubr.bf16.mxu0 0
        %2356 = vmatmul.mubr.bf16.gmra.mxu0 %v2199
        %v2357 = vpop.f32.mrf.mxu0
        %v2358 = vadd.f32 0.0, %v2357
        %v2359 = vpop.f32.mrf.mxu0
        %v2360 = vpop.f32.mrf.mxu0
        %v2361 = vadd.f32 0.0, %v2360
        %v2362 = vpop.f32.mrf.mxu0
        %2363 = vmatprep.mubr.bf16.mxu0 0
        %2364 = vmatmul.mubr.bf16.gmra.mxu0 %v2200
        %v2365 = vpop.f32.mrf.mxu0
        %v2366 = vadd.f32 0.0, %v2365
        %v2367 = vpop.f32.mrf.mxu0
        %v2368 = vpop.f32.mrf.mxu0
        %v2369 = vadd.f32 0.0, %v2368
        %v2370 = vpop.f32.mrf.mxu0
        %2371 = vdwg.mxu0
        %v2372 = vld [vmem:[#allocation4] sm:$0xff]
        %v2373 = vld [vmem:[#allocation4 + $0x8] sm:$0xff]
        %v2374 = vld [vmem:[#allocation4 + $0x10] sm:$0xff]
        %v2375 = vld [vmem:[#allocation4 + $0x18] sm:$0xff]
        %v2376 = vld [vmem:[#allocation4 + $0x20] sm:$0xff]
        %v2377 = vld [vmem:[#allocation4 + $0x28] sm:$0xff]
        %v2378 = vld [vmem:[#allocation4 + $0x30] sm:$0xff]
        %v2379 = vld [vmem:[#allocation4 + $0x38] sm:$0xff]
        %v2380 = vld [vmem:[#allocation4 + $0x40] sm:$0xff]
        %v2381 = vld [vmem:[#allocation4 + $0x48] sm:$0xff]
        %v2382 = vld [vmem:[#allocation4 + $0x50] sm:$0xff]
        %v2383 = vld [vmem:[#allocation4 + $0x58] sm:$0xff]
        %v2384 = vld [vmem:[#allocation4 + $0x60] sm:$0xff]
        %v2385 = vld [vmem:[#allocation4 + $0x68] sm:$0xff]
        %v2386 = vld [vmem:[#allocation4 + $0x70] sm:$0xff]
        %v2387 = vld [vmem:[#allocation4 + $0x78] sm:$0xff]
        %v2388 = vld [vmem:[#allocation4 + $0x80] sm:$0xff]
        %v2389 = vld [vmem:[#allocation4 + $0x88] sm:$0xff]
        %v2390 = vld [vmem:[#allocation4 + $0x90] sm:$0xff]
        %v2391 = vld [vmem:[#allocation4 + $0x98] sm:$0xff]
        %v2392 = vadd.f32 %v2372, %v2294
        %v2393 = vadd.f32 %v2373, %v2297
        %v2394 = vadd.f32 %v2374, %v2302
        %v2395 = vadd.f32 %v2375, %v2305
        %v2396 = vadd.f32 %v2376, %v2310
        %v2397 = vadd.f32 %v2377, %v2313
        %v2398 = vadd.f32 %v2378, %v2318
        %v2399 = vadd.f32 %v2379, %v2321
        %v2400 = vadd.f32 %v2380, %v2326
        %v2401 = vadd.f32 %v2381, %v2329
        %v2402 = vadd.f32 %v2382, %v2334
        %v2403 = vadd.f32 %v2383, %v2337
        %v2404 = vadd.f32 %v2384, %v2342
        %v2405 = vadd.f32 %v2385, %v2345
        %v2406 = vadd.f32 %v2386, %v2350
        %v2407 = vadd.f32 %v2387, %v2353
        %v2408 = vadd.f32 %v2388, %v2358
        %v2409 = vadd.f32 %v2389, %v2361
        %v2410 = vadd.f32 %v2390, %v2366
        %v2411 = vadd.f32 %v2391, %v2369
        %2412 = vst [vmem:[#allocation4] sm:$0xff] %v2392
        %2413 = vst [vmem:[#allocation4 + $0x8] sm:$0xff] %v2393
        %2414 = vst [vmem:[#allocation4 + $0x10] sm:$0xff] %v2394
        %2415 = vst [vmem:[#allocation4 + $0x18] sm:$0xff] %v2395
        %2416 = vst [vmem:[#allocation4 + $0x20] sm:$0xff] %v2396
        %2417 = vst [vmem:[#allocation4 + $0x28] sm:$0xff] %v2397
        %2418 = vst [vmem:[#allocation4 + $0x30] sm:$0xff] %v2398
        %2419 = vst [vmem:[#allocation4 + $0x38] sm:$0xff] %v2399
        %2420 = vst [vmem:[#allocation4 + $0x40] sm:$0xff] %v2400
        %2421 = vst [vmem:[#allocation4 + $0x48] sm:$0xff] %v2401
        %2422 = vst [vmem:[#allocation4 + $0x50] sm:$0xff] %v2402
        %2423 = vst [vmem:[#allocation4 + $0x58] sm:$0xff] %v2403
        %2424 = vst [vmem:[#allocation4 + $0x60] sm:$0xff] %v2404
        %2425 = vst [vmem:[#allocation4 + $0x68] sm:$0xff] %v2405
        %2426 = vst [vmem:[#allocation4 + $0x70] sm:$0xff] %v2406
        %2427 = vst [vmem:[#allocation4 + $0x78] sm:$0xff] %v2407
        %2428 = vst [vmem:[#allocation4 + $0x80] sm:$0xff] %v2408
        %2429 = vst [vmem:[#allocation4 + $0x88] sm:$0xff] %v2409
        %2430 = vst [vmem:[#allocation4 + $0x90] sm:$0xff] %v2410
        %2431 = vst [vmem:[#allocation4 + $0x98] sm:$0xff] %v2411
        %v2432 = vld [vmem:[%s2113] sm:$0xf]
        %v2433 = vld [vmem:[%s2113 + $0x4] sm:$0xf]
        %v2434 = vld [vmem:[%s2113 + $0x8] sm:$0x1]
        %v2435 = vld [vmem:[%s2113 + $0xc] sm:$0xf]
        %v2436 = vld [vmem:[%s2113 + $0x10] sm:$0xf]
        %v2437 = vld [vmem:[%s2113 + $0x14] sm:$0x1]
        %v2438 = vld [vmem:[%s2113 + $0x18] sm:$0xf]
        %v2439 = vld [vmem:[%s2113 + $0x1c] sm:$0xf]
        %v2440 = vld [vmem:[%s2113 + $0x20] sm:$0x1]
        %v2441 = vld [vmem:[%s2113 + $0x24] sm:$0xf]
        %v2442 = vld [vmem:[%s2113 + $0x28] sm:$0xf]
        %v2443 = vld [vmem:[%s2113 + $0x2c] sm:$0x1]
        %v2444 = vld [vmem:[%s2113 + $0x30] sm:$0xf]
        %v2445 = vld [vmem:[%s2113 + $0x34] sm:$0xf]
        %v2446 = vld [vmem:[%s2113 + $0x38] sm:$0x1]
        %v2447 = vld [vmem:[%s2113 + $0x3c] sm:$0xf]
        %v2448 = vld [vmem:[%s2113 + $0x40] sm:$0xf]
        %v2449 = vld [vmem:[%s2113 + $0x44] sm:$0x1]
        %v2450 = vld [vmem:[%s2113 + $0x48] sm:$0xf]
        %v2451 = vld [vmem:[%s2113 + $0x4c] sm:$0xf]
        %v2452 = vld [vmem:[%s2113 + $0x50] sm:$0x1]
        %v2453 = vld [vmem:[%s2113 + $0x54] sm:$0xf]
        %v2454 = vld [vmem:[%s2113 + $0x58] sm:$0xf]
        %v2455 = vld [vmem:[%s2113 + $0x5c] sm:$0x1]
        %v2456 = vld [vmem:[%s2113 + $0x60] sm:$0xf]
        %v2457 = vld [vmem:[%s2113 + $0x64] sm:$0xf]
        %v2458 = vld [vmem:[%s2113 + $0x68] sm:$0x1]
        %v2459 = vld [vmem:[%s2113 + $0x6c] sm:$0xf]
        %v2460 = vld [vmem:[%s2113 + $0x70] sm:$0xf]
        %v2461 = vld [vmem:[%s2113 + $0x74] sm:$0x1]
        %v2463 = vshrl.u32 %v2432, 16
        %v2465 = vrot.slane %v2463, 4
        %v2466 = vshll.u32 %v2432, 16
        %v2468 = vrot.slane %v2466, 5
        %v2469 = vor.u32 %v2465, %v2468
        %v2470 = vrot.slane %v2469, 4
        %v2472 = vshll.u32 %v2433, 16
        %v2474 = vrot.slane %v2472, 5
        %v2475 = vsel %vm1183, %v2470, %v2474
        %v2476 = vshrl.u32 %v2433, 16
        %v2478 = vrot.slane %v2476, 4
        %v2479 = vor.u32 %v2478, %v2474
        %v2480 = vrot.slane %v2479, 4
        %v2482 = vshll.u32 %v2434, 16
        %v2484 = vrot.slane %v2482, 5
        %v2485 = vsel %vm1183, %v2480, %v2484
        %v2487 = vshrl.u32 %v2435, 16
        %v2489 = vrot.slane %v2487, 4
        %v2490 = vshll.u32 %v2435, 16
        %v2492 = vrot.slane %v2490, 5
        %v2493 = vor.u32 %v2489, %v2492
        %v2494 = vrot.slane %v2493, 4
        %v2496 = vshll.u32 %v2436, 16
        %v2498 = vrot.slane %v2496, 5
        %v2499 = vsel %vm1183, %v2494, %v2498
        %v2500 = vshrl.u32 %v2436, 16
        %v2502 = vrot.slane %v2500, 4
        %v2503 = vor.u32 %v2502, %v2498
        %v2504 = vrot.slane %v2503, 4
        %v2506 = vshll.u32 %v2437, 16
        %v2508 = vrot.slane %v2506, 5
        %v2509 = vsel %vm1183, %v2504, %v2508
        %v2511 = vshrl.u32 %v2438, 16
        %v2513 = vrot.slane %v2511, 4
        %v2514 = vshll.u32 %v2438, 16
        %v2516 = vrot.slane %v2514, 5
        %v2517 = vor.u32 %v2513, %v2516
        %v2518 = vrot.slane %v2517, 4
        %v2520 = vshll.u32 %v2439, 16
        %v2522 = vrot.slane %v2520, 5
        %v2523 = vsel %vm1183, %v2518, %v2522
        %v2524 = vshrl.u32 %v2439, 16
        %v2526 = vrot.slane %v2524, 4
        %v2527 = vor.u32 %v2526, %v2522
        %v2528 = vrot.slane %v2527, 4
        %v2530 = vshll.u32 %v2440, 16
        %v2532 = vrot.slane %v2530, 5
        %v2533 = vsel %vm1183, %v2528, %v2532
        %v2535 = vshrl.u32 %v2441, 16
        %v2537 = vrot.slane %v2535, 4
        %v2538 = vshll.u32 %v2441, 16
        %v2540 = vrot.slane %v2538, 5
        %v2541 = vor.u32 %v2537, %v2540
        %v2542 = vrot.slane %v2541, 4
        %v2544 = vshll.u32 %v2442, 16
        %v2546 = vrot.slane %v2544, 5
        %v2547 = vsel %vm1183, %v2542, %v2546
        %v2548 = vshrl.u32 %v2442, 16
        %v2550 = vrot.slane %v2548, 4
        %v2551 = vor.u32 %v2550, %v2546
        %v2552 = vrot.slane %v2551, 4
        %v2554 = vshll.u32 %v2443, 16
        %v2556 = vrot.slane %v2554, 5
        %v2557 = vsel %vm1183, %v2552, %v2556
        %v2559 = vshrl.u32 %v2444, 16
        %v2561 = vrot.slane %v2559, 4
        %v2562 = vshll.u32 %v2444, 16
        %v2564 = vrot.slane %v2562, 5
        %v2565 = vor.u32 %v2561, %v2564
        %v2566 = vrot.slane %v2565, 4
        %v2568 = vshll.u32 %v2445, 16
        %v2570 = vrot.slane %v2568, 5
        %v2571 = vsel %vm1183, %v2566, %v2570
        %v2572 = vshrl.u32 %v2445, 16
        %v2574 = vrot.slane %v2572, 4
        %v2575 = vor.u32 %v2574, %v2570
        %v2576 = vrot.slane %v2575, 4
        %v2578 = vshll.u32 %v2446, 16
        %v2580 = vrot.slane %v2578, 5
        %v2581 = vsel %vm1183, %v2576, %v2580
        %v2583 = vshrl.u32 %v2447, 16
        %v2585 = vrot.slane %v2583, 4
        %v2586 = vshll.u32 %v2447, 16
        %v2588 = vrot.slane %v2586, 5
        %v2589 = vor.u32 %v2585, %v2588
        %v2590 = vrot.slane %v2589, 4
        %v2592 = vshll.u32 %v2448, 16
        %v2594 = vrot.slane %v2592, 5
        %v2595 = vsel %vm1183, %v2590, %v2594
        %v2596 = vshrl.u32 %v2448, 16
        %v2598 = vrot.slane %v2596, 4
        %v2599 = vor.u32 %v2598, %v2594
        %v2600 = vrot.slane %v2599, 4
        %v2602 = vshll.u32 %v2449, 16
        %v2604 = vrot.slane %v2602, 5
        %v2605 = vsel %vm1183, %v2600, %v2604
        %v2607 = vshrl.u32 %v2450, 16
        %v2609 = vrot.slane %v2607, 4
        %v2610 = vshll.u32 %v2450, 16
        %v2612 = vrot.slane %v2610, 5
        %v2613 = vor.u32 %v2609, %v2612
        %v2614 = vrot.slane %v2613, 4
        %v2616 = vshll.u32 %v2451, 16
        %v2618 = vrot.slane %v2616, 5
        %v2619 = vsel %vm1183, %v2614, %v2618
        %v2620 = vshrl.u32 %v2451, 16
        %v2622 = vrot.slane %v2620, 4
        %v2623 = vor.u32 %v2622, %v2618
        %v2624 = vrot.slane %v2623, 4
        %v2626 = vshll.u32 %v2452, 16
        %v2628 = vrot.slane %v2626, 5
        %v2629 = vsel %vm1183, %v2624, %v2628
        %v2631 = vshrl.u32 %v2453, 16
        %v2633 = vrot.slane %v2631, 4
        %v2634 = vshll.u32 %v2453, 16
        %v2636 = vrot.slane %v2634, 5
        %v2637 = vor.u32 %v2633, %v2636
        %v2638 = vrot.slane %v2637, 4
        %v2640 = vshll.u32 %v2454, 16
        %v2642 = vrot.slane %v2640, 5
        %v2643 = vsel %vm1183, %v2638, %v2642
        %v2644 = vshrl.u32 %v2454, 16
        %v2646 = vrot.slane %v2644, 4
        %v2647 = vor.u32 %v2646, %v2642
        %v2648 = vrot.slane %v2647, 4
        %v2650 = vshll.u32 %v2455, 16
        %v2652 = vrot.slane %v2650, 5
        %v2653 = vsel %vm1183, %v2648, %v2652
        %v2655 = vshrl.u32 %v2456, 16
        %v2657 = vrot.slane %v2655, 4
        %v2658 = vshll.u32 %v2456, 16
        %v2660 = vrot.slane %v2658, 5
        %v2661 = vor.u32 %v2657, %v2660
        %v2662 = vrot.slane %v2661, 4
        %v2664 = vshll.u32 %v2457, 16
        %v2666 = vrot.slane %v2664, 5
        %v2667 = vsel %vm1183, %v2662, %v2666
        %v2668 = vshrl.u32 %v2457, 16
        %v2670 = vrot.slane %v2668, 4
        %v2671 = vor.u32 %v2670, %v2666
        %v2672 = vrot.slane %v2671, 4
        %v2674 = vshll.u32 %v2458, 16
        %v2676 = vrot.slane %v2674, 5
        %v2677 = vsel %vm1183, %v2672, %v2676
        %v2679 = vshrl.u32 %v2459, 16
        %v2681 = vrot.slane %v2679, 4
        %v2682 = vshll.u32 %v2459, 16
        %v2684 = vrot.slane %v2682, 5
        %v2685 = vor.u32 %v2681, %v2684
        %v2686 = vrot.slane %v2685, 4
        %v2688 = vshll.u32 %v2460, 16
        %v2690 = vrot.slane %v2688, 5
        %v2691 = vsel %vm1183, %v2686, %v2690
        %v2692 = vshrl.u32 %v2460, 16
        %v2694 = vrot.slane %v2692, 4
        %v2695 = vor.u32 %v2694, %v2690
        %v2696 = vrot.slane %v2695, 4
        %v2698 = vshll.u32 %v2461, 16
        %v2700 = vrot.slane %v2698, 5
        %v2701 = vsel %vm1183, %v2696, %v2700
        %s2702 = scalar_lea.vmem [#allocation9], 256
        %v2703 = vld [vmem:[%s2702] sm:$0xf]
        %v2704 = vld [vmem:[%s2702 + $0x4] sm:$0xf]
        %v2705 = vld [vmem:[%s2702 + $0x8] sm:$0xf]
        %v2706 = vld [vmem:[%s2702 + $0xc] sm:$0xf]
        %v2707 = vld [vmem:[%s2702 + $0x10] sm:$0xf]
        %v2708 = vld [vmem:[%s2702 + $0x14] sm:$0xf]
        %v2709 = vld [vmem:[%s2702 + $0x18] sm:$0xf]
        %v2710 = vld [vmem:[%s2702 + $0x1c] sm:$0xf]
        %v2711 = vld [vmem:[%s2702 + $0x20] sm:$0xf]
        %v2712 = vld [vmem:[%s2702 + $0x24] sm:$0xf]
        %v2713 = vld [vmem:[%s2702 + $0x28] sm:$0xf]
        %v2714 = vld [vmem:[%s2702 + $0x2c] sm:$0xf]
        %v2715 = vld [vmem:[%s2702 + $0x30] sm:$0xf]
        %v2716 = vld [vmem:[%s2702 + $0x34] sm:$0xf]
        %v2717 = vld [vmem:[%s2702 + $0x38] sm:$0xf]
        %v2718 = vld [vmem:[%s2702 + $0x3c] sm:$0xf]
        %v2719 = vunpack.c.l.b16 %v2475
        %v2720 = vunpack.c.l.b16 %v2485
        %v2721 = vunpack.c.l.b16 %v2499
        %v2722 = vunpack.c.l.b16 %v2509
        %v2723 = vunpack.c.l.b16 %v2523
        %v2724 = vunpack.c.l.b16 %v2533
        %v2725 = vunpack.c.l.b16 %v2547
        %v2726 = vunpack.c.l.b16 %v2557
        %v2727 = vunpack.c.l.b16 %v2571
        %v2728 = vunpack.c.l.b16 %v2581
        %v2729 = vunpack.c.l.b16 %v2595
        %v2730 = vunpack.c.l.b16 %v2605
        %v2731 = vunpack.c.l.b16 %v2619
        %v2732 = vunpack.c.l.b16 %v2629
        %v2733 = vunpack.c.l.b16 %v2643
        %v2734 = vunpack.c.l.b16 %v2653
        %v2735 = vunpack.c.l.b16 %v2667
        %v2736 = vunpack.c.l.b16 %v2677
        %v2737 = vunpack.c.l.b16 %v2691
        %v2738 = vunpack.c.l.b16 %v2701
        %v2739 = vpack.c.b16 %v2720, %v2719
        %v2740 = vpack.c.b16 %v2722, %v2721
        %v2741 = vpack.c.b16 %v2724, %v2723
        %v2742 = vpack.c.b16 %v2726, %v2725
        %v2743 = vpack.c.b16 %v2728, %v2727
        %v2744 = vpack.c.b16 %v2730, %v2729
        %v2745 = vpack.c.b16 %v2732, %v2731
        %v2746 = vpack.c.b16 %v2734, %v2733
        %v2747 = vpack.c.b16 %v2736, %v2735
        %v2748 = vpack.c.b16 %v2738, %v2737
        %v2775 = vunpack.c.l.b16 %v2703
        %v2776 = vunpack.c.l.b16 %v2704
        %v2777 = vunpack.c.l.b16 %v2705
        %v2778 = vunpack.c.l.b16 %v2706
        %v2779 = vunpack.c.l.b16 %v2707
        %v2780 = vunpack.c.l.b16 %v2708
        %v2781 = vunpack.c.l.b16 %v2709
        %v2782 = vunpack.c.l.b16 %v2710
        %v2783 = vunpack.c.l.b16 %v2711
        %v2784 = vunpack.c.l.b16 %v2712
        %v2785 = vunpack.c.l.b16 %v2713
        %v2786 = vunpack.c.l.b16 %v2714
        %v2787 = vunpack.c.l.b16 %v2715
        %v2788 = vunpack.c.l.b16 %v2716
        %v2789 = vunpack.c.l.b16 %v2717
        %v2790 = vunpack.c.l.b16 %v2718
        %v2791 = vpack.c.b16 %v2776, %v2775
        %v2792 = vpack.c.b16 %v2778, %v2777
        %v2793 = vpack.c.b16 %v2780, %v2779
        %v2794 = vpack.c.b16 %v2782, %v2781
        %v2795 = vpack.c.b16 %v2784, %v2783
        %v2796 = vpack.c.b16 %v2786, %v2785
        %v2797 = vpack.c.b16 %v2788, %v2787
        %v2798 = vpack.c.b16 %v2790, %v2789
        %2807 = vmatprep.subr.bf16.mxu0 0
        %2808 = vmatpush1.bf16.msra.mxu0 %v2798
        %2809 = vmatprep.subr.bf16.mxu0 0
        %2810 = vmatpush1.bf16.msra.mxu0 %v2797
        %2811 = vmatprep.subr.bf16.mxu0 0
        %2812 = vmatpush1.bf16.msra.mxu0 %v2796
        %2813 = vmatprep.subr.bf16.mxu0 0
        %2814 = vmatpush1.bf16.msra.mxu0 %v2795
        %2815 = vmatprep.subr.bf16.mxu0 0
        %2816 = vmatpush1.bf16.msra.mxu0 %v2794
        %2817 = vmatprep.subr.bf16.mxu0 0
        %2818 = vmatpush1.bf16.msra.mxu0 %v2793
        %2819 = vmatprep.subr.bf16.mxu0 0
        %2820 = vmatpush1.bf16.msra.mxu0 %v2792
        %2821 = vmatprep.subr.bf16.mxu0 0
        %2822 = vmatpush1.bf16.msra.mxu0 %v2791
        %2823 = vmatprep.subr.bf16.mxu0 0
        %2824 = vmatpush2.bf16.msra.mxu0 0
        %2825 = vmatprep.subr.bf16.mxu0 0
        %2826 = vmatpush2.bf16.msra.mxu0 0
        %2827 = vmatprep.subr.bf16.mxu0 0
        %2828 = vmatpush2.bf16.msra.mxu0 0
        %2829 = vmatprep.subr.bf16.mxu0 0
        %2830 = vmatpush2.bf16.msra.mxu0 0
        %2831 = vmatprep.subr.bf16.mxu0 0
        %2832 = vmatpush2.bf16.msra.mxu0 0
        %2833 = vmatprep.subr.bf16.mxu0 0
        %2834 = vmatpush2.bf16.msra.mxu0 0
        %2835 = vmatprep.subr.bf16.mxu0 0
        %2836 = vmatpush2.bf16.msra.mxu0 0
        %2837 = vmatprep.subr.bf16.mxu0 0
        %2838 = vmatpush2.bf16.msra.mxu0 0
        %2839 = vmatprep.mubr.bf16.mxu0 0
        %2840 = vmatmul.mubr.bf16.gmra.mxu0 %v2739
        %v2841 = vpop.f32.mrf.mxu0
        %v2842 = vadd.f32 0.0, %v2841
        %v2843 = vpop.f32.mrf.mxu0
        %v2844 = vpop.f32.mrf.mxu0
        %v2845 = vadd.f32 0.0, %v2844
        %v2846 = vpop.f32.mrf.mxu0
        %2847 = vmatprep.mubr.bf16.mxu0 0
        %2848 = vmatmul.mubr.bf16.gmra.mxu0 %v2740
        %v2849 = vpop.f32.mrf.mxu0
        %v2850 = vadd.f32 0.0, %v2849
        %v2851 = vpop.f32.mrf.mxu0
        %v2852 = vpop.f32.mrf.mxu0
        %v2853 = vadd.f32 0.0, %v2852
        %v2854 = vpop.f32.mrf.mxu0
        %2855 = vmatprep.mubr.bf16.mxu0 0
        %2856 = vmatmul.mubr.bf16.gmra.mxu0 %v2741
        %v2857 = vpop.f32.mrf.mxu0
        %v2858 = vadd.f32 0.0, %v2857
        %v2859 = vpop.f32.mrf.mxu0
        %v2860 = vpop.f32.mrf.mxu0
        %v2861 = vadd.f32 0.0, %v2860
        %v2862 = vpop.f32.mrf.mxu0
        %2863 = vmatprep.mubr.bf16.mxu0 0
        %2864 = vmatmul.mubr.bf16.gmra.mxu0 %v2742
        %v2865 = vpop.f32.mrf.mxu0
        %v2866 = vadd.f32 0.0, %v2865
        %v2867 = vpop.f32.mrf.mxu0
        %v2868 = vpop.f32.mrf.mxu0
        %v2869 = vadd.f32 0.0, %v2868
        %v2870 = vpop.f32.mrf.mxu0
        %2871 = vmatprep.mubr.bf16.mxu0 0
        %2872 = vmatmul.mubr.bf16.gmra.mxu0 %v2743
        %v2873 = vpop.f32.mrf.mxu0
        %v2874 = vadd.f32 0.0, %v2873
        %v2875 = vpop.f32.mrf.mxu0
        %v2876 = vpop.f32.mrf.mxu0
        %v2877 = vadd.f32 0.0, %v2876
        %v2878 = vpop.f32.mrf.mxu0
        %2879 = vmatprep.mubr.bf16.mxu0 0
        %2880 = vmatmul.mubr.bf16.gmra.mxu0 %v2744
        %v2881 = vpop.f32.mrf.mxu0
        %v2882 = vadd.f32 0.0, %v2881
        %v2883 = vpop.f32.mrf.mxu0
        %v2884 = vpop.f32.mrf.mxu0
        %v2885 = vadd.f32 0.0, %v2884
        %v2886 = vpop.f32.mrf.mxu0
        %2887 = vmatprep.mubr.bf16.mxu0 0
        %2888 = vmatmul.mubr.bf16.gmra.mxu0 %v2745
        %v2889 = vpop.f32.mrf.mxu0
        %v2890 = vadd.f32 0.0, %v2889
        %v2891 = vpop.f32.mrf.mxu0
        %v2892 = vpop.f32.mrf.mxu0
        %v2893 = vadd.f32 0.0, %v2892
        %v2894 = vpop.f32.mrf.mxu0
        %2895 = vmatprep.mubr.bf16.mxu0 0
        %2896 = vmatmul.mubr.bf16.gmra.mxu0 %v2746
        %v2897 = vpop.f32.mrf.mxu0
        %v2898 = vadd.f32 0.0, %v2897
        %v2899 = vpop.f32.mrf.mxu0
        %v2900 = vpop.f32.mrf.mxu0
        %v2901 = vadd.f32 0.0, %v2900
        %v2902 = vpop.f32.mrf.mxu0
        %2903 = vmatprep.mubr.bf16.mxu0 0
        %2904 = vmatmul.mubr.bf16.gmra.mxu0 %v2747
        %v2905 = vpop.f32.mrf.mxu0
        %v2906 = vadd.f32 0.0, %v2905
        %v2907 = vpop.f32.mrf.mxu0
        %v2908 = vpop.f32.mrf.mxu0
        %v2909 = vadd.f32 0.0, %v2908
        %v2910 = vpop.f32.mrf.mxu0
        %2911 = vmatprep.mubr.bf16.mxu0 0
        %2912 = vmatmul.mubr.bf16.gmra.mxu0 %v2748
        %v2913 = vpop.f32.mrf.mxu0
        %v2914 = vadd.f32 0.0, %v2913
        %v2915 = vpop.f32.mrf.mxu0
        %v2916 = vpop.f32.mrf.mxu0
        %v2917 = vadd.f32 0.0, %v2916
        %v2918 = vpop.f32.mrf.mxu0
        %2919 = vdwg.mxu0
        %v2920 = vld [vmem:[#allocation4] sm:$0xff]
        %v2921 = vld [vmem:[#allocation4 + $0x8] sm:$0xff]
        %v2922 = vld [vmem:[#allocation4 + $0x10] sm:$0xff]
        %v2923 = vld [vmem:[#allocation4 + $0x18] sm:$0xff]
        %v2924 = vld [vmem:[#allocation4 + $0x20] sm:$0xff]
        %v2925 = vld [vmem:[#allocation4 + $0x28] sm:$0xff]
        %v2926 = vld [vmem:[#allocation4 + $0x30] sm:$0xff]
        %v2927 = vld [vmem:[#allocation4 + $0x38] sm:$0xff]
        %v2928 = vld [vmem:[#allocation4 + $0x40] sm:$0xff]
        %v2929 = vld [vmem:[#allocation4 + $0x48] sm:$0xff]
        %v2930 = vld [vmem:[#allocation4 + $0x50] sm:$0xff]
        %v2931 = vld [vmem:[#allocation4 + $0x58] sm:$0xff]
        %v2932 = vld [vmem:[#allocation4 + $0x60] sm:$0xff]
        %v2933 = vld [vmem:[#allocation4 + $0x68] sm:$0xff]
        %v2934 = vld [vmem:[#allocation4 + $0x70] sm:$0xff]
        %v2935 = vld [vmem:[#allocation4 + $0x78] sm:$0xff]
        %v2936 = vld [vmem:[#allocation4 + $0x80] sm:$0xff]
        %v2937 = vld [vmem:[#allocation4 + $0x88] sm:$0xff]
        %v2938 = vld [vmem:[#allocation4 + $0x90] sm:$0xff]
        %v2939 = vld [vmem:[#allocation4 + $0x98] sm:$0xff]
        %v2940 = vadd.f32 %v2920, %v2842
        %v2941 = vadd.f32 %v2921, %v2845
        %v2942 = vadd.f32 %v2922, %v2850
        %v2943 = vadd.f32 %v2923, %v2853
        %v2944 = vadd.f32 %v2924, %v2858
        %v2945 = vadd.f32 %v2925, %v2861
        %v2946 = vadd.f32 %v2926, %v2866
        %v2947 = vadd.f32 %v2927, %v2869
        %v2948 = vadd.f32 %v2928, %v2874
        %v2949 = vadd.f32 %v2929, %v2877
        %v2950 = vadd.f32 %v2930, %v2882
        %v2951 = vadd.f32 %v2931, %v2885
        %v2952 = vadd.f32 %v2932, %v2890
        %v2953 = vadd.f32 %v2933, %v2893
        %v2954 = vadd.f32 %v2934, %v2898
        %v2955 = vadd.f32 %v2935, %v2901
        %v2956 = vadd.f32 %v2936, %v2906
        %v2957 = vadd.f32 %v2937, %v2909
        %v2958 = vadd.f32 %v2938, %v2914
        %v2959 = vadd.f32 %v2939, %v2917
        %2960 = vst [vmem:[#allocation4] sm:$0xff] %v2940
        %2961 = vst [vmem:[#allocation4 + $0x8] sm:$0xff] %v2941
        %2962 = vst [vmem:[#allocation4 + $0x10] sm:$0xff] %v2942
        %2963 = vst [vmem:[#allocation4 + $0x18] sm:$0xff] %v2943
        %2964 = vst [vmem:[#allocation4 + $0x20] sm:$0xff] %v2944
        %2965 = vst [vmem:[#allocation4 + $0x28] sm:$0xff] %v2945
        %2966 = vst [vmem:[#allocation4 + $0x30] sm:$0xff] %v2946
        %2967 = vst [vmem:[#allocation4 + $0x38] sm:$0xff] %v2947
        %2968 = vst [vmem:[#allocation4 + $0x40] sm:$0xff] %v2948
        %2969 = vst [vmem:[#allocation4 + $0x48] sm:$0xff] %v2949
        %2970 = vst [vmem:[#allocation4 + $0x50] sm:$0xff] %v2950
        %2971 = vst [vmem:[#allocation4 + $0x58] sm:$0xff] %v2951
        %2972 = vst [vmem:[#allocation4 + $0x60] sm:$0xff] %v2952
        %2973 = vst [vmem:[#allocation4 + $0x68] sm:$0xff] %v2953
        %2974 = vst [vmem:[#allocation4 + $0x70] sm:$0xff] %v2954
        %2975 = vst [vmem:[#allocation4 + $0x78] sm:$0xff] %v2955
        %2976 = vst [vmem:[#allocation4 + $0x80] sm:$0xff] %v2956
        %2977 = vst [vmem:[#allocation4 + $0x88] sm:$0xff] %v2957
        %2978 = vst [vmem:[#allocation4 + $0x90] sm:$0xff] %v2958
        %2979 = vst [vmem:[#allocation4 + $0x98] sm:$0xff] %v2959
        %v2980 = vld [vmem:[%s2113] sm:$0xe]
        %v2981 = vld [vmem:[%s2113 + $0x4] sm:$0xf]
        %v2982 = vld [vmem:[%s2113 + $0x8] sm:$0x1]
        %v2983 = vld [vmem:[%s2113 + $0xc] sm:$0xe]
        %v2984 = vld [vmem:[%s2113 + $0x10] sm:$0xf]
        %v2985 = vld [vmem:[%s2113 + $0x14] sm:$0x1]
        %v2986 = vld [vmem:[%s2113 + $0x18] sm:$0xe]
        %v2987 = vld [vmem:[%s2113 + $0x1c] sm:$0xf]
        %v2988 = vld [vmem:[%s2113 + $0x20] sm:$0x1]
        %v2989 = vld [vmem:[%s2113 + $0x24] sm:$0xe]
        %v2990 = vld [vmem:[%s2113 + $0x28] sm:$0xf]
        %v2991 = vld [vmem:[%s2113 + $0x2c] sm:$0x1]
        %v2992 = vld [vmem:[%s2113 + $0x30] sm:$0xe]
        %v2993 = vld [vmem:[%s2113 + $0x34] sm:$0xf]
        %v2994 = vld [vmem:[%s2113 + $0x38] sm:$0x1]
        %v2995 = vld [vmem:[%s2113 + $0x3c] sm:$0xe]
        %v2996 = vld [vmem:[%s2113 + $0x40] sm:$0xf]
        %v2997 = vld [vmem:[%s2113 + $0x44] sm:$0x1]
        %v2998 = vld [vmem:[%s2113 + $0x48] sm:$0xe]
        %v2999 = vld [vmem:[%s2113 + $0x4c] sm:$0xf]
        %v3000 = vld [vmem:[%s2113 + $0x50] sm:$0x1]
        %v3001 = vld [vmem:[%s2113 + $0x54] sm:$0xe]
        %v3002 = vld [vmem:[%s2113 + $0x58] sm:$0xf]
        %v3003 = vld [vmem:[%s2113 + $0x5c] sm:$0x1]
        %v3004 = vld [vmem:[%s2113 + $0x60] sm:$0xe]
        %v3005 = vld [vmem:[%s2113 + $0x64] sm:$0xf]
        %v3006 = vld [vmem:[%s2113 + $0x68] sm:$0x1]
        %v3007 = vld [vmem:[%s2113 + $0x6c] sm:$0xe]
        %v3008 = vld [vmem:[%s2113 + $0x70] sm:$0xf]
        %v3009 = vld [vmem:[%s2113 + $0x74] sm:$0x1]
        %v3040 = vrot.slane %v2980, 5
        %v3041 = vrot.slane %v3040, 4
        %v3042 = vrot.slane %v2981, 5
        %v3043 = vsel %vm1764, %v3041, %v3042
        %v3044 = vrot.slane %v3042, 4
        %v3045 = vrot.slane %v2982, 5
        %v3046 = vsel %vm1764, %v3044, %v3045
        %v3047 = vrot.slane %v2983, 5
        %v3048 = vrot.slane %v3047, 4
        %v3049 = vrot.slane %v2984, 5
        %v3050 = vsel %vm1764, %v3048, %v3049
        %v3051 = vrot.slane %v3049, 4
        %v3052 = vrot.slane %v2985, 5
        %v3053 = vsel %vm1764, %v3051, %v3052
        %v3054 = vrot.slane %v2986, 5
        %v3055 = vrot.slane %v3054, 4
        %v3056 = vrot.slane %v2987, 5
        %v3057 = vsel %vm1764, %v3055, %v3056
        %v3058 = vrot.slane %v3056, 4
        %v3059 = vrot.slane %v2988, 5
        %v3060 = vsel %vm1764, %v3058, %v3059
        %v3061 = vrot.slane %v2989, 5
        %v3062 = vrot.slane %v3061, 4
        %v3063 = vrot.slane %v2990, 5
        %v3064 = vsel %vm1764, %v3062, %v3063
        %v3065 = vrot.slane %v3063, 4
        %v3066 = vrot.slane %v2991, 5
        %v3067 = vsel %vm1764, %v3065, %v3066
        %v3068 = vrot.slane %v2992, 5
        %v3069 = vrot.slane %v3068, 4
        %v3070 = vrot.slane %v2993, 5
        %v3071 = vsel %vm1764, %v3069, %v3070
        %v3072 = vrot.slane %v3070, 4
        %v3073 = vrot.slane %v2994, 5
        %v3074 = vsel %vm1764, %v3072, %v3073
        %v3075 = vrot.slane %v2995, 5
        %v3076 = vrot.slane %v3075, 4
        %v3077 = vrot.slane %v2996, 5
        %v3078 = vsel %vm1764, %v3076, %v3077
        %v3079 = vrot.slane %v3077, 4
        %v3080 = vrot.slane %v2997, 5
        %v3081 = vsel %vm1764, %v3079, %v3080
        %v3082 = vrot.slane %v2998, 5
        %v3083 = vrot.slane %v3082, 4
        %v3084 = vrot.slane %v2999, 5
        %v3085 = vsel %vm1764, %v3083, %v3084
        %v3086 = vrot.slane %v3084, 4
        %v3087 = vrot.slane %v3000, 5
        %v3088 = vsel %vm1764, %v3086, %v3087
        %v3089 = vrot.slane %v3001, 5
        %v3090 = vrot.slane %v3089, 4
        %v3091 = vrot.slane %v3002, 5
        %v3092 = vsel %vm1764, %v3090, %v3091
        %v3093 = vrot.slane %v3091, 4
        %v3094 = vrot.slane %v3003, 5
        %v3095 = vsel %vm1764, %v3093, %v3094
        %v3096 = vrot.slane %v3004, 5
        %v3097 = vrot.slane %v3096, 4
        %v3098 = vrot.slane %v3005, 5
        %v3099 = vsel %vm1764, %v3097, %v3098
        %v3100 = vrot.slane %v3098, 4
        %v3101 = vrot.slane %v3006, 5
        %v3102 = vsel %vm1764, %v3100, %v3101
        %v3103 = vrot.slane %v3007, 5
        %v3104 = vrot.slane %v3103, 4
        %v3105 = vrot.slane %v3008, 5
        %v3106 = vsel %vm1764, %v3104, %v3105
        %v3107 = vrot.slane %v3105, 4
        %v3108 = vrot.slane %v3009, 5
        %v3109 = vsel %vm1764, %v3107, %v3108
        %s3110 = scalar_lea.vmem [#allocation9], 320
        %v3111 = vld [vmem:[%s3110] sm:$0xf]
        %v3112 = vld [vmem:[%s3110 + $0x4] sm:$0xf]
        %v3113 = vld [vmem:[%s3110 + $0x8] sm:$0xf]
        %v3114 = vld [vmem:[%s3110 + $0xc] sm:$0xf]
        %v3115 = vld [vmem:[%s3110 + $0x10] sm:$0xf]
        %v3116 = vld [vmem:[%s3110 + $0x14] sm:$0xf]
        %v3117 = vld [vmem:[%s3110 + $0x18] sm:$0xf]
        %v3118 = vld [vmem:[%s3110 + $0x1c] sm:$0xf]
        %v3119 = vld [vmem:[%s3110 + $0x20] sm:$0xf]
        %v3120 = vld [vmem:[%s3110 + $0x24] sm:$0xf]
        %v3121 = vld [vmem:[%s3110 + $0x28] sm:$0xf]
        %v3122 = vld [vmem:[%s3110 + $0x2c] sm:$0xf]
        %v3123 = vld [vmem:[%s3110 + $0x30] sm:$0xf]
        %v3124 = vld [vmem:[%s3110 + $0x34] sm:$0xf]
        %v3125 = vld [vmem:[%s3110 + $0x38] sm:$0xf]
        %v3126 = vld [vmem:[%s3110 + $0x3c] sm:$0xf]
        %v3127 = vunpack.c.l.b16 %v3043
        %v3128 = vunpack.c.l.b16 %v3046
        %v3129 = vunpack.c.l.b16 %v3050
        %v3130 = vunpack.c.l.b16 %v3053
        %v3131 = vunpack.c.l.b16 %v3057
        %v3132 = vunpack.c.l.b16 %v3060
        %v3133 = vunpack.c.l.b16 %v3064
        %v3134 = vunpack.c.l.b16 %v3067
        %v3135 = vunpack.c.l.b16 %v3071
        %v3136 = vunpack.c.l.b16 %v3074
        %v3137 = vunpack.c.l.b16 %v3078
        %v3138 = vunpack.c.l.b16 %v3081
        %v3139 = vunpack.c.l.b16 %v3085
        %v3140 = vunpack.c.l.b16 %v3088
        %v3141 = vunpack.c.l.b16 %v3092
        %v3142 = vunpack.c.l.b16 %v3095
        %v3143 = vunpack.c.l.b16 %v3099
        %v3144 = vunpack.c.l.b16 %v3102
        %v3145 = vunpack.c.l.b16 %v3106
        %v3146 = vunpack.c.l.b16 %v3109
        %v3147 = vpack.c.b16 %v3128, %v3127
        %v3148 = vpack.c.b16 %v3130, %v3129
        %v3149 = vpack.c.b16 %v3132, %v3131
        %v3150 = vpack.c.b16 %v3134, %v3133
        %v3151 = vpack.c.b16 %v3136, %v3135
        %v3152 = vpack.c.b16 %v3138, %v3137
        %v3153 = vpack.c.b16 %v3140, %v3139
        %v3154 = vpack.c.b16 %v3142, %v3141
        %v3155 = vpack.c.b16 %v3144, %v3143
        %v3156 = vpack.c.b16 %v3146, %v3145
        %v3183 = vunpack.c.l.b16 %v3111
        %v3184 = vunpack.c.l.b16 %v3112
        %v3185 = vunpack.c.l.b16 %v3113
        %v3186 = vunpack.c.l.b16 %v3114
        %v3187 = vunpack.c.l.b16 %v3115
        %v3188 = vunpack.c.l.b16 %v3116
        %v3189 = vunpack.c.l.b16 %v3117
        %v3190 = vunpack.c.l.b16 %v3118
        %v3191 = vunpack.c.l.b16 %v3119
        %v3192 = vunpack.c.l.b16 %v3120
        %v3193 = vunpack.c.l.b16 %v3121
        %v3194 = vunpack.c.l.b16 %v3122
        %v3195 = vunpack.c.l.b16 %v3123
        %v3196 = vunpack.c.l.b16 %v3124
        %v3197 = vunpack.c.l.b16 %v3125
        %v3198 = vunpack.c.l.b16 %v3126
        %v3199 = vpack.c.b16 %v3184, %v3183
        %v3200 = vpack.c.b16 %v3186, %v3185
        %v3201 = vpack.c.b16 %v3188, %v3187
        %v3202 = vpack.c.b16 %v3190, %v3189
        %v3203 = vpack.c.b16 %v3192, %v3191
        %v3204 = vpack.c.b16 %v3194, %v3193
        %v3205 = vpack.c.b16 %v3196, %v3195
        %v3206 = vpack.c.b16 %v3198, %v3197
        %3215 = vmatprep.subr.bf16.mxu0 0
        %3216 = vmatpush1.bf16.msra.mxu0 %v3206
        %3217 = vmatprep.subr.bf16.mxu0 0
        %3218 = vmatpush1.bf16.msra.mxu0 %v3205
        %3219 = vmatprep.subr.bf16.mxu0 0
        %3220 = vmatpush1.bf16.msra.mxu0 %v3204
        %3221 = vmatprep.subr.bf16.mxu0 0
        %3222 = vmatpush1.bf16.msra.mxu0 %v3203
        %3223 = vmatprep.subr.bf16.mxu0 0
        %3224 = vmatpush1.bf16.msra.mxu0 %v3202
        %3225 = vmatprep.subr.bf16.mxu0 0
        %3226 = vmatpush1.bf16.msra.mxu0 %v3201
        %3227 = vmatprep.subr.bf16.mxu0 0
        %3228 = vmatpush1.bf16.msra.mxu0 %v3200
        %3229 = vmatprep.subr.bf16.mxu0 0
        %3230 = vmatpush1.bf16.msra.mxu0 %v3199
        %3231 = vmatprep.subr.bf16.mxu0 0
        %3232 = vmatpush2.bf16.msra.mxu0 0
        %3233 = vmatprep.subr.bf16.mxu0 0
        %3234 = vmatpush2.bf16.msra.mxu0 0
        %3235 = vmatprep.subr.bf16.mxu0 0
        %3236 = vmatpush2.bf16.msra.mxu0 0
        %3237 = vmatprep.subr.bf16.mxu0 0
        %3238 = vmatpush2.bf16.msra.mxu0 0
        %3239 = vmatprep.subr.bf16.mxu0 0
        %3240 = vmatpush2.bf16.msra.mxu0 0
        %3241 = vmatprep.subr.bf16.mxu0 0
        %3242 = vmatpush2.bf16.msra.mxu0 0
        %3243 = vmatprep.subr.bf16.mxu0 0
        %3244 = vmatpush2.bf16.msra.mxu0 0
        %3245 = vmatprep.subr.bf16.mxu0 0
        %3246 = vmatpush2.bf16.msra.mxu0 0
        %3247 = vmatprep.mubr.bf16.mxu0 0
        %3248 = vmatmul.mubr.bf16.gmra.mxu0 %v3147
        %v3249 = vpop.f32.mrf.mxu0
        %v3250 = vadd.f32 0.0, %v3249
        %v3251 = vpop.f32.mrf.mxu0
        %v3252 = vpop.f32.mrf.mxu0
        %v3253 = vadd.f32 0.0, %v3252
        %v3254 = vpop.f32.mrf.mxu0
        %3255 = vmatprep.mubr.bf16.mxu0 0
        %3256 = vmatmul.mubr.bf16.gmra.mxu0 %v3148
        %v3257 = vpop.f32.mrf.mxu0
        %v3258 = vadd.f32 0.0, %v3257
        %v3259 = vpop.f32.mrf.mxu0
        %v3260 = vpop.f32.mrf.mxu0
        %v3261 = vadd.f32 0.0, %v3260
        %v3262 = vpop.f32.mrf.mxu0
        %3263 = vmatprep.mubr.bf16.mxu0 0
        %3264 = vmatmul.mubr.bf16.gmra.mxu0 %v3149
        %v3265 = vpop.f32.mrf.mxu0
        %v3266 = vadd.f32 0.0, %v3265
        %v3267 = vpop.f32.mrf.mxu0
        %v3268 = vpop.f32.mrf.mxu0
        %v3269 = vadd.f32 0.0, %v3268
        %v3270 = vpop.f32.mrf.mxu0
        %3271 = vmatprep.mubr.bf16.mxu0 0
        %3272 = vmatmul.mubr.bf16.gmra.mxu0 %v3150
        %v3273 = vpop.f32.mrf.mxu0
        %v3274 = vadd.f32 0.0, %v3273
        %v3275 = vpop.f32.mrf.mxu0
        %v3276 = vpop.f32.mrf.mxu0
        %v3277 = vadd.f32 0.0, %v3276
        %v3278 = vpop.f32.mrf.mxu0
        %3279 = vmatprep.mubr.bf16.mxu0 0
        %3280 = vmatmul.mubr.bf16.gmra.mxu0 %v3151
        %v3281 = vpop.f32.mrf.mxu0
        %v3282 = vadd.f32 0.0, %v3281
        %v3283 = vpop.f32.mrf.mxu0
        %v3284 = vpop.f32.mrf.mxu0
        %v3285 = vadd.f32 0.0, %v3284
        %v3286 = vpop.f32.mrf.mxu0
        %3287 = vmatprep.mubr.bf16.mxu0 0
        %3288 = vmatmul.mubr.bf16.gmra.mxu0 %v3152
        %v3289 = vpop.f32.mrf.mxu0
        %v3290 = vadd.f32 0.0, %v3289
        %v3291 = vpop.f32.mrf.mxu0
        %v3292 = vpop.f32.mrf.mxu0
        %v3293 = vadd.f32 0.0, %v3292
        %v3294 = vpop.f32.mrf.mxu0
        %3295 = vmatprep.mubr.bf16.mxu0 0
        %3296 = vmatmul.mubr.bf16.gmra.mxu0 %v3153
        %v3297 = vpop.f32.mrf.mxu0
        %v3298 = vadd.f32 0.0, %v3297
        %v3299 = vpop.f32.mrf.mxu0
        %v3300 = vpop.f32.mrf.mxu0
        %v3301 = vadd.f32 0.0, %v3300
        %v3302 = vpop.f32.mrf.mxu0
        %3303 = vmatprep.mubr.bf16.mxu0 0
        %3304 = vmatmul.mubr.bf16.gmra.mxu0 %v3154
        %v3305 = vpop.f32.mrf.mxu0
        %v3306 = vadd.f32 0.0, %v3305
        %v3307 = vpop.f32.mrf.mxu0
        %v3308 = vpop.f32.mrf.mxu0
        %v3309 = vadd.f32 0.0, %v3308
        %v3310 = vpop.f32.mrf.mxu0
        %3311 = vmatprep.mubr.bf16.mxu0 0
        %3312 = vmatmul.mubr.bf16.gmra.mxu0 %v3155
        %v3313 = vpop.f32.mrf.mxu0
        %v3314 = vadd.f32 0.0, %v3313
        %v3315 = vpop.f32.mrf.mxu0
        %v3316 = vpop.f32.mrf.mxu0
        %v3317 = vadd.f32 0.0, %v3316
        %v3318 = vpop.f32.mrf.mxu0
        %3319 = vmatprep.mubr.bf16.mxu0 0
        %3320 = vmatmul.mubr.bf16.gmra.mxu0 %v3156
        %v3321 = vpop.f32.mrf.mxu0
        %v3322 = vadd.f32 0.0, %v3321
        %v3323 = vpop.f32.mrf.mxu0
        %v3324 = vpop.f32.mrf.mxu0
        %v3325 = vadd.f32 0.0, %v3324
        %v3326 = vpop.f32.mrf.mxu0
        %3327 = vdwg.mxu0
        %v3328 = vld [vmem:[#allocation4] sm:$0xff]
        %v3329 = vld [vmem:[#allocation4 + $0x8] sm:$0xff]
        %v3330 = vld [vmem:[#allocation4 + $0x10] sm:$0xff]
        %v3331 = vld [vmem:[#allocation4 + $0x18] sm:$0xff]
        %v3332 = vld [vmem:[#allocation4 + $0x20] sm:$0xff]
        %v3333 = vld [vmem:[#allocation4 + $0x28] sm:$0xff]
        %v3334 = vld [vmem:[#allocation4 + $0x30] sm:$0xff]
        %v3335 = vld [vmem:[#allocation4 + $0x38] sm:$0xff]
        %v3336 = vld [vmem:[#allocation4 + $0x40] sm:$0xff]
        %v3337 = vld [vmem:[#allocation4 + $0x48] sm:$0xff]
        %v3338 = vld [vmem:[#allocation4 + $0x50] sm:$0xff]
        %v3339 = vld [vmem:[#allocation4 + $0x58] sm:$0xff]
        %v3340 = vld [vmem:[#allocation4 + $0x60] sm:$0xff]
        %v3341 = vld [vmem:[#allocation4 + $0x68] sm:$0xff]
        %v3342 = vld [vmem:[#allocation4 + $0x70] sm:$0xff]
        %v3343 = vld [vmem:[#allocation4 + $0x78] sm:$0xff]
        %v3344 = vld [vmem:[#allocation4 + $0x80] sm:$0xff]
        %v3345 = vld [vmem:[#allocation4 + $0x88] sm:$0xff]
        %v3346 = vld [vmem:[#allocation4 + $0x90] sm:$0xff]
        %v3347 = vld [vmem:[#allocation4 + $0x98] sm:$0xff]
        %v3348 = vadd.f32 %v3328, %v3250
        %v3349 = vadd.f32 %v3329, %v3253
        %v3350 = vadd.f32 %v3330, %v3258
        %v3351 = vadd.f32 %v3331, %v3261
        %v3352 = vadd.f32 %v3332, %v3266
        %v3353 = vadd.f32 %v3333, %v3269
        %v3354 = vadd.f32 %v3334, %v3274
        %v3355 = vadd.f32 %v3335, %v3277
        %v3356 = vadd.f32 %v3336, %v3282
        %v3357 = vadd.f32 %v3337, %v3285
        %v3358 = vadd.f32 %v3338, %v3290
        %v3359 = vadd.f32 %v3339, %v3293
        %v3360 = vadd.f32 %v3340, %v3298
        %v3361 = vadd.f32 %v3341, %v3301
        %v3362 = vadd.f32 %v3342, %v3306
        %v3363 = vadd.f32 %v3343, %v3309
        %v3364 = vadd.f32 %v3344, %v3314
        %v3365 = vadd.f32 %v3345, %v3317
        %v3366 = vadd.f32 %v3346, %v3322
        %v3367 = vadd.f32 %v3347, %v3325
        %3368 = vst [vmem:[#allocation4] sm:$0xff] %v3348
        %3369 = vst [vmem:[#allocation4 + $0x8] sm:$0xff] %v3349
        %3370 = vst [vmem:[#allocation4 + $0x10] sm:$0xff] %v3350
        %3371 = vst [vmem:[#allocation4 + $0x18] sm:$0xff] %v3351
        %3372 = vst [vmem:[#allocation4 + $0x20] sm:$0xff] %v3352
        %3373 = vst [vmem:[#allocation4 + $0x28] sm:$0xff] %v3353
        %3374 = vst [vmem:[#allocation4 + $0x30] sm:$0xff] %v3354
        %3375 = vst [vmem:[#allocation4 + $0x38] sm:$0xff] %v3355
        %3376 = vst [vmem:[#allocation4 + $0x40] sm:$0xff] %v3356
        %3377 = vst [vmem:[#allocation4 + $0x48] sm:$0xff] %v3357
        %3378 = vst [vmem:[#allocation4 + $0x50] sm:$0xff] %v3358
        %3379 = vst [vmem:[#allocation4 + $0x58] sm:$0xff] %v3359
        %3380 = vst [vmem:[#allocation4 + $0x60] sm:$0xff] %v3360
        %3381 = vst [vmem:[#allocation4 + $0x68] sm:$0xff] %v3361
        %3382 = vst [vmem:[#allocation4 + $0x70] sm:$0xff] %v3362
        %3383 = vst [vmem:[#allocation4 + $0x78] sm:$0xff] %v3363
        %3384 = vst [vmem:[#allocation4 + $0x80] sm:$0xff] %v3364
        %3385 = vst [vmem:[#allocation4 + $0x88] sm:$0xff] %v3365
        %3386 = vst [vmem:[#allocation4 + $0x90] sm:$0xff] %v3366
        %3387 = vst [vmem:[#allocation4 + $0x98] sm:$0xff] %v3367
        %v3388 = vld [vmem:[%s661] sm:$0xf]
        %v3389 = vld [vmem:[%s661 + $0x4] sm:$0xf]
        %v3390 = vld [vmem:[%s661 + $0xc] sm:$0xf]
        %v3391 = vld [vmem:[%s661 + $0x10] sm:$0xf]
        %v3392 = vld [vmem:[%s661 + $0x18] sm:$0xf]
        %v3393 = vld [vmem:[%s661 + $0x1c] sm:$0xf]
        %v3394 = vld [vmem:[%s661 + $0x24] sm:$0xf]
        %v3395 = vld [vmem:[%s661 + $0x28] sm:$0xf]
        %v3396 = vld [vmem:[%s661 + $0x30] sm:$0xf]
        %v3397 = vld [vmem:[%s661 + $0x34] sm:$0xf]
        %v3398 = vld [vmem:[%s661 + $0x3c] sm:$0xf]
        %v3399 = vld [vmem:[%s661 + $0x40] sm:$0xf]
        %v3400 = vld [vmem:[%s661 + $0x48] sm:$0xf]
        %v3401 = vld [vmem:[%s661 + $0x4c] sm:$0xf]
        %v3402 = vld [vmem:[%s661 + $0x54] sm:$0xf]
        %v3403 = vld [vmem:[%s661 + $0x58] sm:$0xf]
        %v3404 = vld [vmem:[%s661 + $0x60] sm:$0xf]
        %v3405 = vld [vmem:[%s661 + $0x64] sm:$0xf]
        %v3406 = vld [vmem:[%s661 + $0x6c] sm:$0xf]
        %v3407 = vld [vmem:[%s661 + $0x70] sm:$0xf]
        %s3408 = scalar_lea.vmem [#allocation9], 384
        %v3409 = vld [vmem:[%s3408] sm:$0xf]
        %v3410 = vld [vmem:[%s3408 + $0x4] sm:$0xf]
        %v3411 = vld [vmem:[%s3408 + $0x8] sm:$0xf]
        %v3412 = vld [vmem:[%s3408 + $0xc] sm:$0xf]
        %v3413 = vld [vmem:[%s3408 + $0x10] sm:$0xf]
        %v3414 = vld [vmem:[%s3408 + $0x14] sm:$0xf]
        %v3415 = vld [vmem:[%s3408 + $0x18] sm:$0xf]
        %v3416 = vld [vmem:[%s3408 + $0x1c] sm:$0xf]
        %v3417 = vld [vmem:[%s3408 + $0x20] sm:$0xf]
        %v3418 = vld [vmem:[%s3408 + $0x24] sm:$0xf]
        %v3419 = vld [vmem:[%s3408 + $0x28] sm:$0xf]
        %v3420 = vld [vmem:[%s3408 + $0x2c] sm:$0xf]
        %v3421 = vld [vmem:[%s3408 + $0x30] sm:$0xf]
        %v3422 = vld [vmem:[%s3408 + $0x34] sm:$0xf]
        %v3423 = vld [vmem:[%s3408 + $0x38] sm:$0xf]
        %v3424 = vld [vmem:[%s3408 + $0x3c] sm:$0xf]
        %v3445 = vunpack.c.l.b16 %v3388
        %v3446 = vunpack.c.l.b16 %v3389
        %v3447 = vunpack.c.l.b16 %v3390
        %v3448 = vunpack.c.l.b16 %v3391
        %v3449 = vunpack.c.l.b16 %v3392
        %v3450 = vunpack.c.l.b16 %v3393
        %v3451 = vunpack.c.l.b16 %v3394
        %v3452 = vunpack.c.l.b16 %v3395
        %v3453 = vunpack.c.l.b16 %v3396
        %v3454 = vunpack.c.l.b16 %v3397
        %v3455 = vunpack.c.l.b16 %v3398
        %v3456 = vunpack.c.l.b16 %v3399
        %v3457 = vunpack.c.l.b16 %v3400
        %v3458 = vunpack.c.l.b16 %v3401
        %v3459 = vunpack.c.l.b16 %v3402
        %v3460 = vunpack.c.l.b16 %v3403
        %v3461 = vunpack.c.l.b16 %v3404
        %v3462 = vunpack.c.l.b16 %v3405
        %v3463 = vunpack.c.l.b16 %v3406
        %v3464 = vunpack.c.l.b16 %v3407
        %v3465 = vpack.c.b16 %v3446, %v3445
        %v3466 = vpack.c.b16 %v3448, %v3447
        %v3467 = vpack.c.b16 %v3450, %v3449
        %v3468 = vpack.c.b16 %v3452, %v3451
        %v3469 = vpack.c.b16 %v3454, %v3453
        %v3470 = vpack.c.b16 %v3456, %v3455
        %v3471 = vpack.c.b16 %v3458, %v3457
        %v3472 = vpack.c.b16 %v3460, %v3459
        %v3473 = vpack.c.b16 %v3462, %v3461
        %v3474 = vpack.c.b16 %v3464, %v3463
        %v3501 = vunpack.c.l.b16 %v3409
        %v3502 = vunpack.c.l.b16 %v3410
        %v3503 = vunpack.c.l.b16 %v3411
        %v3504 = vunpack.c.l.b16 %v3412
        %v3505 = vunpack.c.l.b16 %v3413
        %v3506 = vunpack.c.l.b16 %v3414
        %v3507 = vunpack.c.l.b16 %v3415
        %v3508 = vunpack.c.l.b16 %v3416
        %v3509 = vunpack.c.l.b16 %v3417
        %v3510 = vunpack.c.l.b16 %v3418
        %v3511 = vunpack.c.l.b16 %v3419
        %v3512 = vunpack.c.l.b16 %v3420
        %v3513 = vunpack.c.l.b16 %v3421
        %v3514 = vunpack.c.l.b16 %v3422
        %v3515 = vunpack.c.l.b16 %v3423
        %v3516 = vunpack.c.l.b16 %v3424
        %v3517 = vpack.c.b16 %v3502, %v3501
        %v3518 = vpack.c.b16 %v3504, %v3503
        %v3519 = vpack.c.b16 %v3506, %v3505
        %v3520 = vpack.c.b16 %v3508, %v3507
        %v3521 = vpack.c.b16 %v3510, %v3509
        %v3522 = vpack.c.b16 %v3512, %v3511
        %v3523 = vpack.c.b16 %v3514, %v3513
        %v3524 = vpack.c.b16 %v3516, %v3515
        %3533 = vmatprep.subr.bf16.mxu0 0
        %3534 = vmatpush1.bf16.msra.mxu0 %v3524
        %3535 = vmatprep.subr.bf16.mxu0 0
        %3536 = vmatpush1.bf16.msra.mxu0 %v3523
        %3537 = vmatprep.subr.bf16.mxu0 0
        %3538 = vmatpush1.bf16.msra.mxu0 %v3522
        %3539 = vmatprep.subr.bf16.mxu0 0
        %3540 = vmatpush1.bf16.msra.mxu0 %v3521
        %3541 = vmatprep.subr.bf16.mxu0 0
        %3542 = vmatpush1.bf16.msra.mxu0 %v3520
        %3543 = vmatprep.subr.bf16.mxu0 0
        %3544 = vmatpush1.bf16.msra.mxu0 %v3519
        %3545 = vmatprep.subr.bf16.mxu0 0
        %3546 = vmatpush1.bf16.msra.mxu0 %v3518
        %3547 = vmatprep.subr.bf16.mxu0 0
        %3548 = vmatpush1.bf16.msra.mxu0 %v3517
        %3549 = vmatprep.subr.bf16.mxu0 0
        %3550 = vmatpush2.bf16.msra.mxu0 0
        %3551 = vmatprep.subr.bf16.mxu0 0
        %3552 = vmatpush2.bf16.msra.mxu0 0
        %3553 = vmatprep.subr.bf16.mxu0 0
        %3554 = vmatpush2.bf16.msra.mxu0 0
        %3555 = vmatprep.subr.bf16.mxu0 0
        %3556 = vmatpush2.bf16.msra.mxu0 0
        %3557 = vmatprep.subr.bf16.mxu0 0
        %3558 = vmatpush2.bf16.msra.mxu0 0
        %3559 = vmatprep.subr.bf16.mxu0 0
        %3560 = vmatpush2.bf16.msra.mxu0 0
        %3561 = vmatprep.subr.bf16.mxu0 0
        %3562 = vmatpush2.bf16.msra.mxu0 0
        %3563 = vmatprep.subr.bf16.mxu0 0
        %3564 = vmatpush2.bf16.msra.mxu0 0
        %3565 = vmatprep.mubr.bf16.mxu0 0
        %3566 = vmatmul.mubr.bf16.gmra.mxu0 %v3465
        %v3567 = vpop.f32.mrf.mxu0
        %v3568 = vadd.f32 0.0, %v3567
        %v3569 = vpop.f32.mrf.mxu0
        %v3570 = vpop.f32.mrf.mxu0
        %v3571 = vadd.f32 0.0, %v3570
        %v3572 = vpop.f32.mrf.mxu0
        %3573 = vmatprep.mubr.bf16.mxu0 0
        %3574 = vmatmul.mubr.bf16.gmra.mxu0 %v3466
        %v3575 = vpop.f32.mrf.mxu0
        %v3576 = vadd.f32 0.0, %v3575
        %v3577 = vpop.f32.mrf.mxu0
        %v3578 = vpop.f32.mrf.mxu0
        %v3579 = vadd.f32 0.0, %v3578
        %v3580 = vpop.f32.mrf.mxu0
        %3581 = vmatprep.mubr.bf16.mxu0 0
        %3582 = vmatmul.mubr.bf16.gmra.mxu0 %v3467
        %v3583 = vpop.f32.mrf.mxu0
        %v3584 = vadd.f32 0.0, %v3583
        %v3585 = vpop.f32.mrf.mxu0
        %v3586 = vpop.f32.mrf.mxu0
        %v3587 = vadd.f32 0.0, %v3586
        %v3588 = vpop.f32.mrf.mxu0
        %3589 = vmatprep.mubr.bf16.mxu0 0
        %3590 = vmatmul.mubr.bf16.gmra.mxu0 %v3468
        %v3591 = vpop.f32.mrf.mxu0
        %v3592 = vadd.f32 0.0, %v3591
        %v3593 = vpop.f32.mrf.mxu0
        %v3594 = vpop.f32.mrf.mxu0
        %v3595 = vadd.f32 0.0, %v3594
        %v3596 = vpop.f32.mrf.mxu0
        %3597 = vmatprep.mubr.bf16.mxu0 0
        %3598 = vmatmul.mubr.bf16.gmra.mxu0 %v3469
        %v3599 = vpop.f32.mrf.mxu0
        %v3600 = vadd.f32 0.0, %v3599
        %v3601 = vpop.f32.mrf.mxu0
        %v3602 = vpop.f32.mrf.mxu0
        %v3603 = vadd.f32 0.0, %v3602
        %v3604 = vpop.f32.mrf.mxu0
        %3605 = vmatprep.mubr.bf16.mxu0 0
        %3606 = vmatmul.mubr.bf16.gmra.mxu0 %v3470
        %v3607 = vpop.f32.mrf.mxu0
        %v3608 = vadd.f32 0.0, %v3607
        %v3609 = vpop.f32.mrf.mxu0
        %v3610 = vpop.f32.mrf.mxu0
        %v3611 = vadd.f32 0.0, %v3610
        %v3612 = vpop.f32.mrf.mxu0
        %3613 = vmatprep.mubr.bf16.mxu0 0
        %3614 = vmatmul.mubr.bf16.gmra.mxu0 %v3471
        %v3615 = vpop.f32.mrf.mxu0
        %v3616 = vadd.f32 0.0, %v3615
        %v3617 = vpop.f32.mrf.mxu0
        %v3618 = vpop.f32.mrf.mxu0
        %v3619 = vadd.f32 0.0, %v3618
        %v3620 = vpop.f32.mrf.mxu0
        %3621 = vmatprep.mubr.bf16.mxu0 0
        %3622 = vmatmul.mubr.bf16.gmra.mxu0 %v3472
        %v3623 = vpop.f32.mrf.mxu0
        %v3624 = vadd.f32 0.0, %v3623
        %v3625 = vpop.f32.mrf.mxu0
        %v3626 = vpop.f32.mrf.mxu0
        %v3627 = vadd.f32 0.0, %v3626
        %v3628 = vpop.f32.mrf.mxu0
        %3629 = vmatprep.mubr.bf16.mxu0 0
        %3630 = vmatmul.mubr.bf16.gmra.mxu0 %v3473
        %v3631 = vpop.f32.mrf.mxu0
        %v3632 = vadd.f32 0.0, %v3631
        %v3633 = vpop.f32.mrf.mxu0
        %v3634 = vpop.f32.mrf.mxu0
        %v3635 = vadd.f32 0.0, %v3634
        %v3636 = vpop.f32.mrf.mxu0
        %3637 = vmatprep.mubr.bf16.mxu0 0
        %3638 = vmatmul.mubr.bf16.gmra.mxu0 %v3474
        %v3639 = vpop.f32.mrf.mxu0
        %v3640 = vadd.f32 0.0, %v3639
        %v3641 = vpop.f32.mrf.mxu0
        %v3642 = vpop.f32.mrf.mxu0
        %v3643 = vadd.f32 0.0, %v3642
        %v3644 = vpop.f32.mrf.mxu0
        %3645 = vdwg.mxu0
        %v3646 = vld [vmem:[#allocation4] sm:$0xff]
        %v3647 = vld [vmem:[#allocation4 + $0x8] sm:$0xff]
        %v3648 = vld [vmem:[#allocation4 + $0x10] sm:$0xff]
        %v3649 = vld [vmem:[#allocation4 + $0x18] sm:$0xff]
        %v3650 = vld [vmem:[#allocation4 + $0x20] sm:$0xff]
        %v3651 = vld [vmem:[#allocation4 + $0x28] sm:$0xff]
        %v3652 = vld [vmem:[#allocation4 + $0x30] sm:$0xff]
        %v3653 = vld [vmem:[#allocation4 + $0x38] sm:$0xff]
        %v3654 = vld [vmem:[#allocation4 + $0x40] sm:$0xff]
        %v3655 = vld [vmem:[#allocation4 + $0x48] sm:$0xff]
        %v3656 = vld [vmem:[#allocation4 + $0x50] sm:$0xff]
        %v3657 = vld [vmem:[#allocation4 + $0x58] sm:$0xff]
        %v3658 = vld [vmem:[#allocation4 + $0x60] sm:$0xff]
        %v3659 = vld [vmem:[#allocation4 + $0x68] sm:$0xff]
        %v3660 = vld [vmem:[#allocation4 + $0x70] sm:$0xff]
        %v3661 = vld [vmem:[#allocation4 + $0x78] sm:$0xff]
        %v3662 = vld [vmem:[#allocation4 + $0x80] sm:$0xff]
        %v3663 = vld [vmem:[#allocation4 + $0x88] sm:$0xff]
        %v3664 = vld [vmem:[#allocation4 + $0x90] sm:$0xff]
        %v3665 = vld [vmem:[#allocation4 + $0x98] sm:$0xff]
        %v3666 = vadd.f32 %v3646, %v3568
        %v3667 = vadd.f32 %v3647, %v3571
        %v3668 = vadd.f32 %v3648, %v3576
        %v3669 = vadd.f32 %v3649, %v3579
        %v3670 = vadd.f32 %v3650, %v3584
        %v3671 = vadd.f32 %v3651, %v3587
        %v3672 = vadd.f32 %v3652, %v3592
        %v3673 = vadd.f32 %v3653, %v3595
        %v3674 = vadd.f32 %v3654, %v3600
        %v3675 = vadd.f32 %v3655, %v3603
        %v3676 = vadd.f32 %v3656, %v3608
        %v3677 = vadd.f32 %v3657, %v3611
        %v3678 = vadd.f32 %v3658, %v3616
        %v3679 = vadd.f32 %v3659, %v3619
        %v3680 = vadd.f32 %v3660, %v3624
        %v3681 = vadd.f32 %v3661, %v3627
        %v3682 = vadd.f32 %v3662, %v3632
        %v3683 = vadd.f32 %v3663, %v3635
        %v3684 = vadd.f32 %v3664, %v3640
        %v3685 = vadd.f32 %v3665, %v3643
        %3686 = vst [vmem:[#allocation4] sm:$0xff] %v3666
        %3687 = vst [vmem:[#allocation4 + $0x8] sm:$0xff] %v3667
        %3688 = vst [vmem:[#allocation4 + $0x10] sm:$0xff] %v3668
        %3689 = vst [vmem:[#allocation4 + $0x18] sm:$0xff] %v3669
        %3690 = vst [vmem:[#allocation4 + $0x20] sm:$0xff] %v3670
        %3691 = vst [vmem:[#allocation4 + $0x28] sm:$0xff] %v3671
        %3692 = vst [vmem:[#allocation4 + $0x30] sm:$0xff] %v3672
        %3693 = vst [vmem:[#allocation4 + $0x38] sm:$0xff] %v3673
        %3694 = vst [vmem:[#allocation4 + $0x40] sm:$0xff] %v3674
        %3695 = vst [vmem:[#allocation4 + $0x48] sm:$0xff] %v3675
        %3696 = vst [vmem:[#allocation4 + $0x50] sm:$0xff] %v3676
        %3697 = vst [vmem:[#allocation4 + $0x58] sm:$0xff] %v3677
        %3698 = vst [vmem:[#allocation4 + $0x60] sm:$0xff] %v3678
        %3699 = vst [vmem:[#allocation4 + $0x68] sm:$0xff] %v3679
        %3700 = vst [vmem:[#allocation4 + $0x70] sm:$0xff] %v3680
        %3701 = vst [vmem:[#allocation4 + $0x78] sm:$0xff] %v3681
        %3702 = vst [vmem:[#allocation4 + $0x80] sm:$0xff] %v3682
        %3703 = vst [vmem:[#allocation4 + $0x88] sm:$0xff] %v3683
        %3704 = vst [vmem:[#allocation4 + $0x90] sm:$0xff] %v3684
        %3705 = vst [vmem:[#allocation4 + $0x98] sm:$0xff] %v3685
        %v3706 = vld [vmem:[%s661] sm:$0xf]
        %v3707 = vld [vmem:[%s661 + $0x4] sm:$0xf]
        %v3708 = vld [vmem:[%s661 + $0x8] sm:$0x1]
        %v3709 = vld [vmem:[%s661 + $0xc] sm:$0xf]
        %v3710 = vld [vmem:[%s661 + $0x10] sm:$0xf]
        %v3711 = vld [vmem:[%s661 + $0x14] sm:$0x1]
        %v3712 = vld [vmem:[%s661 + $0x18] sm:$0xf]
        %v3713 = vld [vmem:[%s661 + $0x1c] sm:$0xf]
        %v3714 = vld [vmem:[%s661 + $0x20] sm:$0x1]
        %v3715 = vld [vmem:[%s661 + $0x24] sm:$0xf]
        %v3716 = vld [vmem:[%s661 + $0x28] sm:$0xf]
        %v3717 = vld [vmem:[%s661 + $0x2c] sm:$0x1]
        %v3718 = vld [vmem:[%s661 + $0x30] sm:$0xf]
        %v3719 = vld [vmem:[%s661 + $0x34] sm:$0xf]
        %v3720 = vld [vmem:[%s661 + $0x38] sm:$0x1]
        %v3721 = vld [vmem:[%s661 + $0x3c] sm:$0xf]
        %v3722 = vld [vmem:[%s661 + $0x40] sm:$0xf]
        %v3723 = vld [vmem:[%s661 + $0x44] sm:$0x1]
        %v3724 = vld [vmem:[%s661 + $0x48] sm:$0xf]
        %v3725 = vld [vmem:[%s661 + $0x4c] sm:$0xf]
        %v3726 = vld [vmem:[%s661 + $0x50] sm:$0x1]
        %v3727 = vld [vmem:[%s661 + $0x54] sm:$0xf]
        %v3728 = vld [vmem:[%s661 + $0x58] sm:$0xf]
        %v3729 = vld [vmem:[%s661 + $0x5c] sm:$0x1]
        %v3730 = vld [vmem:[%s661 + $0x60] sm:$0xf]
        %v3731 = vld [vmem:[%s661 + $0x64] sm:$0xf]
        %v3732 = vld [vmem:[%s661 + $0x68] sm:$0x1]
        %v3733 = vld [vmem:[%s661 + $0x6c] sm:$0xf]
        %v3734 = vld [vmem:[%s661 + $0x70] sm:$0xf]
        %v3735 = vld [vmem:[%s661 + $0x74] sm:$0x1]
        %v3737 = vshrl.u32 %v3706, 16
        %v3739 = vrot.slane %v3737, 4
        %v3740 = vshll.u32 %v3706, 16
        %v3742 = vrot.slane %v3740, 5
        %v3743 = vor.u32 %v3739, %v3742
        %v3744 = vrot.slane %v3743, 4
        %v3746 = vshll.u32 %v3707, 16
        %v3748 = vrot.slane %v3746, 5
        %v3749 = vsel %vm1183, %v3744, %v3748
        %v3750 = vshrl.u32 %v3707, 16
        %v3752 = vrot.slane %v3750, 4
        %v3753 = vor.u32 %v3752, %v3748
        %v3754 = vrot.slane %v3753, 4
        %v3756 = vshll.u32 %v3708, 16
        %v3758 = vrot.slane %v3756, 5
        %v3759 = vsel %vm1183, %v3754, %v3758
        %v3761 = vshrl.u32 %v3709, 16
        %v3763 = vrot.slane %v3761, 4
        %v3764 = vshll.u32 %v3709, 16
        %v3766 = vrot.slane %v3764, 5
        %v3767 = vor.u32 %v3763, %v3766
        %v3768 = vrot.slane %v3767, 4
        %v3770 = vshll.u32 %v3710, 16
        %v3772 = vrot.slane %v3770, 5
        %v3773 = vsel %vm1183, %v3768, %v3772
        %v3774 = vshrl.u32 %v3710, 16
        %v3776 = vrot.slane %v3774, 4
        %v3777 = vor.u32 %v3776, %v3772
        %v3778 = vrot.slane %v3777, 4
        %v3780 = vshll.u32 %v3711, 16
        %v3782 = vrot.slane %v3780, 5
        %v3783 = vsel %vm1183, %v3778, %v3782
        %v3785 = vshrl.u32 %v3712, 16
        %v3787 = vrot.slane %v3785, 4
        %v3788 = vshll.u32 %v3712, 16
        %v3790 = vrot.slane %v3788, 5
        %v3791 = vor.u32 %v3787, %v3790
        %v3792 = vrot.slane %v3791, 4
        %v3794 = vshll.u32 %v3713, 16
        %v3796 = vrot.slane %v3794, 5
        %v3797 = vsel %vm1183, %v3792, %v3796
        %v3798 = vshrl.u32 %v3713, 16
        %v3800 = vrot.slane %v3798, 4
        %v3801 = vor.u32 %v3800, %v3796
        %v3802 = vrot.slane %v3801, 4
        %v3804 = vshll.u32 %v3714, 16
        %v3806 = vrot.slane %v3804, 5
        %v3807 = vsel %vm1183, %v3802, %v3806
        %v3809 = vshrl.u32 %v3715, 16
        %v3811 = vrot.slane %v3809, 4
        %v3812 = vshll.u32 %v3715, 16
        %v3814 = vrot.slane %v3812, 5
        %v3815 = vor.u32 %v3811, %v3814
        %v3816 = vrot.slane %v3815, 4
        %v3818 = vshll.u32 %v3716, 16
        %v3820 = vrot.slane %v3818, 5
        %v3821 = vsel %vm1183, %v3816, %v3820
        %v3822 = vshrl.u32 %v3716, 16
        %v3824 = vrot.slane %v3822, 4
        %v3825 = vor.u32 %v3824, %v3820
        %v3826 = vrot.slane %v3825, 4
        %v3828 = vshll.u32 %v3717, 16
        %v3830 = vrot.slane %v3828, 5
        %v3831 = vsel %vm1183, %v3826, %v3830
        %v3833 = vshrl.u32 %v3718, 16
        %v3835 = vrot.slane %v3833, 4
        %v3836 = vshll.u32 %v3718, 16
        %v3838 = vrot.slane %v3836, 5
        %v3839 = vor.u32 %v3835, %v3838
        %v3840 = vrot.slane %v3839, 4
        %v3842 = vshll.u32 %v3719, 16
        %v3844 = vrot.slane %v3842, 5
        %v3845 = vsel %vm1183, %v3840, %v3844
        %v3846 = vshrl.u32 %v3719, 16
        %v3848 = vrot.slane %v3846, 4
        %v3849 = vor.u32 %v3848, %v3844
        %v3850 = vrot.slane %v3849, 4
        %v3852 = vshll.u32 %v3720, 16
        %v3854 = vrot.slane %v3852, 5
        %v3855 = vsel %vm1183, %v3850, %v3854
        %v3857 = vshrl.u32 %v3721, 16
        %v3859 = vrot.slane %v3857, 4
        %v3860 = vshll.u32 %v3721, 16
        %v3862 = vrot.slane %v3860, 5
        %v3863 = vor.u32 %v3859, %v3862
        %v3864 = vrot.slane %v3863, 4
        %v3866 = vshll.u32 %v3722, 16
        %v3868 = vrot.slane %v3866, 5
        %v3869 = vsel %vm1183, %v3864, %v3868
        %v3870 = vshrl.u32 %v3722, 16
        %v3872 = vrot.slane %v3870, 4
        %v3873 = vor.u32 %v3872, %v3868
        %v3874 = vrot.slane %v3873, 4
        %v3876 = vshll.u32 %v3723, 16
        %v3878 = vrot.slane %v3876, 5
        %v3879 = vsel %vm1183, %v3874, %v3878
        %v3881 = vshrl.u32 %v3724, 16
        %v3883 = vrot.slane %v3881, 4
        %v3884 = vshll.u32 %v3724, 16
        %v3886 = vrot.slane %v3884, 5
        %v3887 = vor.u32 %v3883, %v3886
        %v3888 = vrot.slane %v3887, 4
        %v3890 = vshll.u32 %v3725, 16
        %v3892 = vrot.slane %v3890, 5
        %v3893 = vsel %vm1183, %v3888, %v3892
        %v3894 = vshrl.u32 %v3725, 16
        %v3896 = vrot.slane %v3894, 4
        %v3897 = vor.u32 %v3896, %v3892
        %v3898 = vrot.slane %v3897, 4
        %v3900 = vshll.u32 %v3726, 16
        %v3902 = vrot.slane %v3900, 5
        %v3903 = vsel %vm1183, %v3898, %v3902
        %v3905 = vshrl.u32 %v3727, 16
        %v3907 = vrot.slane %v3905, 4
        %v3908 = vshll.u32 %v3727, 16
        %v3910 = vrot.slane %v3908, 5
        %v3911 = vor.u32 %v3907, %v3910
        %v3912 = vrot.slane %v3911, 4
        %v3914 = vshll.u32 %v3728, 16
        %v3916 = vrot.slane %v3914, 5
        %v3917 = vsel %vm1183, %v3912, %v3916
        %v3918 = vshrl.u32 %v3728, 16
        %v3920 = vrot.slane %v3918, 4
        %v3921 = vor.u32 %v3920, %v3916
        %v3922 = vrot.slane %v3921, 4
        %v3924 = vshll.u32 %v3729, 16
        %v3926 = vrot.slane %v3924, 5
        %v3927 = vsel %vm1183, %v3922, %v3926
        %v3929 = vshrl.u32 %v3730, 16
        %v3931 = vrot.slane %v3929, 4
        %v3932 = vshll.u32 %v3730, 16
        %v3934 = vrot.slane %v3932, 5
        %v3935 = vor.u32 %v3931, %v3934
        %v3936 = vrot.slane %v3935, 4
        %v3938 = vshll.u32 %v3731, 16
        %v3940 = vrot.slane %v3938, 5
        %v3941 = vsel %vm1183, %v3936, %v3940
        %v3942 = vshrl.u32 %v3731, 16
        %v3944 = vrot.slane %v3942, 4
        %v3945 = vor.u32 %v3944, %v3940
        %v3946 = vrot.slane %v3945, 4
        %v3948 = vshll.u32 %v3732, 16
        %v3950 = vrot.slane %v3948, 5
        %v3951 = vsel %vm1183, %v3946, %v3950
        %v3953 = vshrl.u32 %v3733, 16
        %v3955 = vrot.slane %v3953, 4
        %v3956 = vshll.u32 %v3733, 16
        %v3958 = vrot.slane %v3956, 5
        %v3959 = vor.u32 %v3955, %v3958
        %v3960 = vrot.slane %v3959, 4
        %v3962 = vshll.u32 %v3734, 16
        %v3964 = vrot.slane %v3962, 5
        %v3965 = vsel %vm1183, %v3960, %v3964
        %v3966 = vshrl.u32 %v3734, 16
        %v3968 = vrot.slane %v3966, 4
        %v3969 = vor.u32 %v3968, %v3964
        %v3970 = vrot.slane %v3969, 4
        %v3972 = vshll.u32 %v3735, 16
        %v3974 = vrot.slane %v3972, 5
        %v3975 = vsel %vm1183, %v3970, %v3974
        %s3976 = scalar_lea.vmem [#allocation9], 448
        %v3977 = vld [vmem:[%s3976] sm:$0xf]
        %v3978 = vld [vmem:[%s3976 + $0x4] sm:$0xf]
        %v3979 = vld [vmem:[%s3976 + $0x8] sm:$0xf]
        %v3980 = vld [vmem:[%s3976 + $0xc] sm:$0xf]
        %v3981 = vld [vmem:[%s3976 + $0x10] sm:$0xf]
        %v3982 = vld [vmem:[%s3976 + $0x14] sm:$0xf]
        %v3983 = vld [vmem:[%s3976 + $0x18] sm:$0xf]
        %v3984 = vld [vmem:[%s3976 + $0x1c] sm:$0xf]
        %v3985 = vld [vmem:[%s3976 + $0x20] sm:$0xf]
        %v3986 = vld [vmem:[%s3976 + $0x24] sm:$0xf]
        %v3987 = vld [vmem:[%s3976 + $0x28] sm:$0xf]
        %v3988 = vld [vmem:[%s3976 + $0x2c] sm:$0xf]
        %v3989 = vld [vmem:[%s3976 + $0x30] sm:$0xf]
        %v3990 = vld [vmem:[%s3976 + $0x34] sm:$0xf]
        %v3991 = vld [vmem:[%s3976 + $0x38] sm:$0xf]
        %v3992 = vld [vmem:[%s3976 + $0x3c] sm:$0xf]
        %v3993 = vunpack.c.l.b16 %v3749
        %v3994 = vunpack.c.l.b16 %v3759
        %v3995 = vunpack.c.l.b16 %v3773
        %v3996 = vunpack.c.l.b16 %v3783
        %v3997 = vunpack.c.l.b16 %v3797
        %v3998 = vunpack.c.l.b16 %v3807
        %v3999 = vunpack.c.l.b16 %v3821
        %v4000 = vunpack.c.l.b16 %v3831
        %v4001 = vunpack.c.l.b16 %v3845
        %v4002 = vunpack.c.l.b16 %v3855
        %v4003 = vunpack.c.l.b16 %v3869
        %v4004 = vunpack.c.l.b16 %v3879
        %v4005 = vunpack.c.l.b16 %v3893
        %v4006 = vunpack.c.l.b16 %v3903
        %v4007 = vunpack.c.l.b16 %v3917
        %v4008 = vunpack.c.l.b16 %v3927
        %v4009 = vunpack.c.l.b16 %v3941
        %v4010 = vunpack.c.l.b16 %v3951
        %v4011 = vunpack.c.l.b16 %v3965
        %v4012 = vunpack.c.l.b16 %v3975
        %v4013 = vpack.c.b16 %v3994, %v3993
        %v4014 = vpack.c.b16 %v3996, %v3995
        %v4015 = vpack.c.b16 %v3998, %v3997
        %v4016 = vpack.c.b16 %v4000, %v3999
        %v4017 = vpack.c.b16 %v4002, %v4001
        %v4018 = vpack.c.b16 %v4004, %v4003
        %v4019 = vpack.c.b16 %v4006, %v4005
        %v4020 = vpack.c.b16 %v4008, %v4007
        %v4021 = vpack.c.b16 %v4010, %v4009
        %v4022 = vpack.c.b16 %v4012, %v4011
        %v4049 = vunpack.c.l.b16 %v3977
        %v4050 = vunpack.c.l.b16 %v3978
        %v4051 = vunpack.c.l.b16 %v3979
        %v4052 = vunpack.c.l.b16 %v3980
        %v4053 = vunpack.c.l.b16 %v3981
        %v4054 = vunpack.c.l.b16 %v3982
        %v4055 = vunpack.c.l.b16 %v3983
        %v4056 = vunpack.c.l.b16 %v3984
        %v4057 = vunpack.c.l.b16 %v3985
        %v4058 = vunpack.c.l.b16 %v3986
        %v4059 = vunpack.c.l.b16 %v3987
        %v4060 = vunpack.c.l.b16 %v3988
        %v4061 = vunpack.c.l.b16 %v3989
        %v4062 = vunpack.c.l.b16 %v3990
        %v4063 = vunpack.c.l.b16 %v3991
        %v4064 = vunpack.c.l.b16 %v3992
        %v4065 = vpack.c.b16 %v4050, %v4049
        %v4066 = vpack.c.b16 %v4052, %v4051
        %v4067 = vpack.c.b16 %v4054, %v4053
        %v4068 = vpack.c.b16 %v4056, %v4055
        %v4069 = vpack.c.b16 %v4058, %v4057
        %v4070 = vpack.c.b16 %v4060, %v4059
        %v4071 = vpack.c.b16 %v4062, %v4061
        %v4072 = vpack.c.b16 %v4064, %v4063
        %4081 = vmatprep.subr.bf16.mxu0 0
        %4082 = vmatpush1.bf16.msra.mxu0 %v4072
        %4083 = vmatprep.subr.bf16.mxu0 0
        %4084 = vmatpush1.bf16.msra.mxu0 %v4071
        %4085 = vmatprep.subr.bf16.mxu0 0
        %4086 = vmatpush1.bf16.msra.mxu0 %v4070
        %4087 = vmatprep.subr.bf16.mxu0 0
        %4088 = vmatpush1.bf16.msra.mxu0 %v4069
        %4089 = vmatprep.subr.bf16.mxu0 0
        %4090 = vmatpush1.bf16.msra.mxu0 %v4068
        %4091 = vmatprep.subr.bf16.mxu0 0
        %4092 = vmatpush1.bf16.msra.mxu0 %v4067
        %4093 = vmatprep.subr.bf16.mxu0 0
        %4094 = vmatpush1.bf16.msra.mxu0 %v4066
        %4095 = vmatprep.subr.bf16.mxu0 0
        %4096 = vmatpush1.bf16.msra.mxu0 %v4065
        %4097 = vmatprep.subr.bf16.mxu0 0
        %4098 = vmatpush2.bf16.msra.mxu0 0
        %4099 = vmatprep.subr.bf16.mxu0 0
        %4100 = vmatpush2.bf16.msra.mxu0 0
        %4101 = vmatprep.subr.bf16.mxu0 0
        %4102 = vmatpush2.bf16.msra.mxu0 0
        %4103 = vmatprep.subr.bf16.mxu0 0
        %4104 = vmatpush2.bf16.msra.mxu0 0
        %4105 = vmatprep.subr.bf16.mxu0 0
        %4106 = vmatpush2.bf16.msra.mxu0 0
        %4107 = vmatprep.subr.bf16.mxu0 0
        %4108 = vmatpush2.bf16.msra.mxu0 0
        %4109 = vmatprep.subr.bf16.mxu0 0
        %4110 = vmatpush2.bf16.msra.mxu0 0
        %4111 = vmatprep.subr.bf16.mxu0 0
        %4112 = vmatpush2.bf16.msra.mxu0 0
        %4113 = vmatprep.mubr.bf16.mxu0 0
        %4114 = vmatmul.mubr.bf16.gmra.mxu0 %v4013
        %v4115 = vpop.f32.mrf.mxu0
        %v4116 = vadd.f32 0.0, %v4115
        %v4117 = vpop.f32.mrf.mxu0
        %v4118 = vpop.f32.mrf.mxu0
        %v4119 = vadd.f32 0.0, %v4118
        %v4120 = vpop.f32.mrf.mxu0
        %4121 = vmatprep.mubr.bf16.mxu0 0
        %4122 = vmatmul.mubr.bf16.gmra.mxu0 %v4014
        %v4123 = vpop.f32.mrf.mxu0
        %v4124 = vadd.f32 0.0, %v4123
        %v4125 = vpop.f32.mrf.mxu0
        %v4126 = vpop.f32.mrf.mxu0
        %v4127 = vadd.f32 0.0, %v4126
        %v4128 = vpop.f32.mrf.mxu0
        %4129 = vmatprep.mubr.bf16.mxu0 0
        %4130 = vmatmul.mubr.bf16.gmra.mxu0 %v4015
        %v4131 = vpop.f32.mrf.mxu0
        %v4132 = vadd.f32 0.0, %v4131
        %v4133 = vpop.f32.mrf.mxu0
        %v4134 = vpop.f32.mrf.mxu0
        %v4135 = vadd.f32 0.0, %v4134
        %v4136 = vpop.f32.mrf.mxu0
        %4137 = vmatprep.mubr.bf16.mxu0 0
        %4138 = vmatmul.mubr.bf16.gmra.mxu0 %v4016
        %v4139 = vpop.f32.mrf.mxu0
        %v4140 = vadd.f32 0.0, %v4139
        %v4141 = vpop.f32.mrf.mxu0
        %v4142 = vpop.f32.mrf.mxu0
        %v4143 = vadd.f32 0.0, %v4142
        %v4144 = vpop.f32.mrf.mxu0
        %4145 = vmatprep.mubr.bf16.mxu0 0
        %4146 = vmatmul.mubr.bf16.gmra.mxu0 %v4017
        %v4147 = vpop.f32.mrf.mxu0
        %v4148 = vadd.f32 0.0, %v4147
        %v4149 = vpop.f32.mrf.mxu0
        %v4150 = vpop.f32.mrf.mxu0
        %v4151 = vadd.f32 0.0, %v4150
        %v4152 = vpop.f32.mrf.mxu0
        %4153 = vmatprep.mubr.bf16.mxu0 0
        %4154 = vmatmul.mubr.bf16.gmra.mxu0 %v4018
        %v4155 = vpop.f32.mrf.mxu0
        %v4156 = vadd.f32 0.0, %v4155
        %v4157 = vpop.f32.mrf.mxu0
        %v4158 = vpop.f32.mrf.mxu0
        %v4159 = vadd.f32 0.0, %v4158
        %v4160 = vpop.f32.mrf.mxu0
        %4161 = vmatprep.mubr.bf16.mxu0 0
        %4162 = vmatmul.mubr.bf16.gmra.mxu0 %v4019
        %v4163 = vpop.f32.mrf.mxu0
        %v4164 = vadd.f32 0.0, %v4163
        %v4165 = vpop.f32.mrf.mxu0
        %v4166 = vpop.f32.mrf.mxu0
        %v4167 = vadd.f32 0.0, %v4166
        %v4168 = vpop.f32.mrf.mxu0
        %4169 = vmatprep.mubr.bf16.mxu0 0
        %4170 = vmatmul.mubr.bf16.gmra.mxu0 %v4020
        %v4171 = vpop.f32.mrf.mxu0
        %v4172 = vadd.f32 0.0, %v4171
        %v4173 = vpop.f32.mrf.mxu0
        %v4174 = vpop.f32.mrf.mxu0
        %v4175 = vadd.f32 0.0, %v4174
        %v4176 = vpop.f32.mrf.mxu0
        %4177 = vmatprep.mubr.bf16.mxu0 0
        %4178 = vmatmul.mubr.bf16.gmra.mxu0 %v4021
        %v4179 = vpop.f32.mrf.mxu0
        %v4180 = vadd.f32 0.0, %v4179
        %v4181 = vpop.f32.mrf.mxu0
        %v4182 = vpop.f32.mrf.mxu0
        %v4183 = vadd.f32 0.0, %v4182
        %v4184 = vpop.f32.mrf.mxu0
        %4185 = vmatprep.mubr.bf16.mxu0 0
        %4186 = vmatmul.mubr.bf16.gmra.mxu0 %v4022
        %v4187 = vpop.f32.mrf.mxu0
        %v4188 = vadd.f32 0.0, %v4187
        %v4189 = vpop.f32.mrf.mxu0
        %v4190 = vpop.f32.mrf.mxu0
        %v4191 = vadd.f32 0.0, %v4190
        %v4192 = vpop.f32.mrf.mxu0
        %4193 = vdwg.mxu0
        %v4194 = vld [vmem:[#allocation4] sm:$0xff]
        %v4195 = vld [vmem:[#allocation4 + $0x8] sm:$0xff]
        %v4196 = vld [vmem:[#allocation4 + $0x10] sm:$0xff]
        %v4197 = vld [vmem:[#allocation4 + $0x18] sm:$0xff]
        %v4198 = vld [vmem:[#allocation4 + $0x20] sm:$0xff]
        %v4199 = vld [vmem:[#allocation4 + $0x28] sm:$0xff]
        %v4200 = vld [vmem:[#allocation4 + $0x30] sm:$0xff]
        %v4201 = vld [vmem:[#allocation4 + $0x38] sm:$0xff]
        %v4202 = vld [vmem:[#allocation4 + $0x40] sm:$0xff]
        %v4203 = vld [vmem:[#allocation4 + $0x48] sm:$0xff]
        %v4204 = vld [vmem:[#allocation4 + $0x50] sm:$0xff]
        %v4205 = vld [vmem:[#allocation4 + $0x58] sm:$0xff]
        %v4206 = vld [vmem:[#allocation4 + $0x60] sm:$0xff]
        %v4207 = vld [vmem:[#allocation4 + $0x68] sm:$0xff]
        %v4208 = vld [vmem:[#allocation4 + $0x70] sm:$0xff]
        %v4209 = vld [vmem:[#allocation4 + $0x78] sm:$0xff]
        %v4210 = vld [vmem:[#allocation4 + $0x80] sm:$0xff]
        %v4211 = vld [vmem:[#allocation4 + $0x88] sm:$0xff]
        %v4212 = vld [vmem:[#allocation4 + $0x90] sm:$0xff]
        %v4213 = vld [vmem:[#allocation4 + $0x98] sm:$0xff]
        %v4214 = vadd.f32 %v4194, %v4116
        %v4215 = vadd.f32 %v4195, %v4119
        %v4216 = vadd.f32 %v4196, %v4124
        %v4217 = vadd.f32 %v4197, %v4127
        %v4218 = vadd.f32 %v4198, %v4132
        %v4219 = vadd.f32 %v4199, %v4135
        %v4220 = vadd.f32 %v4200, %v4140
        %v4221 = vadd.f32 %v4201, %v4143
        %v4222 = vadd.f32 %v4202, %v4148
        %v4223 = vadd.f32 %v4203, %v4151
        %v4224 = vadd.f32 %v4204, %v4156
        %v4225 = vadd.f32 %v4205, %v4159
        %v4226 = vadd.f32 %v4206, %v4164
        %v4227 = vadd.f32 %v4207, %v4167
        %v4228 = vadd.f32 %v4208, %v4172
        %v4229 = vadd.f32 %v4209, %v4175
        %v4230 = vadd.f32 %v4210, %v4180
        %v4231 = vadd.f32 %v4211, %v4183
        %v4232 = vadd.f32 %v4212, %v4188
        %v4233 = vadd.f32 %v4213, %v4191
        %4234 = vst [vmem:[#allocation4] sm:$0xff] %v4214
        %4235 = vst [vmem:[#allocation4 + $0x8] sm:$0xff] %v4215
        %4236 = vst [vmem:[#allocation4 + $0x10] sm:$0xff] %v4216
        %4237 = vst [vmem:[#allocation4 + $0x18] sm:$0xff] %v4217
        %4238 = vst [vmem:[#allocation4 + $0x20] sm:$0xff] %v4218
        %4239 = vst [vmem:[#allocation4 + $0x28] sm:$0xff] %v4219
        %4240 = vst [vmem:[#allocation4 + $0x30] sm:$0xff] %v4220
        %4241 = vst [vmem:[#allocation4 + $0x38] sm:$0xff] %v4221
        %4242 = vst [vmem:[#allocation4 + $0x40] sm:$0xff] %v4222
        %4243 = vst [vmem:[#allocation4 + $0x48] sm:$0xff] %v4223
        %4244 = vst [vmem:[#allocation4 + $0x50] sm:$0xff] %v4224
        %4245 = vst [vmem:[#allocation4 + $0x58] sm:$0xff] %v4225
        %4246 = vst [vmem:[#allocation4 + $0x60] sm:$0xff] %v4226
        %4247 = vst [vmem:[#allocation4 + $0x68] sm:$0xff] %v4227
        %4248 = vst [vmem:[#allocation4 + $0x70] sm:$0xff] %v4228
        %4249 = vst [vmem:[#allocation4 + $0x78] sm:$0xff] %v4229
        %4250 = vst [vmem:[#allocation4 + $0x80] sm:$0xff] %v4230
        %4251 = vst [vmem:[#allocation4 + $0x88] sm:$0xff] %v4231
        %4252 = vst [vmem:[#allocation4 + $0x90] sm:$0xff] %v4232
        %4253 = vst [vmem:[#allocation4 + $0x98] sm:$0xff] %v4233
        %v4254 = vld [vmem:[%s661] sm:$0xe]
        %v4255 = vld [vmem:[%s661 + $0x4] sm:$0xf]
        %v4256 = vld [vmem:[%s661 + $0x8] sm:$0x1]
        %v4257 = vld [vmem:[%s661 + $0xc] sm:$0xe]
        %v4258 = vld [vmem:[%s661 + $0x10] sm:$0xf]
        %v4259 = vld [vmem:[%s661 + $0x14] sm:$0x1]
        %v4260 = vld [vmem:[%s661 + $0x18] sm:$0xe]
        %v4261 = vld [vmem:[%s661 + $0x1c] sm:$0xf]
        %v4262 = vld [vmem:[%s661 + $0x20] sm:$0x1]
        %v4263 = vld [vmem:[%s661 + $0x24] sm:$0xe]
        %v4264 = vld [vmem:[%s661 + $0x28] sm:$0xf]
        %v4265 = vld [vmem:[%s661 + $0x2c] sm:$0x1]
        %v4266 = vld [vmem:[%s661 + $0x30] sm:$0xe]
        %v4267 = vld [vmem:[%s661 + $0x34] sm:$0xf]
        %v4268 = vld [vmem:[%s661 + $0x38] sm:$0x1]
        %v4269 = vld [vmem:[%s661 + $0x3c] sm:$0xe]
        %v4270 = vld [vmem:[%s661 + $0x40] sm:$0xf]
        %v4271 = vld [vmem:[%s661 + $0x44] sm:$0x1]
        %v4272 = vld [vmem:[%s661 + $0x48] sm:$0xe]
        %v4273 = vld [vmem:[%s661 + $0x4c] sm:$0xf]
        %v4274 = vld [vmem:[%s661 + $0x50] sm:$0x1]
        %v4275 = vld [vmem:[%s661 + $0x54] sm:$0xe]
        %v4276 = vld [vmem:[%s661 + $0x58] sm:$0xf]
        %v4277 = vld [vmem:[%s661 + $0x5c] sm:$0x1]
        %v4278 = vld [vmem:[%s661 + $0x60] sm:$0xe]
        %v4279 = vld [vmem:[%s661 + $0x64] sm:$0xf]
        %v4280 = vld [vmem:[%s661 + $0x68] sm:$0x1]
        %v4281 = vld [vmem:[%s661 + $0x6c] sm:$0xe]
        %v4282 = vld [vmem:[%s661 + $0x70] sm:$0xf]
        %v4283 = vld [vmem:[%s661 + $0x74] sm:$0x1]
        %v4314 = vrot.slane %v4254, 5
        %v4315 = vrot.slane %v4314, 4
        %v4316 = vrot.slane %v4255, 5
        %v4317 = vsel %vm1764, %v4315, %v4316
        %v4318 = vrot.slane %v4316, 4
        %v4319 = vrot.slane %v4256, 5
        %v4320 = vsel %vm1764, %v4318, %v4319
        %v4321 = vrot.slane %v4257, 5
        %v4322 = vrot.slane %v4321, 4
        %v4323 = vrot.slane %v4258, 5
        %v4324 = vsel %vm1764, %v4322, %v4323
        %v4325 = vrot.slane %v4323, 4
        %v4326 = vrot.slane %v4259, 5
        %v4327 = vsel %vm1764, %v4325, %v4326
        %v4328 = vrot.slane %v4260, 5
        %v4329 = vrot.slane %v4328, 4
        %v4330 = vrot.slane %v4261, 5
        %v4331 = vsel %vm1764, %v4329, %v4330
        %v4332 = vrot.slane %v4330, 4
        %v4333 = vrot.slane %v4262, 5
        %v4334 = vsel %vm1764, %v4332, %v4333
        %v4335 = vrot.slane %v4263, 5
        %v4336 = vrot.slane %v4335, 4
        %v4337 = vrot.slane %v4264, 5
        %v4338 = vsel %vm1764, %v4336, %v4337
        %v4339 = vrot.slane %v4337, 4
        %v4340 = vrot.slane %v4265, 5
        %v4341 = vsel %vm1764, %v4339, %v4340
        %v4342 = vrot.slane %v4266, 5
        %v4343 = vrot.slane %v4342, 4
        %v4344 = vrot.slane %v4267, 5
        %v4345 = vsel %vm1764, %v4343, %v4344
        %v4346 = vrot.slane %v4344, 4
        %v4347 = vrot.slane %v4268, 5
        %v4348 = vsel %vm1764, %v4346, %v4347
        %v4349 = vrot.slane %v4269, 5
        %v4350 = vrot.slane %v4349, 4
        %v4351 = vrot.slane %v4270, 5
        %v4352 = vsel %vm1764, %v4350, %v4351
        %v4353 = vrot.slane %v4351, 4
        %v4354 = vrot.slane %v4271, 5
        %v4355 = vsel %vm1764, %v4353, %v4354
        %v4356 = vrot.slane %v4272, 5
        %v4357 = vrot.slane %v4356, 4
        %v4358 = vrot.slane %v4273, 5
        %v4359 = vsel %vm1764, %v4357, %v4358
        %v4360 = vrot.slane %v4358, 4
        %v4361 = vrot.slane %v4274, 5
        %v4362 = vsel %vm1764, %v4360, %v4361
        %v4363 = vrot.slane %v4275, 5
        %v4364 = vrot.slane %v4363, 4
        %v4365 = vrot.slane %v4276, 5
        %v4366 = vsel %vm1764, %v4364, %v4365
        %v4367 = vrot.slane %v4365, 4
        %v4368 = vrot.slane %v4277, 5
        %v4369 = vsel %vm1764, %v4367, %v4368
        %v4370 = vrot.slane %v4278, 5
        %v4371 = vrot.slane %v4370, 4
        %v4372 = vrot.slane %v4279, 5
        %v4373 = vsel %vm1764, %v4371, %v4372
        %v4374 = vrot.slane %v4372, 4
        %v4375 = vrot.slane %v4280, 5
        %v4376 = vsel %vm1764, %v4374, %v4375
        %v4377 = vrot.slane %v4281, 5
        %v4378 = vrot.slane %v4377, 4
        %v4379 = vrot.slane %v4282, 5
        %v4380 = vsel %vm1764, %v4378, %v4379
        %v4381 = vrot.slane %v4379, 4
        %v4382 = vrot.slane %v4283, 5
        %v4383 = vsel %vm1764, %v4381, %v4382
        %s4384 = scalar_lea.vmem [#allocation9], 512
        %v4385 = vld [vmem:[%s4384] sm:$0xf]
        %v4386 = vld [vmem:[%s4384 + $0x4] sm:$0xf]
        %v4387 = vld [vmem:[%s4384 + $0x8] sm:$0xf]
        %v4388 = vld [vmem:[%s4384 + $0xc] sm:$0xf]
        %v4389 = vld [vmem:[%s4384 + $0x10] sm:$0xf]
        %v4390 = vld [vmem:[%s4384 + $0x14] sm:$0xf]
        %v4391 = vld [vmem:[%s4384 + $0x18] sm:$0xf]
        %v4392 = vld [vmem:[%s4384 + $0x1c] sm:$0xf]
        %v4393 = vld [vmem:[%s4384 + $0x20] sm:$0xf]
        %v4394 = vld [vmem:[%s4384 + $0x24] sm:$0xf]
        %v4395 = vld [vmem:[%s4384 + $0x28] sm:$0xf]
        %v4396 = vld [vmem:[%s4384 + $0x2c] sm:$0xf]
        %v4397 = vld [vmem:[%s4384 + $0x30] sm:$0xf]
        %v4398 = vld [vmem:[%s4384 + $0x34] sm:$0xf]
        %v4399 = vld [vmem:[%s4384 + $0x38] sm:$0xf]
        %v4400 = vld [vmem:[%s4384 + $0x3c] sm:$0xf]
        %v4401 = vunpack.c.l.b16 %v4317
        %v4402 = vunpack.c.l.b16 %v4320
        %v4403 = vunpack.c.l.b16 %v4324
        %v4404 = vunpack.c.l.b16 %v4327
        %v4405 = vunpack.c.l.b16 %v4331
        %v4406 = vunpack.c.l.b16 %v4334
        %v4407 = vunpack.c.l.b16 %v4338
        %v4408 = vunpack.c.l.b16 %v4341
        %v4409 = vunpack.c.l.b16 %v4345
        %v4410 = vunpack.c.l.b16 %v4348
        %v4411 = vunpack.c.l.b16 %v4352
        %v4412 = vunpack.c.l.b16 %v4355
        %v4413 = vunpack.c.l.b16 %v4359
        %v4414 = vunpack.c.l.b16 %v4362
        %v4415 = vunpack.c.l.b16 %v4366
        %v4416 = vunpack.c.l.b16 %v4369
        %v4417 = vunpack.c.l.b16 %v4373
        %v4418 = vunpack.c.l.b16 %v4376
        %v4419 = vunpack.c.l.b16 %v4380
        %v4420 = vunpack.c.l.b16 %v4383
        %v4421 = vpack.c.b16 %v4402, %v4401
        %v4422 = vpack.c.b16 %v4404, %v4403
        %v4423 = vpack.c.b16 %v4406, %v4405
        %v4424 = vpack.c.b16 %v4408, %v4407
        %v4425 = vpack.c.b16 %v4410, %v4409
        %v4426 = vpack.c.b16 %v4412, %v4411
        %v4427 = vpack.c.b16 %v4414, %v4413
        %v4428 = vpack.c.b16 %v4416, %v4415
        %v4429 = vpack.c.b16 %v4418, %v4417
        %v4430 = vpack.c.b16 %v4420, %v4419
        %v4457 = vunpack.c.l.b16 %v4385
        %v4458 = vunpack.c.l.b16 %v4386
        %v4459 = vunpack.c.l.b16 %v4387
        %v4460 = vunpack.c.l.b16 %v4388
        %v4461 = vunpack.c.l.b16 %v4389
        %v4462 = vunpack.c.l.b16 %v4390
        %v4463 = vunpack.c.l.b16 %v4391
        %v4464 = vunpack.c.l.b16 %v4392
        %v4465 = vunpack.c.l.b16 %v4393
        %v4466 = vunpack.c.l.b16 %v4394
        %v4467 = vunpack.c.l.b16 %v4395
        %v4468 = vunpack.c.l.b16 %v4396
        %v4469 = vunpack.c.l.b16 %v4397
        %v4470 = vunpack.c.l.b16 %v4398
        %v4471 = vunpack.c.l.b16 %v4399
        %v4472 = vunpack.c.l.b16 %v4400
        %v4473 = vpack.c.b16 %v4458, %v4457
        %v4474 = vpack.c.b16 %v4460, %v4459
        %v4475 = vpack.c.b16 %v4462, %v4461
        %v4476 = vpack.c.b16 %v4464, %v4463
        %v4477 = vpack.c.b16 %v4466, %v4465
        %v4478 = vpack.c.b16 %v4468, %v4467
        %v4479 = vpack.c.b16 %v4470, %v4469
        %v4480 = vpack.c.b16 %v4472, %v4471
        %4489 = vmatprep.subr.bf16.mxu0 0
        %4490 = vmatpush1.bf16.msra.mxu0 %v4480
        %4491 = vmatprep.subr.bf16.mxu0 0
        %4492 = vmatpush1.bf16.msra.mxu0 %v4479
        %4493 = vmatprep.subr.bf16.mxu0 0
        %4494 = vmatpush1.bf16.msra.mxu0 %v4478
        %4495 = vmatprep.subr.bf16.mxu0 0
        %4496 = vmatpush1.bf16.msra.mxu0 %v4477
        %4497 = vmatprep.subr.bf16.mxu0 0
        %4498 = vmatpush1.bf16.msra.mxu0 %v4476
        %4499 = vmatprep.subr.bf16.mxu0 0
        %4500 = vmatpush1.bf16.msra.mxu0 %v4475
        %4501 = vmatprep.subr.bf16.mxu0 0
        %4502 = vmatpush1.bf16.msra.mxu0 %v4474
        %4503 = vmatprep.subr.bf16.mxu0 0
        %4504 = vmatpush1.bf16.msra.mxu0 %v4473
        %4505 = vmatprep.subr.bf16.mxu0 0
        %4506 = vmatpush2.bf16.msra.mxu0 0
        %4507 = vmatprep.subr.bf16.mxu0 0
        %4508 = vmatpush2.bf16.msra.mxu0 0
        %4509 = vmatprep.subr.bf16.mxu0 0
        %4510 = vmatpush2.bf16.msra.mxu0 0
        %4511 = vmatprep.subr.bf16.mxu0 0
        %4512 = vmatpush2.bf16.msra.mxu0 0
        %4513 = vmatprep.subr.bf16.mxu0 0
        %4514 = vmatpush2.bf16.msra.mxu0 0
        %4515 = vmatprep.subr.bf16.mxu0 0
        %4516 = vmatpush2.bf16.msra.mxu0 0
        %4517 = vmatprep.subr.bf16.mxu0 0
        %4518 = vmatpush2.bf16.msra.mxu0 0
        %4519 = vmatprep.subr.bf16.mxu0 0
        %4520 = vmatpush2.bf16.msra.mxu0 0
        %4521 = vmatprep.mubr.bf16.mxu0 0
        %4522 = vmatmul.mubr.bf16.gmra.mxu0 %v4421
        %v4523 = vpop.f32.mrf.mxu0
        %v4524 = vadd.f32 0.0, %v4523
        %v4525 = vpop.f32.mrf.mxu0
        %v4526 = vpop.f32.mrf.mxu0
        %v4527 = vadd.f32 0.0, %v4526
        %v4528 = vpop.f32.mrf.mxu0
        %4529 = vmatprep.mubr.bf16.mxu0 0
        %4530 = vmatmul.mubr.bf16.gmra.mxu0 %v4422
        %v4531 = vpop.f32.mrf.mxu0
        %v4532 = vadd.f32 0.0, %v4531
        %v4533 = vpop.f32.mrf.mxu0
        %v4534 = vpop.f32.mrf.mxu0
        %v4535 = vadd.f32 0.0, %v4534
        %v4536 = vpop.f32.mrf.mxu0
        %4537 = vmatprep.mubr.bf16.mxu0 0
        %4538 = vmatmul.mubr.bf16.gmra.mxu0 %v4423
        %v4539 = vpop.f32.mrf.mxu0
        %v4540 = vadd.f32 0.0, %v4539
        %v4541 = vpop.f32.mrf.mxu0
        %v4542 = vpop.f32.mrf.mxu0
        %v4543 = vadd.f32 0.0, %v4542
        %v4544 = vpop.f32.mrf.mxu0
        %4545 = vmatprep.mubr.bf16.mxu0 0
        %4546 = vmatmul.mubr.bf16.gmra.mxu0 %v4424
        %v4547 = vpop.f32.mrf.mxu0
        %v4548 = vadd.f32 0.0, %v4547
        %v4549 = vpop.f32.mrf.mxu0
        %v4550 = vpop.f32.mrf.mxu0
        %v4551 = vadd.f32 0.0, %v4550
        %v4552 = vpop.f32.mrf.mxu0
        %4553 = vmatprep.mubr.bf16.mxu0 0
        %4554 = vmatmul.mubr.bf16.gmra.mxu0 %v4425
        %v4555 = vpop.f32.mrf.mxu0
        %v4556 = vadd.f32 0.0, %v4555
        %v4557 = vpop.f32.mrf.mxu0
        %v4558 = vpop.f32.mrf.mxu0
        %v4559 = vadd.f32 0.0, %v4558
        %v4560 = vpop.f32.mrf.mxu0
        %4561 = vmatprep.mubr.bf16.mxu0 0
        %4562 = vmatmul.mubr.bf16.gmra.mxu0 %v4426
        %v4563 = vpop.f32.mrf.mxu0
        %v4564 = vadd.f32 0.0, %v4563
        %v4565 = vpop.f32.mrf.mxu0
        %v4566 = vpop.f32.mrf.mxu0
        %v4567 = vadd.f32 0.0, %v4566
        %v4568 = vpop.f32.mrf.mxu0
        %4569 = vmatprep.mubr.bf16.mxu0 0
        %4570 = vmatmul.mubr.bf16.gmra.mxu0 %v4427
        %v4571 = vpop.f32.mrf.mxu0
        %v4572 = vadd.f32 0.0, %v4571
        %v4573 = vpop.f32.mrf.mxu0
        %v4574 = vpop.f32.mrf.mxu0
        %v4575 = vadd.f32 0.0, %v4574
        %v4576 = vpop.f32.mrf.mxu0
        %4577 = vmatprep.mubr.bf16.mxu0 0
        %4578 = vmatmul.mubr.bf16.gmra.mxu0 %v4428
        %v4579 = vpop.f32.mrf.mxu0
        %v4580 = vadd.f32 0.0, %v4579
        %v4581 = vpop.f32.mrf.mxu0
        %v4582 = vpop.f32.mrf.mxu0
        %v4583 = vadd.f32 0.0, %v4582
        %v4584 = vpop.f32.mrf.mxu0
        %4585 = vmatprep.mubr.bf16.mxu0 0
        %4586 = vmatmul.mubr.bf16.gmra.mxu0 %v4429
        %v4587 = vpop.f32.mrf.mxu0
        %v4588 = vadd.f32 0.0, %v4587
        %v4589 = vpop.f32.mrf.mxu0
        %v4590 = vpop.f32.mrf.mxu0
        %v4591 = vadd.f32 0.0, %v4590
        %v4592 = vpop.f32.mrf.mxu0
        %4593 = vmatprep.mubr.bf16.mxu0 0
        %4594 = vmatmul.mubr.bf16.gmra.mxu0 %v4430
        %v4595 = vpop.f32.mrf.mxu0
        %v4596 = vadd.f32 0.0, %v4595
        %v4597 = vpop.f32.mrf.mxu0
        %v4598 = vpop.f32.mrf.mxu0
        %v4599 = vadd.f32 0.0, %v4598
        %v4600 = vpop.f32.mrf.mxu0
        %4601 = vdwg.mxu0
        %v4602 = vld [vmem:[#allocation4] sm:$0xff]
        %v4603 = vld [vmem:[#allocation4 + $0x8] sm:$0xff]
        %v4604 = vld [vmem:[#allocation4 + $0x10] sm:$0xff]
        %v4605 = vld [vmem:[#allocation4 + $0x18] sm:$0xff]
        %v4606 = vld [vmem:[#allocation4 + $0x20] sm:$0xff]
        %v4607 = vld [vmem:[#allocation4 + $0x28] sm:$0xff]
        %v4608 = vld [vmem:[#allocation4 + $0x30] sm:$0xff]
        %v4609 = vld [vmem:[#allocation4 + $0x38] sm:$0xff]
        %v4610 = vld [vmem:[#allocation4 + $0x40] sm:$0xff]
        %v4611 = vld [vmem:[#allocation4 + $0x48] sm:$0xff]
        %v4612 = vld [vmem:[#allocation4 + $0x50] sm:$0xff]
        %v4613 = vld [vmem:[#allocation4 + $0x58] sm:$0xff]
        %v4614 = vld [vmem:[#allocation4 + $0x60] sm:$0xff]
        %v4615 = vld [vmem:[#allocation4 + $0x68] sm:$0xff]
        %v4616 = vld [vmem:[#allocation4 + $0x70] sm:$0xff]
        %v4617 = vld [vmem:[#allocation4 + $0x78] sm:$0xff]
        %v4618 = vld [vmem:[#allocation4 + $0x80] sm:$0xff]
        %v4619 = vld [vmem:[#allocation4 + $0x88] sm:$0xff]
        %v4620 = vld [vmem:[#allocation4 + $0x90] sm:$0xff]
        %v4621 = vld [vmem:[#allocation4 + $0x98] sm:$0xff]
        %v4622 = vadd.f32 %v4602, %v4524
        %v4623 = vadd.f32 %v4603, %v4527
        %v4624 = vadd.f32 %v4604, %v4532
        %v4625 = vadd.f32 %v4605, %v4535
        %v4626 = vadd.f32 %v4606, %v4540
        %v4627 = vadd.f32 %v4607, %v4543
        %v4628 = vadd.f32 %v4608, %v4548
        %v4629 = vadd.f32 %v4609, %v4551
        %v4630 = vadd.f32 %v4610, %v4556
        %v4631 = vadd.f32 %v4611, %v4559
        %v4632 = vadd.f32 %v4612, %v4564
        %v4633 = vadd.f32 %v4613, %v4567
        %v4634 = vadd.f32 %v4614, %v4572
        %v4635 = vadd.f32 %v4615, %v4575
        %v4636 = vadd.f32 %v4616, %v4580
        %v4637 = vadd.f32 %v4617, %v4583
        %v4638 = vadd.f32 %v4618, %v4588
        %v4639 = vadd.f32 %v4619, %v4591
        %v4640 = vadd.f32 %v4620, %v4596
        %v4641 = vadd.f32 %v4621, %v4599
        %4642 = vst [vmem:[#allocation4] sm:$0xff] %v4622
        %4643 = vst [vmem:[#allocation4 + $0x8] sm:$0xff] %v4623
        %4644 = vst [vmem:[#allocation4 + $0x10] sm:$0xff] %v4624
        %4645 = vst [vmem:[#allocation4 + $0x18] sm:$0xff] %v4625
        %4646 = vst [vmem:[#allocation4 + $0x20] sm:$0xff] %v4626
        %4647 = vst [vmem:[#allocation4 + $0x28] sm:$0xff] %v4627
        %4648 = vst [vmem:[#allocation4 + $0x30] sm:$0xff] %v4628
        %4649 = vst [vmem:[#allocation4 + $0x38] sm:$0xff] %v4629
        %4650 = vst [vmem:[#allocation4 + $0x40] sm:$0xff] %v4630
        %4651 = vst [vmem:[#allocation4 + $0x48] sm:$0xff] %v4631
        %4652 = vst [vmem:[#allocation4 + $0x50] sm:$0xff] %v4632
        %4653 = vst [vmem:[#allocation4 + $0x58] sm:$0xff] %v4633
        %4654 = vst [vmem:[#allocation4 + $0x60] sm:$0xff] %v4634
        %4655 = vst [vmem:[#allocation4 + $0x68] sm:$0xff] %v4635
        %4656 = vst [vmem:[#allocation4 + $0x70] sm:$0xff] %v4636
        %4657 = vst [vmem:[#allocation4 + $0x78] sm:$0xff] %v4637
        %4658 = vst [vmem:[#allocation4 + $0x80] sm:$0xff] %v4638
        %4659 = vst [vmem:[#allocation4 + $0x88] sm:$0xff] %v4639
        %4660 = vst [vmem:[#allocation4 + $0x90] sm:$0xff] %v4640
        %4661 = vst [vmem:[#allocation4 + $0x98] sm:$0xff] %v4641
        %v4662 = vld [vmem:[#allocation4] sm:$0xff]
        %v4663 = vld [vmem:[#allocation4 + $0x8] sm:$0xff]
        %v4664 = vld [vmem:[#allocation4 + $0x10] sm:$0xff]
        %v4665 = vld [vmem:[#allocation4 + $0x18] sm:$0xff]
        %v4666 = vld [vmem:[#allocation4 + $0x20] sm:$0xff]
        %v4667 = vld [vmem:[#allocation4 + $0x28] sm:$0xff]
        %v4668 = vld [vmem:[#allocation4 + $0x30] sm:$0xff]
        %v4669 = vld [vmem:[#allocation4 + $0x38] sm:$0xff]
        %v4670 = vld [vmem:[#allocation4 + $0x40] sm:$0xff]
        %v4671 = vld [vmem:[#allocation4 + $0x48] sm:$0xff]
        %v4672 = vld [vmem:[#allocation4 + $0x50] sm:$0xff]
        %v4673 = vld [vmem:[#allocation4 + $0x58] sm:$0xff]
        %v4674 = vld [vmem:[#allocation4 + $0x60] sm:$0xff]
        %v4675 = vld [vmem:[#allocation4 + $0x68] sm:$0xff]
        %v4676 = vld [vmem:[#allocation4 + $0x70] sm:$0xff]
        %v4677 = vld [vmem:[#allocation4 + $0x78] sm:$0xff]
        %v4678 = vld [vmem:[#allocation4 + $0x80] sm:$0xff]
        %v4679 = vld [vmem:[#allocation4 + $0x88] sm:$0xff]
        %v4680 = vld [vmem:[#allocation4 + $0x90] sm:$0xff]
        %v4681 = vld [vmem:[#allocation4 + $0x98] sm:$0xff]
        %v4682 = vld [vmem:[%s2] sm:$0x1]
        %v4684 = vlaneseq
        %v4685 = vshrl.u32 %v4684, 7
        %v4686 = vsub.s32 0, %v4685
        %v4687 = vrot.slane %v4682, %v4686
        %v4689 = vmul.f32 %v4662, %v4687
        %v4690 = vmul.f32 %v4663, %v4687
        %v4691 = vmul.f32 %v4664, %v4687
        %v4692 = vmul.f32 %v4665, %v4687
        %v4693 = vmul.f32 %v4666, %v4687
        %v4694 = vmul.f32 %v4667, %v4687
        %v4695 = vmul.f32 %v4668, %v4687
        %v4696 = vmul.f32 %v4669, %v4687
        %v4697 = vmul.f32 %v4670, %v4687
        %v4698 = vmul.f32 %v4671, %v4687
        %v4699 = vmul.f32 %v4672, %v4687
        %v4700 = vmul.f32 %v4673, %v4687
        %v4701 = vmul.f32 %v4674, %v4687
        %v4702 = vmul.f32 %v4675, %v4687
        %v4703 = vmul.f32 %v4676, %v4687
        %v4704 = vmul.f32 %v4677, %v4687
        %v4705 = vmul.f32 %v4678, %v4687
        %v4706 = vmul.f32 %v4679, %v4687
        %v4707 = vmul.f32 %v4680, %v4687
        %v4708 = vmul.f32 %v4681, %v4687
        %v4709 = vld [vmem:[%s3] sm:$0x1]
        %v4711 = vlaneseq
        %v4712 = vshrl.u32 %v4711, 7
        %v4713 = vsub.s32 0, %v4712
        %v4714 = vrot.slane %v4709, %v4713
        %v4716 = vadd.f32 %v4689, %v4714
        %v4717 = vadd.f32 %v4690, %v4714
        %v4718 = vadd.f32 %v4691, %v4714
        %v4719 = vadd.f32 %v4692, %v4714
        %v4720 = vadd.f32 %v4693, %v4714
        %v4721 = vadd.f32 %v4694, %v4714
        %v4722 = vadd.f32 %v4695, %v4714
        %v4723 = vadd.f32 %v4696, %v4714
        %v4724 = vadd.f32 %v4697, %v4714
        %v4725 = vadd.f32 %v4698, %v4714
        %v4726 = vadd.f32 %v4699, %v4714
        %v4727 = vadd.f32 %v4700, %v4714
        %v4728 = vadd.f32 %v4701, %v4714
        %v4729 = vadd.f32 %v4702, %v4714
        %v4730 = vadd.f32 %v4703, %v4714
        %v4731 = vadd.f32 %v4704, %v4714
        %v4732 = vadd.f32 %v4705, %v4714
        %v4733 = vadd.f32 %v4706, %v4714
        %v4734 = vadd.f32 %v4707, %v4714
        %v4735 = vadd.f32 %v4708, %v4714
        %v4736 = vmax.f32 %v4716, 0.0
        %v4737 = vmax.f32 %v4717, 0.0
        %v4738 = vmax.f32 %v4718, 0.0
        %v4739 = vmax.f32 %v4719, 0.0
        %v4740 = vmax.f32 %v4720, 0.0
        %v4741 = vmax.f32 %v4721, 0.0
        %v4742 = vmax.f32 %v4722, 0.0
        %v4743 = vmax.f32 %v4723, 0.0
        %v4744 = vmax.f32 %v4724, 0.0
        %v4745 = vmax.f32 %v4725, 0.0
        %v4746 = vmax.f32 %v4726, 0.0
        %v4747 = vmax.f32 %v4727, 0.0
        %v4748 = vmax.f32 %v4728, 0.0
        %v4749 = vmax.f32 %v4729, 0.0
        %v4750 = vmax.f32 %v4730, 0.0
        %v4751 = vmax.f32 %v4731, 0.0
        %v4752 = vmax.f32 %v4732, 0.0
        %v4753 = vmax.f32 %v4733, 0.0
        %v4754 = vmax.f32 %v4734, 0.0
        %v4755 = vmax.f32 %v4735, 0.0
        %v4756 = vpack.c.bf16 %v4737, %v4736
        %v4757 = vpack.c.bf16 %v4739, %v4738
        %v4758 = vpack.c.bf16 %v4741, %v4740
        %v4759 = vpack.c.bf16 %v4743, %v4742
        %v4760 = vpack.c.bf16 %v4745, %v4744
        %v4761 = vpack.c.bf16 %v4747, %v4746
        %v4762 = vpack.c.bf16 %v4749, %v4748
        %v4763 = vpack.c.bf16 %v4751, %v4750
        %v4764 = vpack.c.bf16 %v4753, %v4752
        %v4765 = vpack.c.bf16 %v4755, %v4754
        %v4766 = vld [vmem:[#allocation3] sm:$0x1]
        %v4767 = vsel %vm358, 0, %v4766
        %4768 = vst [vmem:[#allocation3] sm:$0x1] %v4767
        %v4769 = vld [vmem:[#allocation3 + $0xc] sm:$0x1]
        %v4770 = vsel %vm358, 0, %v4769
        %4771 = vst [vmem:[#allocation3 + $0xc] sm:$0x1] %v4770
        %v4772 = vld [vmem:[#allocation3 + $0x18] sm:$0x1]
        %v4773 = vsel %vm358, 0, %v4772
        %4774 = vst [vmem:[#allocation3 + $0x18] sm:$0x1] %v4773
        %v4775 = vld [vmem:[#allocation3 + $0x24] sm:$0x1]
        %v4776 = vsel %vm358, 0, %v4775
        %4777 = vst [vmem:[#allocation3 + $0x24] sm:$0x1] %v4776
        %v4778 = vld [vmem:[#allocation3 + $0x30] sm:$0x1]
        %v4779 = vsel %vm358, 0, %v4778
        %4780 = vst [vmem:[#allocation3 + $0x30] sm:$0x1] %v4779
        %v4781 = vld [vmem:[#allocation3 + $0x3c] sm:$0x1]
        %v4782 = vsel %vm358, 0, %v4781
        %4783 = vst [vmem:[#allocation3 + $0x3c] sm:$0x1] %v4782
        %v4784 = vld [vmem:[#allocation3 + $0x48] sm:$0x1]
        %v4785 = vsel %vm358, 0, %v4784
        %4786 = vst [vmem:[#allocation3 + $0x48] sm:$0x1] %v4785
        %v4787 = vld [vmem:[#allocation3 + $0x54] sm:$0x1]
        %v4788 = vsel %vm358, 0, %v4787
        %4789 = vst [vmem:[#allocation3 + $0x54] sm:$0x1] %v4788
        %v4790 = vld [vmem:[#allocation3 + $0x60] sm:$0x1]
        %v4791 = vsel %vm358, 0, %v4790
        %4792 = vst [vmem:[#allocation3 + $0x60] sm:$0x1] %v4791
        %v4793 = vld [vmem:[#allocation3 + $0x6c] sm:$0x1]
        %v4794 = vsel %vm358, 0, %v4793
        %4795 = vst [vmem:[#allocation3 + $0x6c] sm:$0x1] %v4794
        %v4796 = vld [vmem:[#allocation3 + $0x8] sm:$0x1]
        %v4797 = vsel %vm396, 0, %v4796
        %4798 = vst [vmem:[#allocation3 + $0x8] sm:$0x1] %v4797
        %v4799 = vld [vmem:[#allocation3 + $0x14] sm:$0x1]
        %v4800 = vsel %vm396, 0, %v4799
        %4801 = vst [vmem:[#allocation3 + $0x14] sm:$0x1] %v4800
        %v4802 = vld [vmem:[#allocation3 + $0x20] sm:$0x1]
        %v4803 = vsel %vm396, 0, %v4802
        %4804 = vst [vmem:[#allocation3 + $0x20] sm:$0x1] %v4803
        %v4805 = vld [vmem:[#allocation3 + $0x2c] sm:$0x1]
        %v4806 = vsel %vm396, 0, %v4805
        %4807 = vst [vmem:[#allocation3 + $0x2c] sm:$0x1] %v4806
        %v4808 = vld [vmem:[#allocation3 + $0x38] sm:$0x1]
        %v4809 = vsel %vm396, 0, %v4808
        %4810 = vst [vmem:[#allocation3 + $0x38] sm:$0x1] %v4809
        %v4811 = vld [vmem:[#allocation3 + $0x44] sm:$0x1]
        %v4812 = vsel %vm396, 0, %v4811
        %4813 = vst [vmem:[#allocation3 + $0x44] sm:$0x1] %v4812
        %v4814 = vld [vmem:[#allocation3 + $0x50] sm:$0x1]
        %v4815 = vsel %vm396, 0, %v4814
        %4816 = vst [vmem:[#allocation3 + $0x50] sm:$0x1] %v4815
        %v4817 = vld [vmem:[#allocation3 + $0x5c] sm:$0x1]
        %v4818 = vsel %vm396, 0, %v4817
        %4819 = vst [vmem:[#allocation3 + $0x5c] sm:$0x1] %v4818
        %v4820 = vld [vmem:[#allocation3 + $0x68] sm:$0x1]
        %v4821 = vsel %vm396, 0, %v4820
        %4822 = vst [vmem:[#allocation3 + $0x68] sm:$0x1] %v4821
        %v4823 = vld [vmem:[#allocation3 + $0x74] sm:$0x1]
        %v4824 = vsel %vm396, 0, %v4823
        %4825 = vst [vmem:[#allocation3 + $0x74] sm:$0x1] %v4824
        %v4836 = vunpack.c.l.b16 %v4756
        %v4837 = vunpack.c.h.b16 %v4756
        %v4838 = vunpack.c.l.b16 %v4757
        %v4839 = vunpack.c.h.b16 %v4757
        %v4840 = vunpack.c.l.b16 %v4758
        %v4841 = vunpack.c.h.b16 %v4758
        %v4842 = vunpack.c.l.b16 %v4759
        %v4843 = vunpack.c.h.b16 %v4759
        %v4844 = vunpack.c.l.b16 %v4760
        %v4845 = vunpack.c.h.b16 %v4760
        %v4846 = vunpack.c.l.b16 %v4761
        %v4847 = vunpack.c.h.b16 %v4761
        %v4848 = vunpack.c.l.b16 %v4762
        %v4849 = vunpack.c.h.b16 %v4762
        %v4850 = vunpack.c.l.b16 %v4763
        %v4851 = vunpack.c.h.b16 %v4763
        %v4852 = vunpack.c.l.b16 %v4764
        %v4853 = vunpack.c.h.b16 %v4764
        %v4854 = vunpack.c.l.b16 %v4765
        %v4855 = vunpack.c.h.b16 %v4765
        %v4856 = vpack.c.b16 %v4836, %v4836
        %v4857 = vpack.c.b16 %v4837, %v4837
        %v4858 = vpack.c.b16 %v4838, %v4838
        %v4859 = vpack.c.b16 %v4839, %v4839
        %v4860 = vpack.c.b16 %v4840, %v4840
        %v4861 = vpack.c.b16 %v4841, %v4841
        %v4862 = vpack.c.b16 %v4842, %v4842
        %v4863 = vpack.c.b16 %v4843, %v4843
        %v4864 = vpack.c.b16 %v4844, %v4844
        %v4865 = vpack.c.b16 %v4845, %v4845
        %v4866 = vpack.c.b16 %v4846, %v4846
        %v4867 = vpack.c.b16 %v4847, %v4847
        %v4868 = vpack.c.b16 %v4848, %v4848
        %v4869 = vpack.c.b16 %v4849, %v4849
        %v4870 = vpack.c.b16 %v4850, %v4850
        %v4871 = vpack.c.b16 %v4851, %v4851
        %v4872 = vpack.c.b16 %v4852, %v4852
        %v4873 = vpack.c.b16 %v4853, %v4853
        %v4874 = vpack.c.b16 %v4854, %v4854
        %v4875 = vpack.c.b16 %v4855, %v4855
        %v4877 = vshrl.u32 %v4856, 16
        %v4879 = vrot.slane %v4877, 7
        %v4880 = vshll.u32 %v4856, 16
        %v4882 = vor.u32 %v4879, %v4880
        %v4883 = vrot.slane %v4879, 4
        %v4885 = vshrl.u32 %v4857, 16
        %v4887 = vrot.slane %v4885, 7
        %v4888 = vshll.u32 %v4857, 16
        %v4890 = vor.u32 %v4887, %v4888
        %v4891 = vsel %vm500, %v4883, %v4890
        %v4892 = vrot.slane %v4887, 4
        %v4894 = vshrl.u32 %v4858, 16
        %v4896 = vrot.slane %v4894, 7
        %v4897 = vshll.u32 %v4858, 16
        %v4899 = vor.u32 %v4896, %v4897
        %v4900 = vrot.slane %v4896, 4
        %v4902 = vshrl.u32 %v4859, 16
        %v4904 = vrot.slane %v4902, 7
        %v4905 = vshll.u32 %v4859, 16
        %v4907 = vor.u32 %v4904, %v4905
        %v4908 = vsel %vm500, %v4900, %v4907
        %v4909 = vrot.slane %v4904, 4
        %v4911 = vshrl.u32 %v4860, 16
        %v4913 = vrot.slane %v4911, 7
        %v4914 = vshll.u32 %v4860, 16
        %v4916 = vor.u32 %v4913, %v4914
        %v4917 = vrot.slane %v4913, 4
        %v4919 = vshrl.u32 %v4861, 16
        %v4921 = vrot.slane %v4919, 7
        %v4922 = vshll.u32 %v4861, 16
        %v4924 = vor.u32 %v4921, %v4922
        %v4925 = vsel %vm500, %v4917, %v4924
        %v4926 = vrot.slane %v4921, 4
        %v4928 = vshrl.u32 %v4862, 16
        %v4930 = vrot.slane %v4928, 7
        %v4931 = vshll.u32 %v4862, 16
        %v4933 = vor.u32 %v4930, %v4931
        %v4934 = vrot.slane %v4930, 4
        %v4936 = vshrl.u32 %v4863, 16
        %v4938 = vrot.slane %v4936, 7
        %v4939 = vshll.u32 %v4863, 16
        %v4941 = vor.u32 %v4938, %v4939
        %v4942 = vsel %vm500, %v4934, %v4941
        %v4943 = vrot.slane %v4938, 4
        %v4945 = vshrl.u32 %v4864, 16
        %v4947 = vrot.slane %v4945, 7
        %v4948 = vshll.u32 %v4864, 16
        %v4950 = vor.u32 %v4947, %v4948
        %v4951 = vrot.slane %v4947, 4
        %v4953 = vshrl.u32 %v4865, 16
        %v4955 = vrot.slane %v4953, 7
        %v4956 = vshll.u32 %v4865, 16
        %v4958 = vor.u32 %v4955, %v4956
        %v4959 = vsel %vm500, %v4951, %v4958
        %v4960 = vrot.slane %v4955, 4
        %v4962 = vshrl.u32 %v4866, 16
        %v4964 = vrot.slane %v4962, 7
        %v4965 = vshll.u32 %v4866, 16
        %v4967 = vor.u32 %v4964, %v4965
        %v4968 = vrot.slane %v4964, 4
        %v4970 = vshrl.u32 %v4867, 16
        %v4972 = vrot.slane %v4970, 7
        %v4973 = vshll.u32 %v4867, 16
        %v4975 = vor.u32 %v4972, %v4973
        %v4976 = vsel %vm500, %v4968, %v4975
        %v4977 = vrot.slane %v4972, 4
        %v4979 = vshrl.u32 %v4868, 16
        %v4981 = vrot.slane %v4979, 7
        %v4982 = vshll.u32 %v4868, 16
        %v4984 = vor.u32 %v4981, %v4982
        %v4985 = vrot.slane %v4981, 4
        %v4987 = vshrl.u32 %v4869, 16
        %v4989 = vrot.slane %v4987, 7
        %v4990 = vshll.u32 %v4869, 16
        %v4992 = vor.u32 %v4989, %v4990
        %v4993 = vsel %vm500, %v4985, %v4992
        %v4994 = vrot.slane %v4989, 4
        %v4996 = vshrl.u32 %v4870, 16
        %v4998 = vrot.slane %v4996, 7
        %v4999 = vshll.u32 %v4870, 16
        %v5001 = vor.u32 %v4998, %v4999
        %v5002 = vrot.slane %v4998, 4
        %v5004 = vshrl.u32 %v4871, 16
        %v5006 = vrot.slane %v5004, 7
        %v5007 = vshll.u32 %v4871, 16
        %v5009 = vor.u32 %v5006, %v5007
        %v5010 = vsel %vm500, %v5002, %v5009
        %v5011 = vrot.slane %v5006, 4
        %v5013 = vshrl.u32 %v4872, 16
        %v5015 = vrot.slane %v5013, 7
        %v5016 = vshll.u32 %v4872, 16
        %v5018 = vor.u32 %v5015, %v5016
        %v5019 = vrot.slane %v5015, 4
        %v5021 = vshrl.u32 %v4873, 16
        %v5023 = vrot.slane %v5021, 7
        %v5024 = vshll.u32 %v4873, 16
        %v5026 = vor.u32 %v5023, %v5024
        %v5027 = vsel %vm500, %v5019, %v5026
        %v5028 = vrot.slane %v5023, 4
        %v5030 = vshrl.u32 %v4874, 16
        %v5032 = vrot.slane %v5030, 7
        %v5033 = vshll.u32 %v4874, 16
        %v5035 = vor.u32 %v5032, %v5033
        %v5036 = vrot.slane %v5032, 4
        %v5038 = vshrl.u32 %v4875, 16
        %v5040 = vrot.slane %v5038, 7
        %v5041 = vshll.u32 %v4875, 16
        %v5043 = vor.u32 %v5040, %v5041
        %v5044 = vsel %vm500, %v5036, %v5043
        %v5045 = vrot.slane %v5040, 4
        %v5076 = vld [vmem:[#allocation3] sm:$0xf]
        %v5077 = vsel %vm663, %v4882, %v5076
        %5078 = vst [vmem:[#allocation3] sm:$0xf] %v5077
        %5079 = vst [vmem:[#allocation3 + $0x4] sm:$0xf] %v4891
        %v5080 = vld [vmem:[#allocation3 + $0x8] sm:$0x1]
        %v5081 = vsel %vm358, %v4892, %v5080
        %5082 = vst [vmem:[#allocation3 + $0x8] sm:$0x1] %v5081
        %v5083 = vld [vmem:[#allocation3 + $0xc] sm:$0xf]
        %v5084 = vsel %vm663, %v4899, %v5083
        %5085 = vst [vmem:[#allocation3 + $0xc] sm:$0xf] %v5084
        %5086 = vst [vmem:[#allocation3 + $0x10] sm:$0xf] %v4908
        %v5087 = vld [vmem:[#allocation3 + $0x14] sm:$0x1]
        %v5088 = vsel %vm358, %v4909, %v5087
        %5089 = vst [vmem:[#allocation3 + $0x14] sm:$0x1] %v5088
        %v5090 = vld [vmem:[#allocation3 + $0x18] sm:$0xf]
        %v5091 = vsel %vm663, %v4916, %v5090
        %5092 = vst [vmem:[#allocation3 + $0x18] sm:$0xf] %v5091
        %5093 = vst [vmem:[#allocation3 + $0x1c] sm:$0xf] %v4925
        %v5094 = vld [vmem:[#allocation3 + $0x20] sm:$0x1]
        %v5095 = vsel %vm358, %v4926, %v5094
        %5096 = vst [vmem:[#allocation3 + $0x20] sm:$0x1] %v5095
        %v5097 = vld [vmem:[#allocation3 + $0x24] sm:$0xf]
        %v5098 = vsel %vm663, %v4933, %v5097
        %5099 = vst [vmem:[#allocation3 + $0x24] sm:$0xf] %v5098
        %5100 = vst [vmem:[#allocation3 + $0x28] sm:$0xf] %v4942
        %v5101 = vld [vmem:[#allocation3 + $0x2c] sm:$0x1]
        %v5102 = vsel %vm358, %v4943, %v5101
        %5103 = vst [vmem:[#allocation3 + $0x2c] sm:$0x1] %v5102
        %v5104 = vld [vmem:[#allocation3 + $0x30] sm:$0xf]
        %v5105 = vsel %vm663, %v4950, %v5104
        %5106 = vst [vmem:[#allocation3 + $0x30] sm:$0xf] %v5105
        %5107 = vst [vmem:[#allocation3 + $0x34] sm:$0xf] %v4959
        %v5108 = vld [vmem:[#allocation3 + $0x38] sm:$0x1]
        %v5109 = vsel %vm358, %v4960, %v5108
        %5110 = vst [vmem:[#allocation3 + $0x38] sm:$0x1] %v5109
        %v5111 = vld [vmem:[#allocation3 + $0x3c] sm:$0xf]
        %v5112 = vsel %vm663, %v4967, %v5111
        %5113 = vst [vmem:[#allocation3 + $0x3c] sm:$0xf] %v5112
        %5114 = vst [vmem:[#allocation3 + $0x40] sm:$0xf] %v4976
        %v5115 = vld [vmem:[#allocation3 + $0x44] sm:$0x1]
        %v5116 = vsel %vm358, %v4977, %v5115
        %5117 = vst [vmem:[#allocation3 + $0x44] sm:$0x1] %v5116
        %v5118 = vld [vmem:[#allocation3 + $0x48] sm:$0xf]
        %v5119 = vsel %vm663, %v4984, %v5118
        %5120 = vst [vmem:[#allocation3 + $0x48] sm:$0xf] %v5119
        %5121 = vst [vmem:[#allocation3 + $0x4c] sm:$0xf] %v4993
        %v5122 = vld [vmem:[#allocation3 + $0x50] sm:$0x1]
        %v5123 = vsel %vm358, %v4994, %v5122
        %5124 = vst [vmem:[#allocation3 + $0x50] sm:$0x1] %v5123
        %v5125 = vld [vmem:[#allocation3 + $0x54] sm:$0xf]
        %v5126 = vsel %vm663, %v5001, %v5125
        %5127 = vst [vmem:[#allocation3 + $0x54] sm:$0xf] %v5126
        %5128 = vst [vmem:[#allocation3 + $0x58] sm:$0xf] %v5010
        %v5129 = vld [vmem:[#allocation3 + $0x5c] sm:$0x1]
        %v5130 = vsel %vm358, %v5011, %v5129
        %5131 = vst [vmem:[#allocation3 + $0x5c] sm:$0x1] %v5130
        %v5132 = vld [vmem:[#allocation3 + $0x60] sm:$0xf]
        %v5133 = vsel %vm663, %v5018, %v5132
        %5134 = vst [vmem:[#allocation3 + $0x60] sm:$0xf] %v5133
        %5135 = vst [vmem:[#allocation3 + $0x64] sm:$0xf] %v5027
        %v5136 = vld [vmem:[#allocation3 + $0x68] sm:$0x1]
        %v5137 = vsel %vm358, %v5028, %v5136
        %5138 = vst [vmem:[#allocation3 + $0x68] sm:$0x1] %v5137
        %v5139 = vld [vmem:[#allocation3 + $0x6c] sm:$0xf]
        %v5140 = vsel %vm663, %v5035, %v5139
        %5141 = vst [vmem:[#allocation3 + $0x6c] sm:$0xf] %v5140
        %5142 = vst [vmem:[#allocation3 + $0x70] sm:$0xf] %v5044
        %v5143 = vld [vmem:[#allocation3 + $0x74] sm:$0x1]
        %v5144 = vsel %vm358, %v5045, %v5143
        %5145 = vst [vmem:[#allocation3 + $0x74] sm:$0x1] %v5144
        %p5146 = scmp.eq.s32.totalorder %s30, 0
        // Predicated region
        $region69: #{tpu_custom_call.1} parent=47 // pred_check
          %p5147 = pneg %p5146
        $region70: #{tpu_custom_call.1} parent=47 // pred_check_branch
          %5149 = sbr.rel (%p5147) target = $region72
        $region71: #{tpu_custom_call.1} parent=47 // pred_region
          %5150 = vst [vmem:[#allocation3] sm:$0xf] 0
          %5151 = vst [vmem:[#allocation3 + $0x4] sm:$0xf] 0
          %5152 = vst [vmem:[#allocation3 + $0x8] sm:$0x1] 0
        $region72: #{tpu_custom_call.1} parent=47 // pred_fallthru
          _
        %p5153 = scmp.eq.s32.totalorder %s30, 1
        // Predicated region
        $region73: #{tpu_custom_call.1} parent=47 // pred_check
          %p5154 = pneg %p5153
        $region74: #{tpu_custom_call.1} parent=47 // pred_check_branch
          %5156 = sbr.rel (%p5154) target = $region76
        $region75: #{tpu_custom_call.1} parent=47 // pred_region
          %s5157 = scalar_lea.vmem [#allocation3], 108
          %5158 = vst [vmem:[%s5157] sm:$0xf] 0
          %5159 = vst [vmem:[%s5157 + $0x4] sm:$0xf] 0
          %5160 = vst [vmem:[%s5157 + $0x8] sm:$0x1] 0
        $region76: #{tpu_custom_call.1} parent=47 // pred_fallthru
          _
        %v5161 = vld [vmem:[#allocation3] sm:$0xf]
        %v5162 = vld [vmem:[#allocation3 + $0x4] sm:$0xf]
        %v5163 = vld [vmem:[#allocation3 + $0xc] sm:$0xf]
        %v5164 = vld [vmem:[#allocation3 + $0x10] sm:$0xf]
        %v5165 = vld [vmem:[#allocation3 + $0x18] sm:$0xf]
        %v5166 = vld [vmem:[#allocation3 + $0x1c] sm:$0xf]
        %v5167 = vld [vmem:[#allocation3 + $0x24] sm:$0xf]
        %v5168 = vld [vmem:[#allocation3 + $0x28] sm:$0xf]
        %v5169 = vld [vmem:[#allocation3 + $0x30] sm:$0xf]
        %v5170 = vld [vmem:[#allocation3 + $0x34] sm:$0xf]
        %v5171 = vld [vmem:[#allocation3 + $0x3c] sm:$0xf]
        %v5172 = vld [vmem:[#allocation3 + $0x40] sm:$0xf]
        %v5173 = vld [vmem:[#allocation3 + $0x48] sm:$0xf]
        %v5174 = vld [vmem:[#allocation3 + $0x4c] sm:$0xf]
        %v5175 = vld [vmem:[#allocation3 + $0x54] sm:$0xf]
        %v5176 = vld [vmem:[#allocation3 + $0x58] sm:$0xf]
        %v5177 = vld [vmem:[#allocation11] sm:$0xf]
        %v5178 = vld [vmem:[#allocation11 + $0x4] sm:$0xf]
        %v5179 = vld [vmem:[#allocation11 + $0x8] sm:$0xf]
        %v5180 = vld [vmem:[#allocation11 + $0xc] sm:$0xf]
        %v5181 = vld [vmem:[#allocation11 + $0x10] sm:$0xf]
        %v5182 = vld [vmem:[#allocation11 + $0x14] sm:$0xf]
        %v5183 = vld [vmem:[#allocation11 + $0x18] sm:$0xf]
        %v5184 = vld [vmem:[#allocation11 + $0x1c] sm:$0xf]
        %v5185 = vld [vmem:[#allocation11 + $0x20] sm:$0xf]
        %v5186 = vld [vmem:[#allocation11 + $0x24] sm:$0xf]
        %v5187 = vld [vmem:[#allocation11 + $0x28] sm:$0xf]
        %v5188 = vld [vmem:[#allocation11 + $0x2c] sm:$0xf]
        %v5189 = vld [vmem:[#allocation11 + $0x30] sm:$0xf]
        %v5190 = vld [vmem:[#allocation11 + $0x34] sm:$0xf]
        %v5191 = vld [vmem:[#allocation11 + $0x38] sm:$0xf]
        %v5192 = vld [vmem:[#allocation11 + $0x3c] sm:$0xf]
        %v5209 = vunpack.c.l.b16 %v5161
        %v5210 = vunpack.c.l.b16 %v5162
        %v5211 = vunpack.c.l.b16 %v5163
        %v5212 = vunpack.c.l.b16 %v5164
        %v5213 = vunpack.c.l.b16 %v5165
        %v5214 = vunpack.c.l.b16 %v5166
        %v5215 = vunpack.c.l.b16 %v5167
        %v5216 = vunpack.c.l.b16 %v5168
        %v5217 = vunpack.c.l.b16 %v5169
        %v5218 = vunpack.c.l.b16 %v5170
        %v5219 = vunpack.c.l.b16 %v5171
        %v5220 = vunpack.c.l.b16 %v5172
        %v5221 = vunpack.c.l.b16 %v5173
        %v5222 = vunpack.c.l.b16 %v5174
        %v5223 = vunpack.c.l.b16 %v5175
        %v5224 = vunpack.c.l.b16 %v5176
        %v5225 = vpack.c.b16 %v5210, %v5209
        %v5226 = vpack.c.b16 %v5212, %v5211
        %v5227 = vpack.c.b16 %v5214, %v5213
        %v5228 = vpack.c.b16 %v5216, %v5215
        %v5229 = vpack.c.b16 %v5218, %v5217
        %v5230 = vpack.c.b16 %v5220, %v5219
        %v5231 = vpack.c.b16 %v5222, %v5221
        %v5232 = vpack.c.b16 %v5224, %v5223
        %v5257 = vunpack.c.l.b16 %v5177
        %v5258 = vunpack.c.l.b16 %v5178
        %v5259 = vunpack.c.l.b16 %v5179
        %v5260 = vunpack.c.l.b16 %v5180
        %v5261 = vunpack.c.l.b16 %v5181
        %v5262 = vunpack.c.l.b16 %v5182
        %v5263 = vunpack.c.l.b16 %v5183
        %v5264 = vunpack.c.l.b16 %v5184
        %v5265 = vunpack.c.l.b16 %v5185
        %v5266 = vunpack.c.l.b16 %v5186
        %v5267 = vunpack.c.l.b16 %v5187
        %v5268 = vunpack.c.l.b16 %v5188
        %v5269 = vunpack.c.l.b16 %v5189
        %v5270 = vunpack.c.l.b16 %v5190
        %v5271 = vunpack.c.l.b16 %v5191
        %v5272 = vunpack.c.l.b16 %v5192
        %v5273 = vpack.c.b16 %v5258, %v5257
        %v5274 = vpack.c.b16 %v5260, %v5259
        %v5275 = vpack.c.b16 %v5262, %v5261
        %v5276 = vpack.c.b16 %v5264, %v5263
        %v5277 = vpack.c.b16 %v5266, %v5265
        %v5278 = vpack.c.b16 %v5268, %v5267
        %v5279 = vpack.c.b16 %v5270, %v5269
        %v5280 = vpack.c.b16 %v5272, %v5271
        %5289 = vmatprep.subr.bf16.mxu0 0
        %5290 = vmatpush1.bf16.msra.mxu0 %v5280
        %5291 = vmatprep.subr.bf16.mxu0 0
        %5292 = vmatpush1.bf16.msra.mxu0 %v5279
        %5293 = vmatprep.subr.bf16.mxu0 0
        %5294 = vmatpush1.bf16.msra.mxu0 %v5278
        %5295 = vmatprep.subr.bf16.mxu0 0
        %5296 = vmatpush1.bf16.msra.mxu0 %v5277
        %5297 = vmatprep.subr.bf16.mxu0 0
        %5298 = vmatpush1.bf16.msra.mxu0 %v5276
        %5299 = vmatprep.subr.bf16.mxu0 0
        %5300 = vmatpush1.bf16.msra.mxu0 %v5275
        %5301 = vmatprep.subr.bf16.mxu0 0
        %5302 = vmatpush1.bf16.msra.mxu0 %v5274
        %5303 = vmatprep.subr.bf16.mxu0 0
        %5304 = vmatpush1.bf16.msra.mxu0 %v5273
        %5305 = vmatprep.subr.bf16.mxu0 0
        %5306 = vmatpush2.bf16.msra.mxu0 0
        %5307 = vmatprep.subr.bf16.mxu0 0
        %5308 = vmatpush2.bf16.msra.mxu0 0
        %5309 = vmatprep.subr.bf16.mxu0 0
        %5310 = vmatpush2.bf16.msra.mxu0 0
        %5311 = vmatprep.subr.bf16.mxu0 0
        %5312 = vmatpush2.bf16.msra.mxu0 0
        %5313 = vmatprep.subr.bf16.mxu0 0
        %5314 = vmatpush2.bf16.msra.mxu0 0
        %5315 = vmatprep.subr.bf16.mxu0 0
        %5316 = vmatpush2.bf16.msra.mxu0 0
        %5317 = vmatprep.subr.bf16.mxu0 0
        %5318 = vmatpush2.bf16.msra.mxu0 0
        %5319 = vmatprep.subr.bf16.mxu0 0
        %5320 = vmatpush2.bf16.msra.mxu0 0
        %5321 = vmatprep.mubr.bf16.mxu0 0
        %5322 = vmatmul.mubr.bf16.gmra.mxu0 %v5225
        %v5323 = vpop.f32.mrf.mxu0
        %v5324 = vadd.f32 0.0, %v5323
        %v5325 = vpop.f32.mrf.mxu0
        %v5326 = vpop.f32.mrf.mxu0
        %v5327 = vadd.f32 0.0, %v5326
        %v5328 = vpop.f32.mrf.mxu0
        %5329 = vmatprep.mubr.bf16.mxu0 0
        %5330 = vmatmul.mubr.bf16.gmra.mxu0 %v5226
        %v5331 = vpop.f32.mrf.mxu0
        %v5332 = vadd.f32 0.0, %v5331
        %v5333 = vpop.f32.mrf.mxu0
        %v5334 = vpop.f32.mrf.mxu0
        %v5335 = vadd.f32 0.0, %v5334
        %v5336 = vpop.f32.mrf.mxu0
        %5337 = vmatprep.mubr.bf16.mxu0 0
        %5338 = vmatmul.mubr.bf16.gmra.mxu0 %v5227
        %v5339 = vpop.f32.mrf.mxu0
        %v5340 = vadd.f32 0.0, %v5339
        %v5341 = vpop.f32.mrf.mxu0
        %v5342 = vpop.f32.mrf.mxu0
        %v5343 = vadd.f32 0.0, %v5342
        %v5344 = vpop.f32.mrf.mxu0
        %5345 = vmatprep.mubr.bf16.mxu0 0
        %5346 = vmatmul.mubr.bf16.gmra.mxu0 %v5228
        %v5347 = vpop.f32.mrf.mxu0
        %v5348 = vadd.f32 0.0, %v5347
        %v5349 = vpop.f32.mrf.mxu0
        %v5350 = vpop.f32.mrf.mxu0
        %v5351 = vadd.f32 0.0, %v5350
        %v5352 = vpop.f32.mrf.mxu0
        %5353 = vmatprep.mubr.bf16.mxu0 0
        %5354 = vmatmul.mubr.bf16.gmra.mxu0 %v5229
        %v5355 = vpop.f32.mrf.mxu0
        %v5356 = vadd.f32 0.0, %v5355
        %v5357 = vpop.f32.mrf.mxu0
        %v5358 = vpop.f32.mrf.mxu0
        %v5359 = vadd.f32 0.0, %v5358
        %v5360 = vpop.f32.mrf.mxu0
        %5361 = vmatprep.mubr.bf16.mxu0 0
        %5362 = vmatmul.mubr.bf16.gmra.mxu0 %v5230
        %v5363 = vpop.f32.mrf.mxu0
        %v5364 = vadd.f32 0.0, %v5363
        %v5365 = vpop.f32.mrf.mxu0
        %v5366 = vpop.f32.mrf.mxu0
        %v5367 = vadd.f32 0.0, %v5366
        %v5368 = vpop.f32.mrf.mxu0
        %5369 = vmatprep.mubr.bf16.mxu0 0
        %5370 = vmatmul.mubr.bf16.gmra.mxu0 %v5231
        %v5371 = vpop.f32.mrf.mxu0
        %v5372 = vadd.f32 0.0, %v5371
        %v5373 = vpop.f32.mrf.mxu0
        %v5374 = vpop.f32.mrf.mxu0
        %v5375 = vadd.f32 0.0, %v5374
        %v5376 = vpop.f32.mrf.mxu0
        %5377 = vmatprep.mubr.bf16.mxu0 0
        %5378 = vmatmul.mubr.bf16.gmra.mxu0 %v5232
        %v5379 = vpop.f32.mrf.mxu0
        %v5380 = vadd.f32 0.0, %v5379
        %v5381 = vpop.f32.mrf.mxu0
        %v5382 = vpop.f32.mrf.mxu0
        %v5383 = vadd.f32 0.0, %v5382
        %v5384 = vpop.f32.mrf.mxu0
        %5385 = vdwg.mxu0
        %5386 = vst [vmem:[#allocation5] sm:$0xff] %v5324
        %5387 = vst [vmem:[#allocation5 + $0x8] sm:$0xff] %v5327
        %5388 = vst [vmem:[#allocation5 + $0x10] sm:$0xff] %v5332
        %5389 = vst [vmem:[#allocation5 + $0x18] sm:$0xff] %v5335
        %5390 = vst [vmem:[#allocation5 + $0x20] sm:$0xff] %v5340
        %5391 = vst [vmem:[#allocation5 + $0x28] sm:$0xff] %v5343
        %5392 = vst [vmem:[#allocation5 + $0x30] sm:$0xff] %v5348
        %5393 = vst [vmem:[#allocation5 + $0x38] sm:$0xff] %v5351
        %5394 = vst [vmem:[#allocation5 + $0x40] sm:$0xff] %v5356
        %5395 = vst [vmem:[#allocation5 + $0x48] sm:$0xff] %v5359
        %5396 = vst [vmem:[#allocation5 + $0x50] sm:$0xff] %v5364
        %5397 = vst [vmem:[#allocation5 + $0x58] sm:$0xff] %v5367
        %5398 = vst [vmem:[#allocation5 + $0x60] sm:$0xff] %v5372
        %5399 = vst [vmem:[#allocation5 + $0x68] sm:$0xff] %v5375
        %5400 = vst [vmem:[#allocation5 + $0x70] sm:$0xff] %v5380
        %5401 = vst [vmem:[#allocation5 + $0x78] sm:$0xff] %v5383
        %v5402 = vld [vmem:[#allocation3] sm:$0xf]
        %v5403 = vld [vmem:[#allocation3 + $0x4] sm:$0xf]
        %v5404 = vld [vmem:[#allocation3 + $0x8] sm:$0x1]
        %v5405 = vld [vmem:[#allocation3 + $0xc] sm:$0xf]
        %v5406 = vld [vmem:[#allocation3 + $0x10] sm:$0xf]
        %v5407 = vld [vmem:[#allocation3 + $0x14] sm:$0x1]
        %v5408 = vld [vmem:[#allocation3 + $0x18] sm:$0xf]
        %v5409 = vld [vmem:[#allocation3 + $0x1c] sm:$0xf]
        %v5410 = vld [vmem:[#allocation3 + $0x20] sm:$0x1]
        %v5411 = vld [vmem:[#allocation3 + $0x24] sm:$0xf]
        %v5412 = vld [vmem:[#allocation3 + $0x28] sm:$0xf]
        %v5413 = vld [vmem:[#allocation3 + $0x2c] sm:$0x1]
        %v5414 = vld [vmem:[#allocation3 + $0x30] sm:$0xf]
        %v5415 = vld [vmem:[#allocation3 + $0x34] sm:$0xf]
        %v5416 = vld [vmem:[#allocation3 + $0x38] sm:$0x1]
        %v5417 = vld [vmem:[#allocation3 + $0x3c] sm:$0xf]
        %v5418 = vld [vmem:[#allocation3 + $0x40] sm:$0xf]
        %v5419 = vld [vmem:[#allocation3 + $0x44] sm:$0x1]
        %v5420 = vld [vmem:[#allocation3 + $0x48] sm:$0xf]
        %v5421 = vld [vmem:[#allocation3 + $0x4c] sm:$0xf]
        %v5422 = vld [vmem:[#allocation3 + $0x50] sm:$0x1]
        %v5423 = vld [vmem:[#allocation3 + $0x54] sm:$0xf]
        %v5424 = vld [vmem:[#allocation3 + $0x58] sm:$0xf]
        %v5425 = vld [vmem:[#allocation3 + $0x5c] sm:$0x1]
        %v5427 = vshrl.u32 %v5402, 16
        %v5429 = vrot.slane %v5427, 4
        %v5430 = vshll.u32 %v5402, 16
        %v5432 = vrot.slane %v5430, 5
        %v5433 = vor.u32 %v5429, %v5432
        %v5434 = vrot.slane %v5433, 4
        %v5436 = vshll.u32 %v5403, 16
        %v5438 = vrot.slane %v5436, 5
        %v5439 = vsel %vm1183, %v5434, %v5438
        %v5440 = vshrl.u32 %v5403, 16
        %v5442 = vrot.slane %v5440, 4
        %v5443 = vor.u32 %v5442, %v5438
        %v5444 = vrot.slane %v5443, 4
        %v5446 = vshll.u32 %v5404, 16
        %v5448 = vrot.slane %v5446, 5
        %v5449 = vsel %vm1183, %v5444, %v5448
        %v5451 = vshrl.u32 %v5405, 16
        %v5453 = vrot.slane %v5451, 4
        %v5454 = vshll.u32 %v5405, 16
        %v5456 = vrot.slane %v5454, 5
        %v5457 = vor.u32 %v5453, %v5456
        %v5458 = vrot.slane %v5457, 4
        %v5460 = vshll.u32 %v5406, 16
        %v5462 = vrot.slane %v5460, 5
        %v5463 = vsel %vm1183, %v5458, %v5462
        %v5464 = vshrl.u32 %v5406, 16
        %v5466 = vrot.slane %v5464, 4
        %v5467 = vor.u32 %v5466, %v5462
        %v5468 = vrot.slane %v5467, 4
        %v5470 = vshll.u32 %v5407, 16
        %v5472 = vrot.slane %v5470, 5
        %v5473 = vsel %vm1183, %v5468, %v5472
        %v5475 = vshrl.u32 %v5408, 16
        %v5477 = vrot.slane %v5475, 4
        %v5478 = vshll.u32 %v5408, 16
        %v5480 = vrot.slane %v5478, 5
        %v5481 = vor.u32 %v5477, %v5480
        %v5482 = vrot.slane %v5481, 4
        %v5484 = vshll.u32 %v5409, 16
        %v5486 = vrot.slane %v5484, 5
        %v5487 = vsel %vm1183, %v5482, %v5486
        %v5488 = vshrl.u32 %v5409, 16
        %v5490 = vrot.slane %v5488, 4
        %v5491 = vor.u32 %v5490, %v5486
        %v5492 = vrot.slane %v5491, 4
        %v5494 = vshll.u32 %v5410, 16
        %v5496 = vrot.slane %v5494, 5
        %v5497 = vsel %vm1183, %v5492, %v5496
        %v5499 = vshrl.u32 %v5411, 16
        %v5501 = vrot.slane %v5499, 4
        %v5502 = vshll.u32 %v5411, 16
        %v5504 = vrot.slane %v5502, 5
        %v5505 = vor.u32 %v5501, %v5504
        %v5506 = vrot.slane %v5505, 4
        %v5508 = vshll.u32 %v5412, 16
        %v5510 = vrot.slane %v5508, 5
        %v5511 = vsel %vm1183, %v5506, %v5510
        %v5512 = vshrl.u32 %v5412, 16
        %v5514 = vrot.slane %v5512, 4
        %v5515 = vor.u32 %v5514, %v5510
        %v5516 = vrot.slane %v5515, 4
        %v5518 = vshll.u32 %v5413, 16
        %v5520 = vrot.slane %v5518, 5
        %v5521 = vsel %vm1183, %v5516, %v5520
        %v5523 = vshrl.u32 %v5414, 16
        %v5525 = vrot.slane %v5523, 4
        %v5526 = vshll.u32 %v5414, 16
        %v5528 = vrot.slane %v5526, 5
        %v5529 = vor.u32 %v5525, %v5528
        %v5530 = vrot.slane %v5529, 4
        %v5532 = vshll.u32 %v5415, 16
        %v5534 = vrot.slane %v5532, 5
        %v5535 = vsel %vm1183, %v5530, %v5534
        %v5536 = vshrl.u32 %v5415, 16
        %v5538 = vrot.slane %v5536, 4
        %v5539 = vor.u32 %v5538, %v5534
        %v5540 = vrot.slane %v5539, 4
        %v5542 = vshll.u32 %v5416, 16
        %v5544 = vrot.slane %v5542, 5
        %v5545 = vsel %vm1183, %v5540, %v5544
        %v5547 = vshrl.u32 %v5417, 16
        %v5549 = vrot.slane %v5547, 4
        %v5550 = vshll.u32 %v5417, 16
        %v5552 = vrot.slane %v5550, 5
        %v5553 = vor.u32 %v5549, %v5552
        %v5554 = vrot.slane %v5553, 4
        %v5556 = vshll.u32 %v5418, 16
        %v5558 = vrot.slane %v5556, 5
        %v5559 = vsel %vm1183, %v5554, %v5558
        %v5560 = vshrl.u32 %v5418, 16
        %v5562 = vrot.slane %v5560, 4
        %v5563 = vor.u32 %v5562, %v5558
        %v5564 = vrot.slane %v5563, 4
        %v5566 = vshll.u32 %v5419, 16
        %v5568 = vrot.slane %v5566, 5
        %v5569 = vsel %vm1183, %v5564, %v5568
        %v5571 = vshrl.u32 %v5420, 16
        %v5573 = vrot.slane %v5571, 4
        %v5574 = vshll.u32 %v5420, 16
        %v5576 = vrot.slane %v5574, 5
        %v5577 = vor.u32 %v5573, %v5576
        %v5578 = vrot.slane %v5577, 4
        %v5580 = vshll.u32 %v5421, 16
        %v5582 = vrot.slane %v5580, 5
        %v5583 = vsel %vm1183, %v5578, %v5582
        %v5584 = vshrl.u32 %v5421, 16
        %v5586 = vrot.slane %v5584, 4
        %v5587 = vor.u32 %v5586, %v5582
        %v5588 = vrot.slane %v5587, 4
        %v5590 = vshll.u32 %v5422, 16
        %v5592 = vrot.slane %v5590, 5
        %v5593 = vsel %vm1183, %v5588, %v5592
        %v5595 = vshrl.u32 %v5423, 16
        %v5597 = vrot.slane %v5595, 4
        %v5598 = vshll.u32 %v5423, 16
        %v5600 = vrot.slane %v5598, 5
        %v5601 = vor.u32 %v5597, %v5600
        %v5602 = vrot.slane %v5601, 4
        %v5604 = vshll.u32 %v5424, 16
        %v5606 = vrot.slane %v5604, 5
        %v5607 = vsel %vm1183, %v5602, %v5606
        %v5608 = vshrl.u32 %v5424, 16
        %v5610 = vrot.slane %v5608, 4
        %v5611 = vor.u32 %v5610, %v5606
        %v5612 = vrot.slane %v5611, 4
        %v5614 = vshll.u32 %v5425, 16
        %v5616 = vrot.slane %v5614, 5
        %v5617 = vsel %vm1183, %v5612, %v5616
        %s5618 = scalar_lea.vmem [#allocation11], 64
        %v5619 = vld [vmem:[%s5618] sm:$0xf]
        %v5620 = vld [vmem:[%s5618 + $0x4] sm:$0xf]
        %v5621 = vld [vmem:[%s5618 + $0x8] sm:$0xf]
        %v5622 = vld [vmem:[%s5618 + $0xc] sm:$0xf]
        %v5623 = vld [vmem:[%s5618 + $0x10] sm:$0xf]
        %v5624 = vld [vmem:[%s5618 + $0x14] sm:$0xf]
        %v5625 = vld [vmem:[%s5618 + $0x18] sm:$0xf]
        %v5626 = vld [vmem:[%s5618 + $0x1c] sm:$0xf]
        %v5627 = vld [vmem:[%s5618 + $0x20] sm:$0xf]
        %v5628 = vld [vmem:[%s5618 + $0x24] sm:$0xf]
        %v5629 = vld [vmem:[%s5618 + $0x28] sm:$0xf]
        %v5630 = vld [vmem:[%s5618 + $0x2c] sm:$0xf]
        %v5631 = vld [vmem:[%s5618 + $0x30] sm:$0xf]
        %v5632 = vld [vmem:[%s5618 + $0x34] sm:$0xf]
        %v5633 = vld [vmem:[%s5618 + $0x38] sm:$0xf]
        %v5634 = vld [vmem:[%s5618 + $0x3c] sm:$0xf]
        %v5635 = vunpack.c.l.b16 %v5439
        %v5636 = vunpack.c.l.b16 %v5449
        %v5637 = vunpack.c.l.b16 %v5463
        %v5638 = vunpack.c.l.b16 %v5473
        %v5639 = vunpack.c.l.b16 %v5487
        %v5640 = vunpack.c.l.b16 %v5497
        %v5641 = vunpack.c.l.b16 %v5511
        %v5642 = vunpack.c.l.b16 %v5521
        %v5643 = vunpack.c.l.b16 %v5535
        %v5644 = vunpack.c.l.b16 %v5545
        %v5645 = vunpack.c.l.b16 %v5559
        %v5646 = vunpack.c.l.b16 %v5569
        %v5647 = vunpack.c.l.b16 %v5583
        %v5648 = vunpack.c.l.b16 %v5593
        %v5649 = vunpack.c.l.b16 %v5607
        %v5650 = vunpack.c.l.b16 %v5617
        %v5651 = vpack.c.b16 %v5636, %v5635
        %v5652 = vpack.c.b16 %v5638, %v5637
        %v5653 = vpack.c.b16 %v5640, %v5639
        %v5654 = vpack.c.b16 %v5642, %v5641
        %v5655 = vpack.c.b16 %v5644, %v5643
        %v5656 = vpack.c.b16 %v5646, %v5645
        %v5657 = vpack.c.b16 %v5648, %v5647
        %v5658 = vpack.c.b16 %v5650, %v5649
        %v5683 = vunpack.c.l.b16 %v5619
        %v5684 = vunpack.c.l.b16 %v5620
        %v5685 = vunpack.c.l.b16 %v5621
        %v5686 = vunpack.c.l.b16 %v5622
        %v5687 = vunpack.c.l.b16 %v5623
        %v5688 = vunpack.c.l.b16 %v5624
        %v5689 = vunpack.c.l.b16 %v5625
        %v5690 = vunpack.c.l.b16 %v5626
        %v5691 = vunpack.c.l.b16 %v5627
        %v5692 = vunpack.c.l.b16 %v5628
        %v5693 = vunpack.c.l.b16 %v5629
        %v5694 = vunpack.c.l.b16 %v5630
        %v5695 = vunpack.c.l.b16 %v5631
        %v5696 = vunpack.c.l.b16 %v5632
        %v5697 = vunpack.c.l.b16 %v5633
        %v5698 = vunpack.c.l.b16 %v5634
        %v5699 = vpack.c.b16 %v5684, %v5683
        %v5700 = vpack.c.b16 %v5686, %v5685
        %v5701 = vpack.c.b16 %v5688, %v5687
        %v5702 = vpack.c.b16 %v5690, %v5689
        %v5703 = vpack.c.b16 %v5692, %v5691
        %v5704 = vpack.c.b16 %v5694, %v5693
        %v5705 = vpack.c.b16 %v5696, %v5695
        %v5706 = vpack.c.b16 %v5698, %v5697
        %5715 = vmatprep.subr.bf16.mxu0 0
        %5716 = vmatpush1.bf16.msra.mxu0 %v5706
        %5717 = vmatprep.subr.bf16.mxu0 0
        %5718 = vmatpush1.bf16.msra.mxu0 %v5705
        %5719 = vmatprep.subr.bf16.mxu0 0
        %5720 = vmatpush1.bf16.msra.mxu0 %v5704
        %5721 = vmatprep.subr.bf16.mxu0 0
        %5722 = vmatpush1.bf16.msra.mxu0 %v5703
        %5723 = vmatprep.subr.bf16.mxu0 0
        %5724 = vmatpush1.bf16.msra.mxu0 %v5702
        %5725 = vmatprep.subr.bf16.mxu0 0
        %5726 = vmatpush1.bf16.msra.mxu0 %v5701
        %5727 = vmatprep.subr.bf16.mxu0 0
        %5728 = vmatpush1.bf16.msra.mxu0 %v5700
        %5729 = vmatprep.subr.bf16.mxu0 0
        %5730 = vmatpush1.bf16.msra.mxu0 %v5699
        %5731 = vmatprep.subr.bf16.mxu0 0
        %5732 = vmatpush2.bf16.msra.mxu0 0
        %5733 = vmatprep.subr.bf16.mxu0 0
        %5734 = vmatpush2.bf16.msra.mxu0 0
        %5735 = vmatprep.subr.bf16.mxu0 0
        %5736 = vmatpush2.bf16.msra.mxu0 0
        %5737 = vmatprep.subr.bf16.mxu0 0
        %5738 = vmatpush2.bf16.msra.mxu0 0
        %5739 = vmatprep.subr.bf16.mxu0 0
        %5740 = vmatpush2.bf16.msra.mxu0 0
        %5741 = vmatprep.subr.bf16.mxu0 0
        %5742 = vmatpush2.bf16.msra.mxu0 0
        %5743 = vmatprep.subr.bf16.mxu0 0
        %5744 = vmatpush2.bf16.msra.mxu0 0
        %5745 = vmatprep.subr.bf16.mxu0 0
        %5746 = vmatpush2.bf16.msra.mxu0 0
        %5747 = vmatprep.mubr.bf16.mxu0 0
        %5748 = vmatmul.mubr.bf16.gmra.mxu0 %v5651
        %v5749 = vpop.f32.mrf.mxu0
        %v5750 = vadd.f32 0.0, %v5749
        %v5751 = vpop.f32.mrf.mxu0
        %v5752 = vpop.f32.mrf.mxu0
        %v5753 = vadd.f32 0.0, %v5752
        %v5754 = vpop.f32.mrf.mxu0
        %5755 = vmatprep.mubr.bf16.mxu0 0
        %5756 = vmatmul.mubr.bf16.gmra.mxu0 %v5652
        %v5757 = vpop.f32.mrf.mxu0
        %v5758 = vadd.f32 0.0, %v5757
        %v5759 = vpop.f32.mrf.mxu0
        %v5760 = vpop.f32.mrf.mxu0
        %v5761 = vadd.f32 0.0, %v5760
        %v5762 = vpop.f32.mrf.mxu0
        %5763 = vmatprep.mubr.bf16.mxu0 0
        %5764 = vmatmul.mubr.bf16.gmra.mxu0 %v5653
        %v5765 = vpop.f32.mrf.mxu0
        %v5766 = vadd.f32 0.0, %v5765
        %v5767 = vpop.f32.mrf.mxu0
        %v5768 = vpop.f32.mrf.mxu0
        %v5769 = vadd.f32 0.0, %v5768
        %v5770 = vpop.f32.mrf.mxu0
        %5771 = vmatprep.mubr.bf16.mxu0 0
        %5772 = vmatmul.mubr.bf16.gmra.mxu0 %v5654
        %v5773 = vpop.f32.mrf.mxu0
        %v5774 = vadd.f32 0.0, %v5773
        %v5775 = vpop.f32.mrf.mxu0
        %v5776 = vpop.f32.mrf.mxu0
        %v5777 = vadd.f32 0.0, %v5776
        %v5778 = vpop.f32.mrf.mxu0
        %5779 = vmatprep.mubr.bf16.mxu0 0
        %5780 = vmatmul.mubr.bf16.gmra.mxu0 %v5655
        %v5781 = vpop.f32.mrf.mxu0
        %v5782 = vadd.f32 0.0, %v5781
        %v5783 = vpop.f32.mrf.mxu0
        %v5784 = vpop.f32.mrf.mxu0
        %v5785 = vadd.f32 0.0, %v5784
        %v5786 = vpop.f32.mrf.mxu0
        %5787 = vmatprep.mubr.bf16.mxu0 0
        %5788 = vmatmul.mubr.bf16.gmra.mxu0 %v5656
        %v5789 = vpop.f32.mrf.mxu0
        %v5790 = vadd.f32 0.0, %v5789
        %v5791 = vpop.f32.mrf.mxu0
        %v5792 = vpop.f32.mrf.mxu0
        %v5793 = vadd.f32 0.0, %v5792
        %v5794 = vpop.f32.mrf.mxu0
        %5795 = vmatprep.mubr.bf16.mxu0 0
        %5796 = vmatmul.mubr.bf16.gmra.mxu0 %v5657
        %v5797 = vpop.f32.mrf.mxu0
        %v5798 = vadd.f32 0.0, %v5797
        %v5799 = vpop.f32.mrf.mxu0
        %v5800 = vpop.f32.mrf.mxu0
        %v5801 = vadd.f32 0.0, %v5800
        %v5802 = vpop.f32.mrf.mxu0
        %5803 = vmatprep.mubr.bf16.mxu0 0
        %5804 = vmatmul.mubr.bf16.gmra.mxu0 %v5658
        %v5805 = vpop.f32.mrf.mxu0
        %v5806 = vadd.f32 0.0, %v5805
        %v5807 = vpop.f32.mrf.mxu0
        %v5808 = vpop.f32.mrf.mxu0
        %v5809 = vadd.f32 0.0, %v5808
        %v5810 = vpop.f32.mrf.mxu0
        %5811 = vdwg.mxu0
        %v5812 = vld [vmem:[#allocation5] sm:$0xff]
        %v5813 = vld [vmem:[#allocation5 + $0x8] sm:$0xff]
        %v5814 = vld [vmem:[#allocation5 + $0x10] sm:$0xff]
        %v5815 = vld [vmem:[#allocation5 + $0x18] sm:$0xff]
        %v5816 = vld [vmem:[#allocation5 + $0x20] sm:$0xff]
        %v5817 = vld [vmem:[#allocation5 + $0x28] sm:$0xff]
        %v5818 = vld [vmem:[#allocation5 + $0x30] sm:$0xff]
        %v5819 = vld [vmem:[#allocation5 + $0x38] sm:$0xff]
        %v5820 = vld [vmem:[#allocation5 + $0x40] sm:$0xff]
        %v5821 = vld [vmem:[#allocation5 + $0x48] sm:$0xff]
        %v5822 = vld [vmem:[#allocation5 + $0x50] sm:$0xff]
        %v5823 = vld [vmem:[#allocation5 + $0x58] sm:$0xff]
        %v5824 = vld [vmem:[#allocation5 + $0x60] sm:$0xff]
        %v5825 = vld [vmem:[#allocation5 + $0x68] sm:$0xff]
        %v5826 = vld [vmem:[#allocation5 + $0x70] sm:$0xff]
        %v5827 = vld [vmem:[#allocation5 + $0x78] sm:$0xff]
        %v5828 = vadd.f32 %v5812, %v5750
        %v5829 = vadd.f32 %v5813, %v5753
        %v5830 = vadd.f32 %v5814, %v5758
        %v5831 = vadd.f32 %v5815, %v5761
        %v5832 = vadd.f32 %v5816, %v5766
        %v5833 = vadd.f32 %v5817, %v5769
        %v5834 = vadd.f32 %v5818, %v5774
        %v5835 = vadd.f32 %v5819, %v5777
        %v5836 = vadd.f32 %v5820, %v5782
        %v5837 = vadd.f32 %v5821, %v5785
        %v5838 = vadd.f32 %v5822, %v5790
        %v5839 = vadd.f32 %v5823, %v5793
        %v5840 = vadd.f32 %v5824, %v5798
        %v5841 = vadd.f32 %v5825, %v5801
        %v5842 = vadd.f32 %v5826, %v5806
        %v5843 = vadd.f32 %v5827, %v5809
        %5844 = vst [vmem:[#allocation5] sm:$0xff] %v5828
        %5845 = vst [vmem:[#allocation5 + $0x8] sm:$0xff] %v5829
        %5846 = vst [vmem:[#allocation5 + $0x10] sm:$0xff] %v5830
        %5847 = vst [vmem:[#allocation5 + $0x18] sm:$0xff] %v5831
        %5848 = vst [vmem:[#allocation5 + $0x20] sm:$0xff] %v5832
        %5849 = vst [vmem:[#allocation5 + $0x28] sm:$0xff] %v5833
        %5850 = vst [vmem:[#allocation5 + $0x30] sm:$0xff] %v5834
        %5851 = vst [vmem:[#allocation5 + $0x38] sm:$0xff] %v5835
        %5852 = vst [vmem:[#allocation5 + $0x40] sm:$0xff] %v5836
        %5853 = vst [vmem:[#allocation5 + $0x48] sm:$0xff] %v5837
        %5854 = vst [vmem:[#allocation5 + $0x50] sm:$0xff] %v5838
        %5855 = vst [vmem:[#allocation5 + $0x58] sm:$0xff] %v5839
        %5856 = vst [vmem:[#allocation5 + $0x60] sm:$0xff] %v5840
        %5857 = vst [vmem:[#allocation5 + $0x68] sm:$0xff] %v5841
        %5858 = vst [vmem:[#allocation5 + $0x70] sm:$0xff] %v5842
        %5859 = vst [vmem:[#allocation5 + $0x78] sm:$0xff] %v5843
        %v5860 = vld [vmem:[#allocation3] sm:$0xe]
        %v5861 = vld [vmem:[#allocation3 + $0x4] sm:$0xf]
        %v5862 = vld [vmem:[#allocation3 + $0x8] sm:$0x1]
        %v5863 = vld [vmem:[#allocation3 + $0xc] sm:$0xe]
        %v5864 = vld [vmem:[#allocation3 + $0x10] sm:$0xf]
        %v5865 = vld [vmem:[#allocation3 + $0x14] sm:$0x1]
        %v5866 = vld [vmem:[#allocation3 + $0x18] sm:$0xe]
        %v5867 = vld [vmem:[#allocation3 + $0x1c] sm:$0xf]
        %v5868 = vld [vmem:[#allocation3 + $0x20] sm:$0x1]
        %v5869 = vld [vmem:[#allocation3 + $0x24] sm:$0xe]
        %v5870 = vld [vmem:[#allocation3 + $0x28] sm:$0xf]
        %v5871 = vld [vmem:[#allocation3 + $0x2c] sm:$0x1]
        %v5872 = vld [vmem:[#allocation3 + $0x30] sm:$0xe]
        %v5873 = vld [vmem:[#allocation3 + $0x34] sm:$0xf]
        %v5874 = vld [vmem:[#allocation3 + $0x38] sm:$0x1]
        %v5875 = vld [vmem:[#allocation3 + $0x3c] sm:$0xe]
        %v5876 = vld [vmem:[#allocation3 + $0x40] sm:$0xf]
        %v5877 = vld [vmem:[#allocation3 + $0x44] sm:$0x1]
        %v5878 = vld [vmem:[#allocation3 + $0x48] sm:$0xe]
        %v5879 = vld [vmem:[#allocation3 + $0x4c] sm:$0xf]
        %v5880 = vld [vmem:[#allocation3 + $0x50] sm:$0x1]
        %v5881 = vld [vmem:[#allocation3 + $0x54] sm:$0xe]
        %v5882 = vld [vmem:[#allocation3 + $0x58] sm:$0xf]
        %v5883 = vld [vmem:[#allocation3 + $0x5c] sm:$0x1]
        %v5908 = vrot.slane %v5860, 5
        %v5909 = vrot.slane %v5908, 4
        %v5910 = vrot.slane %v5861, 5
        %v5911 = vsel %vm1764, %v5909, %v5910
        %v5912 = vrot.slane %v5910, 4
        %v5913 = vrot.slane %v5862, 5
        %v5914 = vsel %vm1764, %v5912, %v5913
        %v5915 = vrot.slane %v5863, 5
        %v5916 = vrot.slane %v5915, 4
        %v5917 = vrot.slane %v5864, 5
        %v5918 = vsel %vm1764, %v5916, %v5917
        %v5919 = vrot.slane %v5917, 4
        %v5920 = vrot.slane %v5865, 5
        %v5921 = vsel %vm1764, %v5919, %v5920
        %v5922 = vrot.slane %v5866, 5
        %v5923 = vrot.slane %v5922, 4
        %v5924 = vrot.slane %v5867, 5
        %v5925 = vsel %vm1764, %v5923, %v5924
        %v5926 = vrot.slane %v5924, 4
        %v5927 = vrot.slane %v5868, 5
        %v5928 = vsel %vm1764, %v5926, %v5927
        %v5929 = vrot.slane %v5869, 5
        %v5930 = vrot.slane %v5929, 4
        %v5931 = vrot.slane %v5870, 5
        %v5932 = vsel %vm1764, %v5930, %v5931
        %v5933 = vrot.slane %v5931, 4
        %v5934 = vrot.slane %v5871, 5
        %v5935 = vsel %vm1764, %v5933, %v5934
        %v5936 = vrot.slane %v5872, 5
        %v5937 = vrot.slane %v5936, 4
        %v5938 = vrot.slane %v5873, 5
        %v5939 = vsel %vm1764, %v5937, %v5938
        %v5940 = vrot.slane %v5938, 4
        %v5941 = vrot.slane %v5874, 5
        %v5942 = vsel %vm1764, %v5940, %v5941
        %v5943 = vrot.slane %v5875, 5
        %v5944 = vrot.slane %v5943, 4
        %v5945 = vrot.slane %v5876, 5
        %v5946 = vsel %vm1764, %v5944, %v5945
        %v5947 = vrot.slane %v5945, 4
        %v5948 = vrot.slane %v5877, 5
        %v5949 = vsel %vm1764, %v5947, %v5948
        %v5950 = vrot.slane %v5878, 5
        %v5951 = vrot.slane %v5950, 4
        %v5952 = vrot.slane %v5879, 5
        %v5953 = vsel %vm1764, %v5951, %v5952
        %v5954 = vrot.slane %v5952, 4
        %v5955 = vrot.slane %v5880, 5
        %v5956 = vsel %vm1764, %v5954, %v5955
        %v5957 = vrot.slane %v5881, 5
        %v5958 = vrot.slane %v5957, 4
        %v5959 = vrot.slane %v5882, 5
        %v5960 = vsel %vm1764, %v5958, %v5959
        %v5961 = vrot.slane %v5959, 4
        %v5962 = vrot.slane %v5883, 5
        %v5963 = vsel %vm1764, %v5961, %v5962
        %s5964 = scalar_lea.vmem [#allocation11], 128
        %v5965 = vld [vmem:[%s5964] sm:$0xf]
        %v5966 = vld [vmem:[%s5964 + $0x4] sm:$0xf]
        %v5967 = vld [vmem:[%s5964 + $0x8] sm:$0xf]
        %v5968 = vld [vmem:[%s5964 + $0xc] sm:$0xf]
        %v5969 = vld [vmem:[%s5964 + $0x10] sm:$0xf]
        %v5970 = vld [vmem:[%s5964 + $0x14] sm:$0xf]
        %v5971 = vld [vmem:[%s5964 + $0x18] sm:$0xf]
        %v5972 = vld [vmem:[%s5964 + $0x1c] sm:$0xf]
        %v5973 = vld [vmem:[%s5964 + $0x20] sm:$0xf]
        %v5974 = vld [vmem:[%s5964 + $0x24] sm:$0xf]
        %v5975 = vld [vmem:[%s5964 + $0x28] sm:$0xf]
        %v5976 = vld [vmem:[%s5964 + $0x2c] sm:$0xf]
        %v5977 = vld [vmem:[%s5964 + $0x30] sm:$0xf]
        %v5978 = vld [vmem:[%s5964 + $0x34] sm:$0xf]
        %v5979 = vld [vmem:[%s5964 + $0x38] sm:$0xf]
        %v5980 = vld [vmem:[%s5964 + $0x3c] sm:$0xf]
        %v5981 = vunpack.c.l.b16 %v5911
        %v5982 = vunpack.c.l.b16 %v5914
        %v5983 = vunpack.c.l.b16 %v5918
        %v5984 = vunpack.c.l.b16 %v5921
        %v5985 = vunpack.c.l.b16 %v5925
        %v5986 = vunpack.c.l.b16 %v5928
        %v5987 = vunpack.c.l.b16 %v5932
        %v5988 = vunpack.c.l.b16 %v5935
        %v5989 = vunpack.c.l.b16 %v5939
        %v5990 = vunpack.c.l.b16 %v5942
        %v5991 = vunpack.c.l.b16 %v5946
        %v5992 = vunpack.c.l.b16 %v5949
        %v5993 = vunpack.c.l.b16 %v5953
        %v5994 = vunpack.c.l.b16 %v5956
        %v5995 = vunpack.c.l.b16 %v5960
        %v5996 = vunpack.c.l.b16 %v5963
        %v5997 = vpack.c.b16 %v5982, %v5981
        %v5998 = vpack.c.b16 %v5984, %v5983
        %v5999 = vpack.c.b16 %v5986, %v5985
        %v6000 = vpack.c.b16 %v5988, %v5987
        %v6001 = vpack.c.b16 %v5990, %v5989
        %v6002 = vpack.c.b16 %v5992, %v5991
        %v6003 = vpack.c.b16 %v5994, %v5993
        %v6004 = vpack.c.b16 %v5996, %v5995
        %v6029 = vunpack.c.l.b16 %v5965
        %v6030 = vunpack.c.l.b16 %v5966
        %v6031 = vunpack.c.l.b16 %v5967
        %v6032 = vunpack.c.l.b16 %v5968
        %v6033 = vunpack.c.l.b16 %v5969
        %v6034 = vunpack.c.l.b16 %v5970
        %v6035 = vunpack.c.l.b16 %v5971
        %v6036 = vunpack.c.l.b16 %v5972
        %v6037 = vunpack.c.l.b16 %v5973
        %v6038 = vunpack.c.l.b16 %v5974
        %v6039 = vunpack.c.l.b16 %v5975
        %v6040 = vunpack.c.l.b16 %v5976
        %v6041 = vunpack.c.l.b16 %v5977
        %v6042 = vunpack.c.l.b16 %v5978
        %v6043 = vunpack.c.l.b16 %v5979
        %v6044 = vunpack.c.l.b16 %v5980
        %v6045 = vpack.c.b16 %v6030, %v6029
        %v6046 = vpack.c.b16 %v6032, %v6031
        %v6047 = vpack.c.b16 %v6034, %v6033
        %v6048 = vpack.c.b16 %v6036, %v6035
        %v6049 = vpack.c.b16 %v6038, %v6037
        %v6050 = vpack.c.b16 %v6040, %v6039
        %v6051 = vpack.c.b16 %v6042, %v6041
        %v6052 = vpack.c.b16 %v6044, %v6043
        %6061 = vmatprep.subr.bf16.mxu0 0
        %6062 = vmatpush1.bf16.msra.mxu0 %v6052
        %6063 = vmatprep.subr.bf16.mxu0 0
        %6064 = vmatpush1.bf16.msra.mxu0 %v6051
        %6065 = vmatprep.subr.bf16.mxu0 0
        %6066 = vmatpush1.bf16.msra.mxu0 %v6050
        %6067 = vmatprep.subr.bf16.mxu0 0
        %6068 = vmatpush1.bf16.msra.mxu0 %v6049
        %6069 = vmatprep.subr.bf16.mxu0 0
        %6070 = vmatpush1.bf16.msra.mxu0 %v6048
        %6071 = vmatprep.subr.bf16.mxu0 0
        %6072 = vmatpush1.bf16.msra.mxu0 %v6047
        %6073 = vmatprep.subr.bf16.mxu0 0
        %6074 = vmatpush1.bf16.msra.mxu0 %v6046
        %6075 = vmatprep.subr.bf16.mxu0 0
        %6076 = vmatpush1.bf16.msra.mxu0 %v6045
        %6077 = vmatprep.subr.bf16.mxu0 0
        %6078 = vmatpush2.bf16.msra.mxu0 0
        %6079 = vmatprep.subr.bf16.mxu0 0
        %6080 = vmatpush2.bf16.msra.mxu0 0
        %6081 = vmatprep.subr.bf16.mxu0 0
        %6082 = vmatpush2.bf16.msra.mxu0 0
        %6083 = vmatprep.subr.bf16.mxu0 0
        %6084 = vmatpush2.bf16.msra.mxu0 0
        %6085 = vmatprep.subr.bf16.mxu0 0
        %6086 = vmatpush2.bf16.msra.mxu0 0
        %6087 = vmatprep.subr.bf16.mxu0 0
        %6088 = vmatpush2.bf16.msra.mxu0 0
        %6089 = vmatprep.subr.bf16.mxu0 0
        %6090 = vmatpush2.bf16.msra.mxu0 0
        %6091 = vmatprep.subr.bf16.mxu0 0
        %6092 = vmatpush2.bf16.msra.mxu0 0
        %6093 = vmatprep.mubr.bf16.mxu0 0
        %6094 = vmatmul.mubr.bf16.gmra.mxu0 %v5997
        %v6095 = vpop.f32.mrf.mxu0
        %v6096 = vadd.f32 0.0, %v6095
        %v6097 = vpop.f32.mrf.mxu0
        %v6098 = vpop.f32.mrf.mxu0
        %v6099 = vadd.f32 0.0, %v6098
        %v6100 = vpop.f32.mrf.mxu0
        %6101 = vmatprep.mubr.bf16.mxu0 0
        %6102 = vmatmul.mubr.bf16.gmra.mxu0 %v5998
        %v6103 = vpop.f32.mrf.mxu0
        %v6104 = vadd.f32 0.0, %v6103
        %v6105 = vpop.f32.mrf.mxu0
        %v6106 = vpop.f32.mrf.mxu0
        %v6107 = vadd.f32 0.0, %v6106
        %v6108 = vpop.f32.mrf.mxu0
        %6109 = vmatprep.mubr.bf16.mxu0 0
        %6110 = vmatmul.mubr.bf16.gmra.mxu0 %v5999
        %v6111 = vpop.f32.mrf.mxu0
        %v6112 = vadd.f32 0.0, %v6111
        %v6113 = vpop.f32.mrf.mxu0
        %v6114 = vpop.f32.mrf.mxu0
        %v6115 = vadd.f32 0.0, %v6114
        %v6116 = vpop.f32.mrf.mxu0
        %6117 = vmatprep.mubr.bf16.mxu0 0
        %6118 = vmatmul.mubr.bf16.gmra.mxu0 %v6000
        %v6119 = vpop.f32.mrf.mxu0
        %v6120 = vadd.f32 0.0, %v6119
        %v6121 = vpop.f32.mrf.mxu0
        %v6122 = vpop.f32.mrf.mxu0
        %v6123 = vadd.f32 0.0, %v6122
        %v6124 = vpop.f32.mrf.mxu0
        %6125 = vmatprep.mubr.bf16.mxu0 0
        %6126 = vmatmul.mubr.bf16.gmra.mxu0 %v6001
        %v6127 = vpop.f32.mrf.mxu0
        %v6128 = vadd.f32 0.0, %v6127
        %v6129 = vpop.f32.mrf.mxu0
        %v6130 = vpop.f32.mrf.mxu0
        %v6131 = vadd.f32 0.0, %v6130
        %v6132 = vpop.f32.mrf.mxu0
        %6133 = vmatprep.mubr.bf16.mxu0 0
        %6134 = vmatmul.mubr.bf16.gmra.mxu0 %v6002
        %v6135 = vpop.f32.mrf.mxu0
        %v6136 = vadd.f32 0.0, %v6135
        %v6137 = vpop.f32.mrf.mxu0
        %v6138 = vpop.f32.mrf.mxu0
        %v6139 = vadd.f32 0.0, %v6138
        %v6140 = vpop.f32.mrf.mxu0
        %6141 = vmatprep.mubr.bf16.mxu0 0
        %6142 = vmatmul.mubr.bf16.gmra.mxu0 %v6003
        %v6143 = vpop.f32.mrf.mxu0
        %v6144 = vadd.f32 0.0, %v6143
        %v6145 = vpop.f32.mrf.mxu0
        %v6146 = vpop.f32.mrf.mxu0
        %v6147 = vadd.f32 0.0, %v6146
        %v6148 = vpop.f32.mrf.mxu0
        %6149 = vmatprep.mubr.bf16.mxu0 0
        %6150 = vmatmul.mubr.bf16.gmra.mxu0 %v6004
        %v6151 = vpop.f32.mrf.mxu0
        %v6152 = vadd.f32 0.0, %v6151
        %v6153 = vpop.f32.mrf.mxu0
        %v6154 = vpop.f32.mrf.mxu0
        %v6155 = vadd.f32 0.0, %v6154
        %v6156 = vpop.f32.mrf.mxu0
        %6157 = vdwg.mxu0
        %v6158 = vld [vmem:[#allocation5] sm:$0xff]
        %v6159 = vld [vmem:[#allocation5 + $0x8] sm:$0xff]
        %v6160 = vld [vmem:[#allocation5 + $0x10] sm:$0xff]
        %v6161 = vld [vmem:[#allocation5 + $0x18] sm:$0xff]
        %v6162 = vld [vmem:[#allocation5 + $0x20] sm:$0xff]
        %v6163 = vld [vmem:[#allocation5 + $0x28] sm:$0xff]
        %v6164 = vld [vmem:[#allocation5 + $0x30] sm:$0xff]
        %v6165 = vld [vmem:[#allocation5 + $0x38] sm:$0xff]
        %v6166 = vld [vmem:[#allocation5 + $0x40] sm:$0xff]
        %v6167 = vld [vmem:[#allocation5 + $0x48] sm:$0xff]
        %v6168 = vld [vmem:[#allocation5 + $0x50] sm:$0xff]
        %v6169 = vld [vmem:[#allocation5 + $0x58] sm:$0xff]
        %v6170 = vld [vmem:[#allocation5 + $0x60] sm:$0xff]
        %v6171 = vld [vmem:[#allocation5 + $0x68] sm:$0xff]
        %v6172 = vld [vmem:[#allocation5 + $0x70] sm:$0xff]
        %v6173 = vld [vmem:[#allocation5 + $0x78] sm:$0xff]
        %v6174 = vadd.f32 %v6158, %v6096
        %v6175 = vadd.f32 %v6159, %v6099
        %v6176 = vadd.f32 %v6160, %v6104
        %v6177 = vadd.f32 %v6161, %v6107
        %v6178 = vadd.f32 %v6162, %v6112
        %v6179 = vadd.f32 %v6163, %v6115
        %v6180 = vadd.f32 %v6164, %v6120
        %v6181 = vadd.f32 %v6165, %v6123
        %v6182 = vadd.f32 %v6166, %v6128
        %v6183 = vadd.f32 %v6167, %v6131
        %v6184 = vadd.f32 %v6168, %v6136
        %v6185 = vadd.f32 %v6169, %v6139
        %v6186 = vadd.f32 %v6170, %v6144
        %v6187 = vadd.f32 %v6171, %v6147
        %v6188 = vadd.f32 %v6172, %v6152
        %v6189 = vadd.f32 %v6173, %v6155
        %6190 = vst [vmem:[#allocation5] sm:$0xff] %v6174
        %6191 = vst [vmem:[#allocation5 + $0x8] sm:$0xff] %v6175
        %6192 = vst [vmem:[#allocation5 + $0x10] sm:$0xff] %v6176
        %6193 = vst [vmem:[#allocation5 + $0x18] sm:$0xff] %v6177
        %6194 = vst [vmem:[#allocation5 + $0x20] sm:$0xff] %v6178
        %6195 = vst [vmem:[#allocation5 + $0x28] sm:$0xff] %v6179
        %6196 = vst [vmem:[#allocation5 + $0x30] sm:$0xff] %v6180
        %6197 = vst [vmem:[#allocation5 + $0x38] sm:$0xff] %v6181
        %6198 = vst [vmem:[#allocation5 + $0x40] sm:$0xff] %v6182
        %6199 = vst [vmem:[#allocation5 + $0x48] sm:$0xff] %v6183
        %6200 = vst [vmem:[#allocation5 + $0x50] sm:$0xff] %v6184
        %6201 = vst [vmem:[#allocation5 + $0x58] sm:$0xff] %v6185
        %6202 = vst [vmem:[#allocation5 + $0x60] sm:$0xff] %v6186
        %6203 = vst [vmem:[#allocation5 + $0x68] sm:$0xff] %v6187
        %6204 = vst [vmem:[#allocation5 + $0x70] sm:$0xff] %v6188
        %6205 = vst [vmem:[#allocation5 + $0x78] sm:$0xff] %v6189
        %s6206 = scalar_lea.vmem [#allocation3], 12
        %v6207 = vld [vmem:[%s6206] sm:$0xf]
        %v6208 = vld [vmem:[%s6206 + $0x4] sm:$0xf]
        %v6209 = vld [vmem:[%s6206 + $0xc] sm:$0xf]
        %v6210 = vld [vmem:[%s6206 + $0x10] sm:$0xf]
        %v6211 = vld [vmem:[%s6206 + $0x18] sm:$0xf]
        %v6212 = vld [vmem:[%s6206 + $0x1c] sm:$0xf]
        %v6213 = vld [vmem:[%s6206 + $0x24] sm:$0xf]
        %v6214 = vld [vmem:[%s6206 + $0x28] sm:$0xf]
        %v6215 = vld [vmem:[%s6206 + $0x30] sm:$0xf]
        %v6216 = vld [vmem:[%s6206 + $0x34] sm:$0xf]
        %v6217 = vld [vmem:[%s6206 + $0x3c] sm:$0xf]
        %v6218 = vld [vmem:[%s6206 + $0x40] sm:$0xf]
        %v6219 = vld [vmem:[%s6206 + $0x48] sm:$0xf]
        %v6220 = vld [vmem:[%s6206 + $0x4c] sm:$0xf]
        %v6221 = vld [vmem:[%s6206 + $0x54] sm:$0xf]
        %v6222 = vld [vmem:[%s6206 + $0x58] sm:$0xf]
        %s6223 = scalar_lea.vmem [#allocation11], 192
        %v6224 = vld [vmem:[%s6223] sm:$0xf]
        %v6225 = vld [vmem:[%s6223 + $0x4] sm:$0xf]
        %v6226 = vld [vmem:[%s6223 + $0x8] sm:$0xf]
        %v6227 = vld [vmem:[%s6223 + $0xc] sm:$0xf]
        %v6228 = vld [vmem:[%s6223 + $0x10] sm:$0xf]
        %v6229 = vld [vmem:[%s6223 + $0x14] sm:$0xf]
        %v6230 = vld [vmem:[%s6223 + $0x18] sm:$0xf]
        %v6231 = vld [vmem:[%s6223 + $0x1c] sm:$0xf]
        %v6232 = vld [vmem:[%s6223 + $0x20] sm:$0xf]
        %v6233 = vld [vmem:[%s6223 + $0x24] sm:$0xf]
        %v6234 = vld [vmem:[%s6223 + $0x28] sm:$0xf]
        %v6235 = vld [vmem:[%s6223 + $0x2c] sm:$0xf]
        %v6236 = vld [vmem:[%s6223 + $0x30] sm:$0xf]
        %v6237 = vld [vmem:[%s6223 + $0x34] sm:$0xf]
        %v6238 = vld [vmem:[%s6223 + $0x38] sm:$0xf]
        %v6239 = vld [vmem:[%s6223 + $0x3c] sm:$0xf]
        %v6256 = vunpack.c.l.b16 %v6207
        %v6257 = vunpack.c.l.b16 %v6208
        %v6258 = vunpack.c.l.b16 %v6209
        %v6259 = vunpack.c.l.b16 %v6210
        %v6260 = vunpack.c.l.b16 %v6211
        %v6261 = vunpack.c.l.b16 %v6212
        %v6262 = vunpack.c.l.b16 %v6213
        %v6263 = vunpack.c.l.b16 %v6214
        %v6264 = vunpack.c.l.b16 %v6215
        %v6265 = vunpack.c.l.b16 %v6216
        %v6266 = vunpack.c.l.b16 %v6217
        %v6267 = vunpack.c.l.b16 %v6218
        %v6268 = vunpack.c.l.b16 %v6219
        %v6269 = vunpack.c.l.b16 %v6220
        %v6270 = vunpack.c.l.b16 %v6221
        %v6271 = vunpack.c.l.b16 %v6222
        %v6272 = vpack.c.b16 %v6257, %v6256
        %v6273 = vpack.c.b16 %v6259, %v6258
        %v6274 = vpack.c.b16 %v6261, %v6260
        %v6275 = vpack.c.b16 %v6263, %v6262
        %v6276 = vpack.c.b16 %v6265, %v6264
        %v6277 = vpack.c.b16 %v6267, %v6266
        %v6278 = vpack.c.b16 %v6269, %v6268
        %v6279 = vpack.c.b16 %v6271, %v6270
        %v6304 = vunpack.c.l.b16 %v6224
        %v6305 = vunpack.c.l.b16 %v6225
        %v6306 = vunpack.c.l.b16 %v6226
        %v6307 = vunpack.c.l.b16 %v6227
        %v6308 = vunpack.c.l.b16 %v6228
        %v6309 = vunpack.c.l.b16 %v6229
        %v6310 = vunpack.c.l.b16 %v6230
        %v6311 = vunpack.c.l.b16 %v6231
        %v6312 = vunpack.c.l.b16 %v6232
        %v6313 = vunpack.c.l.b16 %v6233
        %v6314 = vunpack.c.l.b16 %v6234
        %v6315 = vunpack.c.l.b16 %v6235
        %v6316 = vunpack.c.l.b16 %v6236
        %v6317 = vunpack.c.l.b16 %v6237
        %v6318 = vunpack.c.l.b16 %v6238
        %v6319 = vunpack.c.l.b16 %v6239
        %v6320 = vpack.c.b16 %v6305, %v6304
        %v6321 = vpack.c.b16 %v6307, %v6306
        %v6322 = vpack.c.b16 %v6309, %v6308
        %v6323 = vpack.c.b16 %v6311, %v6310
        %v6324 = vpack.c.b16 %v6313, %v6312
        %v6325 = vpack.c.b16 %v6315, %v6314
        %v6326 = vpack.c.b16 %v6317, %v6316
        %v6327 = vpack.c.b16 %v6319, %v6318
        %6336 = vmatprep.subr.bf16.mxu0 0
        %6337 = vmatpush1.bf16.msra.mxu0 %v6327
        %6338 = vmatprep.subr.bf16.mxu0 0
        %6339 = vmatpush1.bf16.msra.mxu0 %v6326
        %6340 = vmatprep.subr.bf16.mxu0 0
        %6341 = vmatpush1.bf16.msra.mxu0 %v6325
        %6342 = vmatprep.subr.bf16.mxu0 0
        %6343 = vmatpush1.bf16.msra.mxu0 %v6324
        %6344 = vmatprep.subr.bf16.mxu0 0
        %6345 = vmatpush1.bf16.msra.mxu0 %v6323
        %6346 = vmatprep.subr.bf16.mxu0 0
        %6347 = vmatpush1.bf16.msra.mxu0 %v6322
        %6348 = vmatprep.subr.bf16.mxu0 0
        %6349 = vmatpush1.bf16.msra.mxu0 %v6321
        %6350 = vmatprep.subr.bf16.mxu0 0
        %6351 = vmatpush1.bf16.msra.mxu0 %v6320
        %6352 = vmatprep.subr.bf16.mxu0 0
        %6353 = vmatpush2.bf16.msra.mxu0 0
        %6354 = vmatprep.subr.bf16.mxu0 0
        %6355 = vmatpush2.bf16.msra.mxu0 0
        %6356 = vmatprep.subr.bf16.mxu0 0
        %6357 = vmatpush2.bf16.msra.mxu0 0
        %6358 = vmatprep.subr.bf16.mxu0 0
        %6359 = vmatpush2.bf16.msra.mxu0 0
        %6360 = vmatprep.subr.bf16.mxu0 0
        %6361 = vmatpush2.bf16.msra.mxu0 0
        %6362 = vmatprep.subr.bf16.mxu0 0
        %6363 = vmatpush2.bf16.msra.mxu0 0
        %6364 = vmatprep.subr.bf16.mxu0 0
        %6365 = vmatpush2.bf16.msra.mxu0 0
        %6366 = vmatprep.subr.bf16.mxu0 0
        %6367 = vmatpush2.bf16.msra.mxu0 0
        %6368 = vmatprep.mubr.bf16.mxu0 0
        %6369 = vmatmul.mubr.bf16.gmra.mxu0 %v6272
        %v6370 = vpop.f32.mrf.mxu0
        %v6371 = vadd.f32 0.0, %v6370
        %v6372 = vpop.f32.mrf.mxu0
        %v6373 = vpop.f32.mrf.mxu0
        %v6374 = vadd.f32 0.0, %v6373
        %v6375 = vpop.f32.mrf.mxu0
        %6376 = vmatprep.mubr.bf16.mxu0 0
        %6377 = vmatmul.mubr.bf16.gmra.mxu0 %v6273
        %v6378 = vpop.f32.mrf.mxu0
        %v6379 = vadd.f32 0.0, %v6378
        %v6380 = vpop.f32.mrf.mxu0
        %v6381 = vpop.f32.mrf.mxu0
        %v6382 = vadd.f32 0.0, %v6381
        %v6383 = vpop.f32.mrf.mxu0
        %6384 = vmatprep.mubr.bf16.mxu0 0
        %6385 = vmatmul.mubr.bf16.gmra.mxu0 %v6274
        %v6386 = vpop.f32.mrf.mxu0
        %v6387 = vadd.f32 0.0, %v6386
        %v6388 = vpop.f32.mrf.mxu0
        %v6389 = vpop.f32.mrf.mxu0
        %v6390 = vadd.f32 0.0, %v6389
        %v6391 = vpop.f32.mrf.mxu0
        %6392 = vmatprep.mubr.bf16.mxu0 0
        %6393 = vmatmul.mubr.bf16.gmra.mxu0 %v6275
        %v6394 = vpop.f32.mrf.mxu0
        %v6395 = vadd.f32 0.0, %v6394
        %v6396 = vpop.f32.mrf.mxu0
        %v6397 = vpop.f32.mrf.mxu0
        %v6398 = vadd.f32 0.0, %v6397
        %v6399 = vpop.f32.mrf.mxu0
        %6400 = vmatprep.mubr.bf16.mxu0 0
        %6401 = vmatmul.mubr.bf16.gmra.mxu0 %v6276
        %v6402 = vpop.f32.mrf.mxu0
        %v6403 = vadd.f32 0.0, %v6402
        %v6404 = vpop.f32.mrf.mxu0
        %v6405 = vpop.f32.mrf.mxu0
        %v6406 = vadd.f32 0.0, %v6405
        %v6407 = vpop.f32.mrf.mxu0
        %6408 = vmatprep.mubr.bf16.mxu0 0
        %6409 = vmatmul.mubr.bf16.gmra.mxu0 %v6277
        %v6410 = vpop.f32.mrf.mxu0
        %v6411 = vadd.f32 0.0, %v6410
        %v6412 = vpop.f32.mrf.mxu0
        %v6413 = vpop.f32.mrf.mxu0
        %v6414 = vadd.f32 0.0, %v6413
        %v6415 = vpop.f32.mrf.mxu0
        %6416 = vmatprep.mubr.bf16.mxu0 0
        %6417 = vmatmul.mubr.bf16.gmra.mxu0 %v6278
        %v6418 = vpop.f32.mrf.mxu0
        %v6419 = vadd.f32 0.0, %v6418
        %v6420 = vpop.f32.mrf.mxu0
        %v6421 = vpop.f32.mrf.mxu0
        %v6422 = vadd.f32 0.0, %v6421
        %v6423 = vpop.f32.mrf.mxu0
        %6424 = vmatprep.mubr.bf16.mxu0 0
        %6425 = vmatmul.mubr.bf16.gmra.mxu0 %v6279
        %v6426 = vpop.f32.mrf.mxu0
        %v6427 = vadd.f32 0.0, %v6426
        %v6428 = vpop.f32.mrf.mxu0
        %v6429 = vpop.f32.mrf.mxu0
        %v6430 = vadd.f32 0.0, %v6429
        %v6431 = vpop.f32.mrf.mxu0
        %6432 = vdwg.mxu0
        %v6433 = vld [vmem:[#allocation5] sm:$0xff]
        %v6434 = vld [vmem:[#allocation5 + $0x8] sm:$0xff]
        %v6435 = vld [vmem:[#allocation5 + $0x10] sm:$0xff]
        %v6436 = vld [vmem:[#allocation5 + $0x18] sm:$0xff]
        %v6437 = vld [vmem:[#allocation5 + $0x20] sm:$0xff]
        %v6438 = vld [vmem:[#allocation5 + $0x28] sm:$0xff]
        %v6439 = vld [vmem:[#allocation5 + $0x30] sm:$0xff]
        %v6440 = vld [vmem:[#allocation5 + $0x38] sm:$0xff]
        %v6441 = vld [vmem:[#allocation5 + $0x40] sm:$0xff]
        %v6442 = vld [vmem:[#allocation5 + $0x48] sm:$0xff]
        %v6443 = vld [vmem:[#allocation5 + $0x50] sm:$0xff]
        %v6444 = vld [vmem:[#allocation5 + $0x58] sm:$0xff]
        %v6445 = vld [vmem:[#allocation5 + $0x60] sm:$0xff]
        %v6446 = vld [vmem:[#allocation5 + $0x68] sm:$0xff]
        %v6447 = vld [vmem:[#allocation5 + $0x70] sm:$0xff]
        %v6448 = vld [vmem:[#allocation5 + $0x78] sm:$0xff]
        %v6449 = vadd.f32 %v6433, %v6371
        %v6450 = vadd.f32 %v6434, %v6374
        %v6451 = vadd.f32 %v6435, %v6379
        %v6452 = vadd.f32 %v6436, %v6382
        %v6453 = vadd.f32 %v6437, %v6387
        %v6454 = vadd.f32 %v6438, %v6390
        %v6455 = vadd.f32 %v6439, %v6395
        %v6456 = vadd.f32 %v6440, %v6398
        %v6457 = vadd.f32 %v6441, %v6403
        %v6458 = vadd.f32 %v6442, %v6406
        %v6459 = vadd.f32 %v6443, %v6411
        %v6460 = vadd.f32 %v6444, %v6414
        %v6461 = vadd.f32 %v6445, %v6419
        %v6462 = vadd.f32 %v6446, %v6422
        %v6463 = vadd.f32 %v6447, %v6427
        %v6464 = vadd.f32 %v6448, %v6430
        %6465 = vst [vmem:[#allocation5] sm:$0xff] %v6449
        %6466 = vst [vmem:[#allocation5 + $0x8] sm:$0xff] %v6450
        %6467 = vst [vmem:[#allocation5 + $0x10] sm:$0xff] %v6451
        %6468 = vst [vmem:[#allocation5 + $0x18] sm:$0xff] %v6452
        %6469 = vst [vmem:[#allocation5 + $0x20] sm:$0xff] %v6453
        %6470 = vst [vmem:[#allocation5 + $0x28] sm:$0xff] %v6454
        %6471 = vst [vmem:[#allocation5 + $0x30] sm:$0xff] %v6455
        %6472 = vst [vmem:[#allocation5 + $0x38] sm:$0xff] %v6456
        %6473 = vst [vmem:[#allocation5 + $0x40] sm:$0xff] %v6457
        %6474 = vst [vmem:[#allocation5 + $0x48] sm:$0xff] %v6458
        %6475 = vst [vmem:[#allocation5 + $0x50] sm:$0xff] %v6459
        %6476 = vst [vmem:[#allocation5 + $0x58] sm:$0xff] %v6460
        %6477 = vst [vmem:[#allocation5 + $0x60] sm:$0xff] %v6461
        %6478 = vst [vmem:[#allocation5 + $0x68] sm:$0xff] %v6462
        %6479 = vst [vmem:[#allocation5 + $0x70] sm:$0xff] %v6463
        %6480 = vst [vmem:[#allocation5 + $0x78] sm:$0xff] %v6464
        %v6481 = vld [vmem:[%s6206] sm:$0xf]
        %v6482 = vld [vmem:[%s6206 + $0x4] sm:$0xf]
        %v6483 = vld [vmem:[%s6206 + $0x8] sm:$0x1]
        %v6484 = vld [vmem:[%s6206 + $0xc] sm:$0xf]
        %v6485 = vld [vmem:[%s6206 + $0x10] sm:$0xf]
        %v6486 = vld [vmem:[%s6206 + $0x14] sm:$0x1]
        %v6487 = vld [vmem:[%s6206 + $0x18] sm:$0xf]
        %v6488 = vld [vmem:[%s6206 + $0x1c] sm:$0xf]
        %v6489 = vld [vmem:[%s6206 + $0x20] sm:$0x1]
        %v6490 = vld [vmem:[%s6206 + $0x24] sm:$0xf]
        %v6491 = vld [vmem:[%s6206 + $0x28] sm:$0xf]
        %v6492 = vld [vmem:[%s6206 + $0x2c] sm:$0x1]
        %v6493 = vld [vmem:[%s6206 + $0x30] sm:$0xf]
        %v6494 = vld [vmem:[%s6206 + $0x34] sm:$0xf]
        %v6495 = vld [vmem:[%s6206 + $0x38] sm:$0x1]
        %v6496 = vld [vmem:[%s6206 + $0x3c] sm:$0xf]
        %v6497 = vld [vmem:[%s6206 + $0x40] sm:$0xf]
        %v6498 = vld [vmem:[%s6206 + $0x44] sm:$0x1]
        %v6499 = vld [vmem:[%s6206 + $0x48] sm:$0xf]
        %v6500 = vld [vmem:[%s6206 + $0x4c] sm:$0xf]
        %v6501 = vld [vmem:[%s6206 + $0x50] sm:$0x1]
        %v6502 = vld [vmem:[%s6206 + $0x54] sm:$0xf]
        %v6503 = vld [vmem:[%s6206 + $0x58] sm:$0xf]
        %v6504 = vld [vmem:[%s6206 + $0x5c] sm:$0x1]
        %v6506 = vshrl.u32 %v6481, 16
        %v6508 = vrot.slane %v6506, 4
        %v6509 = vshll.u32 %v6481, 16
        %v6511 = vrot.slane %v6509, 5
        %v6512 = vor.u32 %v6508, %v6511
        %v6513 = vrot.slane %v6512, 4
        %v6515 = vshll.u32 %v6482, 16
        %v6517 = vrot.slane %v6515, 5
        %v6518 = vsel %vm1183, %v6513, %v6517
        %v6519 = vshrl.u32 %v6482, 16
        %v6521 = vrot.slane %v6519, 4
        %v6522 = vor.u32 %v6521, %v6517
        %v6523 = vrot.slane %v6522, 4
        %v6525 = vshll.u32 %v6483, 16
        %v6527 = vrot.slane %v6525, 5
        %v6528 = vsel %vm1183, %v6523, %v6527
        %v6530 = vshrl.u32 %v6484, 16
        %v6532 = vrot.slane %v6530, 4
        %v6533 = vshll.u32 %v6484, 16
        %v6535 = vrot.slane %v6533, 5
        %v6536 = vor.u32 %v6532, %v6535
        %v6537 = vrot.slane %v6536, 4
        %v6539 = vshll.u32 %v6485, 16
        %v6541 = vrot.slane %v6539, 5
        %v6542 = vsel %vm1183, %v6537, %v6541
        %v6543 = vshrl.u32 %v6485, 16
        %v6545 = vrot.slane %v6543, 4
        %v6546 = vor.u32 %v6545, %v6541
        %v6547 = vrot.slane %v6546, 4
        %v6549 = vshll.u32 %v6486, 16
        %v6551 = vrot.slane %v6549, 5
        %v6552 = vsel %vm1183, %v6547, %v6551
        %v6554 = vshrl.u32 %v6487, 16
        %v6556 = vrot.slane %v6554, 4
        %v6557 = vshll.u32 %v6487, 16
        %v6559 = vrot.slane %v6557, 5
        %v6560 = vor.u32 %v6556, %v6559
        %v6561 = vrot.slane %v6560, 4
        %v6563 = vshll.u32 %v6488, 16
        %v6565 = vrot.slane %v6563, 5
        %v6566 = vsel %vm1183, %v6561, %v6565
        %v6567 = vshrl.u32 %v6488, 16
        %v6569 = vrot.slane %v6567, 4
        %v6570 = vor.u32 %v6569, %v6565
        %v6571 = vrot.slane %v6570, 4
        %v6573 = vshll.u32 %v6489, 16
        %v6575 = vrot.slane %v6573, 5
        %v6576 = vsel %vm1183, %v6571, %v6575
        %v6578 = vshrl.u32 %v6490, 16
        %v6580 = vrot.slane %v6578, 4
        %v6581 = vshll.u32 %v6490, 16
        %v6583 = vrot.slane %v6581, 5
        %v6584 = vor.u32 %v6580, %v6583
        %v6585 = vrot.slane %v6584, 4
        %v6587 = vshll.u32 %v6491, 16
        %v6589 = vrot.slane %v6587, 5
        %v6590 = vsel %vm1183, %v6585, %v6589
        %v6591 = vshrl.u32 %v6491, 16
        %v6593 = vrot.slane %v6591, 4
        %v6594 = vor.u32 %v6593, %v6589
        %v6595 = vrot.slane %v6594, 4
        %v6597 = vshll.u32 %v6492, 16
        %v6599 = vrot.slane %v6597, 5
        %v6600 = vsel %vm1183, %v6595, %v6599
        %v6602 = vshrl.u32 %v6493, 16
        %v6604 = vrot.slane %v6602, 4
        %v6605 = vshll.u32 %v6493, 16
        %v6607 = vrot.slane %v6605, 5
        %v6608 = vor.u32 %v6604, %v6607
        %v6609 = vrot.slane %v6608, 4
        %v6611 = vshll.u32 %v6494, 16
        %v6613 = vrot.slane %v6611, 5
        %v6614 = vsel %vm1183, %v6609, %v6613
        %v6615 = vshrl.u32 %v6494, 16
        %v6617 = vrot.slane %v6615, 4
        %v6618 = vor.u32 %v6617, %v6613
        %v6619 = vrot.slane %v6618, 4
        %v6621 = vshll.u32 %v6495, 16
        %v6623 = vrot.slane %v6621, 5
        %v6624 = vsel %vm1183, %v6619, %v6623
        %v6626 = vshrl.u32 %v6496, 16
        %v6628 = vrot.slane %v6626, 4
        %v6629 = vshll.u32 %v6496, 16
        %v6631 = vrot.slane %v6629, 5
        %v6632 = vor.u32 %v6628, %v6631
        %v6633 = vrot.slane %v6632, 4
        %v6635 = vshll.u32 %v6497, 16
        %v6637 = vrot.slane %v6635, 5
        %v6638 = vsel %vm1183, %v6633, %v6637
        %v6639 = vshrl.u32 %v6497, 16
        %v6641 = vrot.slane %v6639, 4
        %v6642 = vor.u32 %v6641, %v6637
        %v6643 = vrot.slane %v6642, 4
        %v6645 = vshll.u32 %v6498, 16
        %v6647 = vrot.slane %v6645, 5
        %v6648 = vsel %vm1183, %v6643, %v6647
        %v6650 = vshrl.u32 %v6499, 16
        %v6652 = vrot.slane %v6650, 4
        %v6653 = vshll.u32 %v6499, 16
        %v6655 = vrot.slane %v6653, 5
        %v6656 = vor.u32 %v6652, %v6655
        %v6657 = vrot.slane %v6656, 4
        %v6659 = vshll.u32 %v6500, 16
        %v6661 = vrot.slane %v6659, 5
        %v6662 = vsel %vm1183, %v6657, %v6661
        %v6663 = vshrl.u32 %v6500, 16
        %v6665 = vrot.slane %v6663, 4
        %v6666 = vor.u32 %v6665, %v6661
        %v6667 = vrot.slane %v6666, 4
        %v6669 = vshll.u32 %v6501, 16
        %v6671 = vrot.slane %v6669, 5
        %v6672 = vsel %vm1183, %v6667, %v6671
        %v6674 = vshrl.u32 %v6502, 16
        %v6676 = vrot.slane %v6674, 4
        %v6677 = vshll.u32 %v6502, 16
        %v6679 = vrot.slane %v6677, 5
        %v6680 = vor.u32 %v6676, %v6679
        %v6681 = vrot.slane %v6680, 4
        %v6683 = vshll.u32 %v6503, 16
        %v6685 = vrot.slane %v6683, 5
        %v6686 = vsel %vm1183, %v6681, %v6685
        %v6687 = vshrl.u32 %v6503, 16
        %v6689 = vrot.slane %v6687, 4
        %v6690 = vor.u32 %v6689, %v6685
        %v6691 = vrot.slane %v6690, 4
        %v6693 = vshll.u32 %v6504, 16
        %v6695 = vrot.slane %v6693, 5
        %v6696 = vsel %vm1183, %v6691, %v6695
        %s6697 = scalar_lea.vmem [#allocation11], 256
        %v6698 = vld [vmem:[%s6697] sm:$0xf]
        %v6699 = vld [vmem:[%s6697 + $0x4] sm:$0xf]
        %v6700 = vld [vmem:[%s6697 + $0x8] sm:$0xf]
        %v6701 = vld [vmem:[%s6697 + $0xc] sm:$0xf]
        %v6702 = vld [vmem:[%s6697 + $0x10] sm:$0xf]
        %v6703 = vld [vmem:[%s6697 + $0x14] sm:$0xf]
        %v6704 = vld [vmem:[%s6697 + $0x18] sm:$0xf]
        %v6705 = vld [vmem:[%s6697 + $0x1c] sm:$0xf]
        %v6706 = vld [vmem:[%s6697 + $0x20] sm:$0xf]
        %v6707 = vld [vmem:[%s6697 + $0x24] sm:$0xf]
        %v6708 = vld [vmem:[%s6697 + $0x28] sm:$0xf]
        %v6709 = vld [vmem:[%s6697 + $0x2c] sm:$0xf]
        %v6710 = vld [vmem:[%s6697 + $0x30] sm:$0xf]
        %v6711 = vld [vmem:[%s6697 + $0x34] sm:$0xf]
        %v6712 = vld [vmem:[%s6697 + $0x38] sm:$0xf]
        %v6713 = vld [vmem:[%s6697 + $0x3c] sm:$0xf]
        %v6714 = vunpack.c.l.b16 %v6518
        %v6715 = vunpack.c.l.b16 %v6528
        %v6716 = vunpack.c.l.b16 %v6542
        %v6717 = vunpack.c.l.b16 %v6552
        %v6718 = vunpack.c.l.b16 %v6566
        %v6719 = vunpack.c.l.b16 %v6576
        %v6720 = vunpack.c.l.b16 %v6590
        %v6721 = vunpack.c.l.b16 %v6600
        %v6722 = vunpack.c.l.b16 %v6614
        %v6723 = vunpack.c.l.b16 %v6624
        %v6724 = vunpack.c.l.b16 %v6638
        %v6725 = vunpack.c.l.b16 %v6648
        %v6726 = vunpack.c.l.b16 %v6662
        %v6727 = vunpack.c.l.b16 %v6672
        %v6728 = vunpack.c.l.b16 %v6686
        %v6729 = vunpack.c.l.b16 %v6696
        %v6730 = vpack.c.b16 %v6715, %v6714
        %v6731 = vpack.c.b16 %v6717, %v6716
        %v6732 = vpack.c.b16 %v6719, %v6718
        %v6733 = vpack.c.b16 %v6721, %v6720
        %v6734 = vpack.c.b16 %v6723, %v6722
        %v6735 = vpack.c.b16 %v6725, %v6724
        %v6736 = vpack.c.b16 %v6727, %v6726
        %v6737 = vpack.c.b16 %v6729, %v6728
        %v6762 = vunpack.c.l.b16 %v6698
        %v6763 = vunpack.c.l.b16 %v6699
        %v6764 = vunpack.c.l.b16 %v6700
        %v6765 = vunpack.c.l.b16 %v6701
        %v6766 = vunpack.c.l.b16 %v6702
        %v6767 = vunpack.c.l.b16 %v6703
        %v6768 = vunpack.c.l.b16 %v6704
        %v6769 = vunpack.c.l.b16 %v6705
        %v6770 = vunpack.c.l.b16 %v6706
        %v6771 = vunpack.c.l.b16 %v6707
        %v6772 = vunpack.c.l.b16 %v6708
        %v6773 = vunpack.c.l.b16 %v6709
        %v6774 = vunpack.c.l.b16 %v6710
        %v6775 = vunpack.c.l.b16 %v6711
        %v6776 = vunpack.c.l.b16 %v6712
        %v6777 = vunpack.c.l.b16 %v6713
        %v6778 = vpack.c.b16 %v6763, %v6762
        %v6779 = vpack.c.b16 %v6765, %v6764
        %v6780 = vpack.c.b16 %v6767, %v6766
        %v6781 = vpack.c.b16 %v6769, %v6768
        %v6782 = vpack.c.b16 %v6771, %v6770
        %v6783 = vpack.c.b16 %v6773, %v6772
        %v6784 = vpack.c.b16 %v6775, %v6774
        %v6785 = vpack.c.b16 %v6777, %v6776
        %6794 = vmatprep.subr.bf16.mxu0 0
        %6795 = vmatpush1.bf16.msra.mxu0 %v6785
        %6796 = vmatprep.subr.bf16.mxu0 0
        %6797 = vmatpush1.bf16.msra.mxu0 %v6784
        %6798 = vmatprep.subr.bf16.mxu0 0
        %6799 = vmatpush1.bf16.msra.mxu0 %v6783
        %6800 = vmatprep.subr.bf16.mxu0 0
        %6801 = vmatpush1.bf16.msra.mxu0 %v6782
        %6802 = vmatprep.subr.bf16.mxu0 0
        %6803 = vmatpush1.bf16.msra.mxu0 %v6781
        %6804 = vmatprep.subr.bf16.mxu0 0
        %6805 = vmatpush1.bf16.msra.mxu0 %v6780
        %6806 = vmatprep.subr.bf16.mxu0 0
        %6807 = vmatpush1.bf16.msra.mxu0 %v6779
        %6808 = vmatprep.subr.bf16.mxu0 0
        %6809 = vmatpush1.bf16.msra.mxu0 %v6778
        %6810 = vmatprep.subr.bf16.mxu0 0
        %6811 = vmatpush2.bf16.msra.mxu0 0
        %6812 = vmatprep.subr.bf16.mxu0 0
        %6813 = vmatpush2.bf16.msra.mxu0 0
        %6814 = vmatprep.subr.bf16.mxu0 0
        %6815 = vmatpush2.bf16.msra.mxu0 0
        %6816 = vmatprep.subr.bf16.mxu0 0
        %6817 = vmatpush2.bf16.msra.mxu0 0
        %6818 = vmatprep.subr.bf16.mxu0 0
        %6819 = vmatpush2.bf16.msra.mxu0 0
        %6820 = vmatprep.subr.bf16.mxu0 0
        %6821 = vmatpush2.bf16.msra.mxu0 0
        %6822 = vmatprep.subr.bf16.mxu0 0
        %6823 = vmatpush2.bf16.msra.mxu0 0
        %6824 = vmatprep.subr.bf16.mxu0 0
        %6825 = vmatpush2.bf16.msra.mxu0 0
        %6826 = vmatprep.mubr.bf16.mxu0 0
        %6827 = vmatmul.mubr.bf16.gmra.mxu0 %v6730
        %v6828 = vpop.f32.mrf.mxu0
        %v6829 = vadd.f32 0.0, %v6828
        %v6830 = vpop.f32.mrf.mxu0
        %v6831 = vpop.f32.mrf.mxu0
        %v6832 = vadd.f32 0.0, %v6831
        %v6833 = vpop.f32.mrf.mxu0
        %6834 = vmatprep.mubr.bf16.mxu0 0
        %6835 = vmatmul.mubr.bf16.gmra.mxu0 %v6731
        %v6836 = vpop.f32.mrf.mxu0
        %v6837 = vadd.f32 0.0, %v6836
        %v6838 = vpop.f32.mrf.mxu0
        %v6839 = vpop.f32.mrf.mxu0
        %v6840 = vadd.f32 0.0, %v6839
        %v6841 = vpop.f32.mrf.mxu0
        %6842 = vmatprep.mubr.bf16.mxu0 0
        %6843 = vmatmul.mubr.bf16.gmra.mxu0 %v6732
        %v6844 = vpop.f32.mrf.mxu0
        %v6845 = vadd.f32 0.0, %v6844
        %v6846 = vpop.f32.mrf.mxu0
        %v6847 = vpop.f32.mrf.mxu0
        %v6848 = vadd.f32 0.0, %v6847
        %v6849 = vpop.f32.mrf.mxu0
        %6850 = vmatprep.mubr.bf16.mxu0 0
        %6851 = vmatmul.mubr.bf16.gmra.mxu0 %v6733
        %v6852 = vpop.f32.mrf.mxu0
        %v6853 = vadd.f32 0.0, %v6852
        %v6854 = vpop.f32.mrf.mxu0
        %v6855 = vpop.f32.mrf.mxu0
        %v6856 = vadd.f32 0.0, %v6855
        %v6857 = vpop.f32.mrf.mxu0
        %6858 = vmatprep.mubr.bf16.mxu0 0
        %6859 = vmatmul.mubr.bf16.gmra.mxu0 %v6734
        %v6860 = vpop.f32.mrf.mxu0
        %v6861 = vadd.f32 0.0, %v6860
        %v6862 = vpop.f32.mrf.mxu0
        %v6863 = vpop.f32.mrf.mxu0
        %v6864 = vadd.f32 0.0, %v6863
        %v6865 = vpop.f32.mrf.mxu0
        %6866 = vmatprep.mubr.bf16.mxu0 0
        %6867 = vmatmul.mubr.bf16.gmra.mxu0 %v6735
        %v6868 = vpop.f32.mrf.mxu0
        %v6869 = vadd.f32 0.0, %v6868
        %v6870 = vpop.f32.mrf.mxu0
        %v6871 = vpop.f32.mrf.mxu0
        %v6872 = vadd.f32 0.0, %v6871
        %v6873 = vpop.f32.mrf.mxu0
        %6874 = vmatprep.mubr.bf16.mxu0 0
        %6875 = vmatmul.mubr.bf16.gmra.mxu0 %v6736
        %v6876 = vpop.f32.mrf.mxu0
        %v6877 = vadd.f32 0.0, %v6876
        %v6878 = vpop.f32.mrf.mxu0
        %v6879 = vpop.f32.mrf.mxu0
        %v6880 = vadd.f32 0.0, %v6879
        %v6881 = vpop.f32.mrf.mxu0
        %6882 = vmatprep.mubr.bf16.mxu0 0
        %6883 = vmatmul.mubr.bf16.gmra.mxu0 %v6737
        %v6884 = vpop.f32.mrf.mxu0
        %v6885 = vadd.f32 0.0, %v6884
        %v6886 = vpop.f32.mrf.mxu0
        %v6887 = vpop.f32.mrf.mxu0
        %v6888 = vadd.f32 0.0, %v6887
        %v6889 = vpop.f32.mrf.mxu0
        %6890 = vdwg.mxu0
        %v6891 = vld [vmem:[#allocation5] sm:$0xff]
        %v6892 = vld [vmem:[#allocation5 + $0x8] sm:$0xff]
        %v6893 = vld [vmem:[#allocation5 + $0x10] sm:$0xff]
        %v6894 = vld [vmem:[#allocation5 + $0x18] sm:$0xff]
        %v6895 = vld [vmem:[#allocation5 + $0x20] sm:$0xff]
        %v6896 = vld [vmem:[#allocation5 + $0x28] sm:$0xff]
        %v6897 = vld [vmem:[#allocation5 + $0x30] sm:$0xff]
        %v6898 = vld [vmem:[#allocation5 + $0x38] sm:$0xff]
        %v6899 = vld [vmem:[#allocation5 + $0x40] sm:$0xff]
        %v6900 = vld [vmem:[#allocation5 + $0x48] sm:$0xff]
        %v6901 = vld [vmem:[#allocation5 + $0x50] sm:$0xff]
        %v6902 = vld [vmem:[#allocation5 + $0x58] sm:$0xff]
        %v6903 = vld [vmem:[#allocation5 + $0x60] sm:$0xff]
        %v6904 = vld [vmem:[#allocation5 + $0x68] sm:$0xff]
        %v6905 = vld [vmem:[#allocation5 + $0x70] sm:$0xff]
        %v6906 = vld [vmem:[#allocation5 + $0x78] sm:$0xff]
        %v6907 = vadd.f32 %v6891, %v6829
        %v6908 = vadd.f32 %v6892, %v6832
        %v6909 = vadd.f32 %v6893, %v6837
        %v6910 = vadd.f32 %v6894, %v6840
        %v6911 = vadd.f32 %v6895, %v6845
        %v6912 = vadd.f32 %v6896, %v6848
        %v6913 = vadd.f32 %v6897, %v6853
        %v6914 = vadd.f32 %v6898, %v6856
        %v6915 = vadd.f32 %v6899, %v6861
        %v6916 = vadd.f32 %v6900, %v6864
        %v6917 = vadd.f32 %v6901, %v6869
        %v6918 = vadd.f32 %v6902, %v6872
        %v6919 = vadd.f32 %v6903, %v6877
        %v6920 = vadd.f32 %v6904, %v6880
        %v6921 = vadd.f32 %v6905, %v6885
        %v6922 = vadd.f32 %v6906, %v6888
        %6923 = vst [vmem:[#allocation5] sm:$0xff] %v6907
        %6924 = vst [vmem:[#allocation5 + $0x8] sm:$0xff] %v6908
        %6925 = vst [vmem:[#allocation5 + $0x10] sm:$0xff] %v6909
        %6926 = vst [vmem:[#allocation5 + $0x18] sm:$0xff] %v6910
        %6927 = vst [vmem:[#allocation5 + $0x20] sm:$0xff] %v6911
        %6928 = vst [vmem:[#allocation5 + $0x28] sm:$0xff] %v6912
        %6929 = vst [vmem:[#allocation5 + $0x30] sm:$0xff] %v6913
        %6930 = vst [vmem:[#allocation5 + $0x38] sm:$0xff] %v6914
        %6931 = vst [vmem:[#allocation5 + $0x40] sm:$0xff] %v6915
        %6932 = vst [vmem:[#allocation5 + $0x48] sm:$0xff] %v6916
        %6933 = vst [vmem:[#allocation5 + $0x50] sm:$0xff] %v6917
        %6934 = vst [vmem:[#allocation5 + $0x58] sm:$0xff] %v6918
        %6935 = vst [vmem:[#allocation5 + $0x60] sm:$0xff] %v6919
        %6936 = vst [vmem:[#allocation5 + $0x68] sm:$0xff] %v6920
        %6937 = vst [vmem:[#allocation5 + $0x70] sm:$0xff] %v6921
        %6938 = vst [vmem:[#allocation5 + $0x78] sm:$0xff] %v6922
        %v6939 = vld [vmem:[%s6206] sm:$0xe]
        %v6940 = vld [vmem:[%s6206 + $0x4] sm:$0xf]
        %v6941 = vld [vmem:[%s6206 + $0x8] sm:$0x1]
        %v6942 = vld [vmem:[%s6206 + $0xc] sm:$0xe]
        %v6943 = vld [vmem:[%s6206 + $0x10] sm:$0xf]
        %v6944 = vld [vmem:[%s6206 + $0x14] sm:$0x1]
        %v6945 = vld [vmem:[%s6206 + $0x18] sm:$0xe]
        %v6946 = vld [vmem:[%s6206 + $0x1c] sm:$0xf]
        %v6947 = vld [vmem:[%s6206 + $0x20] sm:$0x1]
        %v6948 = vld [vmem:[%s6206 + $0x24] sm:$0xe]
        %v6949 = vld [vmem:[%s6206 + $0x28] sm:$0xf]
        %v6950 = vld [vmem:[%s6206 + $0x2c] sm:$0x1]
        %v6951 = vld [vmem:[%s6206 + $0x30] sm:$0xe]
        %v6952 = vld [vmem:[%s6206 + $0x34] sm:$0xf]
        %v6953 = vld [vmem:[%s6206 + $0x38] sm:$0x1]
        %v6954 = vld [vmem:[%s6206 + $0x3c] sm:$0xe]
        %v6955 = vld [vmem:[%s6206 + $0x40] sm:$0xf]
        %v6956 = vld [vmem:[%s6206 + $0x44] sm:$0x1]
        %v6957 = vld [vmem:[%s6206 + $0x48] sm:$0xe]
        %v6958 = vld [vmem:[%s6206 + $0x4c] sm:$0xf]
        %v6959 = vld [vmem:[%s6206 + $0x50] sm:$0x1]
        %v6960 = vld [vmem:[%s6206 + $0x54] sm:$0xe]
        %v6961 = vld [vmem:[%s6206 + $0x58] sm:$0xf]
        %v6962 = vld [vmem:[%s6206 + $0x5c] sm:$0x1]
        %v6987 = vrot.slane %v6939, 5
        %v6988 = vrot.slane %v6987, 4
        %v6989 = vrot.slane %v6940, 5
        %v6990 = vsel %vm1764, %v6988, %v6989
        %v6991 = vrot.slane %v6989, 4
        %v6992 = vrot.slane %v6941, 5
        %v6993 = vsel %vm1764, %v6991, %v6992
        %v6994 = vrot.slane %v6942, 5
        %v6995 = vrot.slane %v6994, 4
        %v6996 = vrot.slane %v6943, 5
        %v6997 = vsel %vm1764, %v6995, %v6996
        %v6998 = vrot.slane %v6996, 4
        %v6999 = vrot.slane %v6944, 5
        %v7000 = vsel %vm1764, %v6998, %v6999
        %v7001 = vrot.slane %v6945, 5
        %v7002 = vrot.slane %v7001, 4
        %v7003 = vrot.slane %v6946, 5
        %v7004 = vsel %vm1764, %v7002, %v7003
        %v7005 = vrot.slane %v7003, 4
        %v7006 = vrot.slane %v6947, 5
        %v7007 = vsel %vm1764, %v7005, %v7006
        %v7008 = vrot.slane %v6948, 5
        %v7009 = vrot.slane %v7008, 4
        %v7010 = vrot.slane %v6949, 5
        %v7011 = vsel %vm1764, %v7009, %v7010
        %v7012 = vrot.slane %v7010, 4
        %v7013 = vrot.slane %v6950, 5
        %v7014 = vsel %vm1764, %v7012, %v7013
        %v7015 = vrot.slane %v6951, 5
        %v7016 = vrot.slane %v7015, 4
        %v7017 = vrot.slane %v6952, 5
        %v7018 = vsel %vm1764, %v7016, %v7017
        %v7019 = vrot.slane %v7017, 4
        %v7020 = vrot.slane %v6953, 5
        %v7021 = vsel %vm1764, %v7019, %v7020
        %v7022 = vrot.slane %v6954, 5
        %v7023 = vrot.slane %v7022, 4
        %v7024 = vrot.slane %v6955, 5
        %v7025 = vsel %vm1764, %v7023, %v7024
        %v7026 = vrot.slane %v7024, 4
        %v7027 = vrot.slane %v6956, 5
        %v7028 = vsel %vm1764, %v7026, %v7027
        %v7029 = vrot.slane %v6957, 5
        %v7030 = vrot.slane %v7029, 4
        %v7031 = vrot.slane %v6958, 5
        %v7032 = vsel %vm1764, %v7030, %v7031
        %v7033 = vrot.slane %v7031, 4
        %v7034 = vrot.slane %v6959, 5
        %v7035 = vsel %vm1764, %v7033, %v7034
        %v7036 = vrot.slane %v6960, 5
        %v7037 = vrot.slane %v7036, 4
        %v7038 = vrot.slane %v6961, 5
        %v7039 = vsel %vm1764, %v7037, %v7038
        %v7040 = vrot.slane %v7038, 4
        %v7041 = vrot.slane %v6962, 5
        %v7042 = vsel %vm1764, %v7040, %v7041
        %s7043 = scalar_lea.vmem [#allocation11], 320
        %v7044 = vld [vmem:[%s7043] sm:$0xf]
        %v7045 = vld [vmem:[%s7043 + $0x4] sm:$0xf]
        %v7046 = vld [vmem:[%s7043 + $0x8] sm:$0xf]
        %v7047 = vld [vmem:[%s7043 + $0xc] sm:$0xf]
        %v7048 = vld [vmem:[%s7043 + $0x10] sm:$0xf]
        %v7049 = vld [vmem:[%s7043 + $0x14] sm:$0xf]
        %v7050 = vld [vmem:[%s7043 + $0x18] sm:$0xf]
        %v7051 = vld [vmem:[%s7043 + $0x1c] sm:$0xf]
        %v7052 = vld [vmem:[%s7043 + $0x20] sm:$0xf]
        %v7053 = vld [vmem:[%s7043 + $0x24] sm:$0xf]
        %v7054 = vld [vmem:[%s7043 + $0x28] sm:$0xf]
        %v7055 = vld [vmem:[%s7043 + $0x2c] sm:$0xf]
        %v7056 = vld [vmem:[%s7043 + $0x30] sm:$0xf]
        %v7057 = vld [vmem:[%s7043 + $0x34] sm:$0xf]
        %v7058 = vld [vmem:[%s7043 + $0x38] sm:$0xf]
        %v7059 = vld [vmem:[%s7043 + $0x3c] sm:$0xf]
        %v7060 = vunpack.c.l.b16 %v6990
        %v7061 = vunpack.c.l.b16 %v6993
        %v7062 = vunpack.c.l.b16 %v6997
        %v7063 = vunpack.c.l.b16 %v7000
        %v7064 = vunpack.c.l.b16 %v7004
        %v7065 = vunpack.c.l.b16 %v7007
        %v7066 = vunpack.c.l.b16 %v7011
        %v7067 = vunpack.c.l.b16 %v7014
        %v7068 = vunpack.c.l.b16 %v7018
        %v7069 = vunpack.c.l.b16 %v7021
        %v7070 = vunpack.c.l.b16 %v7025
        %v7071 = vunpack.c.l.b16 %v7028
        %v7072 = vunpack.c.l.b16 %v7032
        %v7073 = vunpack.c.l.b16 %v7035
        %v7074 = vunpack.c.l.b16 %v7039
        %v7075 = vunpack.c.l.b16 %v7042
        %v7076 = vpack.c.b16 %v7061, %v7060
        %v7077 = vpack.c.b16 %v7063, %v7062
        %v7078 = vpack.c.b16 %v7065, %v7064
        %v7079 = vpack.c.b16 %v7067, %v7066
        %v7080 = vpack.c.b16 %v7069, %v7068
        %v7081 = vpack.c.b16 %v7071, %v7070
        %v7082 = vpack.c.b16 %v7073, %v7072
        %v7083 = vpack.c.b16 %v7075, %v7074
        %v7108 = vunpack.c.l.b16 %v7044
        %v7109 = vunpack.c.l.b16 %v7045
        %v7110 = vunpack.c.l.b16 %v7046
        %v7111 = vunpack.c.l.b16 %v7047
        %v7112 = vunpack.c.l.b16 %v7048
        %v7113 = vunpack.c.l.b16 %v7049
        %v7114 = vunpack.c.l.b16 %v7050
        %v7115 = vunpack.c.l.b16 %v7051
        %v7116 = vunpack.c.l.b16 %v7052
        %v7117 = vunpack.c.l.b16 %v7053
        %v7118 = vunpack.c.l.b16 %v7054
        %v7119 = vunpack.c.l.b16 %v7055
        %v7120 = vunpack.c.l.b16 %v7056
        %v7121 = vunpack.c.l.b16 %v7057
        %v7122 = vunpack.c.l.b16 %v7058
        %v7123 = vunpack.c.l.b16 %v7059
        %v7124 = vpack.c.b16 %v7109, %v7108
        %v7125 = vpack.c.b16 %v7111, %v7110
        %v7126 = vpack.c.b16 %v7113, %v7112
        %v7127 = vpack.c.b16 %v7115, %v7114
        %v7128 = vpack.c.b16 %v7117, %v7116
        %v7129 = vpack.c.b16 %v7119, %v7118
        %v7130 = vpack.c.b16 %v7121, %v7120
        %v7131 = vpack.c.b16 %v7123, %v7122
        %7140 = vmatprep.subr.bf16.mxu0 0
        %7141 = vmatpush1.bf16.msra.mxu0 %v7131
        %7142 = vmatprep.subr.bf16.mxu0 0
        %7143 = vmatpush1.bf16.msra.mxu0 %v7130
        %7144 = vmatprep.subr.bf16.mxu0 0
        %7145 = vmatpush1.bf16.msra.mxu0 %v7129
        %7146 = vmatprep.subr.bf16.mxu0 0
        %7147 = vmatpush1.bf16.msra.mxu0 %v7128
        %7148 = vmatprep.subr.bf16.mxu0 0
        %7149 = vmatpush1.bf16.msra.mxu0 %v7127
        %7150 = vmatprep.subr.bf16.mxu0 0
        %7151 = vmatpush1.bf16.msra.mxu0 %v7126
        %7152 = vmatprep.subr.bf16.mxu0 0
        %7153 = vmatpush1.bf16.msra.mxu0 %v7125
        %7154 = vmatprep.subr.bf16.mxu0 0
        %7155 = vmatpush1.bf16.msra.mxu0 %v7124
        %7156 = vmatprep.subr.bf16.mxu0 0
        %7157 = vmatpush2.bf16.msra.mxu0 0
        %7158 = vmatprep.subr.bf16.mxu0 0
        %7159 = vmatpush2.bf16.msra.mxu0 0
        %7160 = vmatprep.subr.bf16.mxu0 0
        %7161 = vmatpush2.bf16.msra.mxu0 0
        %7162 = vmatprep.subr.bf16.mxu0 0
        %7163 = vmatpush2.bf16.msra.mxu0 0
        %7164 = vmatprep.subr.bf16.mxu0 0
        %7165 = vmatpush2.bf16.msra.mxu0 0
        %7166 = vmatprep.subr.bf16.mxu0 0
        %7167 = vmatpush2.bf16.msra.mxu0 0
        %7168 = vmatprep.subr.bf16.mxu0 0
        %7169 = vmatpush2.bf16.msra.mxu0 0
        %7170 = vmatprep.subr.bf16.mxu0 0
        %7171 = vmatpush2.bf16.msra.mxu0 0
        %7172 = vmatprep.mubr.bf16.mxu0 0
        %7173 = vmatmul.mubr.bf16.gmra.mxu0 %v7076
        %v7174 = vpop.f32.mrf.mxu0
        %v7175 = vadd.f32 0.0, %v7174
        %v7176 = vpop.f32.mrf.mxu0
        %v7177 = vpop.f32.mrf.mxu0
        %v7178 = vadd.f32 0.0, %v7177
        %v7179 = vpop.f32.mrf.mxu0
        %7180 = vmatprep.mubr.bf16.mxu0 0
        %7181 = vmatmul.mubr.bf16.gmra.mxu0 %v7077
        %v7182 = vpop.f32.mrf.mxu0
        %v7183 = vadd.f32 0.0, %v7182
        %v7184 = vpop.f32.mrf.mxu0
        %v7185 = vpop.f32.mrf.mxu0
        %v7186 = vadd.f32 0.0, %v7185
        %v7187 = vpop.f32.mrf.mxu0
        %7188 = vmatprep.mubr.bf16.mxu0 0
        %7189 = vmatmul.mubr.bf16.gmra.mxu0 %v7078
        %v7190 = vpop.f32.mrf.mxu0
        %v7191 = vadd.f32 0.0, %v7190
        %v7192 = vpop.f32.mrf.mxu0
        %v7193 = vpop.f32.mrf.mxu0
        %v7194 = vadd.f32 0.0, %v7193
        %v7195 = vpop.f32.mrf.mxu0
        %7196 = vmatprep.mubr.bf16.mxu0 0
        %7197 = vmatmul.mubr.bf16.gmra.mxu0 %v7079
        %v7198 = vpop.f32.mrf.mxu0
        %v7199 = vadd.f32 0.0, %v7198
        %v7200 = vpop.f32.mrf.mxu0
        %v7201 = vpop.f32.mrf.mxu0
        %v7202 = vadd.f32 0.0, %v7201
        %v7203 = vpop.f32.mrf.mxu0
        %7204 = vmatprep.mubr.bf16.mxu0 0
        %7205 = vmatmul.mubr.bf16.gmra.mxu0 %v7080
        %v7206 = vpop.f32.mrf.mxu0
        %v7207 = vadd.f32 0.0, %v7206
        %v7208 = vpop.f32.mrf.mxu0
        %v7209 = vpop.f32.mrf.mxu0
        %v7210 = vadd.f32 0.0, %v7209
        %v7211 = vpop.f32.mrf.mxu0
        %7212 = vmatprep.mubr.bf16.mxu0 0
        %7213 = vmatmul.mubr.bf16.gmra.mxu0 %v7081
        %v7214 = vpop.f32.mrf.mxu0
        %v7215 = vadd.f32 0.0, %v7214
        %v7216 = vpop.f32.mrf.mxu0
        %v7217 = vpop.f32.mrf.mxu0
        %v7218 = vadd.f32 0.0, %v7217
        %v7219 = vpop.f32.mrf.mxu0
        %7220 = vmatprep.mubr.bf16.mxu0 0
        %7221 = vmatmul.mubr.bf16.gmra.mxu0 %v7082
        %v7222 = vpop.f32.mrf.mxu0
        %v7223 = vadd.f32 0.0, %v7222
        %v7224 = vpop.f32.mrf.mxu0
        %v7225 = vpop.f32.mrf.mxu0
        %v7226 = vadd.f32 0.0, %v7225
        %v7227 = vpop.f32.mrf.mxu0
        %7228 = vmatprep.mubr.bf16.mxu0 0
        %7229 = vmatmul.mubr.bf16.gmra.mxu0 %v7083
        %v7230 = vpop.f32.mrf.mxu0
        %v7231 = vadd.f32 0.0, %v7230
        %v7232 = vpop.f32.mrf.mxu0
        %v7233 = vpop.f32.mrf.mxu0
        %v7234 = vadd.f32 0.0, %v7233
        %v7235 = vpop.f32.mrf.mxu0
        %7236 = vdwg.mxu0
        %v7237 = vld [vmem:[#allocation5] sm:$0xff]
        %v7238 = vld [vmem:[#allocation5 + $0x8] sm:$0xff]
        %v7239 = vld [vmem:[#allocation5 + $0x10] sm:$0xff]
        %v7240 = vld [vmem:[#allocation5 + $0x18] sm:$0xff]
        %v7241 = vld [vmem:[#allocation5 + $0x20] sm:$0xff]
        %v7242 = vld [vmem:[#allocation5 + $0x28] sm:$0xff]
        %v7243 = vld [vmem:[#allocation5 + $0x30] sm:$0xff]
        %v7244 = vld [vmem:[#allocation5 + $0x38] sm:$0xff]
        %v7245 = vld [vmem:[#allocation5 + $0x40] sm:$0xff]
        %v7246 = vld [vmem:[#allocation5 + $0x48] sm:$0xff]
        %v7247 = vld [vmem:[#allocation5 + $0x50] sm:$0xff]
        %v7248 = vld [vmem:[#allocation5 + $0x58] sm:$0xff]
        %v7249 = vld [vmem:[#allocation5 + $0x60] sm:$0xff]
        %v7250 = vld [vmem:[#allocation5 + $0x68] sm:$0xff]
        %v7251 = vld [vmem:[#allocation5 + $0x70] sm:$0xff]
        %v7252 = vld [vmem:[#allocation5 + $0x78] sm:$0xff]
        %v7253 = vadd.f32 %v7237, %v7175
        %v7254 = vadd.f32 %v7238, %v7178
        %v7255 = vadd.f32 %v7239, %v7183
        %v7256 = vadd.f32 %v7240, %v7186
        %v7257 = vadd.f32 %v7241, %v7191
        %v7258 = vadd.f32 %v7242, %v7194
        %v7259 = vadd.f32 %v7243, %v7199
        %v7260 = vadd.f32 %v7244, %v7202
        %v7261 = vadd.f32 %v7245, %v7207
        %v7262 = vadd.f32 %v7246, %v7210
        %v7263 = vadd.f32 %v7247, %v7215
        %v7264 = vadd.f32 %v7248, %v7218
        %v7265 = vadd.f32 %v7249, %v7223
        %v7266 = vadd.f32 %v7250, %v7226
        %v7267 = vadd.f32 %v7251, %v7231
        %v7268 = vadd.f32 %v7252, %v7234
        %7269 = vst [vmem:[#allocation5] sm:$0xff] %v7253
        %7270 = vst [vmem:[#allocation5 + $0x8] sm:$0xff] %v7254
        %7271 = vst [vmem:[#allocation5 + $0x10] sm:$0xff] %v7255
        %7272 = vst [vmem:[#allocation5 + $0x18] sm:$0xff] %v7256
        %7273 = vst [vmem:[#allocation5 + $0x20] sm:$0xff] %v7257
        %7274 = vst [vmem:[#allocation5 + $0x28] sm:$0xff] %v7258
        %7275 = vst [vmem:[#allocation5 + $0x30] sm:$0xff] %v7259
        %7276 = vst [vmem:[#allocation5 + $0x38] sm:$0xff] %v7260
        %7277 = vst [vmem:[#allocation5 + $0x40] sm:$0xff] %v7261
        %7278 = vst [vmem:[#allocation5 + $0x48] sm:$0xff] %v7262
        %7279 = vst [vmem:[#allocation5 + $0x50] sm:$0xff] %v7263
        %7280 = vst [vmem:[#allocation5 + $0x58] sm:$0xff] %v7264
        %7281 = vst [vmem:[#allocation5 + $0x60] sm:$0xff] %v7265
        %7282 = vst [vmem:[#allocation5 + $0x68] sm:$0xff] %v7266
        %7283 = vst [vmem:[#allocation5 + $0x70] sm:$0xff] %v7267
        %7284 = vst [vmem:[#allocation5 + $0x78] sm:$0xff] %v7268
        %s7285 = scalar_lea.vmem [#allocation3], 24
        %v7286 = vld [vmem:[%s7285] sm:$0xf]
        %v7287 = vld [vmem:[%s7285 + $0x4] sm:$0xf]
        %v7288 = vld [vmem:[%s7285 + $0xc] sm:$0xf]
        %v7289 = vld [vmem:[%s7285 + $0x10] sm:$0xf]
        %v7290 = vld [vmem:[%s7285 + $0x18] sm:$0xf]
        %v7291 = vld [vmem:[%s7285 + $0x1c] sm:$0xf]
        %v7292 = vld [vmem:[%s7285 + $0x24] sm:$0xf]
        %v7293 = vld [vmem:[%s7285 + $0x28] sm:$0xf]
        %v7294 = vld [vmem:[%s7285 + $0x30] sm:$0xf]
        %v7295 = vld [vmem:[%s7285 + $0x34] sm:$0xf]
        %v7296 = vld [vmem:[%s7285 + $0x3c] sm:$0xf]
        %v7297 = vld [vmem:[%s7285 + $0x40] sm:$0xf]
        %v7298 = vld [vmem:[%s7285 + $0x48] sm:$0xf]
        %v7299 = vld [vmem:[%s7285 + $0x4c] sm:$0xf]
        %v7300 = vld [vmem:[%s7285 + $0x54] sm:$0xf]
        %v7301 = vld [vmem:[%s7285 + $0x58] sm:$0xf]
        %s7302 = scalar_lea.vmem [#allocation11], 384
        %v7303 = vld [vmem:[%s7302] sm:$0xf]
        %v7304 = vld [vmem:[%s7302 + $0x4] sm:$0xf]
        %v7305 = vld [vmem:[%s7302 + $0x8] sm:$0xf]
        %v7306 = vld [vmem:[%s7302 + $0xc] sm:$0xf]
        %v7307 = vld [vmem:[%s7302 + $0x10] sm:$0xf]
        %v7308 = vld [vmem:[%s7302 + $0x14] sm:$0xf]
        %v7309 = vld [vmem:[%s7302 + $0x18] sm:$0xf]
        %v7310 = vld [vmem:[%s7302 + $0x1c] sm:$0xf]
        %v7311 = vld [vmem:[%s7302 + $0x20] sm:$0xf]
        %v7312 = vld [vmem:[%s7302 + $0x24] sm:$0xf]
        %v7313 = vld [vmem:[%s7302 + $0x28] sm:$0xf]
        %v7314 = vld [vmem:[%s7302 + $0x2c] sm:$0xf]
        %v7315 = vld [vmem:[%s7302 + $0x30] sm:$0xf]
        %v7316 = vld [vmem:[%s7302 + $0x34] sm:$0xf]
        %v7317 = vld [vmem:[%s7302 + $0x38] sm:$0xf]
        %v7318 = vld [vmem:[%s7302 + $0x3c] sm:$0xf]
        %v7335 = vunpack.c.l.b16 %v7286
        %v7336 = vunpack.c.l.b16 %v7287
        %v7337 = vunpack.c.l.b16 %v7288
        %v7338 = vunpack.c.l.b16 %v7289
        %v7339 = vunpack.c.l.b16 %v7290
        %v7340 = vunpack.c.l.b16 %v7291
        %v7341 = vunpack.c.l.b16 %v7292
        %v7342 = vunpack.c.l.b16 %v7293
        %v7343 = vunpack.c.l.b16 %v7294
        %v7344 = vunpack.c.l.b16 %v7295
        %v7345 = vunpack.c.l.b16 %v7296
        %v7346 = vunpack.c.l.b16 %v7297
        %v7347 = vunpack.c.l.b16 %v7298
        %v7348 = vunpack.c.l.b16 %v7299
        %v7349 = vunpack.c.l.b16 %v7300
        %v7350 = vunpack.c.l.b16 %v7301
        %v7351 = vpack.c.b16 %v7336, %v7335
        %v7352 = vpack.c.b16 %v7338, %v7337
        %v7353 = vpack.c.b16 %v7340, %v7339
        %v7354 = vpack.c.b16 %v7342, %v7341
        %v7355 = vpack.c.b16 %v7344, %v7343
        %v7356 = vpack.c.b16 %v7346, %v7345
        %v7357 = vpack.c.b16 %v7348, %v7347
        %v7358 = vpack.c.b16 %v7350, %v7349
        %v7383 = vunpack.c.l.b16 %v7303
        %v7384 = vunpack.c.l.b16 %v7304
        %v7385 = vunpack.c.l.b16 %v7305
        %v7386 = vunpack.c.l.b16 %v7306
        %v7387 = vunpack.c.l.b16 %v7307
        %v7388 = vunpack.c.l.b16 %v7308
        %v7389 = vunpack.c.l.b16 %v7309
        %v7390 = vunpack.c.l.b16 %v7310
        %v7391 = vunpack.c.l.b16 %v7311
        %v7392 = vunpack.c.l.b16 %v7312
        %v7393 = vunpack.c.l.b16 %v7313
        %v7394 = vunpack.c.l.b16 %v7314
        %v7395 = vunpack.c.l.b16 %v7315
        %v7396 = vunpack.c.l.b16 %v7316
        %v7397 = vunpack.c.l.b16 %v7317
        %v7398 = vunpack.c.l.b16 %v7318
        %v7399 = vpack.c.b16 %v7384, %v7383
        %v7400 = vpack.c.b16 %v7386, %v7385
        %v7401 = vpack.c.b16 %v7388, %v7387
        %v7402 = vpack.c.b16 %v7390, %v7389
        %v7403 = vpack.c.b16 %v7392, %v7391
        %v7404 = vpack.c.b16 %v7394, %v7393
        %v7405 = vpack.c.b16 %v7396, %v7395
        %v7406 = vpack.c.b16 %v7398, %v7397
        %7415 = vmatprep.subr.bf16.mxu0 0
        %7416 = vmatpush1.bf16.msra.mxu0 %v7406
        %7417 = vmatprep.subr.bf16.mxu0 0
        %7418 = vmatpush1.bf16.msra.mxu0 %v7405
        %7419 = vmatprep.subr.bf16.mxu0 0
        %7420 = vmatpush1.bf16.msra.mxu0 %v7404
        %7421 = vmatprep.subr.bf16.mxu0 0
        %7422 = vmatpush1.bf16.msra.mxu0 %v7403
        %7423 = vmatprep.subr.bf16.mxu0 0
        %7424 = vmatpush1.bf16.msra.mxu0 %v7402
        %7425 = vmatprep.subr.bf16.mxu0 0
        %7426 = vmatpush1.bf16.msra.mxu0 %v7401
        %7427 = vmatprep.subr.bf16.mxu0 0
        %7428 = vmatpush1.bf16.msra.mxu0 %v7400
        %7429 = vmatprep.subr.bf16.mxu0 0
        %7430 = vmatpush1.bf16.msra.mxu0 %v7399
        %7431 = vmatprep.subr.bf16.mxu0 0
        %7432 = vmatpush2.bf16.msra.mxu0 0
        %7433 = vmatprep.subr.bf16.mxu0 0
        %7434 = vmatpush2.bf16.msra.mxu0 0
        %7435 = vmatprep.subr.bf16.mxu0 0
        %7436 = vmatpush2.bf16.msra.mxu0 0
        %7437 = vmatprep.subr.bf16.mxu0 0
        %7438 = vmatpush2.bf16.msra.mxu0 0
        %7439 = vmatprep.subr.bf16.mxu0 0
        %7440 = vmatpush2.bf16.msra.mxu0 0
        %7441 = vmatprep.subr.bf16.mxu0 0
        %7442 = vmatpush2.bf16.msra.mxu0 0
        %7443 = vmatprep.subr.bf16.mxu0 0
        %7444 = vmatpush2.bf16.msra.mxu0 0
        %7445 = vmatprep.subr.bf16.mxu0 0
        %7446 = vmatpush2.bf16.msra.mxu0 0
        %7447 = vmatprep.mubr.bf16.mxu0 0
        %7448 = vmatmul.mubr.bf16.gmra.mxu0 %v7351
        %v7449 = vpop.f32.mrf.mxu0
        %v7450 = vadd.f32 0.0, %v7449
        %v7451 = vpop.f32.mrf.mxu0
        %v7452 = vpop.f32.mrf.mxu0
        %v7453 = vadd.f32 0.0, %v7452
        %v7454 = vpop.f32.mrf.mxu0
        %7455 = vmatprep.mubr.bf16.mxu0 0
        %7456 = vmatmul.mubr.bf16.gmra.mxu0 %v7352
        %v7457 = vpop.f32.mrf.mxu0
        %v7458 = vadd.f32 0.0, %v7457
        %v7459 = vpop.f32.mrf.mxu0
        %v7460 = vpop.f32.mrf.mxu0
        %v7461 = vadd.f32 0.0, %v7460
        %v7462 = vpop.f32.mrf.mxu0
        %7463 = vmatprep.mubr.bf16.mxu0 0
        %7464 = vmatmul.mubr.bf16.gmra.mxu0 %v7353
        %v7465 = vpop.f32.mrf.mxu0
        %v7466 = vadd.f32 0.0, %v7465
        %v7467 = vpop.f32.mrf.mxu0
        %v7468 = vpop.f32.mrf.mxu0
        %v7469 = vadd.f32 0.0, %v7468
        %v7470 = vpop.f32.mrf.mxu0
        %7471 = vmatprep.mubr.bf16.mxu0 0
        %7472 = vmatmul.mubr.bf16.gmra.mxu0 %v7354
        %v7473 = vpop.f32.mrf.mxu0
        %v7474 = vadd.f32 0.0, %v7473
        %v7475 = vpop.f32.mrf.mxu0
        %v7476 = vpop.f32.mrf.mxu0
        %v7477 = vadd.f32 0.0, %v7476
        %v7478 = vpop.f32.mrf.mxu0
        %7479 = vmatprep.mubr.bf16.mxu0 0
        %7480 = vmatmul.mubr.bf16.gmra.mxu0 %v7355
        %v7481 = vpop.f32.mrf.mxu0
        %v7482 = vadd.f32 0.0, %v7481
        %v7483 = vpop.f32.mrf.mxu0
        %v7484 = vpop.f32.mrf.mxu0
        %v7485 = vadd.f32 0.0, %v7484
        %v7486 = vpop.f32.mrf.mxu0
        %7487 = vmatprep.mubr.bf16.mxu0 0
        %7488 = vmatmul.mubr.bf16.gmra.mxu0 %v7356
        %v7489 = vpop.f32.mrf.mxu0
        %v7490 = vadd.f32 0.0, %v7489
        %v7491 = vpop.f32.mrf.mxu0
        %v7492 = vpop.f32.mrf.mxu0
        %v7493 = vadd.f32 0.0, %v7492
        %v7494 = vpop.f32.mrf.mxu0
        %7495 = vmatprep.mubr.bf16.mxu0 0
        %7496 = vmatmul.mubr.bf16.gmra.mxu0 %v7357
        %v7497 = vpop.f32.mrf.mxu0
        %v7498 = vadd.f32 0.0, %v7497
        %v7499 = vpop.f32.mrf.mxu0
        %v7500 = vpop.f32.mrf.mxu0
        %v7501 = vadd.f32 0.0, %v7500
        %v7502 = vpop.f32.mrf.mxu0
        %7503 = vmatprep.mubr.bf16.mxu0 0
        %7504 = vmatmul.mubr.bf16.gmra.mxu0 %v7358
        %v7505 = vpop.f32.mrf.mxu0
        %v7506 = vadd.f32 0.0, %v7505
        %v7507 = vpop.f32.mrf.mxu0
        %v7508 = vpop.f32.mrf.mxu0
        %v7509 = vadd.f32 0.0, %v7508
        %v7510 = vpop.f32.mrf.mxu0
        %7511 = vdwg.mxu0
        %v7512 = vld [vmem:[#allocation5] sm:$0xff]
        %v7513 = vld [vmem:[#allocation5 + $0x8] sm:$0xff]
        %v7514 = vld [vmem:[#allocation5 + $0x10] sm:$0xff]
        %v7515 = vld [vmem:[#allocation5 + $0x18] sm:$0xff]
        %v7516 = vld [vmem:[#allocation5 + $0x20] sm:$0xff]
        %v7517 = vld [vmem:[#allocation5 + $0x28] sm:$0xff]
        %v7518 = vld [vmem:[#allocation5 + $0x30] sm:$0xff]
        %v7519 = vld [vmem:[#allocation5 + $0x38] sm:$0xff]
        %v7520 = vld [vmem:[#allocation5 + $0x40] sm:$0xff]
        %v7521 = vld [vmem:[#allocation5 + $0x48] sm:$0xff]
        %v7522 = vld [vmem:[#allocation5 + $0x50] sm:$0xff]
        %v7523 = vld [vmem:[#allocation5 + $0x58] sm:$0xff]
        %v7524 = vld [vmem:[#allocation5 + $0x60] sm:$0xff]
        %v7525 = vld [vmem:[#allocation5 + $0x68] sm:$0xff]
        %v7526 = vld [vmem:[#allocation5 + $0x70] sm:$0xff]
        %v7527 = vld [vmem:[#allocation5 + $0x78] sm:$0xff]
        %v7528 = vadd.f32 %v7512, %v7450
        %v7529 = vadd.f32 %v7513, %v7453
        %v7530 = vadd.f32 %v7514, %v7458
        %v7531 = vadd.f32 %v7515, %v7461
        %v7532 = vadd.f32 %v7516, %v7466
        %v7533 = vadd.f32 %v7517, %v7469
        %v7534 = vadd.f32 %v7518, %v7474
        %v7535 = vadd.f32 %v7519, %v7477
        %v7536 = vadd.f32 %v7520, %v7482
        %v7537 = vadd.f32 %v7521, %v7485
        %v7538 = vadd.f32 %v7522, %v7490
        %v7539 = vadd.f32 %v7523, %v7493
        %v7540 = vadd.f32 %v7524, %v7498
        %v7541 = vadd.f32 %v7525, %v7501
        %v7542 = vadd.f32 %v7526, %v7506
        %v7543 = vadd.f32 %v7527, %v7509
        %7544 = vst [vmem:[#allocation5] sm:$0xff] %v7528
        %7545 = vst [vmem:[#allocation5 + $0x8] sm:$0xff] %v7529
        %7546 = vst [vmem:[#allocation5 + $0x10] sm:$0xff] %v7530
        %7547 = vst [vmem:[#allocation5 + $0x18] sm:$0xff] %v7531
        %7548 = vst [vmem:[#allocation5 + $0x20] sm:$0xff] %v7532
        %7549 = vst [vmem:[#allocation5 + $0x28] sm:$0xff] %v7533
        %7550 = vst [vmem:[#allocation5 + $0x30] sm:$0xff] %v7534
        %7551 = vst [vmem:[#allocation5 + $0x38] sm:$0xff] %v7535
        %7552 = vst [vmem:[#allocation5 + $0x40] sm:$0xff] %v7536
        %7553 = vst [vmem:[#allocation5 + $0x48] sm:$0xff] %v7537
        %7554 = vst [vmem:[#allocation5 + $0x50] sm:$0xff] %v7538
        %7555 = vst [vmem:[#allocation5 + $0x58] sm:$0xff] %v7539
        %7556 = vst [vmem:[#allocation5 + $0x60] sm:$0xff] %v7540
        %7557 = vst [vmem:[#allocation5 + $0x68] sm:$0xff] %v7541
        %7558 = vst [vmem:[#allocation5 + $0x70] sm:$0xff] %v7542
        %7559 = vst [vmem:[#allocation5 + $0x78] sm:$0xff] %v7543
        %v7560 = vld [vmem:[%s7285] sm:$0xf]
        %v7561 = vld [vmem:[%s7285 + $0x4] sm:$0xf]
        %v7562 = vld [vmem:[%s7285 + $0x8] sm:$0x1]
        %v7563 = vld [vmem:[%s7285 + $0xc] sm:$0xf]
        %v7564 = vld [vmem:[%s7285 + $0x10] sm:$0xf]
        %v7565 = vld [vmem:[%s7285 + $0x14] sm:$0x1]
        %v7566 = vld [vmem:[%s7285 + $0x18] sm:$0xf]
        %v7567 = vld [vmem:[%s7285 + $0x1c] sm:$0xf]
        %v7568 = vld [vmem:[%s7285 + $0x20] sm:$0x1]
        %v7569 = vld [vmem:[%s7285 + $0x24] sm:$0xf]
        %v7570 = vld [vmem:[%s7285 + $0x28] sm:$0xf]
        %v7571 = vld [vmem:[%s7285 + $0x2c] sm:$0x1]
        %v7572 = vld [vmem:[%s7285 + $0x30] sm:$0xf]
        %v7573 = vld [vmem:[%s7285 + $0x34] sm:$0xf]
        %v7574 = vld [vmem:[%s7285 + $0x38] sm:$0x1]
        %v7575 = vld [vmem:[%s7285 + $0x3c] sm:$0xf]
        %v7576 = vld [vmem:[%s7285 + $0x40] sm:$0xf]
        %v7577 = vld [vmem:[%s7285 + $0x44] sm:$0x1]
        %v7578 = vld [vmem:[%s7285 + $0x48] sm:$0xf]
        %v7579 = vld [vmem:[%s7285 + $0x4c] sm:$0xf]
        %v7580 = vld [vmem:[%s7285 + $0x50] sm:$0x1]
        %v7581 = vld [vmem:[%s7285 + $0x54] sm:$0xf]
        %v7582 = vld [vmem:[%s7285 + $0x58] sm:$0xf]
        %v7583 = vld [vmem:[%s7285 + $0x5c] sm:$0x1]
        %v7585 = vshrl.u32 %v7560, 16
        %v7587 = vrot.slane %v7585, 4
        %v7588 = vshll.u32 %v7560, 16
        %v7590 = vrot.slane %v7588, 5
        %v7591 = vor.u32 %v7587, %v7590
        %v7592 = vrot.slane %v7591, 4
        %v7594 = vshll.u32 %v7561, 16
        %v7596 = vrot.slane %v7594, 5
        %v7597 = vsel %vm1183, %v7592, %v7596
        %v7598 = vshrl.u32 %v7561, 16
        %v7600 = vrot.slane %v7598, 4
        %v7601 = vor.u32 %v7600, %v7596
        %v7602 = vrot.slane %v7601, 4
        %v7604 = vshll.u32 %v7562, 16
        %v7606 = vrot.slane %v7604, 5
        %v7607 = vsel %vm1183, %v7602, %v7606
        %v7609 = vshrl.u32 %v7563, 16
        %v7611 = vrot.slane %v7609, 4
        %v7612 = vshll.u32 %v7563, 16
        %v7614 = vrot.slane %v7612, 5
        %v7615 = vor.u32 %v7611, %v7614
        %v7616 = vrot.slane %v7615, 4
        %v7618 = vshll.u32 %v7564, 16
        %v7620 = vrot.slane %v7618, 5
        %v7621 = vsel %vm1183, %v7616, %v7620
        %v7622 = vshrl.u32 %v7564, 16
        %v7624 = vrot.slane %v7622, 4
        %v7625 = vor.u32 %v7624, %v7620
        %v7626 = vrot.slane %v7625, 4
        %v7628 = vshll.u32 %v7565, 16
        %v7630 = vrot.slane %v7628, 5
        %v7631 = vsel %vm1183, %v7626, %v7630
        %v7633 = vshrl.u32 %v7566, 16
        %v7635 = vrot.slane %v7633, 4
        %v7636 = vshll.u32 %v7566, 16
        %v7638 = vrot.slane %v7636, 5
        %v7639 = vor.u32 %v7635, %v7638
        %v7640 = vrot.slane %v7639, 4
        %v7642 = vshll.u32 %v7567, 16
        %v7644 = vrot.slane %v7642, 5
        %v7645 = vsel %vm1183, %v7640, %v7644
        %v7646 = vshrl.u32 %v7567, 16
        %v7648 = vrot.slane %v7646, 4
        %v7649 = vor.u32 %v7648, %v7644
        %v7650 = vrot.slane %v7649, 4
        %v7652 = vshll.u32 %v7568, 16
        %v7654 = vrot.slane %v7652, 5
        %v7655 = vsel %vm1183, %v7650, %v7654
        %v7657 = vshrl.u32 %v7569, 16
        %v7659 = vrot.slane %v7657, 4
        %v7660 = vshll.u32 %v7569, 16
        %v7662 = vrot.slane %v7660, 5
        %v7663 = vor.u32 %v7659, %v7662
        %v7664 = vrot.slane %v7663, 4
        %v7666 = vshll.u32 %v7570, 16
        %v7668 = vrot.slane %v7666, 5
        %v7669 = vsel %vm1183, %v7664, %v7668
        %v7670 = vshrl.u32 %v7570, 16
        %v7672 = vrot.slane %v7670, 4
        %v7673 = vor.u32 %v7672, %v7668
        %v7674 = vrot.slane %v7673, 4
        %v7676 = vshll.u32 %v7571, 16
        %v7678 = vrot.slane %v7676, 5
        %v7679 = vsel %vm1183, %v7674, %v7678
        %v7681 = vshrl.u32 %v7572, 16
        %v7683 = vrot.slane %v7681, 4
        %v7684 = vshll.u32 %v7572, 16
        %v7686 = vrot.slane %v7684, 5
        %v7687 = vor.u32 %v7683, %v7686
        %v7688 = vrot.slane %v7687, 4
        %v7690 = vshll.u32 %v7573, 16
        %v7692 = vrot.slane %v7690, 5
        %v7693 = vsel %vm1183, %v7688, %v7692
        %v7694 = vshrl.u32 %v7573, 16
        %v7696 = vrot.slane %v7694, 4
        %v7697 = vor.u32 %v7696, %v7692
        %v7698 = vrot.slane %v7697, 4
        %v7700 = vshll.u32 %v7574, 16
        %v7702 = vrot.slane %v7700, 5
        %v7703 = vsel %vm1183, %v7698, %v7702
        %v7705 = vshrl.u32 %v7575, 16
        %v7707 = vrot.slane %v7705, 4
        %v7708 = vshll.u32 %v7575, 16
        %v7710 = vrot.slane %v7708, 5
        %v7711 = vor.u32 %v7707, %v7710
        %v7712 = vrot.slane %v7711, 4
        %v7714 = vshll.u32 %v7576, 16
        %v7716 = vrot.slane %v7714, 5
        %v7717 = vsel %vm1183, %v7712, %v7716
        %v7718 = vshrl.u32 %v7576, 16
        %v7720 = vrot.slane %v7718, 4
        %v7721 = vor.u32 %v7720, %v7716
        %v7722 = vrot.slane %v7721, 4
        %v7724 = vshll.u32 %v7577, 16
        %v7726 = vrot.slane %v7724, 5
        %v7727 = vsel %vm1183, %v7722, %v7726
        %v7729 = vshrl.u32 %v7578, 16
        %v7731 = vrot.slane %v7729, 4
        %v7732 = vshll.u32 %v7578, 16
        %v7734 = vrot.slane %v7732, 5
        %v7735 = vor.u32 %v7731, %v7734
        %v7736 = vrot.slane %v7735, 4
        %v7738 = vshll.u32 %v7579, 16
        %v7740 = vrot.slane %v7738, 5
        %v7741 = vsel %vm1183, %v7736, %v7740
        %v7742 = vshrl.u32 %v7579, 16
        %v7744 = vrot.slane %v7742, 4
        %v7745 = vor.u32 %v7744, %v7740
        %v7746 = vrot.slane %v7745, 4
        %v7748 = vshll.u32 %v7580, 16
        %v7750 = vrot.slane %v7748, 5
        %v7751 = vsel %vm1183, %v7746, %v7750
        %v7753 = vshrl.u32 %v7581, 16
        %v7755 = vrot.slane %v7753, 4
        %v7756 = vshll.u32 %v7581, 16
        %v7758 = vrot.slane %v7756, 5
        %v7759 = vor.u32 %v7755, %v7758
        %v7760 = vrot.slane %v7759, 4
        %v7762 = vshll.u32 %v7582, 16
        %v7764 = vrot.slane %v7762, 5
        %v7765 = vsel %vm1183, %v7760, %v7764
        %v7766 = vshrl.u32 %v7582, 16
        %v7768 = vrot.slane %v7766, 4
        %v7769 = vor.u32 %v7768, %v7764
        %v7770 = vrot.slane %v7769, 4
        %v7772 = vshll.u32 %v7583, 16
        %v7774 = vrot.slane %v7772, 5
        %v7775 = vsel %vm1183, %v7770, %v7774
        %s7776 = scalar_lea.vmem [#allocation11], 448
        %v7777 = vld [vmem:[%s7776] sm:$0xf]
        %v7778 = vld [vmem:[%s7776 + $0x4] sm:$0xf]
        %v7779 = vld [vmem:[%s7776 + $0x8] sm:$0xf]
        %v7780 = vld [vmem:[%s7776 + $0xc] sm:$0xf]
        %v7781 = vld [vmem:[%s7776 + $0x10] sm:$0xf]
        %v7782 = vld [vmem:[%s7776 + $0x14] sm:$0xf]
        %v7783 = vld [vmem:[%s7776 + $0x18] sm:$0xf]
        %v7784 = vld [vmem:[%s7776 + $0x1c] sm:$0xf]
        %v7785 = vld [vmem:[%s7776 + $0x20] sm:$0xf]
        %v7786 = vld [vmem:[%s7776 + $0x24] sm:$0xf]
        %v7787 = vld [vmem:[%s7776 + $0x28] sm:$0xf]
        %v7788 = vld [vmem:[%s7776 + $0x2c] sm:$0xf]
        %v7789 = vld [vmem:[%s7776 + $0x30] sm:$0xf]
        %v7790 = vld [vmem:[%s7776 + $0x34] sm:$0xf]
        %v7791 = vld [vmem:[%s7776 + $0x38] sm:$0xf]
        %v7792 = vld [vmem:[%s7776 + $0x3c] sm:$0xf]
        %v7793 = vunpack.c.l.b16 %v7597
        %v7794 = vunpack.c.l.b16 %v7607
        %v7795 = vunpack.c.l.b16 %v7621
        %v7796 = vunpack.c.l.b16 %v7631
        %v7797 = vunpack.c.l.b16 %v7645
        %v7798 = vunpack.c.l.b16 %v7655
        %v7799 = vunpack.c.l.b16 %v7669
        %v7800 = vunpack.c.l.b16 %v7679
        %v7801 = vunpack.c.l.b16 %v7693
        %v7802 = vunpack.c.l.b16 %v7703
        %v7803 = vunpack.c.l.b16 %v7717
        %v7804 = vunpack.c.l.b16 %v7727
        %v7805 = vunpack.c.l.b16 %v7741
        %v7806 = vunpack.c.l.b16 %v7751
        %v7807 = vunpack.c.l.b16 %v7765
        %v7808 = vunpack.c.l.b16 %v7775
        %v7809 = vpack.c.b16 %v7794, %v7793
        %v7810 = vpack.c.b16 %v7796, %v7795
        %v7811 = vpack.c.b16 %v7798, %v7797
        %v7812 = vpack.c.b16 %v7800, %v7799
        %v7813 = vpack.c.b16 %v7802, %v7801
        %v7814 = vpack.c.b16 %v7804, %v7803
        %v7815 = vpack.c.b16 %v7806, %v7805
        %v7816 = vpack.c.b16 %v7808, %v7807
        %v7841 = vunpack.c.l.b16 %v7777
        %v7842 = vunpack.c.l.b16 %v7778
        %v7843 = vunpack.c.l.b16 %v7779
        %v7844 = vunpack.c.l.b16 %v7780
        %v7845 = vunpack.c.l.b16 %v7781
        %v7846 = vunpack.c.l.b16 %v7782
        %v7847 = vunpack.c.l.b16 %v7783
        %v7848 = vunpack.c.l.b16 %v7784
        %v7849 = vunpack.c.l.b16 %v7785
        %v7850 = vunpack.c.l.b16 %v7786
        %v7851 = vunpack.c.l.b16 %v7787
        %v7852 = vunpack.c.l.b16 %v7788
        %v7853 = vunpack.c.l.b16 %v7789
        %v7854 = vunpack.c.l.b16 %v7790
        %v7855 = vunpack.c.l.b16 %v7791
        %v7856 = vunpack.c.l.b16 %v7792
        %v7857 = vpack.c.b16 %v7842, %v7841
        %v7858 = vpack.c.b16 %v7844, %v7843
        %v7859 = vpack.c.b16 %v7846, %v7845
        %v7860 = vpack.c.b16 %v7848, %v7847
        %v7861 = vpack.c.b16 %v7850, %v7849
        %v7862 = vpack.c.b16 %v7852, %v7851
        %v7863 = vpack.c.b16 %v7854, %v7853
        %v7864 = vpack.c.b16 %v7856, %v7855
        %7873 = vmatprep.subr.bf16.mxu0 0
        %7874 = vmatpush1.bf16.msra.mxu0 %v7864
        %7875 = vmatprep.subr.bf16.mxu0 0
        %7876 = vmatpush1.bf16.msra.mxu0 %v7863
        %7877 = vmatprep.subr.bf16.mxu0 0
        %7878 = vmatpush1.bf16.msra.mxu0 %v7862
        %7879 = vmatprep.subr.bf16.mxu0 0
        %7880 = vmatpush1.bf16.msra.mxu0 %v7861
        %7881 = vmatprep.subr.bf16.mxu0 0
        %7882 = vmatpush1.bf16.msra.mxu0 %v7860
        %7883 = vmatprep.subr.bf16.mxu0 0
        %7884 = vmatpush1.bf16.msra.mxu0 %v7859
        %7885 = vmatprep.subr.bf16.mxu0 0
        %7886 = vmatpush1.bf16.msra.mxu0 %v7858
        %7887 = vmatprep.subr.bf16.mxu0 0
        %7888 = vmatpush1.bf16.msra.mxu0 %v7857
        %7889 = vmatprep.subr.bf16.mxu0 0
        %7890 = vmatpush2.bf16.msra.mxu0 0
        %7891 = vmatprep.subr.bf16.mxu0 0
        %7892 = vmatpush2.bf16.msra.mxu0 0
        %7893 = vmatprep.subr.bf16.mxu0 0
        %7894 = vmatpush2.bf16.msra.mxu0 0
        %7895 = vmatprep.subr.bf16.mxu0 0
        %7896 = vmatpush2.bf16.msra.mxu0 0
        %7897 = vmatprep.subr.bf16.mxu0 0
        %7898 = vmatpush2.bf16.msra.mxu0 0
        %7899 = vmatprep.subr.bf16.mxu0 0
        %7900 = vmatpush2.bf16.msra.mxu0 0
        %7901 = vmatprep.subr.bf16.mxu0 0
        %7902 = vmatpush2.bf16.msra.mxu0 0
        %7903 = vmatprep.subr.bf16.mxu0 0
        %7904 = vmatpush2.bf16.msra.mxu0 0
        %7905 = vmatprep.mubr.bf16.mxu0 0
        %7906 = vmatmul.mubr.bf16.gmra.mxu0 %v7809
        %v7907 = vpop.f32.mrf.mxu0
        %v7908 = vadd.f32 0.0, %v7907
        %v7909 = vpop.f32.mrf.mxu0
        %v7910 = vpop.f32.mrf.mxu0
        %v7911 = vadd.f32 0.0, %v7910
        %v7912 = vpop.f32.mrf.mxu0
        %7913 = vmatprep.mubr.bf16.mxu0 0
        %7914 = vmatmul.mubr.bf16.gmra.mxu0 %v7810
        %v7915 = vpop.f32.mrf.mxu0
        %v7916 = vadd.f32 0.0, %v7915
        %v7917 = vpop.f32.mrf.mxu0
        %v7918 = vpop.f32.mrf.mxu0
        %v7919 = vadd.f32 0.0, %v7918
        %v7920 = vpop.f32.mrf.mxu0
        %7921 = vmatprep.mubr.bf16.mxu0 0
        %7922 = vmatmul.mubr.bf16.gmra.mxu0 %v7811
        %v7923 = vpop.f32.mrf.mxu0
        %v7924 = vadd.f32 0.0, %v7923
        %v7925 = vpop.f32.mrf.mxu0
        %v7926 = vpop.f32.mrf.mxu0
        %v7927 = vadd.f32 0.0, %v7926
        %v7928 = vpop.f32.mrf.mxu0
        %7929 = vmatprep.mubr.bf16.mxu0 0
        %7930 = vmatmul.mubr.bf16.gmra.mxu0 %v7812
        %v7931 = vpop.f32.mrf.mxu0
        %v7932 = vadd.f32 0.0, %v7931
        %v7933 = vpop.f32.mrf.mxu0
        %v7934 = vpop.f32.mrf.mxu0
        %v7935 = vadd.f32 0.0, %v7934
        %v7936 = vpop.f32.mrf.mxu0
        %7937 = vmatprep.mubr.bf16.mxu0 0
        %7938 = vmatmul.mubr.bf16.gmra.mxu0 %v7813
        %v7939 = vpop.f32.mrf.mxu0
        %v7940 = vadd.f32 0.0, %v7939
        %v7941 = vpop.f32.mrf.mxu0
        %v7942 = vpop.f32.mrf.mxu0
        %v7943 = vadd.f32 0.0, %v7942
        %v7944 = vpop.f32.mrf.mxu0
        %7945 = vmatprep.mubr.bf16.mxu0 0
        %7946 = vmatmul.mubr.bf16.gmra.mxu0 %v7814
        %v7947 = vpop.f32.mrf.mxu0
        %v7948 = vadd.f32 0.0, %v7947
        %v7949 = vpop.f32.mrf.mxu0
        %v7950 = vpop.f32.mrf.mxu0
        %v7951 = vadd.f32 0.0, %v7950
        %v7952 = vpop.f32.mrf.mxu0
        %7953 = vmatprep.mubr.bf16.mxu0 0
        %7954 = vmatmul.mubr.bf16.gmra.mxu0 %v7815
        %v7955 = vpop.f32.mrf.mxu0
        %v7956 = vadd.f32 0.0, %v7955
        %v7957 = vpop.f32.mrf.mxu0
        %v7958 = vpop.f32.mrf.mxu0
        %v7959 = vadd.f32 0.0, %v7958
        %v7960 = vpop.f32.mrf.mxu0
        %7961 = vmatprep.mubr.bf16.mxu0 0
        %7962 = vmatmul.mubr.bf16.gmra.mxu0 %v7816
        %v7963 = vpop.f32.mrf.mxu0
        %v7964 = vadd.f32 0.0, %v7963
        %v7965 = vpop.f32.mrf.mxu0
        %v7966 = vpop.f32.mrf.mxu0
        %v7967 = vadd.f32 0.0, %v7966
        %v7968 = vpop.f32.mrf.mxu0
        %7969 = vdwg.mxu0
        %v7970 = vld [vmem:[#allocation5] sm:$0xff]
        %v7971 = vld [vmem:[#allocation5 + $0x8] sm:$0xff]
        %v7972 = vld [vmem:[#allocation5 + $0x10] sm:$0xff]
        %v7973 = vld [vmem:[#allocation5 + $0x18] sm:$0xff]
        %v7974 = vld [vmem:[#allocation5 + $0x20] sm:$0xff]
        %v7975 = vld [vmem:[#allocation5 + $0x28] sm:$0xff]
        %v7976 = vld [vmem:[#allocation5 + $0x30] sm:$0xff]
        %v7977 = vld [vmem:[#allocation5 + $0x38] sm:$0xff]
        %v7978 = vld [vmem:[#allocation5 + $0x40] sm:$0xff]
        %v7979 = vld [vmem:[#allocation5 + $0x48] sm:$0xff]
        %v7980 = vld [vmem:[#allocation5 + $0x50] sm:$0xff]
        %v7981 = vld [vmem:[#allocation5 + $0x58] sm:$0xff]
        %v7982 = vld [vmem:[#allocation5 + $0x60] sm:$0xff]
        %v7983 = vld [vmem:[#allocation5 + $0x68] sm:$0xff]
        %v7984 = vld [vmem:[#allocation5 + $0x70] sm:$0xff]
        %v7985 = vld [vmem:[#allocation5 + $0x78] sm:$0xff]
        %v7986 = vadd.f32 %v7970, %v7908
        %v7987 = vadd.f32 %v7971, %v7911
        %v7988 = vadd.f32 %v7972, %v7916
        %v7989 = vadd.f32 %v7973, %v7919
        %v7990 = vadd.f32 %v7974, %v7924
        %v7991 = vadd.f32 %v7975, %v7927
        %v7992 = vadd.f32 %v7976, %v7932
        %v7993 = vadd.f32 %v7977, %v7935
        %v7994 = vadd.f32 %v7978, %v7940
        %v7995 = vadd.f32 %v7979, %v7943
        %v7996 = vadd.f32 %v7980, %v7948
        %v7997 = vadd.f32 %v7981, %v7951
        %v7998 = vadd.f32 %v7982, %v7956
        %v7999 = vadd.f32 %v7983, %v7959
        %v8000 = vadd.f32 %v7984, %v7964
        %v8001 = vadd.f32 %v7985, %v7967
        %8002 = vst [vmem:[#allocation5] sm:$0xff] %v7986
        %8003 = vst [vmem:[#allocation5 + $0x8] sm:$0xff] %v7987
        %8004 = vst [vmem:[#allocation5 + $0x10] sm:$0xff] %v7988
        %8005 = vst [vmem:[#allocation5 + $0x18] sm:$0xff] %v7989
        %8006 = vst [vmem:[#allocation5 + $0x20] sm:$0xff] %v7990
        %8007 = vst [vmem:[#allocation5 + $0x28] sm:$0xff] %v7991
        %8008 = vst [vmem:[#allocation5 + $0x30] sm:$0xff] %v7992
        %8009 = vst [vmem:[#allocation5 + $0x38] sm:$0xff] %v7993
        %8010 = vst [vmem:[#allocation5 + $0x40] sm:$0xff] %v7994
        %8011 = vst [vmem:[#allocation5 + $0x48] sm:$0xff] %v7995
        %8012 = vst [vmem:[#allocation5 + $0x50] sm:$0xff] %v7996
        %8013 = vst [vmem:[#allocation5 + $0x58] sm:$0xff] %v7997
        %8014 = vst [vmem:[#allocation5 + $0x60] sm:$0xff] %v7998
        %8015 = vst [vmem:[#allocation5 + $0x68] sm:$0xff] %v7999
        %8016 = vst [vmem:[#allocation5 + $0x70] sm:$0xff] %v8000
        %8017 = vst [vmem:[#allocation5 + $0x78] sm:$0xff] %v8001
        %v8018 = vld [vmem:[%s7285] sm:$0xe]
        %v8019 = vld [vmem:[%s7285 + $0x4] sm:$0xf]
        %v8020 = vld [vmem:[%s7285 + $0x8] sm:$0x1]
        %v8021 = vld [vmem:[%s7285 + $0xc] sm:$0xe]
        %v8022 = vld [vmem:[%s7285 + $0x10] sm:$0xf]
        %v8023 = vld [vmem:[%s7285 + $0x14] sm:$0x1]
        %v8024 = vld [vmem:[%s7285 + $0x18] sm:$0xe]
        %v8025 = vld [vmem:[%s7285 + $0x1c] sm:$0xf]
        %v8026 = vld [vmem:[%s7285 + $0x20] sm:$0x1]
        %v8027 = vld [vmem:[%s7285 + $0x24] sm:$0xe]
        %v8028 = vld [vmem:[%s7285 + $0x28] sm:$0xf]
        %v8029 = vld [vmem:[%s7285 + $0x2c] sm:$0x1]
        %v8030 = vld [vmem:[%s7285 + $0x30] sm:$0xe]
        %v8031 = vld [vmem:[%s7285 + $0x34] sm:$0xf]
        %v8032 = vld [vmem:[%s7285 + $0x38] sm:$0x1]
        %v8033 = vld [vmem:[%s7285 + $0x3c] sm:$0xe]
        %v8034 = vld [vmem:[%s7285 + $0x40] sm:$0xf]
        %v8035 = vld [vmem:[%s7285 + $0x44] sm:$0x1]
        %v8036 = vld [vmem:[%s7285 + $0x48] sm:$0xe]
        %v8037 = vld [vmem:[%s7285 + $0x4c] sm:$0xf]
        %v8038 = vld [vmem:[%s7285 + $0x50] sm:$0x1]
        %v8039 = vld [vmem:[%s7285 + $0x54] sm:$0xe]
        %v8040 = vld [vmem:[%s7285 + $0x58] sm:$0xf]
        %v8041 = vld [vmem:[%s7285 + $0x5c] sm:$0x1]
        %v8066 = vrot.slane %v8018, 5
        %v8067 = vrot.slane %v8066, 4
        %v8068 = vrot.slane %v8019, 5
        %v8069 = vsel %vm1764, %v8067, %v8068
        %v8070 = vrot.slane %v8068, 4
        %v8071 = vrot.slane %v8020, 5
        %v8072 = vsel %vm1764, %v8070, %v8071
        %v8073 = vrot.slane %v8021, 5
        %v8074 = vrot.slane %v8073, 4
        %v8075 = vrot.slane %v8022, 5
        %v8076 = vsel %vm1764, %v8074, %v8075
        %v8077 = vrot.slane %v8075, 4
        %v8078 = vrot.slane %v8023, 5
        %v8079 = vsel %vm1764, %v8077, %v8078
        %v8080 = vrot.slane %v8024, 5
        %v8081 = vrot.slane %v8080, 4
        %v8082 = vrot.slane %v8025, 5
        %v8083 = vsel %vm1764, %v8081, %v8082
        %v8084 = vrot.slane %v8082, 4
        %v8085 = vrot.slane %v8026, 5
        %v8086 = vsel %vm1764, %v8084, %v8085
        %v8087 = vrot.slane %v8027, 5
        %v8088 = vrot.slane %v8087, 4
        %v8089 = vrot.slane %v8028, 5
        %v8090 = vsel %vm1764, %v8088, %v8089
        %v8091 = vrot.slane %v8089, 4
        %v8092 = vrot.slane %v8029, 5
        %v8093 = vsel %vm1764, %v8091, %v8092
        %v8094 = vrot.slane %v8030, 5
        %v8095 = vrot.slane %v8094, 4
        %v8096 = vrot.slane %v8031, 5
        %v8097 = vsel %vm1764, %v8095, %v8096
        %v8098 = vrot.slane %v8096, 4
        %v8099 = vrot.slane %v8032, 5
        %v8100 = vsel %vm1764, %v8098, %v8099
        %v8101 = vrot.slane %v8033, 5
        %v8102 = vrot.slane %v8101, 4
        %v8103 = vrot.slane %v8034, 5
        %v8104 = vsel %vm1764, %v8102, %v8103
        %v8105 = vrot.slane %v8103, 4
        %v8106 = vrot.slane %v8035, 5
        %v8107 = vsel %vm1764, %v8105, %v8106
        %v8108 = vrot.slane %v8036, 5
        %v8109 = vrot.slane %v8108, 4
        %v8110 = vrot.slane %v8037, 5
        %v8111 = vsel %vm1764, %v8109, %v8110
        %v8112 = vrot.slane %v8110, 4
        %v8113 = vrot.slane %v8038, 5
        %v8114 = vsel %vm1764, %v8112, %v8113
        %v8115 = vrot.slane %v8039, 5
        %v8116 = vrot.slane %v8115, 4
        %v8117 = vrot.slane %v8040, 5
        %v8118 = vsel %vm1764, %v8116, %v8117
        %v8119 = vrot.slane %v8117, 4
        %v8120 = vrot.slane %v8041, 5
        %v8121 = vsel %vm1764, %v8119, %v8120
        %s8122 = scalar_lea.vmem [#allocation11], 512
        %v8123 = vld [vmem:[%s8122] sm:$0xf]
        %v8124 = vld [vmem:[%s8122 + $0x4] sm:$0xf]
        %v8125 = vld [vmem:[%s8122 + $0x8] sm:$0xf]
        %v8126 = vld [vmem:[%s8122 + $0xc] sm:$0xf]
        %v8127 = vld [vmem:[%s8122 + $0x10] sm:$0xf]
        %v8128 = vld [vmem:[%s8122 + $0x14] sm:$0xf]
        %v8129 = vld [vmem:[%s8122 + $0x18] sm:$0xf]
        %v8130 = vld [vmem:[%s8122 + $0x1c] sm:$0xf]
        %v8131 = vld [vmem:[%s8122 + $0x20] sm:$0xf]
        %v8132 = vld [vmem:[%s8122 + $0x24] sm:$0xf]
        %v8133 = vld [vmem:[%s8122 + $0x28] sm:$0xf]
        %v8134 = vld [vmem:[%s8122 + $0x2c] sm:$0xf]
        %v8135 = vld [vmem:[%s8122 + $0x30] sm:$0xf]
        %v8136 = vld [vmem:[%s8122 + $0x34] sm:$0xf]
        %v8137 = vld [vmem:[%s8122 + $0x38] sm:$0xf]
        %v8138 = vld [vmem:[%s8122 + $0x3c] sm:$0xf]
        %v8139 = vunpack.c.l.b16 %v8069
        %v8140 = vunpack.c.l.b16 %v8072
        %v8141 = vunpack.c.l.b16 %v8076
        %v8142 = vunpack.c.l.b16 %v8079
        %v8143 = vunpack.c.l.b16 %v8083
        %v8144 = vunpack.c.l.b16 %v8086
        %v8145 = vunpack.c.l.b16 %v8090
        %v8146 = vunpack.c.l.b16 %v8093
        %v8147 = vunpack.c.l.b16 %v8097
        %v8148 = vunpack.c.l.b16 %v8100
        %v8149 = vunpack.c.l.b16 %v8104
        %v8150 = vunpack.c.l.b16 %v8107
        %v8151 = vunpack.c.l.b16 %v8111
        %v8152 = vunpack.c.l.b16 %v8114
        %v8153 = vunpack.c.l.b16 %v8118
        %v8154 = vunpack.c.l.b16 %v8121
        %v8155 = vpack.c.b16 %v8140, %v8139
        %v8156 = vpack.c.b16 %v8142, %v8141
        %v8157 = vpack.c.b16 %v8144, %v8143
        %v8158 = vpack.c.b16 %v8146, %v8145
        %v8159 = vpack.c.b16 %v8148, %v8147
        %v8160 = vpack.c.b16 %v8150, %v8149
        %v8161 = vpack.c.b16 %v8152, %v8151
        %v8162 = vpack.c.b16 %v8154, %v8153
        %v8187 = vunpack.c.l.b16 %v8123
        %v8188 = vunpack.c.l.b16 %v8124
        %v8189 = vunpack.c.l.b16 %v8125
        %v8190 = vunpack.c.l.b16 %v8126
        %v8191 = vunpack.c.l.b16 %v8127
        %v8192 = vunpack.c.l.b16 %v8128
        %v8193 = vunpack.c.l.b16 %v8129
        %v8194 = vunpack.c.l.b16 %v8130
        %v8195 = vunpack.c.l.b16 %v8131
        %v8196 = vunpack.c.l.b16 %v8132
        %v8197 = vunpack.c.l.b16 %v8133
        %v8198 = vunpack.c.l.b16 %v8134
        %v8199 = vunpack.c.l.b16 %v8135
        %v8200 = vunpack.c.l.b16 %v8136
        %v8201 = vunpack.c.l.b16 %v8137
        %v8202 = vunpack.c.l.b16 %v8138
        %v8203 = vpack.c.b16 %v8188, %v8187
        %v8204 = vpack.c.b16 %v8190, %v8189
        %v8205 = vpack.c.b16 %v8192, %v8191
        %v8206 = vpack.c.b16 %v8194, %v8193
        %v8207 = vpack.c.b16 %v8196, %v8195
        %v8208 = vpack.c.b16 %v8198, %v8197
        %v8209 = vpack.c.b16 %v8200, %v8199
        %v8210 = vpack.c.b16 %v8202, %v8201
        %8219 = vmatprep.subr.bf16.mxu0 0
        %8220 = vmatpush1.bf16.msra.mxu0 %v8210
        %8221 = vmatprep.subr.bf16.mxu0 0
        %8222 = vmatpush1.bf16.msra.mxu0 %v8209
        %8223 = vmatprep.subr.bf16.mxu0 0
        %8224 = vmatpush1.bf16.msra.mxu0 %v8208
        %8225 = vmatprep.subr.bf16.mxu0 0
        %8226 = vmatpush1.bf16.msra.mxu0 %v8207
        %8227 = vmatprep.subr.bf16.mxu0 0
        %8228 = vmatpush1.bf16.msra.mxu0 %v8206
        %8229 = vmatprep.subr.bf16.mxu0 0
        %8230 = vmatpush1.bf16.msra.mxu0 %v8205
        %8231 = vmatprep.subr.bf16.mxu0 0
        %8232 = vmatpush1.bf16.msra.mxu0 %v8204
        %8233 = vmatprep.subr.bf16.mxu0 0
        %8234 = vmatpush1.bf16.msra.mxu0 %v8203
        %8235 = vmatprep.subr.bf16.mxu0 0
        %8236 = vmatpush2.bf16.msra.mxu0 0
        %8237 = vmatprep.subr.bf16.mxu0 0
        %8238 = vmatpush2.bf16.msra.mxu0 0
        %8239 = vmatprep.subr.bf16.mxu0 0
        %8240 = vmatpush2.bf16.msra.mxu0 0
        %8241 = vmatprep.subr.bf16.mxu0 0
        %8242 = vmatpush2.bf16.msra.mxu0 0
        %8243 = vmatprep.subr.bf16.mxu0 0
        %8244 = vmatpush2.bf16.msra.mxu0 0
        %8245 = vmatprep.subr.bf16.mxu0 0
        %8246 = vmatpush2.bf16.msra.mxu0 0
        %8247 = vmatprep.subr.bf16.mxu0 0
        %8248 = vmatpush2.bf16.msra.mxu0 0
        %8249 = vmatprep.subr.bf16.mxu0 0
        %8250 = vmatpush2.bf16.msra.mxu0 0
        %8251 = vmatprep.mubr.bf16.mxu0 0
        %8252 = vmatmul.mubr.bf16.gmra.mxu0 %v8155
        %v8253 = vpop.f32.mrf.mxu0
        %v8254 = vadd.f32 0.0, %v8253
        %v8255 = vpop.f32.mrf.mxu0
        %v8256 = vpop.f32.mrf.mxu0
        %v8257 = vadd.f32 0.0, %v8256
        %v8258 = vpop.f32.mrf.mxu0
        %8259 = vmatprep.mubr.bf16.mxu0 0
        %8260 = vmatmul.mubr.bf16.gmra.mxu0 %v8156
        %v8261 = vpop.f32.mrf.mxu0
        %v8262 = vadd.f32 0.0, %v8261
        %v8263 = vpop.f32.mrf.mxu0
        %v8264 = vpop.f32.mrf.mxu0
        %v8265 = vadd.f32 0.0, %v8264
        %v8266 = vpop.f32.mrf.mxu0
        %8267 = vmatprep.mubr.bf16.mxu0 0
        %8268 = vmatmul.mubr.bf16.gmra.mxu0 %v8157
        %v8269 = vpop.f32.mrf.mxu0
        %v8270 = vadd.f32 0.0, %v8269
        %v8271 = vpop.f32.mrf.mxu0
        %v8272 = vpop.f32.mrf.mxu0
        %v8273 = vadd.f32 0.0, %v8272
        %v8274 = vpop.f32.mrf.mxu0
        %8275 = vmatprep.mubr.bf16.mxu0 0
        %8276 = vmatmul.mubr.bf16.gmra.mxu0 %v8158
        %v8277 = vpop.f32.mrf.mxu0
        %v8278 = vadd.f32 0.0, %v8277
        %v8279 = vpop.f32.mrf.mxu0
        %v8280 = vpop.f32.mrf.mxu0
        %v8281 = vadd.f32 0.0, %v8280
        %v8282 = vpop.f32.mrf.mxu0
        %8283 = vmatprep.mubr.bf16.mxu0 0
        %8284 = vmatmul.mubr.bf16.gmra.mxu0 %v8159
        %v8285 = vpop.f32.mrf.mxu0
        %v8286 = vadd.f32 0.0, %v8285
        %v8287 = vpop.f32.mrf.mxu0
        %v8288 = vpop.f32.mrf.mxu0
        %v8289 = vadd.f32 0.0, %v8288
        %v8290 = vpop.f32.mrf.mxu0
        %8291 = vmatprep.mubr.bf16.mxu0 0
        %8292 = vmatmul.mubr.bf16.gmra.mxu0 %v8160
        %v8293 = vpop.f32.mrf.mxu0
        %v8294 = vadd.f32 0.0, %v8293
        %v8295 = vpop.f32.mrf.mxu0
        %v8296 = vpop.f32.mrf.mxu0
        %v8297 = vadd.f32 0.0, %v8296
        %v8298 = vpop.f32.mrf.mxu0
        %8299 = vmatprep.mubr.bf16.mxu0 0
        %8300 = vmatmul.mubr.bf16.gmra.mxu0 %v8161
        %v8301 = vpop.f32.mrf.mxu0
        %v8302 = vadd.f32 0.0, %v8301
        %v8303 = vpop.f32.mrf.mxu0
        %v8304 = vpop.f32.mrf.mxu0
        %v8305 = vadd.f32 0.0, %v8304
        %v8306 = vpop.f32.mrf.mxu0
        %8307 = vmatprep.mubr.bf16.mxu0 0
        %8308 = vmatmul.mubr.bf16.gmra.mxu0 %v8162
        %v8309 = vpop.f32.mrf.mxu0
        %v8310 = vadd.f32 0.0, %v8309
        %v8311 = vpop.f32.mrf.mxu0
        %v8312 = vpop.f32.mrf.mxu0
        %v8313 = vadd.f32 0.0, %v8312
        %v8314 = vpop.f32.mrf.mxu0
        %8315 = vdwg.mxu0
        %v8316 = vld [vmem:[#allocation5] sm:$0xff]
        %v8317 = vld [vmem:[#allocation5 + $0x8] sm:$0xff]
        %v8318 = vld [vmem:[#allocation5 + $0x10] sm:$0xff]
        %v8319 = vld [vmem:[#allocation5 + $0x18] sm:$0xff]
        %v8320 = vld [vmem:[#allocation5 + $0x20] sm:$0xff]
        %v8321 = vld [vmem:[#allocation5 + $0x28] sm:$0xff]
        %v8322 = vld [vmem:[#allocation5 + $0x30] sm:$0xff]
        %v8323 = vld [vmem:[#allocation5 + $0x38] sm:$0xff]
        %v8324 = vld [vmem:[#allocation5 + $0x40] sm:$0xff]
        %v8325 = vld [vmem:[#allocation5 + $0x48] sm:$0xff]
        %v8326 = vld [vmem:[#allocation5 + $0x50] sm:$0xff]
        %v8327 = vld [vmem:[#allocation5 + $0x58] sm:$0xff]
        %v8328 = vld [vmem:[#allocation5 + $0x60] sm:$0xff]
        %v8329 = vld [vmem:[#allocation5 + $0x68] sm:$0xff]
        %v8330 = vld [vmem:[#allocation5 + $0x70] sm:$0xff]
        %v8331 = vld [vmem:[#allocation5 + $0x78] sm:$0xff]
        %v8332 = vadd.f32 %v8316, %v8254
        %v8333 = vadd.f32 %v8317, %v8257
        %v8334 = vadd.f32 %v8318, %v8262
        %v8335 = vadd.f32 %v8319, %v8265
        %v8336 = vadd.f32 %v8320, %v8270
        %v8337 = vadd.f32 %v8321, %v8273
        %v8338 = vadd.f32 %v8322, %v8278
        %v8339 = vadd.f32 %v8323, %v8281
        %v8340 = vadd.f32 %v8324, %v8286
        %v8341 = vadd.f32 %v8325, %v8289
        %v8342 = vadd.f32 %v8326, %v8294
        %v8343 = vadd.f32 %v8327, %v8297
        %v8344 = vadd.f32 %v8328, %v8302
        %v8345 = vadd.f32 %v8329, %v8305
        %v8346 = vadd.f32 %v8330, %v8310
        %v8347 = vadd.f32 %v8331, %v8313
        %8348 = vst [vmem:[#allocation5] sm:$0xff] %v8332
        %8349 = vst [vmem:[#allocation5 + $0x8] sm:$0xff] %v8333
        %8350 = vst [vmem:[#allocation5 + $0x10] sm:$0xff] %v8334
        %8351 = vst [vmem:[#allocation5 + $0x18] sm:$0xff] %v8335
        %8352 = vst [vmem:[#allocation5 + $0x20] sm:$0xff] %v8336
        %8353 = vst [vmem:[#allocation5 + $0x28] sm:$0xff] %v8337
        %8354 = vst [vmem:[#allocation5 + $0x30] sm:$0xff] %v8338
        %8355 = vst [vmem:[#allocation5 + $0x38] sm:$0xff] %v8339
        %8356 = vst [vmem:[#allocation5 + $0x40] sm:$0xff] %v8340
        %8357 = vst [vmem:[#allocation5 + $0x48] sm:$0xff] %v8341
        %8358 = vst [vmem:[#allocation5 + $0x50] sm:$0xff] %v8342
        %8359 = vst [vmem:[#allocation5 + $0x58] sm:$0xff] %v8343
        %8360 = vst [vmem:[#allocation5 + $0x60] sm:$0xff] %v8344
        %8361 = vst [vmem:[#allocation5 + $0x68] sm:$0xff] %v8345
        %8362 = vst [vmem:[#allocation5 + $0x70] sm:$0xff] %v8346
        %8363 = vst [vmem:[#allocation5 + $0x78] sm:$0xff] %v8347
        %v8364 = vld [vmem:[%s434] sm:$0xff]
        %v8365 = vld [vmem:[%s434 + $0x8] sm:$0xff]
        %v8366 = vld [vmem:[%s434 + $0x10] sm:$0xff]
        %v8367 = vld [vmem:[%s434 + $0x18] sm:$0xff]
        %v8368 = vld [vmem:[%s434 + $0x20] sm:$0xff]
        %v8369 = vld [vmem:[%s434 + $0x28] sm:$0xff]
        %v8370 = vld [vmem:[%s434 + $0x30] sm:$0xff]
        %v8371 = vld [vmem:[%s434 + $0x38] sm:$0xff]
        %v8372 = vld [vmem:[%s434 + $0x40] sm:$0xff]
        %v8373 = vld [vmem:[%s434 + $0x48] sm:$0xff]
        %v8374 = vld [vmem:[%s434 + $0x50] sm:$0xff]
        %v8375 = vld [vmem:[%s434 + $0x58] sm:$0xff]
        %v8376 = vld [vmem:[%s434 + $0x60] sm:$0xff]
        %v8377 = vld [vmem:[%s434 + $0x68] sm:$0xff]
        %v8378 = vld [vmem:[%s434 + $0x70] sm:$0xff]
        %v8379 = vld [vmem:[%s434 + $0x78] sm:$0xff]
        %v8380 = vld [vmem:[#allocation5] sm:$0xff]
        %v8381 = vld [vmem:[#allocation5 + $0x8] sm:$0xff]
        %v8382 = vld [vmem:[#allocation5 + $0x10] sm:$0xff]
        %v8383 = vld [vmem:[#allocation5 + $0x18] sm:$0xff]
        %v8384 = vld [vmem:[#allocation5 + $0x20] sm:$0xff]
        %v8385 = vld [vmem:[#allocation5 + $0x28] sm:$0xff]
        %v8386 = vld [vmem:[#allocation5 + $0x30] sm:$0xff]
        %v8387 = vld [vmem:[#allocation5 + $0x38] sm:$0xff]
        %v8388 = vld [vmem:[#allocation5 + $0x40] sm:$0xff]
        %v8389 = vld [vmem:[#allocation5 + $0x48] sm:$0xff]
        %v8390 = vld [vmem:[#allocation5 + $0x50] sm:$0xff]
        %v8391 = vld [vmem:[#allocation5 + $0x58] sm:$0xff]
        %v8392 = vld [vmem:[#allocation5 + $0x60] sm:$0xff]
        %v8393 = vld [vmem:[#allocation5 + $0x68] sm:$0xff]
        %v8394 = vld [vmem:[#allocation5 + $0x70] sm:$0xff]
        %v8395 = vld [vmem:[#allocation5 + $0x78] sm:$0xff]
        %v8396 = vld [vmem:[%s5] sm:$0x1]
        %v8398 = vlaneseq
        %v8399 = vshrl.u32 %v8398, 7
        %v8400 = vsub.s32 0, %v8399
        %v8401 = vrot.slane %v8396, %v8400
        %v8403 = vmul.f32 %v8380, %v8401
        %v8404 = vmul.f32 %v8381, %v8401
        %v8405 = vmul.f32 %v8382, %v8401
        %v8406 = vmul.f32 %v8383, %v8401
        %v8407 = vmul.f32 %v8384, %v8401
        %v8408 = vmul.f32 %v8385, %v8401
        %v8409 = vmul.f32 %v8386, %v8401
        %v8410 = vmul.f32 %v8387, %v8401
        %v8411 = vmul.f32 %v8388, %v8401
        %v8412 = vmul.f32 %v8389, %v8401
        %v8413 = vmul.f32 %v8390, %v8401
        %v8414 = vmul.f32 %v8391, %v8401
        %v8415 = vmul.f32 %v8392, %v8401
        %v8416 = vmul.f32 %v8393, %v8401
        %v8417 = vmul.f32 %v8394, %v8401
        %v8418 = vmul.f32 %v8395, %v8401
        %v8419 = vld [vmem:[%s6] sm:$0x1]
        %v8421 = vlaneseq
        %v8422 = vshrl.u32 %v8421, 7
        %v8423 = vsub.s32 0, %v8422
        %v8424 = vrot.slane %v8419, %v8423
        %v8426 = vadd.f32 %v8403, %v8424
        %v8427 = vadd.f32 %v8404, %v8424
        %v8428 = vadd.f32 %v8405, %v8424
        %v8429 = vadd.f32 %v8406, %v8424
        %v8430 = vadd.f32 %v8407, %v8424
        %v8431 = vadd.f32 %v8408, %v8424
        %v8432 = vadd.f32 %v8409, %v8424
        %v8433 = vadd.f32 %v8410, %v8424
        %v8434 = vadd.f32 %v8411, %v8424
        %v8435 = vadd.f32 %v8412, %v8424
        %v8436 = vadd.f32 %v8413, %v8424
        %v8437 = vadd.f32 %v8414, %v8424
        %v8438 = vadd.f32 %v8415, %v8424
        %v8439 = vadd.f32 %v8416, %v8424
        %v8440 = vadd.f32 %v8417, %v8424
        %v8441 = vadd.f32 %v8418, %v8424
        %v8442 = vadd.f32 %v8426, %v8364
        %v8443 = vadd.f32 %v8427, %v8365
        %v8444 = vadd.f32 %v8428, %v8366
        %v8445 = vadd.f32 %v8429, %v8367
        %v8446 = vadd.f32 %v8430, %v8368
        %v8447 = vadd.f32 %v8431, %v8369
        %v8448 = vadd.f32 %v8432, %v8370
        %v8449 = vadd.f32 %v8433, %v8371
        %v8450 = vadd.f32 %v8434, %v8372
        %v8451 = vadd.f32 %v8435, %v8373
        %v8452 = vadd.f32 %v8436, %v8374
        %v8453 = vadd.f32 %v8437, %v8375
        %v8454 = vadd.f32 %v8438, %v8376
        %v8455 = vadd.f32 %v8439, %v8377
        %v8456 = vadd.f32 %v8440, %v8378
        %v8457 = vadd.f32 %v8441, %v8379
        %v8458 = vmax.f32 %v8442, 0.0
        %v8459 = vmax.f32 %v8443, 0.0
        %v8460 = vmax.f32 %v8444, 0.0
        %v8461 = vmax.f32 %v8445, 0.0
        %v8462 = vmax.f32 %v8446, 0.0
        %v8463 = vmax.f32 %v8447, 0.0
        %v8464 = vmax.f32 %v8448, 0.0
        %v8465 = vmax.f32 %v8449, 0.0
        %v8466 = vmax.f32 %v8450, 0.0
        %v8467 = vmax.f32 %v8451, 0.0
        %v8468 = vmax.f32 %v8452, 0.0
        %v8469 = vmax.f32 %v8453, 0.0
        %v8470 = vmax.f32 %v8454, 0.0
        %v8471 = vmax.f32 %v8455, 0.0
        %v8472 = vmax.f32 %v8456, 0.0
        %v8473 = vmax.f32 %v8457, 0.0
        %8474 = vst [vmem:[%s339] sm:$0xff] %v8458
        %8475 = vst [vmem:[%s339 + $0x8] sm:$0xff] %v8459
        %8476 = vst [vmem:[%s339 + $0x10] sm:$0xff] %v8460
        %8477 = vst [vmem:[%s339 + $0x18] sm:$0xff] %v8461
        %8478 = vst [vmem:[%s339 + $0x20] sm:$0xff] %v8462
        %8479 = vst [vmem:[%s339 + $0x28] sm:$0xff] %v8463
        %8480 = vst [vmem:[%s339 + $0x30] sm:$0xff] %v8464
        %8481 = vst [vmem:[%s339 + $0x38] sm:$0xff] %v8465
        %8482 = vst [vmem:[%s339 + $0x40] sm:$0xff] %v8466
        %8483 = vst [vmem:[%s339 + $0x48] sm:$0xff] %v8467
        %8484 = vst [vmem:[%s339 + $0x50] sm:$0xff] %v8468
        %8485 = vst [vmem:[%s339 + $0x58] sm:$0xff] %v8469
        %8486 = vst [vmem:[%s339 + $0x60] sm:$0xff] %v8470
        %8487 = vst [vmem:[%s339 + $0x68] sm:$0xff] %v8471
        %8488 = vst [vmem:[%s339 + $0x70] sm:$0xff] %v8472
        %8489 = vst [vmem:[%s339 + $0x78] sm:$0xff] %v8473
        %s8490 = sand.u32 %s199, 1
        %s8491 = scalar_lea.sflag [#allocation8], %s8490
        %s8492 = sand.u32 %s199, 1
        %s8493 = smul.addr %s8492, 128
        %s8494 = scalar_lea.vmem [#allocation12], %s8493
        // Predicated region
        $region77: #{tpu_custom_call.1} parent=47 // pred_check
          %p8495 = pneg %p209
        $region78: #{tpu_custom_call.1} parent=47 // pred_check_branch
          %8497 = sbr.rel (%p8495) target = $region80
        $region79: #{tpu_custom_call.1} parent=47 // pred_region
          %s8498 = smul.u32 8, %s30
          %s8500 = ssub.s32 2048, 2048
          %8501 = vsyncadd %s8491, %s8500
          %s8502 = smul.addr %s8498, 2
          %s8503 = smul.addr %s29, 32
          %s8504 = sadd.s32 %s8502, %s8503
          %s8505 = smul.addr %s8504, 128
          %s8506 = scalar_lea.hbm %s7, %s8505
          %s8507 = sshll.u32 %s8494, 4
          %s8508 = int_to_ptr.vmem [resolvable:$true] %s8507
          %8513 = dma.vmem_to_hbm [thread:$0]  %s8508, 2048, %s8506, %s8491, 128, 128, 8
        $region80: #{tpu_custom_call.1} parent=47 // pred_fallthru
          _
      $region48: #{tpu_custom_call.1} parent=5 // pred_fallthru
        _
      %p8514 = scmp.le.s32.totalorder 2, %s20
      // Predicated region
      $region81: #{tpu_custom_call.1} parent=5 // pred_check
        %p8515 = pneg %p8514
      $region82: #{tpu_custom_call.1} parent=5 // pred_check_branch
        %8517 = sbr.rel (%p8515) target = $region84
      $region83: #{tpu_custom_call.1} parent=5 // pred_region
        %s8518 = ssub.s32 %s20, 2
        // Predicated region
        $region85: #{tpu_custom_call.1} parent=83 // pred_check
          %p8519 = pneg %p215
        $region86: #{tpu_custom_call.1} parent=83 // pred_check_branch
          %8521 = sbr.rel (%p8519) target = $region88
        $region87: #{tpu_custom_call.1} parent=83 // pred_region
          %s8522 = sand.u32 %s200, 1
          %s8523 = scalar_lea.sflag [#allocation8], %s8522
          %s8524 = sand.u32 %s200, 1
          %s8525 = smul.addr %s8524, 128
          %s8526 = scalar_lea.vmem [#allocation12], %s8525
          %8527 = dma.done %s8523, 2048
        $region88: #{tpu_custom_call.1} parent=83 // pred_fallthru
          _
      $region84: #{tpu_custom_call.1} parent=5 // pred_fallthru
        _
    $region6: #{tpu_custom_call.1} parent=1 // loop_footer
      %s24 = sadd.s32 1, %s20
    $region7: #{tpu_custom_call.1} parent=1 // loop_footer_branch
      %19 = sbr.rel target = $region3
    $region8: #{tpu_custom_call.1} parent=1 // loop_exit
      _
    %8528 = vsyncpa [#allocation7], 1
    %s8529 = scalar_lea.sflag [#allocation7], 1
    %8530 = vsyncpa %s8529, 1
    %8531 = vsyncpa [#allocation10], 1
    %8532 = vsyncpa [#allocation8], 1
    %s8533 = scalar_lea.sflag [#allocation8], 1
    %8534 = vsyncpa %s8533, 1

</llo_original>
